<compile_context>
chip_gen: v7x
topology: tpu7x:2x2x1
jax: 0.10.0
libtpu: 0.0.40
codegen_flags: <defaults>
</compile_context>

<pallas_src>
import jax
import jax.numpy as jnp
import numpy as np
from jax import lax
from jax.experimental import pallas as pl
from jax.experimental.pallas import tpu as pltpu

EPS = 1e-5


# --------------------------- Pallas kernels ----------------------------------

def _matmul_bias_relu_kernel(x_ref, w_ref, b_ref, o_ref):
    # x_ref: (TM, K), w_ref: (K, Cout), b_ref: (1, Cout), o_ref: (TM, Cout)
    acc = jnp.dot(x_ref[...], w_ref[...], preferred_element_type=jnp.float32)
    acc = acc + b_ref[...]
    o_ref[...] = jnp.maximum(acc, 0.0).astype(o_ref.dtype)


def _conv3x3_bias_relu_kernel(xp_ref, w_ref, b_ref, o_ref):
    # In-kernel im2col: 9 shifted windows of the zero-padded image, each fed to
    # the MXU and accumulated in f32 registers.  No im2col tensor in HBM.
    # xp_ref: (1, H+2, W+2, Cin) zero-padded image
    # w_ref : (9, Cin, Cout)     ordered (dy*3+dx, cin, cout)
    # b_ref : (1, Cout)          o_ref: (1, H, W, Cout)
    H, W, Cout = o_ref.shape[1], o_ref.shape[2], o_ref.shape[3]
    Cin = xp_ref.shape[3]
    acc = None
    for dy in range(3):
        for dx in range(3):
            patch = xp_ref[0, dy:dy + H, dx:dx + W, :].reshape(H * W, Cin)
            part = jnp.dot(patch, w_ref[dy * 3 + dx],
                           preferred_element_type=jnp.float32)
            acc = part if acc is None else acc + part
    acc = acc + b_ref[...]
    o_ref[0] = jnp.maximum(acc, 0.0).reshape(H, W, Cout).astype(o_ref.dtype)


def _maxpool_conv1x1_kernel(xp_ref, w_ref, b_ref, o_ref):
    # Fused MaxPool2d(3, stride=1, pad=1) + 1x1 conv + bias + ReLU.
    # xp_ref: (1, H+2, W+2, Cin) padded with -inf
    # w_ref : (Cin, Cout), b_ref: (1, Cout), o_ref: (1, H, W, Cout)
    H, W, Cout = o_ref.shape[1], o_ref.shape[2], o_ref.shape[3]
    Cin = xp_ref.shape[3]
    xp = xp_ref[0]
    # Separable 3x3 max: rows then cols (4 maximum ops instead of 8).
    rm = jnp.maximum(jnp.maximum(xp[0:H, :, :], xp[1:H + 1, :, :]),
                     xp[2:H + 2, :, :])                        # (H, W+2, Cin)
    pooled = jnp.maximum(jnp.maximum(rm[:, 0:W, :], rm[:, 1:W + 1, :]),
                         rm[:, 2:W + 2, :])                    # (H, W, Cin)
    acc = jnp.dot(pooled.reshape(H * W, Cin), w_ref[...],
                  preferred_element_type=jnp.float32)
    acc = acc + b_ref[...]
    o_ref[0] = jnp.maximum(acc, 0.0).reshape(H, W, Cout).astype(o_ref.dtype)


# --------------------------- helpers ------------------------------------------

def _round_up(x, m):
    return ((x + m - 1) // m) * m


def _pad_cout(w, b, mult=128):
    """Zero-pad the output-channel (last) dim to a multiple of `mult` so Pallas
    output stores are lane-dense (unmasked vst).  Sliced off after the call."""
    cout = w.shape[-1]
    cpad = _round_up(cout, mult)
    if cpad != cout:
        w = jnp.pad(w, [(0, 0)] * (w.ndim - 1) + [(0, cpad - cout)])
        b = jnp.pad(b, (0, cpad - cout))
    return w, b, cpad


def _pick_tm(M, K, Cout, max_tm=512, vmem_budget=12 * 1024 * 1024):
    """Largest row tile (multiple of 128) whose double-buffered input/output
    plus resident weight fit comfortably in the default scoped VMEM on every
    TPU generation (v5e 16 MiB default scoped, v7x 32/64 MiB)."""
    tm = max_tm
    while tm > 128 and 4 * (2 * tm * K + K * Cout + 2 * tm * Cout) > vmem_budget:
        tm //= 2
    return min(tm, max(128, _round_up(M, 128)))


# --------------------------- Pallas wrappers ----------------------------------

def _matmul_bias_relu(x2d, w, b, out_dtype):
    M, K = x2d.shape
    Cout = w.shape[1]
    tm = _pick_tm(M, K, Cout)
    mpad = _round_up(M, tm)
    if mpad != M:                       # robust cdiv grid, no tm=M fallback
        x2d = jnp.pad(x2d, ((0, mpad - M), (0, 0)))
    y = pl.pallas_call(
        _matmul_bias_relu_kernel,
        out_shape=jax.ShapeDtypeStruct((mpad, Cout), out_dtype),
        grid_spec=pltpu.PrefetchScalarGridSpec(
            num_scalar_prefetch=0,
            grid=(mpad // tm,),
            in_specs=[
                pl.BlockSpec((tm, K), lambda i: (i, 0)),
                pl.BlockSpec((K, Cout), lambda i: (0, 0)),
                pl.BlockSpec((1, Cout), lambda i: (0, 0)),
            ],
            out_specs=pl.BlockSpec((tm, Cout), lambda i: (i, 0)),
        ),
        compiler_params=pltpu.CompilerParams(
            dimension_semantics=("parallel",)),
    )(x2d, w, b.reshape(1, Cout))
    return y[:M] if mpad != M else y


def conv1x1_fused(x_nhwc, w_eff, b_eff):
    # w_eff: (Cin, Ctot) — possibly several fused 1x1 convs concatenated along
    # Cout; padded to a lane-dense width inside.
    N, H, W, Cin = x_nhwc.shape
    ctot = w_eff.shape[1]
    w_p, b_p, cpad = _pad_cout(w_eff, b_eff)
    y = _matmul_bias_relu(x_nhwc.reshape(N * H * W, Cin), w_p, b_p,
                          x_nhwc.dtype)
    return y.reshape(N, H, W, cpad)[..., :ctot]


def conv3x3_bn_relu(x_nhwc, w_eff, b_eff):
    # w_eff: (9, Cin, Cout), axis 0 ordered as (dy, dx).
    N, H, W, Cin = x_nhwc.shape
    cout = w_eff.shape[-1]
    w_p, b_p, cpad = _pad_cout(w_eff, b_eff)
    # Only the thin spatial halo is padded in HBM (not a 9x im2col tensor).
    xp = jnp.pad(x_nhwc, ((0, 0), (1, 1), (1, 1), (0, 0)))
    y = pl.pallas_call(
        _conv3x3_bias_relu_kernel,
        out_shape=jax.ShapeDtypeStruct((N, H, W, cpad), x_nhwc.dtype),
        grid_spec=pltpu.PrefetchScalarGridSpec(
            num_scalar_prefetch=0,
            grid=(N,),
            in_specs=[
                pl.BlockSpec((1, H + 2, W + 2, Cin), lambda n: (n, 0, 0, 0)),
                pl.BlockSpec((9, Cin, cpad), lambda n: (0, 0, 0)),
                pl.BlockSpec((1, cpad), lambda n: (0, 0)),
            ],
            out_specs=pl.BlockSpec((1, H, W, cpad), lambda n: (n, 0, 0, 0)),
        ),
        compiler_params=pltpu.CompilerParams(
            dimension_semantics=("parallel",)),
    )(xp, w_p, b_p.reshape(1, cpad))
    return y[..., :cout]


def maxpool3x3_conv1x1(x_nhwc, w_eff, b_eff):
    # w_eff: (Cin, Cout)
    N, H, W, Cin = x_nhwc.shape
    cout = w_eff.shape[-1]
    w_p, b_p, cpad = _pad_cout(w_eff, b_eff)
    xp = jnp.pad(x_nhwc, ((0, 0), (1, 1), (1, 1), (0, 0)),
                 constant_values=-jnp.inf)
    y = pl.pallas_call(
        _maxpool_conv1x1_kernel,
        out_shape=jax.ShapeDtypeStruct((N, H, W, cpad), x_nhwc.dtype),
        grid_spec=pltpu.PrefetchScalarGridSpec(
            num_scalar_prefetch=0,
            grid=(N,),
            in_specs=[
                pl.BlockSpec((1, H + 2, W + 2, Cin), lambda n: (n, 0, 0, 0)),
                pl.BlockSpec((Cin, cpad), lambda n: (0, 0)),
                pl.BlockSpec((1, cpad), lambda n: (0, 0)),
            ],
            out_specs=pl.BlockSpec((1, H, W, cpad), lambda n: (n, 0, 0, 0)),
        ),
        compiler_params=pltpu.CompilerParams(
            dimension_semantics=("parallel",)),
    )(xp, w_p, b_p.reshape(1, cpad))
    return y[..., :cout]


# --------------------------- parameters ---------------------------------------

def _conv_bn_params(key, cin, cout, ksize):
    k = jax.random.split(key, 6)
    return dict(
        w=jax.random.normal(k[0], (cout, cin, ksize, ksize), jnp.float32) * 0.1,
        b=jax.random.normal(k[1], (cout,), jnp.float32) * 0.1,
        gamma=jax.random.uniform(k[2], (cout,), jnp.float32, 0.5, 1.5),
        beta=jax.random.normal(k[3], (cout,), jnp.float32) * 0.1,
        mean=jax.random.normal(k[4], (cout,), jnp.float32) * 0.1,
        var=jax.random.uniform(k[5], (cout,), jnp.float32, 0.5, 1.5),
    )


def _fold_bn(p):
    """Fold eval-mode BatchNorm into the conv.  Returns weight as
    (kh*kw, Cin, Cout) ordered (dy, dx) on axis 0, and bias (Cout,)."""
    cout, cin, kh, kw = p['w'].shape
    s = p['gamma'] / jnp.sqrt(p['var'] + EPS)
    w = jnp.transpose(p['w'], (2, 3, 1, 0)).reshape(kh * kw, cin, cout)
    w_eff = w * s[None, None, :]
    b_eff = (p['b'] - p['mean']) * s + p['beta']
    return w_eff, b_eff


def init_inception_params(key, in_planes, n1x1, n3x3red, n3x3,
                          n5x5red, n5x5, pool_planes):
    ks = jax.random.split(key, 7)
    return dict(
        b1=[_conv_bn_params(ks[0], in_planes, n1x1, 1)],
        b2=[_conv_bn_params(ks[1], in_planes, n3x3red, 1),
            _conv_bn_params(ks[2], n3x3red, n3x3, 3)],
        b3=[_conv_bn_params(ks[3], in_planes, n5x5red, 1),
            _conv_bn_params(ks[4], n5x5red, n5x5, 3),
            _conv_bn_params(ks[5], n5x5, n5x5, 3)],
        b4=[_conv_bn_params(ks[6], in_planes, pool_planes, 1)],
    )


# --------------------------- forward -------------------------------------------

def inception_forward(x_nchw, params):
    x = jnp.transpose(x_nchw, (0, 2, 3, 1))  # NCHW -> NHWC

    w1, b1 = _fold_bn(params['b1'][0])       # (1, Cin, n1x1)
    w2r, b2r = _fold_bn(params['b2'][0])     # (1, Cin, n3x3red)
    w2, b2 = _fold_bn(params['b2'][1])       # (9, n3x3red, n3x3)
    w3r, b3r = _fold_bn(params['b3'][0])     # (1, Cin, n5x5red)
    w3a, b3a = _fold_bn(params['b3'][1])     # (9, n5x5red, n5x5)
    w3b, b3b = _fold_bn(params['b3'][2])     # (9, n5x5, n5x5)
    w4, b4 = _fold_bn(params['b4'][0])       # (1, Cin, pool_planes)

    n1x1, n3x3red, n5x5red = w1.shape[-1], w2r.shape[-1], w3r.shape[-1]

    # Call 1: b1 / b2-reduce / b3-reduce all read x -> one fused, lane-dense
    # 1x1-conv matmul (single HBM read of x, single pallas_call).
    wf = jnp.concatenate([w1[0], w2r[0], w3r[0]], axis=1)
    bf = jnp.concatenate([b1, b2r, b3r], axis=0)
    yf = conv1x1_fused(x, wf, bf)
    y1 = yf[..., :n1x1]
    t2 = yf[..., n1x1:n1x1 + n3x3red]
    t3 = yf[..., n1x1 + n3x3red:n1x1 + n3x3red + n5x5red]

    # branch 2: 3x3 conv (in-kernel im2col, 9 accumulated dots)
    y2 = conv3x3_bn_relu(t2, w2, b2)

    # branch 3: 3x3 conv -> 3x3 conv
    t = conv3x3_bn_relu(t3, w3a, b3a)
    y3 = conv3x3_bn_relu(t, w3b, b3b)

    # branch 4: fused 3x3 maxpool + 1x1 conv (single kernel)
    y4 = maxpool3x3_conv1x1(x, w4[0], b4)

    y = jnp.concatenate([y1, y2, y3, y4], axis=-1)  # channel concat
    return jnp.transpose(y, (0, 3, 1, 2))           # NHWC -> NCHW


# --------------------------- pure-JAX reference --------------------------------

def _ref_conv_bn_relu(x_nhwc, p):
    w_hwio = jnp.transpose(p['w'], (2, 3, 1, 0))
    y = lax.conv_general_dilated(x_nhwc, w_hwio, (1, 1), 'SAME',
                                 dimension_numbers=('NHWC', 'HWIO', 'NHWC'))
    y = y + p['b']
    y = (y - p['mean']) / jnp.sqrt(p['var'] + EPS) * p['gamma'] + p['beta']
    return jnp.maximum(y, 0.0)


def inception_reference(x_nchw, params):
    x = jnp.transpose(x_nchw, (0, 2, 3, 1))
    y1 = _ref_conv_bn_relu(x, params['b1'][0])
    t = _ref_conv_bn_relu(x, params['b2'][0])
    y2 = _ref_conv_bn_relu(t, params['b2'][1])
    t = _ref_conv_bn_relu(x, params['b3'][0])
    t = _ref_conv_bn_relu(t, params['b3'][1])
    y3 = _ref_conv_bn_relu(t, params['b3'][2])
    p = lax.reduce_window(x, -jnp.inf, lax.max, (1, 3, 3, 1), (1, 1, 1, 1),
                          ((0, 0), (1, 1), (1, 1), (0, 0)))
    y4 = _ref_conv_bn_relu(p, params['b4'][0])
    y = jnp.concatenate([y1, y2, y3, y4], axis=-1)
    return jnp.transpose(y, (0, 3, 1, 2))


# --------------------------- main -----------------------------------------------

if __name__ == "__main__":
    key = jax.random.PRNGKey(0)
    kx, kp = jax.random.split(key)

    in_planes, n1x1, n3x3red, n3x3, n5x5red, n5x5, pool_planes = 4, 8, 4, 8, 4, 8, 8
    x = jax.random.normal(kx, (2, in_planes, 16, 16), jnp.float32)
    params = init_inception_params(kp, in_planes, n1x1, n3x3red, n3x3,
                                   n5x5red, n5x5, pool_planes)

    out = jax.jit(inception_forward)(x, params)
    out = jax.block_until_ready(out)
    assert out.shape == (2, n1x1 + n3x3 + n5x5 + pool_planes, 16, 16), out.shape

    ref = inception_reference(x, params)
    np.testing.assert_allclose(np.asarray(out), np.asarray(ref),
                               rtol=2e-3, atol=2e-3)
    print("KERNEL_OK")
</pallas_src>

<mosaic_0001>
module attributes {stable_mosaic.version = 11 : i64} {
  func.func @_matmul_bias_relu_kernel(%arg0: i32, %arg1: memref<512x4xf32, #tpu.memory_space<vmem>>, %arg2: memref<4x128xf32, #tpu.memory_space<vmem>>, %arg3: memref<1x128xf32, #tpu.memory_space<vmem>>, %arg4: memref<512x128xf32, #tpu.memory_space<vmem>>) attributes {dimension_semantics = [#tpu.dimension_semantics<parallel>], iteration_bounds = array<i64: 1>, scalar_prefetch = 0 : i64, scratch_operands = 0 : i64, tpu.core_type = #tpu.core_type<tc>, window_params = [{transform_indices = @transform_0, window_bounds = array<i64: 512, 4>}, {pipeline_mode = #tpu.pipeline_mode<synchronous>, transform_indices = @transform_1, window_bounds = array<i64: 4, 128>}, {pipeline_mode = #tpu.pipeline_mode<synchronous>, transform_indices = @transform_2, window_bounds = array<i64: 1, 128>}, {transform_indices = @transform_3, window_bounds = array<i64: 512, 128>}]} {
    %c0 = arith.constant 0 : index
    %c0_0 = arith.constant 0 : index
    %0 = vector.load %arg1[%c0, %c0_0] : memref<512x4xf32, #tpu.memory_space<vmem>>, vector<512x4xf32>
    %c0_1 = arith.constant 0 : index
    %c0_2 = arith.constant 0 : index
    %1 = vector.load %arg2[%c0_1, %c0_2] : memref<4x128xf32, #tpu.memory_space<vmem>>, vector<4x128xf32>
    %cst = arith.constant dense<0.000000e+00> : vector<512x128xf32>
    %2 = tpu.matmul %0, %1, %cst {dimension_numbers = #tpu.dot_dimension_numbers<[1], [0], [0], [1], [0, 0, 1, 1], [], []>} : vector<512x4xf32>, vector<4x128xf32>, vector<512x128xf32> -> vector<512x128xf32>
    %c0_3 = arith.constant 0 : index
    %c0_4 = arith.constant 0 : index
    %3 = vector.load %arg3[%c0_3, %c0_4] : memref<1x128xf32, #tpu.memory_space<vmem>>, vector<1x128xf32>
    %4 = vector.broadcast %3 : vector<1x128xf32> to vector<512x128xf32>
    %5 = arith.addf %2, %4 : vector<512x128xf32>
    %cst_5 = arith.constant 0.000000e+00 : f32
    %6 = vector.broadcast %cst_5 : f32 to vector<512x128xf32>
    %7 = arith.maximumf %5, %6 : vector<512x128xf32>
    %c0_6 = arith.constant 0 : index
    %c0_7 = arith.constant 0 : index
    %8 = vector.load %arg4[%c0_6, %c0_7] : memref<512x128xf32, #tpu.memory_space<vmem>>, vector<512x128xf32>
    tpu.vector_store %arg4[%c0_6, %c0_7], %7 {strides = array<i32>} : memref<512x128xf32, #tpu.memory_space<vmem>>, vector<512x128xf32>,
    return
  }
  func.func @transform_0(%arg0: i32) -> (i32, i32) {
    %c0_i32 = arith.constant 0 : i32
    %c0_i32_0 = arith.constant 0 : i32
    return %arg0, %c0_i32 : i32, i32
  }
  func.func @transform_1(%arg0: i32) -> (i32, i32) {
    %c0_i32 = arith.constant 0 : i32
    %c0_i32_0 = arith.constant 0 : i32
    %c0_i32_1 = arith.constant 0 : i32
    return %c0_i32, %c0_i32_0 : i32, i32
  }
  func.func @transform_2(%arg0: i32) -> (i32, i32) {
    %c0_i32 = arith.constant 0 : i32
    %c0_i32_0 = arith.constant 0 : i32
    %c0_i32_1 = arith.constant 0 : i32
    return %c0_i32, %c0_i32_0 : i32, i32
  }
  func.func @transform_3(%arg0: i32) -> (i32, i32) {
    %c0_i32 = arith.constant 0 : i32
    %c0_i32_0 = arith.constant 0 : i32
    return %arg0, %c0_i32 : i32, i32
  }
}

module attributes {stable_mosaic.version = 11 : i64} {
  func.func @_conv3x3_bias_relu_kernel(%arg0: i32, %arg1: memref<1x18x18x4xf32, #tpu.memory_space<vmem>>, %arg2: memref<9x4x128xf32, #tpu.memory_space<vmem>>, %arg3: memref<1x128xf32, #tpu.memory_space<vmem>>, %arg4: memref<1x16x16x128xf32, #tpu.memory_space<vmem>>) attributes {dimension_semantics = [#tpu.dimension_semantics<parallel>], iteration_bounds = array<i64: 2>, scalar_prefetch = 0 : i64, scratch_operands = 0 : i64, tpu.core_type = #tpu.core_type<tc>, window_params = [{transform_indices = @transform_0, window_bounds = array<i64: 1, 18, 18, 4>}, {pipeline_mode = #tpu.pipeline_mode<synchronous>, transform_indices = @transform_1, window_bounds = array<i64: 9, 4, 128>}, {pipeline_mode = #tpu.pipeline_mode<synchronous>, transform_indices = @transform_2, window_bounds = array<i64: 1, 128>}, {transform_indices = @transform_3, window_bounds = array<i64: 1, 16, 16, 128>}]} {
    %c0 = arith.constant 0 : index
    %c0_0 = arith.constant 0 : index
    %c0_1 = arith.constant 0 : index
    %c0_2 = arith.constant 0 : index
    %0 = vector.load %arg1[%c0, %c0_0, %c0_1, %c0_2] : memref<1x18x18x4xf32, #tpu.memory_space<vmem>>, vector<1x16x16x4xf32>
    %1 = vector.shape_cast %0 : vector<1x16x16x4xf32> to vector<16x16x4xf32>
    %2 = vector.shape_cast %1 : vector<16x16x4xf32> to vector<256x4xf32>
    %c0_3 = arith.constant 0 : index
    %c0_4 = arith.constant 0 : index
    %c0_5 = arith.constant 0 : index
    %3 = vector.load %arg2[%c0_3, %c0_4, %c0_5] : memref<9x4x128xf32, #tpu.memory_space<vmem>>, vector<1x4x128xf32>
    %4 = vector.shape_cast %3 : vector<1x4x128xf32> to vector<4x128xf32>
    %cst = arith.constant dense<0.000000e+00> : vector<256x128xf32>
    %5 = tpu.matmul %2, %4, %cst {dimension_numbers = #tpu.dot_dimension_numbers<[1], [0], [0], [1], [0, 0, 1, 1], [], []>} : vector<256x4xf32>, vector<4x128xf32>, vector<256x128xf32> -> vector<256x128xf32>
    %c0_6 = arith.constant 0 : index
    %c0_7 = arith.constant 0 : index
    %c1 = arith.constant 1 : index
    %c0_8 = arith.constant 0 : index
    %6 = vector.load %arg1[%c0_6, %c0_7, %c1, %c0_8] : memref<1x18x18x4xf32, #tpu.memory_space<vmem>>, vector<1x16x16x4xf32>
    %7 = vector.shape_cast %6 : vector<1x16x16x4xf32> to vector<16x16x4xf32>
    %8 = vector.shape_cast %7 : vector<16x16x4xf32> to vector<256x4xf32>
    %c1_9 = arith.constant 1 : index
    %c0_10 = arith.constant 0 : index
    %c0_11 = arith.constant 0 : index
    %9 = vector.load %arg2[%c1_9, %c0_10, %c0_11] : memref<9x4x128xf32, #tpu.memory_space<vmem>>, vector<1x4x128xf32>
    %10 = vector.shape_cast %9 : vector<1x4x128xf32> to vector<4x128xf32>
    %cst_12 = arith.constant dense<0.000000e+00> : vector<256x128xf32>
    %11 = tpu.matmul %8, %10, %cst_12 {dimension_numbers = #tpu.dot_dimension_numbers<[1], [0], [0], [1], [0, 0, 1, 1], [], []>} : vector<256x4xf32>, vector<4x128xf32>, vector<256x128xf32> -> vector<256x128xf32>
    %12 = arith.addf %5, %11 : vector<256x128xf32>
    %c0_13 = arith.constant 0 : index
    %c0_14 = arith.constant 0 : index
    %c2 = arith.constant 2 : index
    %c0_15 = arith.constant 0 : index
    %13 = vector.load %arg1[%c0_13, %c0_14, %c2, %c0_15] : memref<1x18x18x4xf32, #tpu.memory_space<vmem>>, vector<1x16x16x4xf32>
    %14 = vector.shape_cast %13 : vector<1x16x16x4xf32> to vector<16x16x4xf32>
    %15 = vector.shape_cast %14 : vector<16x16x4xf32> to vector<256x4xf32>
    %c2_16 = arith.constant 2 : index
    %c0_17 = arith.constant 0 : index
    %c0_18 = arith.constant 0 : index
    %16 = vector.load %arg2[%c2_16, %c0_17, %c0_18] : memref<9x4x128xf32, #tpu.memory_space<vmem>>, vector<1x4x128xf32>
    %17 = vector.shape_cast %16 : vector<1x4x128xf32> to vector<4x128xf32>
    %cst_19 = arith.constant dense<0.000000e+00> : vector<256x128xf32>
    %18 = tpu.matmul %15, %17, %cst_19 {dimension_numbers = #tpu.dot_dimension_numbers<[1], [0], [0], [1], [0, 0, 1, 1], [], []>} : vector<256x4xf32>, vector<4x128xf32>, vector<256x128xf32> -> vector<256x128xf32>
    %19 = arith.addf %12, %18 : vector<256x128xf32>
    %c0_20 = arith.constant 0 : index
    %c1_21 = arith.constant 1 : index
    %c0_22 = arith.constant 0 : index
    %c0_23 = arith.constant 0 : index
    %20 = vector.load %arg1[%c0_20, %c1_21, %c0_22, %c0_23] : memref<1x18x18x4xf32, #tpu.memory_space<vmem>>, vector<1x16x16x4xf32>
    %21 = vector.shape_cast %20 : vector<1x16x16x4xf32> to vector<16x16x4xf32>
    %22 = vector.shape_cast %21 : vector<16x16x4xf32> to vector<256x4xf32>
    %c3 = arith.constant 3 : index
    %c0_24 = arith.constant 0 : index
    %c0_25 = arith.constant 0 : index
    %23 = vector.load %arg2[%c3, %c0_24, %c0_25] : memref<9x4x128xf32, #tpu.memory_space<vmem>>, vector<1x4x128xf32>
    %24 = vector.shape_cast %23 : vector<1x4x128xf32> to vector<4x128xf32>
    %cst_26 = arith.constant dense<0.000000e+00> : vector<256x128xf32>
    %25 = tpu.matmul %22, %24, %cst_26 {dimension_numbers = #tpu.dot_dimension_numbers<[1], [0], [0], [1], [0, 0, 1, 1], [], []>} : vector<256x4xf32>, vector<4x128xf32>, vector<256x128xf32> -> vector<256x128xf32>
    %26 = arith.addf %19, %25 : vector<256x128xf32>
    %c0_27 = arith.constant 0 : index
    %c1_28 = arith.constant 1 : index
    %c1_29 = arith.constant 1 : index
    %c0_30 = arith.constant 0 : index
    %27 = vector.load %arg1[%c0_27, %c1_28, %c1_29, %c0_30] : memref<1x18x18x4xf32, #tpu.memory_space<vmem>>, vector<1x16x16x4xf32>
    %28 = vector.shape_cast %27 : vector<1x16x16x4xf32> to vector<16x16x4xf32>
    %29 = vector.shape_cast %28 : vector<16x16x4xf32> to vector<256x4xf32>
    %c4 = arith.constant 4 : index
    %c0_31 = arith.constant 0 : index
    %c0_32 = arith.constant 0 : index
    %30 = vector.load %arg2[%c4, %c0_31, %c0_32] : memref<9x4x128xf32, #tpu.memory_space<vmem>>, vector<1x4x128xf32>
    %31 = vector.shape_cast %30 : vector<1x4x128xf32> to vector<4x128xf32>
    %cst_33 = arith.constant dense<0.000000e+00> : vector<256x128xf32>
    %32 = tpu.matmul %29, %31, %cst_33 {dimension_numbers = #tpu.dot_dimension_numbers<[1], [0], [0], [1], [0, 0, 1, 1], [], []>} : vector<256x4xf32>, vector<4x128xf32>, vector<256x128xf32> -> vector<256x128xf32>
    %33 = arith.addf %26, %32 : vector<256x128xf32>
    %c0_34 = arith.constant 0 : index
    %c1_35 = arith.constant 1 : index
    %c2_36 = arith.constant 2 : index
    %c0_37 = arith.constant 0 : index
    %34 = vector.load %arg1[%c0_34, %c1_35, %c2_36, %c0_37] : memref<1x18x18x4xf32, #tpu.memory_space<vmem>>, vector<1x16x16x4xf32>
    %35 = vector.shape_cast %34 : vector<1x16x16x4xf32> to vector<16x16x4xf32>
    %36 = vector.shape_cast %35 : vector<16x16x4xf32> to vector<256x4xf32>
    %c5 = arith.constant 5 : index
    %c0_38 = arith.constant 0 : index
    %c0_39 = arith.constant 0 : index
    %37 = vector.load %arg2[%c5, %c0_38, %c0_39] : memref<9x4x128xf32, #tpu.memory_space<vmem>>, vector<1x4x128xf32>
    %38 = vector.shape_cast %37 : vector<1x4x128xf32> to vector<4x128xf32>
    %cst_40 = arith.constant dense<0.000000e+00> : vector<256x128xf32>
    %39 = tpu.matmul %36, %38, %cst_40 {dimension_numbers = #tpu.dot_dimension_numbers<[1], [0], [0], [1], [0, 0, 1, 1], [], []>} : vector<256x4xf32>, vector<4x128xf32>, vector<256x128xf32> -> vector<256x128xf32>
    %40 = arith.addf %33, %39 : vector<256x128xf32>
    %c0_41 = arith.constant 0 : index
    %c2_42 = arith.constant 2 : index
    %c0_43 = arith.constant 0 : index
    %c0_44 = arith.constant 0 : index
    %41 = vector.load %arg1[%c0_41, %c2_42, %c0_43, %c0_44] : memref<1x18x18x4xf32, #tpu.memory_space<vmem>>, vector<1x16x16x4xf32>
    %42 = vector.shape_cast %41 : vector<1x16x16x4xf32> to vector<16x16x4xf32>
    %43 = vector.shape_cast %42 : vector<16x16x4xf32> to vector<256x4xf32>
    %c6 = arith.constant 6 : index
    %c0_45 = arith.constant 0 : index
    %c0_46 = arith.constant 0 : index
    %44 = vector.load %arg2[%c6, %c0_45, %c0_46] : memref<9x4x128xf32, #tpu.memory_space<vmem>>, vector<1x4x128xf32>
    %45 = vector.shape_cast %44 : vector<1x4x128xf32> to vector<4x128xf32>
    %cst_47 = arith.constant dense<0.000000e+00> : vector<256x128xf32>
    %46 = tpu.matmul %43, %45, %cst_47 {dimension_numbers = #tpu.dot_dimension_numbers<[1], [0], [0], [1], [0, 0, 1, 1], [], []>} : vector<256x4xf32>, vector<4x128xf32>, vector<256x128xf32> -> vector<256x128xf32>
    %47 = arith.addf %40, %46 : vector<256x128xf32>
    %c0_48 = arith.constant 0 : index
    %c2_49 = arith.constant 2 : index
    %c1_50 = arith.constant 1 : index
    %c0_51 = arith.constant 0 : index
    %48 = vector.load %arg1[%c0_48, %c2_49, %c1_50, %c0_51] : memref<1x18x18x4xf32, #tpu.memory_space<vmem>>, vector<1x16x16x4xf32>
    %49 = vector.shape_cast %48 : vector<1x16x16x4xf32> to vector<16x16x4xf32>
    %50 = vector.shape_cast %49 : vector<16x16x4xf32> to vector<256x4xf32>
    %c7 = arith.constant 7 : index
    %c0_52 = arith.constant 0 : index
    %c0_53 = arith.constant 0 : index
    %51 = vector.load %arg2[%c7, %c0_52, %c0_53] : memref<9x4x128xf32, #tpu.memory_space<vmem>>, vector<1x4x128xf32>
    %52 = vector.shape_cast %51 : vector<1x4x128xf32> to vector<4x128xf32>
    %cst_54 = arith.constant dense<0.000000e+00> : vector<256x128xf32>
    %53 = tpu.matmul %50, %52, %cst_54 {dimension_numbers = #tpu.dot_dimension_numbers<[1], [0], [0], [1], [0, 0, 1, 1], [], []>} : vector<256x4xf32>, vector<4x128xf32>, vector<256x128xf32> -> vector<256x128xf32>
    %54 = arith.addf %47, %53 : vector<256x128xf32>
    %c0_55 = arith.constant 0 : index
    %c2_56 = arith.constant 2 : index
    %c2_57 = arith.constant 2 : index
    %c0_58 = arith.constant 0 : index
    %55 = vector.load %arg1[%c0_55, %c2_56, %c2_57, %c0_58] : memref<1x18x18x4xf32, #tpu.memory_space<vmem>>, vector<1x16x16x4xf32>
    %56 = vector.shape_cast %55 : vector<1x16x16x4xf32> to vector<16x16x4xf32>
    %57 = vector.shape_cast %56 : vector<16x16x4xf32> to vector<256x4xf32>
    %c8 = arith.constant 8 : index
    %c0_59 = arith.constant 0 : index
    %c0_60 = arith.constant 0 : index
    %58 = vector.load %arg2[%c8, %c0_59, %c0_60] : memref<9x4x128xf32, #tpu.memory_space<vmem>>, vector<1x4x128xf32>
    %59 = vector.shape_cast %58 : vector<1x4x128xf32> to vector<4x128xf32>
    %cst_61 = arith.constant dense<0.000000e+00> : vector<256x128xf32>
    %60 = tpu.matmul %57, %59, %cst_61 {dimension_numbers = #tpu.dot_dimension_numbers<[1], [0], [0], [1], [0, 0, 1, 1], [], []>} : vector<256x4xf32>, vector<4x128xf32>, vector<256x128xf32> -> vector<256x128xf32>
    %61 = arith.addf %54, %60 : vector<256x128xf32>
    %c0_62 = arith.constant 0 : index
    %c0_63 = arith.constant 0 : index
    %62 = vector.load %arg3[%c0_62, %c0_63] : memref<1x128xf32, #tpu.memory_space<vmem>>, vector<1x128xf32>
    %63 = vector.broadcast %62 : vector<1x128xf32> to vector<256x128xf32>
    %64 = arith.addf %61, %63 : vector<256x128xf32>
    %cst_64 = arith.constant 0.000000e+00 : f32
    %65 = vector.broadcast %cst_64 : f32 to vector<256x128xf32>
    %66 = arith.maximumf %64, %65 : vector<256x128xf32>
    %67 = vector.shape_cast %66 : vector<256x128xf32> to vector<16x16x128xf32>
    %c0_65 = arith.constant 0 : index
    %c0_66 = arith.constant 0 : index
    %c0_67 = arith.constant 0 : index
    %c0_68 = arith.constant 0 : index
    %68 = vector.load %arg4[%c0_65, %c0_66, %c0_67, %c0_68] : memref<1x16x16x128xf32, #tpu.memory_space<vmem>>, vector<1x16x16x128xf32>
    %69 = vector.shape_cast %68 : vector<1x16x16x128xf32> to vector<16x16x128xf32>
    %70 = vector.shape_cast %67 : vector<16x16x128xf32> to vector<1x16x16x128xf32>
    tpu.vector_store %arg4[%c0_65, %c0_66, %c0_67, %c0_68], %70 {strides = array<i32>} : memref<1x16x16x128xf32, #tpu.memory_space<vmem>>, vector<1x16x16x128xf32>,
    return
  }
  func.func @transform_0(%arg0: i32) -> (i32, i32, i32, i32) {
    %c0_i32 = arith.constant 0 : i32
    %c0_i32_0 = arith.constant 0 : i32
    %c0_i32_1 = arith.constant 0 : i32
    %c0_i32_2 = arith.constant 0 : i32
    return %arg0, %c0_i32, %c0_i32_0, %c0_i32_1 : i32, i32, i32, i32
  }
  func.func @transform_1(%arg0: i32) -> (i32, i32, i32) {
    %c0_i32 = arith.constant 0 : i32
    %c0_i32_0 = arith.constant 0 : i32
    %c0_i32_1 = arith.constant 0 : i32
    %c0_i32_2 = arith.constant 0 : i32
    return %c0_i32, %c0_i32_0, %c0_i32_1 : i32, i32, i32
  }
  func.func @transform_2(%arg0: i32) -> (i32, i32) {
    %c0_i32 = arith.constant 0 : i32
    %c0_i32_0 = arith.constant 0 : i32
    %c0_i32_1 = arith.constant 0 : i32
    return %c0_i32, %c0_i32_0 : i32, i32
  }
  func.func @transform_3(%arg0: i32) -> (i32, i32, i32, i32) {
    %c0_i32 = arith.constant 0 : i32
    %c0_i32_0 = arith.constant 0 : i32
    %c0_i32_1 = arith.constant 0 : i32
    %c0_i32_2 = arith.constant 0 : i32
    return %arg0, %c0_i32, %c0_i32_0, %c0_i32_1 : i32, i32, i32, i32
  }
}

module attributes {stable_mosaic.version = 11 : i64} {
  func.func @_conv3x3_bias_relu_kernel(%arg0: i32, %arg1: memref<1x18x18x8xf32, #tpu.memory_space<vmem>>, %arg2: memref<9x8x128xf32, #tpu.memory_space<vmem>>, %arg3: memref<1x128xf32, #tpu.memory_space<vmem>>, %arg4: memref<1x16x16x128xf32, #tpu.memory_space<vmem>>) attributes {dimension_semantics = [#tpu.dimension_semantics<parallel>], iteration_bounds = array<i64: 2>, scalar_prefetch = 0 : i64, scratch_operands = 0 : i64, tpu.core_type = #tpu.core_type<tc>, window_params = [{transform_indices = @transform_0, window_bounds = array<i64: 1, 18, 18, 8>}, {pipeline_mode = #tpu.pipeline_mode<synchronous>, transform_indices = @transform_1, window_bounds = array<i64: 9, 8, 128>}, {pipeline_mode = #tpu.pipeline_mode<synchronous>, transform_indices = @transform_2, window_bounds = array<i64: 1, 128>}, {transform_indices = @transform_3, window_bounds = array<i64: 1, 16, 16, 128>}]} {
    %c0 = arith.constant 0 : index
    %c0_0 = arith.constant 0 : index
    %c0_1 = arith.constant 0 : index
    %c0_2 = arith.constant 0 : index
    %0 = vector.load %arg1[%c0, %c0_0, %c0_1, %c0_2] : memref<1x18x18x8xf32, #tpu.memory_space<vmem>>, vector<1x16x16x8xf32>
    %1 = vector.shape_cast %0 : vector<1x16x16x8xf32> to vector<16x16x8xf32>
    %2 = vector.shape_cast %1 : vector<16x16x8xf32> to vector<256x8xf32>
    %c0_3 = arith.constant 0 : index
    %c0_4 = arith.constant 0 : index
    %c0_5 = arith.constant 0 : index
    %3 = vector.load %arg2[%c0_3, %c0_4, %c0_5] : memref<9x8x128xf32, #tpu.memory_space<vmem>>, vector<1x8x128xf32>
    %4 = vector.shape_cast %3 : vector<1x8x128xf32> to vector<8x128xf32>
    %cst = arith.constant dense<0.000000e+00> : vector<256x128xf32>
    %5 = tpu.matmul %2, %4, %cst {dimension_numbers = #tpu.dot_dimension_numbers<[1], [0], [0], [1], [0, 0, 1, 1], [], []>} : vector<256x8xf32>, vector<8x128xf32>, vector<256x128xf32> -> vector<256x128xf32>
    %c0_6 = arith.constant 0 : index
    %c0_7 = arith.constant 0 : index
    %c1 = arith.constant 1 : index
    %c0_8 = arith.constant 0 : index
    %6 = vector.load %arg1[%c0_6, %c0_7, %c1, %c0_8] : memref<1x18x18x8xf32, #tpu.memory_space<vmem>>, vector<1x16x16x8xf32>
    %7 = vector.shape_cast %6 : vector<1x16x16x8xf32> to vector<16x16x8xf32>
    %8 = vector.shape_cast %7 : vector<16x16x8xf32> to vector<256x8xf32>
    %c1_9 = arith.constant 1 : index
    %c0_10 = arith.constant 0 : index
    %c0_11 = arith.constant 0 : index
    %9 = vector.load %arg2[%c1_9, %c0_10, %c0_11] : memref<9x8x128xf32, #tpu.memory_space<vmem>>, vector<1x8x128xf32>
    %10 = vector.shape_cast %9 : vector<1x8x128xf32> to vector<8x128xf32>
    %cst_12 = arith.constant dense<0.000000e+00> : vector<256x128xf32>
    %11 = tpu.matmul %8, %10, %cst_12 {dimension_numbers = #tpu.dot_dimension_numbers<[1], [0], [0], [1], [0, 0, 1, 1], [], []>} : vector<256x8xf32>, vector<8x128xf32>, vector<256x128xf32> -> vector<256x128xf32>
    %12 = arith.addf %5, %11 : vector<256x128xf32>
    %c0_13 = arith.constant 0 : index
    %c0_14 = arith.constant 0 : index
    %c2 = arith.constant 2 : index
    %c0_15 = arith.constant 0 : index
    %13 = vector.load %arg1[%c0_13, %c0_14, %c2, %c0_15] : memref<1x18x18x8xf32, #tpu.memory_space<vmem>>, vector<1x16x16x8xf32>
    %14 = vector.shape_cast %13 : vector<1x16x16x8xf32> to vector<16x16x8xf32>
    %15 = vector.shape_cast %14 : vector<16x16x8xf32> to vector<256x8xf32>
    %c2_16 = arith.constant 2 : index
    %c0_17 = arith.constant 0 : index
    %c0_18 = arith.constant 0 : index
    %16 = vector.load %arg2[%c2_16, %c0_17, %c0_18] : memref<9x8x128xf32, #tpu.memory_space<vmem>>, vector<1x8x128xf32>
    %17 = vector.shape_cast %16 : vector<1x8x128xf32> to vector<8x128xf32>
    %cst_19 = arith.constant dense<0.000000e+00> : vector<256x128xf32>
    %18 = tpu.matmul %15, %17, %cst_19 {dimension_numbers = #tpu.dot_dimension_numbers<[1], [0], [0], [1], [0, 0, 1, 1], [], []>} : vector<256x8xf32>, vector<8x128xf32>, vector<256x128xf32> -> vector<256x128xf32>
    %19 = arith.addf %12, %18 : vector<256x128xf32>
    %c0_20 = arith.constant 0 : index
    %c1_21 = arith.constant 1 : index
    %c0_22 = arith.constant 0 : index
    %c0_23 = arith.constant 0 : index
    %20 = vector.load %arg1[%c0_20, %c1_21, %c0_22, %c0_23] : memref<1x18x18x8xf32, #tpu.memory_space<vmem>>, vector<1x16x16x8xf32>
    %21 = vector.shape_cast %20 : vector<1x16x16x8xf32> to vector<16x16x8xf32>
    %22 = vector.shape_cast %21 : vector<16x16x8xf32> to vector<256x8xf32>
    %c3 = arith.constant 3 : index
    %c0_24 = arith.constant 0 : index
    %c0_25 = arith.constant 0 : index
    %23 = vector.load %arg2[%c3, %c0_24, %c0_25] : memref<9x8x128xf32, #tpu.memory_space<vmem>>, vector<1x8x128xf32>
    %24 = vector.shape_cast %23 : vector<1x8x128xf32> to vector<8x128xf32>
    %cst_26 = arith.constant dense<0.000000e+00> : vector<256x128xf32>
    %25 = tpu.matmul %22, %24, %cst_26 {dimension_numbers = #tpu.dot_dimension_numbers<[1], [0], [0], [1], [0, 0, 1, 1], [], []>} : vector<256x8xf32>, vector<8x128xf32>, vector<256x128xf32> -> vector<256x128xf32>
    %26 = arith.addf %19, %25 : vector<256x128xf32>
    %c0_27 = arith.constant 0 : index
    %c1_28 = arith.constant 1 : index
    %c1_29 = arith.constant 1 : index
    %c0_30 = arith.constant 0 : index
    %27 = vector.load %arg1[%c0_27, %c1_28, %c1_29, %c0_30] : memref<1x18x18x8xf32, #tpu.memory_space<vmem>>, vector<1x16x16x8xf32>
    %28 = vector.shape_cast %27 : vector<1x16x16x8xf32> to vector<16x16x8xf32>
    %29 = vector.shape_cast %28 : vector<16x16x8xf32> to vector<256x8xf32>
    %c4 = arith.constant 4 : index
    %c0_31 = arith.constant 0 : index
    %c0_32 = arith.constant 0 : index
    %30 = vector.load %arg2[%c4, %c0_31, %c0_32] : memref<9x8x128xf32, #tpu.memory_space<vmem>>, vector<1x8x128xf32>
    %31 = vector.shape_cast %30 : vector<1x8x128xf32> to vector<8x128xf32>
    %cst_33 = arith.constant dense<0.000000e+00> : vector<256x128xf32>
    %32 = tpu.matmul %29, %31, %cst_33 {dimension_numbers = #tpu.dot_dimension_numbers<[1], [0], [0], [1], [0, 0, 1, 1], [], []>} : vector<256x8xf32>, vector<8x128xf32>, vector<256x128xf32> -> vector<256x128xf32>
    %33 = arith.addf %26, %32 : vector<256x128xf32>
    %c0_34 = arith.constant 0 : index
    %c1_35 = arith.constant 1 : index
    %c2_36 = arith.constant 2 : index
    %c0_37 = arith.constant 0 : index
    %34 = vector.load %arg1[%c0_34, %c1_35, %c2_36, %c0_37] : memref<1x18x18x8xf32, #tpu.memory_space<vmem>>, vector<1x16x16x8xf32>
    %35 = vector.shape_cast %34 : vector<1x16x16x8xf32> to vector<16x16x8xf32>
    %36 = vector.shape_cast %35 : vector<16x16x8xf32> to vector<256x8xf32>
    %c5 = arith.constant 5 : index
    %c0_38 = arith.constant 0 : index
    %c0_39 = arith.constant 0 : index
    %37 = vector.load %arg2[%c5, %c0_38, %c0_39] : memref<9x8x128xf32, #tpu.memory_space<vmem>>, vector<1x8x128xf32>
    %38 = vector.shape_cast %37 : vector<1x8x128xf32> to vector<8x128xf32>
    %cst_40 = arith.constant dense<0.000000e+00> : vector<256x128xf32>
    %39 = tpu.matmul %36, %38, %cst_40 {dimension_numbers = #tpu.dot_dimension_numbers<[1], [0], [0], [1], [0, 0, 1, 1], [], []>} : vector<256x8xf32>, vector<8x128xf32>, vector<256x128xf32> -> vector<256x128xf32>
    %40 = arith.addf %33, %39 : vector<256x128xf32>
    %c0_41 = arith.constant 0 : index
    %c2_42 = arith.constant 2 : index
    %c0_43 = arith.constant 0 : index
    %c0_44 = arith.constant 0 : index
    %41 = vector.load %arg1[%c0_41, %c2_42, %c0_43, %c0_44] : memref<1x18x18x8xf32, #tpu.memory_space<vmem>>, vector<1x16x16x8xf32>
    %42 = vector.shape_cast %41 : vector<1x16x16x8xf32> to vector<16x16x8xf32>
    %43 = vector.shape_cast %42 : vector<16x16x8xf32> to vector<256x8xf32>
    %c6 = arith.constant 6 : index
    %c0_45 = arith.constant 0 : index
    %c0_46 = arith.constant 0 : index
    %44 = vector.load %arg2[%c6, %c0_45, %c0_46] : memref<9x8x128xf32, #tpu.memory_space<vmem>>, vector<1x8x128xf32>
    %45 = vector.shape_cast %44 : vector<1x8x128xf32> to vector<8x128xf32>
    %cst_47 = arith.constant dense<0.000000e+00> : vector<256x128xf32>
    %46 = tpu.matmul %43, %45, %cst_47 {dimension_numbers = #tpu.dot_dimension_numbers<[1], [0], [0], [1], [0, 0, 1, 1], [], []>} : vector<256x8xf32>, vector<8x128xf32>, vector<256x128xf32> -> vector<256x128xf32>
    %47 = arith.addf %40, %46 : vector<256x128xf32>
    %c0_48 = arith.constant 0 : index
    %c2_49 = arith.constant 2 : index
    %c1_50 = arith.constant 1 : index
    %c0_51 = arith.constant 0 : index
    %48 = vector.load %arg1[%c0_48, %c2_49, %c1_50, %c0_51] : memref<1x18x18x8xf32, #tpu.memory_space<vmem>>, vector<1x16x16x8xf32>
    %49 = vector.shape_cast %48 : vector<1x16x16x8xf32> to vector<16x16x8xf32>
    %50 = vector.shape_cast %49 : vector<16x16x8xf32> to vector<256x8xf32>
    %c7 = arith.constant 7 : index
    %c0_52 = arith.constant 0 : index
    %c0_53 = arith.constant 0 : index
    %51 = vector.load %arg2[%c7, %c0_52, %c0_53] : memref<9x8x128xf32, #tpu.memory_space<vmem>>, vector<1x8x128xf32>
    %52 = vector.shape_cast %51 : vector<1x8x128xf32> to vector<8x128xf32>
    %cst_54 = arith.constant dense<0.000000e+00> : vector<256x128xf32>
    %53 = tpu.matmul %50, %52, %cst_54 {dimension_numbers = #tpu.dot_dimension_numbers<[1], [0], [0], [1], [0, 0, 1, 1], [], []>} : vector<256x8xf32>, vector<8x128xf32>, vector<256x128xf32> -> vector<256x128xf32>
    %54 = arith.addf %47, %53 : vector<256x128xf32>
    %c0_55 = arith.constant 0 : index
    %c2_56 = arith.constant 2 : index
    %c2_57 = arith.constant 2 : index
    %c0_58 = arith.constant 0 : index
    %55 = vector.load %arg1[%c0_55, %c2_56, %c2_57, %c0_58] : memref<1x18x18x8xf32, #tpu.memory_space<vmem>>, vector<1x16x16x8xf32>
    %56 = vector.shape_cast %55 : vector<1x16x16x8xf32> to vector<16x16x8xf32>
    %57 = vector.shape_cast %56 : vector<16x16x8xf32> to vector<256x8xf32>
    %c8 = arith.constant 8 : index
    %c0_59 = arith.constant 0 : index
    %c0_60 = arith.constant 0 : index
    %58 = vector.load %arg2[%c8, %c0_59, %c0_60] : memref<9x8x128xf32, #tpu.memory_space<vmem>>, vector<1x8x128xf32>
    %59 = vector.shape_cast %58 : vector<1x8x128xf32> to vector<8x128xf32>
    %cst_61 = arith.constant dense<0.000000e+00> : vector<256x128xf32>
    %60 = tpu.matmul %57, %59, %cst_61 {dimension_numbers = #tpu.dot_dimension_numbers<[1], [0], [0], [1], [0, 0, 1, 1], [], []>} : vector<256x8xf32>, vector<8x128xf32>, vector<256x128xf32> -> vector<256x128xf32>
    %61 = arith.addf %54, %60 : vector<256x128xf32>
    %c0_62 = arith.constant 0 : index
    %c0_63 = arith.constant 0 : index
    %62 = vector.load %arg3[%c0_62, %c0_63] : memref<1x128xf32, #tpu.memory_space<vmem>>, vector<1x128xf32>
    %63 = vector.broadcast %62 : vector<1x128xf32> to vector<256x128xf32>
    %64 = arith.addf %61, %63 : vector<256x128xf32>
    %cst_64 = arith.constant 0.000000e+00 : f32
    %65 = vector.broadcast %cst_64 : f32 to vector<256x128xf32>
    %66 = arith.maximumf %64, %65 : vector<256x128xf32>
    %67 = vector.shape_cast %66 : vector<256x128xf32> to vector<16x16x128xf32>
    %c0_65 = arith.constant 0 : index
    %c0_66 = arith.constant 0 : index
    %c0_67 = arith.constant 0 : index
    %c0_68 = arith.constant 0 : index
    %68 = vector.load %arg4[%c0_65, %c0_66, %c0_67, %c0_68] : memref<1x16x16x128xf32, #tpu.memory_space<vmem>>, vector<1x16x16x128xf32>
    %69 = vector.shape_cast %68 : vector<1x16x16x128xf32> to vector<16x16x128xf32>
    %70 = vector.shape_cast %67 : vector<16x16x128xf32> to vector<1x16x16x128xf32>
    tpu.vector_store %arg4[%c0_65, %c0_66, %c0_67, %c0_68], %70 {strides = array<i32>} : memref<1x16x16x128xf32, #tpu.memory_space<vmem>>, vector<1x16x16x128xf32>,
    return
  }
  func.func @transform_0(%arg0: i32) -> (i32, i32, i32, i32) {
    %c0_i32 = arith.constant 0 : i32
    %c0_i32_0 = arith.constant 0 : i32
    %c0_i32_1 = arith.constant 0 : i32
    %c0_i32_2 = arith.constant 0 : i32
    return %arg0, %c0_i32, %c0_i32_0, %c0_i32_1 : i32, i32, i32, i32
  }
  func.func @transform_1(%arg0: i32) -> (i32, i32, i32) {
    %c0_i32 = arith.constant 0 : i32
    %c0_i32_0 = arith.constant 0 : i32
    %c0_i32_1 = arith.constant 0 : i32
    %c0_i32_2 = arith.constant 0 : i32
    return %c0_i32, %c0_i32_0, %c0_i32_1 : i32, i32, i32
  }
  func.func @transform_2(%arg0: i32) -> (i32, i32) {
    %c0_i32 = arith.constant 0 : i32
    %c0_i32_0 = arith.constant 0 : i32
    %c0_i32_1 = arith.constant 0 : i32
    return %c0_i32, %c0_i32_0 : i32, i32
  }
  func.func @transform_3(%arg0: i32) -> (i32, i32, i32, i32) {
    %c0_i32 = arith.constant 0 : i32
    %c0_i32_0 = arith.constant 0 : i32
    %c0_i32_1 = arith.constant 0 : i32
    %c0_i32_2 = arith.constant 0 : i32
    return %arg0, %c0_i32, %c0_i32_0, %c0_i32_1 : i32, i32, i32, i32
  }
}

module attributes {stable_mosaic.version = 11 : i64} {
  func.func @_maxpool_conv1x1_kernel(%arg0: i32, %arg1: memref<1x18x18x4xf32, #tpu.memory_space<vmem>>, %arg2: memref<4x128xf32, #tpu.memory_space<vmem>>, %arg3: memref<1x128xf32, #tpu.memory_space<vmem>>, %arg4: memref<1x16x16x128xf32, #tpu.memory_space<vmem>>) attributes {dimension_semantics = [#tpu.dimension_semantics<parallel>], iteration_bounds = array<i64: 2>, scalar_prefetch = 0 : i64, scratch_operands = 0 : i64, tpu.core_type = #tpu.core_type<tc>, window_params = [{transform_indices = @transform_0, window_bounds = array<i64: 1, 18, 18, 4>}, {pipeline_mode = #tpu.pipeline_mode<synchronous>, transform_indices = @transform_1, window_bounds = array<i64: 4, 128>}, {pipeline_mode = #tpu.pipeline_mode<synchronous>, transform_indices = @transform_2, window_bounds = array<i64: 1, 128>}, {transform_indices = @transform_3, window_bounds = array<i64: 1, 16, 16, 128>}]} {
    %c0 = arith.constant 0 : index
    %c0_0 = arith.constant 0 : index
    %c0_1 = arith.constant 0 : index
    %c0_2 = arith.constant 0 : index
    %0 = vector.load %arg1[%c0, %c0_0, %c0_1, %c0_2] : memref<1x18x18x4xf32, #tpu.memory_space<vmem>>, vector<1x18x18x4xf32>
    %1 = vector.shape_cast %0 : vector<1x18x18x4xf32> to vector<18x18x4xf32>
    %2 = vector.extract_strided_slice %1 {offsets = [0, 0, 0], sizes = [16, 18, 4], strides = [1, 1, 1]} : vector<18x18x4xf32> to vector<16x18x4xf32>
    %3 = vector.extract_strided_slice %1 {offsets = [1, 0, 0], sizes = [16, 18, 4], strides = [1, 1, 1]} : vector<18x18x4xf32> to vector<16x18x4xf32>
    %4 = arith.maximumf %2, %3 : vector<16x18x4xf32>
    %5 = vector.extract_strided_slice %1 {offsets = [2, 0, 0], sizes = [16, 18, 4], strides = [1, 1, 1]} : vector<18x18x4xf32> to vector<16x18x4xf32>
    %6 = arith.maximumf %4, %5 : vector<16x18x4xf32>
    %7 = vector.extract_strided_slice %6 {offsets = [0, 0, 0], sizes = [16, 16, 4], strides = [1, 1, 1]} : vector<16x18x4xf32> to vector<16x16x4xf32>
    %8 = vector.extract_strided_slice %6 {offsets = [0, 1, 0], sizes = [16, 16, 4], strides = [1, 1, 1]} : vector<16x18x4xf32> to vector<16x16x4xf32>
    %9 = arith.maximumf %7, %8 : vector<16x16x4xf32>
    %10 = vector.extract_strided_slice %6 {offsets = [0, 2, 0], sizes = [16, 16, 4], strides = [1, 1, 1]} : vector<16x18x4xf32> to vector<16x16x4xf32>
    %11 = arith.maximumf %9, %10 : vector<16x16x4xf32>
    %12 = vector.shape_cast %11 : vector<16x16x4xf32> to vector<256x4xf32>
    %c0_3 = arith.constant 0 : index
    %c0_4 = arith.constant 0 : index
    %13 = vector.load %arg2[%c0_3, %c0_4] : memref<4x128xf32, #tpu.memory_space<vmem>>, vector<4x128xf32>
    %cst = arith.constant dense<0.000000e+00> : vector<256x128xf32>
    %14 = tpu.matmul %12, %13, %cst {dimension_numbers = #tpu.dot_dimension_numbers<[1], [0], [0], [1], [0, 0, 1, 1], [], []>} : vector<256x4xf32>, vector<4x128xf32>, vector<256x128xf32> -> vector<256x128xf32>
    %c0_5 = arith.constant 0 : index
    %c0_6 = arith.constant 0 : index
    %15 = vector.load %arg3[%c0_5, %c0_6] : memref<1x128xf32, #tpu.memory_space<vmem>>, vector<1x128xf32>
    %16 = vector.broadcast %15 : vector<1x128xf32> to vector<256x128xf32>
    %17 = arith.addf %14, %16 : vector<256x128xf32>
    %cst_7 = arith.constant 0.000000e+00 : f32
    %18 = vector.broadcast %cst_7 : f32 to vector<256x128xf32>
    %19 = arith.maximumf %17, %18 : vector<256x128xf32>
    %20 = vector.shape_cast %19 : vector<256x128xf32> to vector<16x16x128xf32>
    %c0_8 = arith.constant 0 : index
    %c0_9 = arith.constant 0 : index
    %c0_10 = arith.constant 0 : index
    %c0_11 = arith.constant 0 : index
    %21 = vector.load %arg4[%c0_8, %c0_9, %c0_10, %c0_11] : memref<1x16x16x128xf32, #tpu.memory_space<vmem>>, vector<1x16x16x128xf32>
    %22 = vector.shape_cast %21 : vector<1x16x16x128xf32> to vector<16x16x128xf32>
    %23 = vector.shape_cast %20 : vector<16x16x128xf32> to vector<1x16x16x128xf32>
    tpu.vector_store %arg4[%c0_8, %c0_9, %c0_10, %c0_11], %23 {strides = array<i32>} : memref<1x16x16x128xf32, #tpu.memory_space<vmem>>, vector<1x16x16x128xf32>,
    return
  }
  func.func @transform_0(%arg0: i32) -> (i32, i32, i32, i32) {
    %c0_i32 = arith.constant 0 : i32
    %c0_i32_0 = arith.constant 0 : i32
    %c0_i32_1 = arith.constant 0 : i32
    %c0_i32_2 = arith.constant 0 : i32
    return %arg0, %c0_i32, %c0_i32_0, %c0_i32_1 : i32, i32, i32, i32
  }
  func.func @transform_1(%arg0: i32) -> (i32, i32) {
    %c0_i32 = arith.constant 0 : i32
    %c0_i32_0 = arith.constant 0 : i32
    %c0_i32_1 = arith.constant 0 : i32
    return %c0_i32, %c0_i32_0 : i32, i32
  }
  func.func @transform_2(%arg0: i32) -> (i32, i32) {
    %c0_i32 = arith.constant 0 : i32
    %c0_i32_0 = arith.constant 0 : i32
    %c0_i32_1 = arith.constant 0 : i32
    return %c0_i32, %c0_i32_0 : i32, i32
  }
  func.func @transform_3(%arg0: i32) -> (i32, i32, i32, i32) {
    %c0_i32 = arith.constant 0 : i32
    %c0_i32_0 = arith.constant 0 : i32
    %c0_i32_1 = arith.constant 0 : i32
    %c0_i32_2 = arith.constant 0 : i32
    return %arg0, %c0_i32, %c0_i32_0, %c0_i32_1 : i32, i32, i32, i32
  }
}

</mosaic_0001>

<llo_original>
// kernel: inception_forward.5
$region0: #{inception_forward.5}
  #allocation0 [shape = 'u32[]', space=smem, size = 0x4, offset = 0x4, fixed_abs, tag = 'smem constant byte address 0x4 - core index']
  #allocation1 [shape = 'u32[144,128]{1,0:T(1,128)}', space=vmem, size = 0x12000, scoped, tag = 'internal scratch']
  %s0 = inlined_call_operand.vmem [shape: f32[512,4], index: 0, kind: input, shape index: {}]
  %s1 = inlined_call_operand.vmem [shape: f32[4,128], index: 1, kind: input, shape index: {}]
  %s2 = inlined_call_operand.vmem [shape: f32[1,128], index: 2, kind: input, shape index: {}]
  %s3 = inlined_call_operand.vmem [shape: f32[512,128], index: 3, kind: output, shape index: {}]
  %s4 = sld [smem:[#allocation0]]
  $region22: #{inception_forward.5} parent=0
    _
  %s6 = ssub.s32 1, %s4
  %s7 = scalar_select 0, %s6, %s4
  // Predicated region
  $region2: #{inception_forward.5} parent=0 // pred_check
    _
  $region3: #{inception_forward.5} parent=0 // pred_check_branch
    %9 = sbr.rel (0) target = $region5
  $region4: #{inception_forward.5} parent=0 // pred_region
    _
  $region5: #{inception_forward.5} parent=0 // pred_fallthru
    _
  // Predicated region
  $region6: #{inception_forward.5} parent=0 // pred_check
    _
  $region7: #{inception_forward.5} parent=0 // pred_check_branch
    %11 = sbr.rel (0) target = $region9
  $region8: #{inception_forward.5} parent=0 // pred_region
    _
  $region9: #{inception_forward.5} parent=0 // pred_fallthru
    _
  // Predicated region
  $region10: #{inception_forward.5} parent=0 // pred_check
    _
  $region11: #{inception_forward.5} parent=0 // pred_check_branch
    %13 = sbr.rel (0) target = $region13
  $region12: #{inception_forward.5} parent=0 // pred_region
    _
  $region13: #{inception_forward.5} parent=0 // pred_fallthru
    _
  %v14 = vld [vmem:[%s0] sm:$0xff]
  %v15 = vld [vmem:[%s0 + $0x8] sm:$0xff]
  %v16 = vld [vmem:[%s0 + $0x10] sm:$0xff]
  %v17 = vld [vmem:[%s0 + $0x18] sm:$0xff]
  %v18 = vld [vmem:[%s0 + $0x20] sm:$0xff]
  %v19 = vld [vmem:[%s0 + $0x28] sm:$0xff]
  %v20 = vld [vmem:[%s0 + $0x30] sm:$0xff]
  %v21 = vld [vmem:[%s0 + $0x38] sm:$0xff]
  %v22 = vld [vmem:[%s0 + $0x40] sm:$0xff]
  %v23 = vld [vmem:[%s0 + $0x48] sm:$0xff]
  %v24 = vld [vmem:[%s0 + $0x50] sm:$0xff]
  %v25 = vld [vmem:[%s0 + $0x58] sm:$0xff]
  %v26 = vld [vmem:[%s0 + $0x60] sm:$0xff]
  %v27 = vld [vmem:[%s0 + $0x68] sm:$0xff]
  %v28 = vld [vmem:[%s0 + $0x70] sm:$0xff]
  %v29 = vld [vmem:[%s0 + $0x78] sm:$0xff]
  %v30 = vld [vmem:[%s0 + $0x80] sm:$0xff]
  %v31 = vld [vmem:[%s0 + $0x88] sm:$0xff]
  %v32 = vld [vmem:[%s0 + $0x90] sm:$0xff]
  %v33 = vld [vmem:[%s0 + $0x98] sm:$0xff]
  %v34 = vld [vmem:[%s0 + $0xa0] sm:$0xff]
  %v35 = vld [vmem:[%s0 + $0xa8] sm:$0xff]
  %v36 = vld [vmem:[%s0 + $0xb0] sm:$0xff]
  %v37 = vld [vmem:[%s0 + $0xb8] sm:$0xff]
  %v38 = vld [vmem:[%s0 + $0xc0] sm:$0xff]
  %v39 = vld [vmem:[%s0 + $0xc8] sm:$0xff]
  %v40 = vld [vmem:[%s0 + $0xd0] sm:$0xff]
  %v41 = vld [vmem:[%s0 + $0xd8] sm:$0xff]
  %v42 = vld [vmem:[%s0 + $0xe0] sm:$0xff]
  %v43 = vld [vmem:[%s0 + $0xe8] sm:$0xff]
  %v44 = vld [vmem:[%s0 + $0xf0] sm:$0xff]
  %v45 = vld [vmem:[%s0 + $0xf8] sm:$0xff]
  %v46 = vld [vmem:[%s0 + $0x100] sm:$0xff]
  %v47 = vld [vmem:[%s0 + $0x108] sm:$0xff]
  %v48 = vld [vmem:[%s0 + $0x110] sm:$0xff]
  %v49 = vld [vmem:[%s0 + $0x118] sm:$0xff]
  %v50 = vld [vmem:[%s0 + $0x120] sm:$0xff]
  %v51 = vld [vmem:[%s0 + $0x128] sm:$0xff]
  %v52 = vld [vmem:[%s0 + $0x130] sm:$0xff]
  %v53 = vld [vmem:[%s0 + $0x138] sm:$0xff]
  %v54 = vld [vmem:[%s0 + $0x140] sm:$0xff]
  %v55 = vld [vmem:[%s0 + $0x148] sm:$0xff]
  %v56 = vld [vmem:[%s0 + $0x150] sm:$0xff]
  %v57 = vld [vmem:[%s0 + $0x158] sm:$0xff]
  %v58 = vld [vmem:[%s0 + $0x160] sm:$0xff]
  %v59 = vld [vmem:[%s0 + $0x168] sm:$0xff]
  %v60 = vld [vmem:[%s0 + $0x170] sm:$0xff]
  %v61 = vld [vmem:[%s0 + $0x178] sm:$0xff]
  %v62 = vld [vmem:[%s0 + $0x180] sm:$0xff]
  %v63 = vld [vmem:[%s0 + $0x188] sm:$0xff]
  %v64 = vld [vmem:[%s0 + $0x190] sm:$0xff]
  %v65 = vld [vmem:[%s0 + $0x198] sm:$0xff]
  %v66 = vld [vmem:[%s0 + $0x1a0] sm:$0xff]
  %v67 = vld [vmem:[%s0 + $0x1a8] sm:$0xff]
  %v68 = vld [vmem:[%s0 + $0x1b0] sm:$0xff]
  %v69 = vld [vmem:[%s0 + $0x1b8] sm:$0xff]
  %v70 = vld [vmem:[%s0 + $0x1c0] sm:$0xff]
  %v71 = vld [vmem:[%s0 + $0x1c8] sm:$0xff]
  %v72 = vld [vmem:[%s0 + $0x1d0] sm:$0xff]
  %v73 = vld [vmem:[%s0 + $0x1d8] sm:$0xff]
  %v74 = vld [vmem:[%s0 + $0x1e0] sm:$0xff]
  %v75 = vld [vmem:[%s0 + $0x1e8] sm:$0xff]
  %v76 = vld [vmem:[%s0 + $0x1f0] sm:$0xff]
  %v77 = vld [vmem:[%s0 + $0x1f8] sm:$0xff]
  %v78 = vld [vmem:[%s1] sm:$0xf]
  %v79 = vld [vmem:[%s2] sm:$0x1]
  %v81 = vlaneseq
  %v82 = vshrl.u32 %v81, 7
  %v83 = vsub.s32 0, %v82
  %v84 = vrot.slane %v79, %v83
  %vm86 = vcmask 31744
  %v88 = vsel %vm86, %v14, 0
  %v91 = vsel %vm86, %v15, 0
  %v94 = vsel %vm86, %v16, 0
  %v97 = vsel %vm86, %v17, 0
  %v100 = vsel %vm86, %v18, 0
  %v103 = vsel %vm86, %v19, 0
  %v106 = vsel %vm86, %v20, 0
  %v109 = vsel %vm86, %v21, 0
  %v112 = vsel %vm86, %v22, 0
  %v115 = vsel %vm86, %v23, 0
  %v118 = vsel %vm86, %v24, 0
  %v121 = vsel %vm86, %v25, 0
  %v124 = vsel %vm86, %v26, 0
  %v127 = vsel %vm86, %v27, 0
  %v130 = vsel %vm86, %v28, 0
  %v133 = vsel %vm86, %v29, 0
  %v136 = vsel %vm86, %v30, 0
  %v139 = vsel %vm86, %v31, 0
  %v142 = vsel %vm86, %v32, 0
  %v145 = vsel %vm86, %v33, 0
  %v148 = vsel %vm86, %v34, 0
  %v151 = vsel %vm86, %v35, 0
  %v154 = vsel %vm86, %v36, 0
  %v157 = vsel %vm86, %v37, 0
  %v160 = vsel %vm86, %v38, 0
  %v163 = vsel %vm86, %v39, 0
  %v166 = vsel %vm86, %v40, 0
  %v169 = vsel %vm86, %v41, 0
  %v172 = vsel %vm86, %v42, 0
  %v175 = vsel %vm86, %v43, 0
  %v178 = vsel %vm86, %v44, 0
  %v181 = vsel %vm86, %v45, 0
  %v184 = vsel %vm86, %v46, 0
  %v187 = vsel %vm86, %v47, 0
  %v190 = vsel %vm86, %v48, 0
  %v193 = vsel %vm86, %v49, 0
  %v196 = vsel %vm86, %v50, 0
  %v199 = vsel %vm86, %v51, 0
  %v202 = vsel %vm86, %v52, 0
  %v205 = vsel %vm86, %v53, 0
  %v208 = vsel %vm86, %v54, 0
  %v211 = vsel %vm86, %v55, 0
  %v214 = vsel %vm86, %v56, 0
  %v217 = vsel %vm86, %v57, 0
  %v220 = vsel %vm86, %v58, 0
  %v223 = vsel %vm86, %v59, 0
  %v226 = vsel %vm86, %v60, 0
  %v229 = vsel %vm86, %v61, 0
  %v232 = vsel %vm86, %v62, 0
  %v235 = vsel %vm86, %v63, 0
  %v238 = vsel %vm86, %v64, 0
  %v241 = vsel %vm86, %v65, 0
  %v244 = vsel %vm86, %v66, 0
  %v247 = vsel %vm86, %v67, 0
  %v250 = vsel %vm86, %v68, 0
  %v253 = vsel %vm86, %v69, 0
  %v256 = vsel %vm86, %v70, 0
  %v259 = vsel %vm86, %v71, 0
  %v262 = vsel %vm86, %v72, 0
  %v265 = vsel %vm86, %v73, 0
  %v268 = vsel %vm86, %v74, 0
  %v271 = vsel %vm86, %v75, 0
  %v274 = vsel %vm86, %v76, 0
  %v277 = vsel %vm86, %v77, 0
  %vm279 = vcmask 1043456
  %v281 = vsel %vm279, %v78, 0
  %283 = vmatprep.subr.mxu0 0.0
  %284 = vmatpush1.msra.mxu0 %v281
  %285 = vmatprep.subr.mxu0 0.0
  %286 = vmatpush1.msra.mxu0 0.0
  %287 = vmatprep.subr.mxu0 0.0
  %288 = vmatpush1.msra.mxu0 0.0
  %289 = vmatprep.subr.mxu0 0.0
  %290 = vmatpush1.msra.mxu0 0.0
  %291 = vmatprep.subr.mxu0 0.0
  %292 = vmatpush1.msra.mxu0 0.0
  %293 = vmatprep.subr.mxu0 0.0
  %294 = vmatpush1.msra.mxu0 0.0
  %295 = vmatprep.subr.mxu0 0.0
  %296 = vmatpush1.msra.mxu0 0.0
  %297 = vmatprep.subr.mxu0 0.0
  %298 = vmatpush1.msra.mxu0 0.0
  %299 = vmatprep.subr.mxu0 0.0
  %300 = vmatpush1.msra.mxu0 0.0
  %301 = vmatprep.subr.mxu0 0.0
  %302 = vmatpush1.msra.mxu0 0.0
  %303 = vmatprep.subr.mxu0 0.0
  %304 = vmatpush1.msra.mxu0 0.0
  %305 = vmatprep.subr.mxu0 0.0
  %306 = vmatpush1.msra.mxu0 0.0
  %307 = vmatprep.subr.mxu0 0.0
  %308 = vmatpush1.msra.mxu0 0.0
  %309 = vmatprep.subr.mxu0 0.0
  %310 = vmatpush1.msra.mxu0 0.0
  %311 = vmatprep.subr.mxu0 0.0
  %312 = vmatpush1.msra.mxu0 0.0
  %313 = vmatprep.subr.mxu0 0.0
  %314 = vmatpush1.msra.mxu0 0.0
  %315 = vmatprep.subr.mxu0 0.0
  %316 = vmatpush1.msra.mxu0 0.0
  %317 = vmatprep.subr.mxu0 0.0
  %318 = vmatpush1.msra.mxu0 0.0
  %319 = vmatprep.subr.mxu0 0.0
  %320 = vmatpush1.msra.mxu0 0.0
  %321 = vmatprep.subr.mxu0 0.0
  %322 = vmatpush1.msra.mxu0 0.0
  %323 = vmatprep.subr.mxu0 0.0
  %324 = vmatpush1.msra.mxu0 0.0
  %325 = vmatprep.subr.mxu0 0.0
  %326 = vmatpush1.msra.mxu0 0.0
  %327 = vmatprep.subr.mxu0 0.0
  %328 = vmatpush1.msra.mxu0 0.0
  %329 = vmatprep.subr.mxu0 0.0
  %330 = vmatpush1.msra.mxu0 0.0
  %331 = vmatprep.subr.mxu0 0.0
  %332 = vmatpush1.msra.mxu0 0.0
  %333 = vmatprep.subr.mxu0 0.0
  %334 = vmatpush1.msra.mxu0 0.0
  %335 = vmatprep.subr.mxu0 0.0
  %336 = vmatpush1.msra.mxu0 0.0
  %337 = vmatprep.subr.mxu0 0.0
  %338 = vmatpush1.msra.mxu0 0.0
  %339 = vmatprep.subr.mxu0 0.0
  %340 = vmatpush1.msra.mxu0 0.0
  %341 = vmatprep.subr.mxu0 0.0
  %342 = vmatpush1.msra.mxu0 0.0
  %343 = vmatprep.subr.mxu0 0.0
  %344 = vmatpush1.msra.mxu0 0.0
  %345 = vmatprep.subr.mxu0 0.0
  %346 = vmatpush1.msra.mxu0 0.0
  %347 = vmatprep.mubr.f32.mxu0 0.0
  %348 = vmatmul.mubr.f32.gmra.mrb[0].mxu0 %v88
  %v349 = vpop.f32.mrb[0].mxu0
  %v350 = vadd.f32 %v84, %v349
  %v351 = vpop.f32.mrb[0].mxu0
  %352 = vmatprep.mubr.f32.mxu0 0.0
  %353 = vmatmul.mubr.f32.gmra.mrb[0].mxu0 %v91
  %v354 = vpop.f32.mrb[0].mxu0
  %v355 = vadd.f32 %v84, %v354
  %v356 = vpop.f32.mrb[0].mxu0
  %357 = vmatprep.mubr.f32.mxu0 0.0
  %358 = vmatmul.mubr.f32.gmra.mrb[0].mxu0 %v94
  %v359 = vpop.f32.mrb[0].mxu0
  %v360 = vadd.f32 %v84, %v359
  %v361 = vpop.f32.mrb[0].mxu0
  %362 = vmatprep.mubr.f32.mxu0 0.0
  %363 = vmatmul.mubr.f32.gmra.mrb[0].mxu0 %v97
  %v364 = vpop.f32.mrb[0].mxu0
  %v365 = vadd.f32 %v84, %v364
  %v366 = vpop.f32.mrb[0].mxu0
  %367 = vmatprep.mubr.f32.mxu0 0.0
  %368 = vmatmul.mubr.f32.gmra.mrb[0].mxu0 %v100
  %v369 = vpop.f32.mrb[0].mxu0
  %v370 = vadd.f32 %v84, %v369
  %v371 = vpop.f32.mrb[0].mxu0
  %372 = vmatprep.mubr.f32.mxu0 0.0
  %373 = vmatmul.mubr.f32.gmra.mrb[0].mxu0 %v103
  %v374 = vpop.f32.mrb[0].mxu0
  %v375 = vadd.f32 %v84, %v374
  %v376 = vpop.f32.mrb[0].mxu0
  %377 = vmatprep.mubr.f32.mxu0 0.0
  %378 = vmatmul.mubr.f32.gmra.mrb[0].mxu0 %v106
  %v379 = vpop.f32.mrb[0].mxu0
  %v380 = vadd.f32 %v84, %v379
  %v381 = vpop.f32.mrb[0].mxu0
  %382 = vmatprep.mubr.f32.mxu0 0.0
  %383 = vmatmul.mubr.f32.gmra.mrb[0].mxu0 %v109
  %v384 = vpop.f32.mrb[0].mxu0
  %v385 = vadd.f32 %v84, %v384
  %v386 = vpop.f32.mrb[0].mxu0
  %387 = vmatprep.mubr.f32.mxu0 0.0
  %388 = vmatmul.mubr.f32.gmra.mrb[0].mxu0 %v112
  %v389 = vpop.f32.mrb[0].mxu0
  %v390 = vadd.f32 %v84, %v389
  %v391 = vpop.f32.mrb[0].mxu0
  %392 = vmatprep.mubr.f32.mxu0 0.0
  %393 = vmatmul.mubr.f32.gmra.mrb[0].mxu0 %v115
  %v394 = vpop.f32.mrb[0].mxu0
  %v395 = vadd.f32 %v84, %v394
  %v396 = vpop.f32.mrb[0].mxu0
  %397 = vmatprep.mubr.f32.mxu0 0.0
  %398 = vmatmul.mubr.f32.gmra.mrb[0].mxu0 %v118
  %v399 = vpop.f32.mrb[0].mxu0
  %v400 = vadd.f32 %v84, %v399
  %v401 = vpop.f32.mrb[0].mxu0
  %402 = vmatprep.mubr.f32.mxu0 0.0
  %403 = vmatmul.mubr.f32.gmra.mrb[0].mxu0 %v121
  %v404 = vpop.f32.mrb[0].mxu0
  %v405 = vadd.f32 %v84, %v404
  %v406 = vpop.f32.mrb[0].mxu0
  %407 = vmatprep.mubr.f32.mxu0 0.0
  %408 = vmatmul.mubr.f32.gmra.mrb[0].mxu0 %v124
  %v409 = vpop.f32.mrb[0].mxu0
  %v410 = vadd.f32 %v84, %v409
  %v411 = vpop.f32.mrb[0].mxu0
  %412 = vmatprep.mubr.f32.mxu0 0.0
  %413 = vmatmul.mubr.f32.gmra.mrb[0].mxu0 %v127
  %v414 = vpop.f32.mrb[0].mxu0
  %v415 = vadd.f32 %v84, %v414
  %v416 = vpop.f32.mrb[0].mxu0
  %417 = vmatprep.mubr.f32.mxu0 0.0
  %418 = vmatmul.mubr.f32.gmra.mrb[0].mxu0 %v130
  %v419 = vpop.f32.mrb[0].mxu0
  %v420 = vadd.f32 %v84, %v419
  %v421 = vpop.f32.mrb[0].mxu0
  %422 = vmatprep.mubr.f32.mxu0 0.0
  %423 = vmatmul.mubr.f32.gmra.mrb[0].mxu0 %v133
  %v424 = vpop.f32.mrb[0].mxu0
  %v425 = vadd.f32 %v84, %v424
  %v426 = vpop.f32.mrb[0].mxu0
  %427 = vmatprep.mubr.f32.mxu0 0.0
  %428 = vmatmul.mubr.f32.gmra.mrb[0].mxu0 %v136
  %v429 = vpop.f32.mrb[0].mxu0
  %v430 = vadd.f32 %v84, %v429
  %v431 = vpop.f32.mrb[0].mxu0
  %432 = vmatprep.mubr.f32.mxu0 0.0
  %433 = vmatmul.mubr.f32.gmra.mrb[0].mxu0 %v139
  %v434 = vpop.f32.mrb[0].mxu0
  %v435 = vadd.f32 %v84, %v434
  %v436 = vpop.f32.mrb[0].mxu0
  %437 = vmatprep.mubr.f32.mxu0 0.0
  %438 = vmatmul.mubr.f32.gmra.mrb[0].mxu0 %v142
  %v439 = vpop.f32.mrb[0].mxu0
  %v440 = vadd.f32 %v84, %v439
  %v441 = vpop.f32.mrb[0].mxu0
  %442 = vmatprep.mubr.f32.mxu0 0.0
  %443 = vmatmul.mubr.f32.gmra.mrb[0].mxu0 %v145
  %v444 = vpop.f32.mrb[0].mxu0
  %v445 = vadd.f32 %v84, %v444
  %v446 = vpop.f32.mrb[0].mxu0
  %447 = vmatprep.mubr.f32.mxu0 0.0
  %448 = vmatmul.mubr.f32.gmra.mrb[0].mxu0 %v148
  %v449 = vpop.f32.mrb[0].mxu0
  %v450 = vadd.f32 %v84, %v449
  %v451 = vpop.f32.mrb[0].mxu0
  %452 = vmatprep.mubr.f32.mxu0 0.0
  %453 = vmatmul.mubr.f32.gmra.mrb[0].mxu0 %v151
  %v454 = vpop.f32.mrb[0].mxu0
  %v455 = vadd.f32 %v84, %v454
  %v456 = vpop.f32.mrb[0].mxu0
  %457 = vmatprep.mubr.f32.mxu0 0.0
  %458 = vmatmul.mubr.f32.gmra.mrb[0].mxu0 %v154
  %v459 = vpop.f32.mrb[0].mxu0
  %v460 = vadd.f32 %v84, %v459
  %v461 = vpop.f32.mrb[0].mxu0
  %462 = vmatprep.mubr.f32.mxu0 0.0
  %463 = vmatmul.mubr.f32.gmra.mrb[0].mxu0 %v157
  %v464 = vpop.f32.mrb[0].mxu0
  %v465 = vadd.f32 %v84, %v464
  %v466 = vpop.f32.mrb[0].mxu0
  %467 = vmatprep.mubr.f32.mxu0 0.0
  %468 = vmatmul.mubr.f32.gmra.mrb[0].mxu0 %v160
  %v469 = vpop.f32.mrb[0].mxu0
  %v470 = vadd.f32 %v84, %v469
  %v471 = vpop.f32.mrb[0].mxu0
  %472 = vmatprep.mubr.f32.mxu0 0.0
  %473 = vmatmul.mubr.f32.gmra.mrb[0].mxu0 %v163
  %v474 = vpop.f32.mrb[0].mxu0
  %v475 = vadd.f32 %v84, %v474
  %v476 = vpop.f32.mrb[0].mxu0
  %477 = vmatprep.mubr.f32.mxu0 0.0
  %478 = vmatmul.mubr.f32.gmra.mrb[0].mxu0 %v166
  %v479 = vpop.f32.mrb[0].mxu0
  %v480 = vadd.f32 %v84, %v479
  %v481 = vpop.f32.mrb[0].mxu0
  %482 = vmatprep.mubr.f32.mxu0 0.0
  %483 = vmatmul.mubr.f32.gmra.mrb[0].mxu0 %v169
  %v484 = vpop.f32.mrb[0].mxu0
  %v485 = vadd.f32 %v84, %v484
  %v486 = vpop.f32.mrb[0].mxu0
  %487 = vmatprep.mubr.f32.mxu0 0.0
  %488 = vmatmul.mubr.f32.gmra.mrb[0].mxu0 %v172
  %v489 = vpop.f32.mrb[0].mxu0
  %v490 = vadd.f32 %v84, %v489
  %v491 = vpop.f32.mrb[0].mxu0
  %492 = vmatprep.mubr.f32.mxu0 0.0
  %493 = vmatmul.mubr.f32.gmra.mrb[0].mxu0 %v175
  %v494 = vpop.f32.mrb[0].mxu0
  %v495 = vadd.f32 %v84, %v494
  %v496 = vpop.f32.mrb[0].mxu0
  %497 = vmatprep.mubr.f32.mxu0 0.0
  %498 = vmatmul.mubr.f32.gmra.mrb[0].mxu0 %v178
  %v499 = vpop.f32.mrb[0].mxu0
  %v500 = vadd.f32 %v84, %v499
  %v501 = vpop.f32.mrb[0].mxu0
  %502 = vmatprep.mubr.f32.mxu0 0.0
  %503 = vmatmul.mubr.f32.gmra.mrb[0].mxu0 %v181
  %v504 = vpop.f32.mrb[0].mxu0
  %v505 = vadd.f32 %v84, %v504
  %v506 = vpop.f32.mrb[0].mxu0
  %507 = vmatprep.mubr.f32.mxu0 0.0
  %508 = vmatmul.mubr.f32.gmra.mrb[0].mxu0 %v184
  %v509 = vpop.f32.mrb[0].mxu0
  %v510 = vadd.f32 %v84, %v509
  %v511 = vpop.f32.mrb[0].mxu0
  %512 = vmatprep.mubr.f32.mxu0 0.0
  %513 = vmatmul.mubr.f32.gmra.mrb[0].mxu0 %v187
  %v514 = vpop.f32.mrb[0].mxu0
  %v515 = vadd.f32 %v84, %v514
  %v516 = vpop.f32.mrb[0].mxu0
  %517 = vmatprep.mubr.f32.mxu0 0.0
  %518 = vmatmul.mubr.f32.gmra.mrb[0].mxu0 %v190
  %v519 = vpop.f32.mrb[0].mxu0
  %v520 = vadd.f32 %v84, %v519
  %v521 = vpop.f32.mrb[0].mxu0
  %522 = vmatprep.mubr.f32.mxu0 0.0
  %523 = vmatmul.mubr.f32.gmra.mrb[0].mxu0 %v193
  %v524 = vpop.f32.mrb[0].mxu0
  %v525 = vadd.f32 %v84, %v524
  %v526 = vpop.f32.mrb[0].mxu0
  %527 = vmatprep.mubr.f32.mxu0 0.0
  %528 = vmatmul.mubr.f32.gmra.mrb[0].mxu0 %v196
  %v529 = vpop.f32.mrb[0].mxu0
  %v530 = vadd.f32 %v84, %v529
  %v531 = vpop.f32.mrb[0].mxu0
  %532 = vmatprep.mubr.f32.mxu0 0.0
  %533 = vmatmul.mubr.f32.gmra.mrb[0].mxu0 %v199
  %v534 = vpop.f32.mrb[0].mxu0
  %v535 = vadd.f32 %v84, %v534
  %v536 = vpop.f32.mrb[0].mxu0
  %537 = vmatprep.mubr.f32.mxu0 0.0
  %538 = vmatmul.mubr.f32.gmra.mrb[0].mxu0 %v202
  %v539 = vpop.f32.mrb[0].mxu0
  %v540 = vadd.f32 %v84, %v539
  %v541 = vpop.f32.mrb[0].mxu0
  %542 = vmatprep.mubr.f32.mxu0 0.0
  %543 = vmatmul.mubr.f32.gmra.mrb[0].mxu0 %v205
  %v544 = vpop.f32.mrb[0].mxu0
  %v545 = vadd.f32 %v84, %v544
  %v546 = vpop.f32.mrb[0].mxu0
  %547 = vmatprep.mubr.f32.mxu0 0.0
  %548 = vmatmul.mubr.f32.gmra.mrb[0].mxu0 %v208
  %v549 = vpop.f32.mrb[0].mxu0
  %v550 = vadd.f32 %v84, %v549
  %v551 = vpop.f32.mrb[0].mxu0
  %552 = vmatprep.mubr.f32.mxu0 0.0
  %553 = vmatmul.mubr.f32.gmra.mrb[0].mxu0 %v211
  %v554 = vpop.f32.mrb[0].mxu0
  %v555 = vadd.f32 %v84, %v554
  %v556 = vpop.f32.mrb[0].mxu0
  %557 = vmatprep.mubr.f32.mxu0 0.0
  %558 = vmatmul.mubr.f32.gmra.mrb[0].mxu0 %v214
  %v559 = vpop.f32.mrb[0].mxu0
  %v560 = vadd.f32 %v84, %v559
  %v561 = vpop.f32.mrb[0].mxu0
  %562 = vmatprep.mubr.f32.mxu0 0.0
  %563 = vmatmul.mubr.f32.gmra.mrb[0].mxu0 %v217
  %v564 = vpop.f32.mrb[0].mxu0
  %v565 = vadd.f32 %v84, %v564
  %v566 = vpop.f32.mrb[0].mxu0
  %567 = vmatprep.mubr.f32.mxu0 0.0
  %568 = vmatmul.mubr.f32.gmra.mrb[0].mxu0 %v220
  %v569 = vpop.f32.mrb[0].mxu0
  %v570 = vadd.f32 %v84, %v569
  %v571 = vpop.f32.mrb[0].mxu0
  %572 = vmatprep.mubr.f32.mxu0 0.0
  %573 = vmatmul.mubr.f32.gmra.mrb[0].mxu0 %v223
  %v574 = vpop.f32.mrb[0].mxu0
  %v575 = vadd.f32 %v84, %v574
  %v576 = vpop.f32.mrb[0].mxu0
  %577 = vmatprep.mubr.f32.mxu0 0.0
  %578 = vmatmul.mubr.f32.gmra.mrb[0].mxu0 %v226
  %v579 = vpop.f32.mrb[0].mxu0
  %v580 = vadd.f32 %v84, %v579
  %v581 = vpop.f32.mrb[0].mxu0
  %582 = vmatprep.mubr.f32.mxu0 0.0
  %583 = vmatmul.mubr.f32.gmra.mrb[0].mxu0 %v229
  %v584 = vpop.f32.mrb[0].mxu0
  %v585 = vadd.f32 %v84, %v584
  %v586 = vpop.f32.mrb[0].mxu0
  %587 = vmatprep.mubr.f32.mxu0 0.0
  %588 = vmatmul.mubr.f32.gmra.mrb[0].mxu0 %v232
  %v589 = vpop.f32.mrb[0].mxu0
  %v590 = vadd.f32 %v84, %v589
  %v591 = vpop.f32.mrb[0].mxu0
  %592 = vmatprep.mubr.f32.mxu0 0.0
  %593 = vmatmul.mubr.f32.gmra.mrb[0].mxu0 %v235
  %v594 = vpop.f32.mrb[0].mxu0
  %v595 = vadd.f32 %v84, %v594
  %v596 = vpop.f32.mrb[0].mxu0
  %597 = vmatprep.mubr.f32.mxu0 0.0
  %598 = vmatmul.mubr.f32.gmra.mrb[0].mxu0 %v238
  %v599 = vpop.f32.mrb[0].mxu0
  %v600 = vadd.f32 %v84, %v599
  %v601 = vpop.f32.mrb[0].mxu0
  %602 = vmatprep.mubr.f32.mxu0 0.0
  %603 = vmatmul.mubr.f32.gmra.mrb[0].mxu0 %v241
  %v604 = vpop.f32.mrb[0].mxu0
  %v605 = vadd.f32 %v84, %v604
  %v606 = vpop.f32.mrb[0].mxu0
  %607 = vmatprep.mubr.f32.mxu0 0.0
  %608 = vmatmul.mubr.f32.gmra.mrb[0].mxu0 %v244
  %v609 = vpop.f32.mrb[0].mxu0
  %v610 = vadd.f32 %v84, %v609
  %v611 = vpop.f32.mrb[0].mxu0
  %612 = vmatprep.mubr.f32.mxu0 0.0
  %613 = vmatmul.mubr.f32.gmra.mrb[0].mxu0 %v247
  %v614 = vpop.f32.mrb[0].mxu0
  %v615 = vadd.f32 %v84, %v614
  %v616 = vpop.f32.mrb[0].mxu0
  %617 = vmatprep.mubr.f32.mxu0 0.0
  %618 = vmatmul.mubr.f32.gmra.mrb[0].mxu0 %v250
  %v619 = vpop.f32.mrb[0].mxu0
  %v620 = vadd.f32 %v84, %v619
  %v621 = vpop.f32.mrb[0].mxu0
  %622 = vmatprep.mubr.f32.mxu0 0.0
  %623 = vmatmul.mubr.f32.gmra.mrb[0].mxu0 %v253
  %v624 = vpop.f32.mrb[0].mxu0
  %v625 = vadd.f32 %v84, %v624
  %v626 = vpop.f32.mrb[0].mxu0
  %627 = vmatprep.mubr.f32.mxu0 0.0
  %628 = vmatmul.mubr.f32.gmra.mrb[0].mxu0 %v256
  %v629 = vpop.f32.mrb[0].mxu0
  %v630 = vadd.f32 %v84, %v629
  %v631 = vpop.f32.mrb[0].mxu0
  %632 = vmatprep.mubr.f32.mxu0 0.0
  %633 = vmatmul.mubr.f32.gmra.mrb[0].mxu0 %v259
  %v634 = vpop.f32.mrb[0].mxu0
  %v635 = vadd.f32 %v84, %v634
  %v636 = vpop.f32.mrb[0].mxu0
  %637 = vmatprep.mubr.f32.mxu0 0.0
  %638 = vmatmul.mubr.f32.gmra.mrb[0].mxu0 %v262
  %v639 = vpop.f32.mrb[0].mxu0
  %v640 = vadd.f32 %v84, %v639
  %v641 = vpop.f32.mrb[0].mxu0
  %642 = vmatprep.mubr.f32.mxu0 0.0
  %643 = vmatmul.mubr.f32.gmra.mrb[0].mxu0 %v265
  %v644 = vpop.f32.mrb[0].mxu0
  %v645 = vadd.f32 %v84, %v644
  %v646 = vpop.f32.mrb[0].mxu0
  %647 = vmatprep.mubr.f32.mxu0 0.0
  %648 = vmatmul.mubr.f32.gmra.mrb[0].mxu0 %v268
  %v649 = vpop.f32.mrb[0].mxu0
  %v650 = vadd.f32 %v84, %v649
  %v651 = vpop.f32.mrb[0].mxu0
  %652 = vmatprep.mubr.f32.mxu0 0.0
  %653 = vmatmul.mubr.f32.gmra.mrb[0].mxu0 %v271
  %v654 = vpop.f32.mrb[0].mxu0
  %v655 = vadd.f32 %v84, %v654
  %v656 = vpop.f32.mrb[0].mxu0
  %657 = vmatprep.mubr.f32.mxu0 0.0
  %658 = vmatmul.mubr.f32.gmra.mrb[0].mxu0 %v274
  %v659 = vpop.f32.mrb[0].mxu0
  %v660 = vadd.f32 %v84, %v659
  %v661 = vpop.f32.mrb[0].mxu0
  %662 = vmatprep.mubr.f32.mxu0 0.0
  %663 = vmatmul.mubr.f32.gmra.mrb[0].mxu0 %v277
  %v664 = vpop.f32.mrb[0].mxu0
  %v665 = vadd.f32 %v84, %v664
  %v666 = vpop.f32.mrb[0].mxu0
  %667 = vdwg.mxu0
  %v668 = vmax.f32 %v350, 0.0
  %v669 = vmax.f32 %v355, 0.0
  %v670 = vmax.f32 %v360, 0.0
  %v671 = vmax.f32 %v365, 0.0
  %v672 = vmax.f32 %v370, 0.0
  %v673 = vmax.f32 %v375, 0.0
  %v674 = vmax.f32 %v380, 0.0
  %v675 = vmax.f32 %v385, 0.0
  %v676 = vmax.f32 %v390, 0.0
  %v677 = vmax.f32 %v395, 0.0
  %v678 = vmax.f32 %v400, 0.0
  %v679 = vmax.f32 %v405, 0.0
  %v680 = vmax.f32 %v410, 0.0
  %v681 = vmax.f32 %v415, 0.0
  %v682 = vmax.f32 %v420, 0.0
  %v683 = vmax.f32 %v425, 0.0
  %v684 = vmax.f32 %v430, 0.0
  %v685 = vmax.f32 %v435, 0.0
  %v686 = vmax.f32 %v440, 0.0
  %v687 = vmax.f32 %v445, 0.0
  %v688 = vmax.f32 %v450, 0.0
  %v689 = vmax.f32 %v455, 0.0
  %v690 = vmax.f32 %v460, 0.0
  %v691 = vmax.f32 %v465, 0.0
  %v692 = vmax.f32 %v470, 0.0
  %v693 = vmax.f32 %v475, 0.0
  %v694 = vmax.f32 %v480, 0.0
  %v695 = vmax.f32 %v485, 0.0
  %v696 = vmax.f32 %v490, 0.0
  %v697 = vmax.f32 %v495, 0.0
  %v698 = vmax.f32 %v500, 0.0
  %v699 = vmax.f32 %v505, 0.0
  %v700 = vmax.f32 %v510, 0.0
  %v701 = vmax.f32 %v515, 0.0
  %v702 = vmax.f32 %v520, 0.0
  %v703 = vmax.f32 %v525, 0.0
  %v704 = vmax.f32 %v530, 0.0
  %v705 = vmax.f32 %v535, 0.0
  %v706 = vmax.f32 %v540, 0.0
  %v707 = vmax.f32 %v545, 0.0
  %v708 = vmax.f32 %v550, 0.0
  %v709 = vmax.f32 %v555, 0.0
  %v710 = vmax.f32 %v560, 0.0
  %v711 = vmax.f32 %v565, 0.0
  %v712 = vmax.f32 %v570, 0.0
  %v713 = vmax.f32 %v575, 0.0
  %v714 = vmax.f32 %v580, 0.0
  %v715 = vmax.f32 %v585, 0.0
  %v716 = vmax.f32 %v590, 0.0
  %v717 = vmax.f32 %v595, 0.0
  %v718 = vmax.f32 %v600, 0.0
  %v719 = vmax.f32 %v605, 0.0
  %v720 = vmax.f32 %v610, 0.0
  %v721 = vmax.f32 %v615, 0.0
  %v722 = vmax.f32 %v620, 0.0
  %v723 = vmax.f32 %v625, 0.0
  %v724 = vmax.f32 %v630, 0.0
  %v725 = vmax.f32 %v635, 0.0
  %v726 = vmax.f32 %v640, 0.0
  %v727 = vmax.f32 %v645, 0.0
  %v728 = vmax.f32 %v650, 0.0
  %v729 = vmax.f32 %v655, 0.0
  %v730 = vmax.f32 %v660, 0.0
  %v731 = vmax.f32 %v665, 0.0
  %732 = vst [vmem:[%s3] sm:$0xff] %v668
  %733 = vst [vmem:[%s3 + $0x8] sm:$0xff] %v669
  %734 = vst [vmem:[%s3 + $0x10] sm:$0xff] %v670
  %735 = vst [vmem:[%s3 + $0x18] sm:$0xff] %v671
  %736 = vst [vmem:[%s3 + $0x20] sm:$0xff] %v672
  %737 = vst [vmem:[%s3 + $0x28] sm:$0xff] %v673
  %738 = vst [vmem:[%s3 + $0x30] sm:$0xff] %v674
  %739 = vst [vmem:[%s3 + $0x38] sm:$0xff] %v675
  %740 = vst [vmem:[%s3 + $0x40] sm:$0xff] %v676
  %741 = vst [vmem:[%s3 + $0x48] sm:$0xff] %v677
  %742 = vst [vmem:[%s3 + $0x50] sm:$0xff] %v678
  %743 = vst [vmem:[%s3 + $0x58] sm:$0xff] %v679
  %744 = vst [vmem:[%s3 + $0x60] sm:$0xff] %v680
  %745 = vst [vmem:[%s3 + $0x68] sm:$0xff] %v681
  %746 = vst [vmem:[%s3 + $0x70] sm:$0xff] %v682
  %747 = vst [vmem:[%s3 + $0x78] sm:$0xff] %v683
  %748 = vst [vmem:[%s3 + $0x80] sm:$0xff] %v684
  %749 = vst [vmem:[%s3 + $0x88] sm:$0xff] %v685
  %750 = vst [vmem:[%s3 + $0x90] sm:$0xff] %v686
  %751 = vst [vmem:[%s3 + $0x98] sm:$0xff] %v687
  %752 = vst [vmem:[%s3 + $0xa0] sm:$0xff] %v688
  %753 = vst [vmem:[%s3 + $0xa8] sm:$0xff] %v689
  %754 = vst [vmem:[%s3 + $0xb0] sm:$0xff] %v690
  %755 = vst [vmem:[%s3 + $0xb8] sm:$0xff] %v691
  %756 = vst [vmem:[%s3 + $0xc0] sm:$0xff] %v692
  %757 = vst [vmem:[%s3 + $0xc8] sm:$0xff] %v693
  %758 = vst [vmem:[%s3 + $0xd0] sm:$0xff] %v694
  %759 = vst [vmem:[%s3 + $0xd8] sm:$0xff] %v695
  %760 = vst [vmem:[%s3 + $0xe0] sm:$0xff] %v696
  %761 = vst [vmem:[%s3 + $0xe8] sm:$0xff] %v697
  %762 = vst [vmem:[%s3 + $0xf0] sm:$0xff] %v698
  %763 = vst [vmem:[%s3 + $0xf8] sm:$0xff] %v699
  %764 = vst [vmem:[%s3 + $0x100] sm:$0xff] %v700
  %765 = vst [vmem:[%s3 + $0x108] sm:$0xff] %v701
  %766 = vst [vmem:[%s3 + $0x110] sm:$0xff] %v702
  %767 = vst [vmem:[%s3 + $0x118] sm:$0xff] %v703
  %768 = vst [vmem:[%s3 + $0x120] sm:$0xff] %v704
  %769 = vst [vmem:[%s3 + $0x128] sm:$0xff] %v705
  %770 = vst [vmem:[%s3 + $0x130] sm:$0xff] %v706
  %771 = vst [vmem:[%s3 + $0x138] sm:$0xff] %v707
  %772 = vst [vmem:[%s3 + $0x140] sm:$0xff] %v708
  %773 = vst [vmem:[%s3 + $0x148] sm:$0xff] %v709
  %774 = vst [vmem:[%s3 + $0x150] sm:$0xff] %v710
  %775 = vst [vmem:[%s3 + $0x158] sm:$0xff] %v711
  %776 = vst [vmem:[%s3 + $0x160] sm:$0xff] %v712
  %777 = vst [vmem:[%s3 + $0x168] sm:$0xff] %v713
  %778 = vst [vmem:[%s3 + $0x170] sm:$0xff] %v714
  %779 = vst [vmem:[%s3 + $0x178] sm:$0xff] %v715
  %780 = vst [vmem:[%s3 + $0x180] sm:$0xff] %v716
  %781 = vst [vmem:[%s3 + $0x188] sm:$0xff] %v717
  %782 = vst [vmem:[%s3 + $0x190] sm:$0xff] %v718
  %783 = vst [vmem:[%s3 + $0x198] sm:$0xff] %v719
  %784 = vst [vmem:[%s3 + $0x1a0] sm:$0xff] %v720
  %785 = vst [vmem:[%s3 + $0x1a8] sm:$0xff] %v721
  %786 = vst [vmem:[%s3 + $0x1b0] sm:$0xff] %v722
  %787 = vst [vmem:[%s3 + $0x1b8] sm:$0xff] %v723
  %788 = vst [vmem:[%s3 + $0x1c0] sm:$0xff] %v724
  %789 = vst [vmem:[%s3 + $0x1c8] sm:$0xff] %v725
  %790 = vst [vmem:[%s3 + $0x1d0] sm:$0xff] %v726
  %791 = vst [vmem:[%s3 + $0x1d8] sm:$0xff] %v727
  %792 = vst [vmem:[%s3 + $0x1e0] sm:$0xff] %v728
  %793 = vst [vmem:[%s3 + $0x1e8] sm:$0xff] %v729
  %794 = vst [vmem:[%s3 + $0x1f0] sm:$0xff] %v730
  %795 = vst [vmem:[%s3 + $0x1f8] sm:$0xff] %v731
  // Predicated region
  $region14: #{inception_forward.5} parent=0 // pred_check
    _
  $region15: #{inception_forward.5} parent=0 // pred_check_branch
    %797 = sbr.rel (0) target = $region17
  $region16: #{inception_forward.5} parent=0 // pred_region
    _
  $region17: #{inception_forward.5} parent=0 // pred_fallthru
    _
  // Predicated region
  $region18: #{inception_forward.5} parent=0 // pred_check
    _
  $region19: #{inception_forward.5} parent=0 // pred_check_branch
    %799 = sbr.rel (0) target = $region21
  $region20: #{inception_forward.5} parent=0 // pred_region
    _
  $region21: #{inception_forward.5} parent=0 // pred_fallthru
    _

// kernel: inception_forward.9
$region0: #{inception_forward.9}
  #allocation0 [shape = 'u32[]', space=smem, size = 0x4, offset = 0x4, fixed_abs, tag = 'smem constant byte address 0x4 - core index']
  #allocation1 [shape = 'u32[144,128]{1,0:T(1,128)}', space=vmem, size = 0x12000, scoped, tag = 'internal scratch']
  %s0 = inlined_call_operand.vmem [shape: f32[2,18,18,4], index: 0, kind: input, shape index: {}]
  %s1 = inlined_call_operand.vmem [shape: f32[4,128], index: 1, kind: input, shape index: {}]
  %s2 = inlined_call_operand.vmem [shape: f32[1,128], index: 2, kind: input, shape index: {}]
  %s3 = inlined_call_operand.vmem [shape: f32[2,16,16,128], index: 3, kind: output, shape index: {}]
  %s4 = sld [smem:[#allocation0]]
  $region45: #{inception_forward.9} parent=0
    _
  %s6 = ssub.s32 1, %s4
  %s7 = scalar_select 0, %s6, %s4
  loop: start=0, step=1, limit=4
  $region2: #{inception_forward.9} parent=0 // loop_pre_header
    _
  $region3: #{inception_forward.9} parent=0 // loop_header
    %s9 = sphi 0, %s13
    %p10 = scmp.ge.s32.totalorder %s9, 4
    %s19 = sphi 0, %s21
    %s22 = sphi 0, %s19
    %s23 = sphi 0, %s22
    %s39 = sphi 0, %s23
    %s43 = sphi 0, %s43
    %s45 = sphi 0, %s43
    %s46 = sphi 0, %s45
    %s60 = sphi 0, %s46
    %s64 = sphi 0, %s64
    %s66 = sphi 0, %s64
    %s67 = sphi 0, %s66
    %s81 = sphi 0, %s67
    %s87 = sphi 0, %s89
    %s90 = sphi 0, %s87
    %s91 = sphi 0, %s90
    %s107 = sphi 0, %s91
  $region4: #{inception_forward.9} parent=0 // loop_header_branch
    %12 = sbr.rel (%p10) target = $region8
  $region5: #{inception_forward.9} parent=0 // loop_body
    %s14 = ssub.s32 %s9, 1
    %s15 = ssub.s32 %s9, 2
    %s16 = sadd.s32 %s9, 1
    %s17 = ssub.s32 %s9, %s16
    %p18 = scmp.eq.s32.totalorder %s17, 0
    %s20 = sadd.s32 %s19, 1
    %s21 = scalar_select %p18, %s19, %s20
    %p24 = pneg %p18
    %p25 = scmp.eq.s32.totalorder %s9, 1
    %p26 = por %p24, %p25
    %p27 = scmp.ne.s32.totalorder %s19, %s22
    %p28 = scmp.eq.s32.totalorder %s9, 0
    %p29 = por %p27, %p28
    %p30 = scmp.ne.s32.totalorder %s19, %s22
    %p31 = scmp.eq.s32.totalorder %s14, 1
    %p32 = por %p30, %p31
    %p33 = scmp.ne.s32.totalorder %s22, %s23
    %p34 = scmp.eq.s32.totalorder %s14, 0
    %p35 = por %p33, %p34
    %p36 = scmp.ne.s32.totalorder %s22, %s23
    %p37 = scmp.eq.s32.totalorder %s15, 1
    %p38 = por %p36, %p37
    %p40 = scmp.ne.s32.totalorder %s23, %s39
    %p41 = scmp.eq.s32.totalorder %s15, 0
    %p42 = por %p40, %p41
    %s44 = sadd.s32 %s43, 1
    %p47 = scmp.eq.s32.totalorder %s9, 1
    %p48 = scmp.ne.s32.totalorder %s43, %s45
    %p49 = scmp.eq.s32.totalorder %s9, 0
    %p50 = por %p48, %p49
    %p51 = scmp.ne.s32.totalorder %s43, %s45
    %p52 = scmp.eq.s32.totalorder %s14, 1
    %p53 = por %p51, %p52
    %p54 = scmp.ne.s32.totalorder %s45, %s46
    %p55 = scmp.eq.s32.totalorder %s14, 0
    %p56 = por %p54, %p55
    %p57 = scmp.ne.s32.totalorder %s45, %s46
    %p58 = scmp.eq.s32.totalorder %s15, 1
    %p59 = por %p57, %p58
    %p61 = scmp.ne.s32.totalorder %s46, %s60
    %p62 = scmp.eq.s32.totalorder %s15, 0
    %p63 = por %p61, %p62
    %s65 = sadd.s32 %s64, 1
    %p68 = scmp.eq.s32.totalorder %s9, 1
    %p69 = scmp.ne.s32.totalorder %s64, %s66
    %p70 = scmp.eq.s32.totalorder %s9, 0
    %p71 = por %p69, %p70
    %p72 = scmp.ne.s32.totalorder %s64, %s66
    %p73 = scmp.eq.s32.totalorder %s14, 1
    %p74 = por %p72, %p73
    %p75 = scmp.ne.s32.totalorder %s66, %s67
    %p76 = scmp.eq.s32.totalorder %s14, 0
    %p77 = por %p75, %p76
    %p78 = scmp.ne.s32.totalorder %s66, %s67
    %p79 = scmp.eq.s32.totalorder %s15, 1
    %p80 = por %p78, %p79
    %p82 = scmp.ne.s32.totalorder %s67, %s81
    %p83 = scmp.eq.s32.totalorder %s15, 0
    %p84 = por %p82, %p83
    %s85 = ssub.s32 %s9, %s16
    %p86 = scmp.eq.s32.totalorder %s85, 0
    %s88 = sadd.s32 %s87, 1
    %s89 = scalar_select %p86, %s87, %s88
    %p92 = pneg %p86
    %p93 = scmp.eq.s32.totalorder %s9, 1
    %p94 = por %p92, %p93
    %p95 = scmp.ne.s32.totalorder %s87, %s90
    %p96 = scmp.eq.s32.totalorder %s9, 0
    %p97 = por %p95, %p96
    %p98 = scmp.ne.s32.totalorder %s87, %s90
    %p99 = scmp.eq.s32.totalorder %s14, 1
    %p100 = por %p98, %p99
    %p101 = scmp.ne.s32.totalorder %s90, %s91
    %p102 = scmp.eq.s32.totalorder %s14, 0
    %p103 = por %p101, %p102
    %p104 = scmp.ne.s32.totalorder %s90, %s91
    %p105 = scmp.eq.s32.totalorder %s15, 1
    %p106 = por %p104, %p105
    %p108 = scmp.ne.s32.totalorder %s91, %s107
    %p109 = scmp.eq.s32.totalorder %s15, 0
    %p110 = por %p108, %p109
    %p111 = scmp.le.s32.totalorder 1, %s9
    %p112 = scmp.lt.s32.totalorder %s9, 3
    %p113 = pnand %p111, %p112
    %p114 = pneg %p113
    // Predicated region
    $region9: #{inception_forward.9} parent=5 // pred_check
      _
    $region10: #{inception_forward.9} parent=5 // pred_check_branch
      %116 = sbr.rel (%p113) target = $region12
    $region11: #{inception_forward.9} parent=5 // pred_region
      %s117 = ssub.s32 %s9, 1
      // Predicated region
      $region13: #{inception_forward.9} parent=11 // pred_check
        %p118 = pneg %p56
      $region14: #{inception_forward.9} parent=11 // pred_check_branch
        %120 = sbr.rel (%p118) target = $region16
      $region15: #{inception_forward.9} parent=11 // pred_region
        _
      $region16: #{inception_forward.9} parent=11 // pred_fallthru
        _
      // Predicated region
      $region17: #{inception_forward.9} parent=11 // pred_check
        %p121 = pneg %p77
      $region18: #{inception_forward.9} parent=11 // pred_check_branch
        %123 = sbr.rel (%p121) target = $region20
      $region19: #{inception_forward.9} parent=11 // pred_region
        _
      $region20: #{inception_forward.9} parent=11 // pred_fallthru
        _
    $region12: #{inception_forward.9} parent=5 // pred_fallthru
      _
    %p124 = scmp.lt.s32.totalorder %s9, 2
    // Predicated region
    $region21: #{inception_forward.9} parent=5 // pred_check
      %p125 = pneg %p124
    $region22: #{inception_forward.9} parent=5 // pred_check_branch
      %127 = sbr.rel (%p125) target = $region24
    $region23: #{inception_forward.9} parent=5 // pred_region
      // Predicated region
      $region25: #{inception_forward.9} parent=23 // pred_check
        %p128 = pneg %p29
      $region26: #{inception_forward.9} parent=23 // pred_check_branch
        %130 = sbr.rel (%p128) target = $region28
      $region27: #{inception_forward.9} parent=23 // pred_region
        %p131 = scmp.lt.s32.totalorder %s9, 1
        %s132 = scalar_select %p131, %s9, 1
        %s133 = smul.addr %s132, 54
        %s134 = smul.addr %s133, 8
        %s135 = scalar_lea.vmem %s0, %s134
      $region28: #{inception_forward.9} parent=23 // pred_fallthru
        _
    $region24: #{inception_forward.9} parent=5 // pred_fallthru
      _
    %p136 = scmp.le.s32.totalorder 1, %s9
    %p137 = scmp.lt.s32.totalorder %s9, 3
    %p138 = pnand %p136, %p137
    %p139 = pneg %p138
    // Predicated region
    $region29: #{inception_forward.9} parent=5 // pred_check
      _
    $region30: #{inception_forward.9} parent=5 // pred_check_branch
      %141 = sbr.rel (%p138) target = $region32
    $region31: #{inception_forward.9} parent=5 // pred_region
      %s142 = ssub.s32 %s9, 1
      %p143 = scmp.lt.s32.totalorder %s14, 1
      %s144 = scalar_select %p143, %s14, 1
      %s145 = smul.addr %s144, 54
      %s146 = smul.addr %s145, 8
      %s147 = scalar_lea.vmem %s0, %s146
      %p148 = pneg %p35
      %p149 = pneg %p32
      %p150 = pneg %p56
      %p151 = pneg %p53
      %p152 = pneg %p77
      %p153 = pneg %p74
      %p154 = pneg %p103
      %p155 = pneg %p100
      %p156 = scmp.lt.s32.totalorder %s14, 1
      %s157 = scalar_select %p156, %s14, 1
      %s158 = smul.addr %s157, 32
      %s159 = smul.addr %s158, 8
      %s160 = scalar_lea.vmem %s3, %s159
      %p161 = scmp.lt.s32.totalorder %s14, 1
      %s162 = scalar_select %p161, %s14, 1
      %s163 = smul.addr %s162, 54
      %s164 = smul.addr %s163, 8
      %s165 = scalar_lea.vmem %s0, %s164
      %p166 = scmp.lt.s32.totalorder %s14, 1
      %s167 = scalar_select %p166, %s14, 1
      %s168 = smul.addr %s167, 32
      %s169 = smul.addr %s168, 8
      %s170 = scalar_lea.vmem %s3, %s169
      %v171 = vld [vmem:[%s165] sm:$0xff]
      %v172 = vld [vmem:[%s165 + $0x8] sm:$0xff]
      %v173 = vld [vmem:[%s165 + $0x10] sm:$0x3]
      %v174 = vld [vmem:[%s165 + $0x18] sm:$0xff]
      %v175 = vld [vmem:[%s165 + $0x20] sm:$0xff]
      %v176 = vld [vmem:[%s165 + $0x28] sm:$0x3]
      %v177 = vld [vmem:[%s165 + $0x30] sm:$0xff]
      %v178 = vld [vmem:[%s165 + $0x38] sm:$0xff]
      %v179 = vld [vmem:[%s165 + $0x40] sm:$0x3]
      %v180 = vld [vmem:[%s165 + $0x48] sm:$0xff]
      %v181 = vld [vmem:[%s165 + $0x50] sm:$0xff]
      %v182 = vld [vmem:[%s165 + $0x58] sm:$0x3]
      %v183 = vld [vmem:[%s165 + $0x60] sm:$0xff]
      %v184 = vld [vmem:[%s165 + $0x68] sm:$0xff]
      %v185 = vld [vmem:[%s165 + $0x70] sm:$0x3]
      %v186 = vld [vmem:[%s165 + $0x78] sm:$0xff]
      %v187 = vld [vmem:[%s165 + $0x80] sm:$0xff]
      %v188 = vld [vmem:[%s165 + $0x88] sm:$0x3]
      %v189 = vld [vmem:[%s165 + $0x90] sm:$0xff]
      %v190 = vld [vmem:[%s165 + $0x98] sm:$0xff]
      %v191 = vld [vmem:[%s165 + $0xa0] sm:$0x3]
      %v192 = vld [vmem:[%s165 + $0xa8] sm:$0xff]
      %v193 = vld [vmem:[%s165 + $0xb0] sm:$0xff]
      %v194 = vld [vmem:[%s165 + $0xb8] sm:$0x3]
      %v195 = vld [vmem:[%s165 + $0xc0] sm:$0xff]
      %v196 = vld [vmem:[%s165 + $0xc8] sm:$0xff]
      %v197 = vld [vmem:[%s165 + $0xd0] sm:$0x3]
      %v198 = vld [vmem:[%s165 + $0xd8] sm:$0xff]
      %v199 = vld [vmem:[%s165 + $0xe0] sm:$0xff]
      %v200 = vld [vmem:[%s165 + $0xe8] sm:$0x3]
      %v201 = vld [vmem:[%s165 + $0xf0] sm:$0xff]
      %v202 = vld [vmem:[%s165 + $0xf8] sm:$0xff]
      %v203 = vld [vmem:[%s165 + $0x100] sm:$0x3]
      %v204 = vld [vmem:[%s165 + $0x108] sm:$0xff]
      %v205 = vld [vmem:[%s165 + $0x110] sm:$0xff]
      %v206 = vld [vmem:[%s165 + $0x118] sm:$0x3]
      %v207 = vld [vmem:[%s165 + $0x120] sm:$0xff]
      %v208 = vld [vmem:[%s165 + $0x128] sm:$0xff]
      %v209 = vld [vmem:[%s165 + $0x130] sm:$0x3]
      %v210 = vld [vmem:[%s165 + $0x138] sm:$0xff]
      %v211 = vld [vmem:[%s165 + $0x140] sm:$0xff]
      %v212 = vld [vmem:[%s165 + $0x148] sm:$0x3]
      %v213 = vld [vmem:[%s165 + $0x150] sm:$0xff]
      %v214 = vld [vmem:[%s165 + $0x158] sm:$0xff]
      %v215 = vld [vmem:[%s165 + $0x160] sm:$0x3]
      %v216 = vld [vmem:[%s165 + $0x168] sm:$0xff]
      %v217 = vld [vmem:[%s165 + $0x170] sm:$0xff]
      %v218 = vld [vmem:[%s165 + $0x178] sm:$0x3]
      %v219 = vld [vmem:[%s165 + $0x180] sm:$0xff]
      %v220 = vld [vmem:[%s165 + $0x188] sm:$0xff]
      %v221 = vld [vmem:[%s165 + $0x190] sm:$0x3]
      %v222 = vld [vmem:[%s165 + $0x198] sm:$0xff]
      %v223 = vld [vmem:[%s165 + $0x1a0] sm:$0xff]
      %v224 = vld [vmem:[%s165 + $0x1a8] sm:$0x3]
      %v225 = vmax.f32 %v171, %v174
      %v226 = vmax.f32 %v172, %v175
      %v227 = vmax.f32 %v173, %v176
      %v228 = vmax.f32 %v174, %v177
      %v229 = vmax.f32 %v175, %v178
      %v230 = vmax.f32 %v176, %v179
      %v231 = vmax.f32 %v177, %v180
      %v232 = vmax.f32 %v178, %v181
      %v233 = vmax.f32 %v179, %v182
      %v234 = vmax.f32 %v180, %v183
      %v235 = vmax.f32 %v181, %v184
      %v236 = vmax.f32 %v182, %v185
      %v237 = vmax.f32 %v183, %v186
      %v238 = vmax.f32 %v184, %v187
      %v239 = vmax.f32 %v185, %v188
      %v240 = vmax.f32 %v186, %v189
      %v241 = vmax.f32 %v187, %v190
      %v242 = vmax.f32 %v188, %v191
      %v243 = vmax.f32 %v189, %v192
      %v244 = vmax.f32 %v190, %v193
      %v245 = vmax.f32 %v191, %v194
      %v246 = vmax.f32 %v192, %v195
      %v247 = vmax.f32 %v193, %v196
      %v248 = vmax.f32 %v194, %v197
      %v249 = vmax.f32 %v195, %v198
      %v250 = vmax.f32 %v196, %v199
      %v251 = vmax.f32 %v197, %v200
      %v252 = vmax.f32 %v198, %v201
      %v253 = vmax.f32 %v199, %v202
      %v254 = vmax.f32 %v200, %v203
      %v255 = vmax.f32 %v201, %v204
      %v256 = vmax.f32 %v202, %v205
      %v257 = vmax.f32 %v203, %v206
      %v258 = vmax.f32 %v204, %v207
      %v259 = vmax.f32 %v205, %v208
      %v260 = vmax.f32 %v206, %v209
      %v261 = vmax.f32 %v207, %v210
      %v262 = vmax.f32 %v208, %v211
      %v263 = vmax.f32 %v209, %v212
      %v264 = vmax.f32 %v210, %v213
      %v265 = vmax.f32 %v211, %v214
      %v266 = vmax.f32 %v212, %v215
      %v267 = vmax.f32 %v213, %v216
      %v268 = vmax.f32 %v214, %v217
      %v269 = vmax.f32 %v215, %v218
      %v270 = vmax.f32 %v216, %v219
      %v271 = vmax.f32 %v217, %v220
      %v272 = vmax.f32 %v218, %v221
      %v273 = vmax.f32 %v225, %v177
      %v274 = vmax.f32 %v226, %v178
      %v275 = vmax.f32 %v227, %v179
      %v276 = vmax.f32 %v228, %v180
      %v277 = vmax.f32 %v229, %v181
      %v278 = vmax.f32 %v230, %v182
      %v279 = vmax.f32 %v231, %v183
      %v280 = vmax.f32 %v232, %v184
      %v281 = vmax.f32 %v233, %v185
      %v282 = vmax.f32 %v234, %v186
      %v283 = vmax.f32 %v235, %v187
      %v284 = vmax.f32 %v236, %v188
      %v285 = vmax.f32 %v237, %v189
      %v286 = vmax.f32 %v238, %v190
      %v287 = vmax.f32 %v239, %v191
      %v288 = vmax.f32 %v240, %v192
      %v289 = vmax.f32 %v241, %v193
      %v290 = vmax.f32 %v242, %v194
      %v291 = vmax.f32 %v243, %v195
      %v292 = vmax.f32 %v244, %v196
      %v293 = vmax.f32 %v245, %v197
      %v294 = vmax.f32 %v246, %v198
      %v295 = vmax.f32 %v247, %v199
      %v296 = vmax.f32 %v248, %v200
      %v297 = vmax.f32 %v249, %v201
      %v298 = vmax.f32 %v250, %v202
      %v299 = vmax.f32 %v251, %v203
      %v300 = vmax.f32 %v252, %v204
      %v301 = vmax.f32 %v253, %v205
      %v302 = vmax.f32 %v254, %v206
      %v303 = vmax.f32 %v255, %v207
      %v304 = vmax.f32 %v256, %v208
      %v305 = vmax.f32 %v257, %v209
      %v306 = vmax.f32 %v258, %v210
      %v307 = vmax.f32 %v259, %v211
      %v308 = vmax.f32 %v260, %v212
      %v309 = vmax.f32 %v261, %v213
      %v310 = vmax.f32 %v262, %v214
      %v311 = vmax.f32 %v263, %v215
      %v312 = vmax.f32 %v264, %v216
      %v313 = vmax.f32 %v265, %v217
      %v314 = vmax.f32 %v266, %v218
      %v315 = vmax.f32 %v267, %v219
      %v316 = vmax.f32 %v268, %v220
      %v317 = vmax.f32 %v269, %v221
      %v318 = vmax.f32 %v270, %v222
      %v319 = vmax.f32 %v271, %v223
      %v320 = vmax.f32 %v272, %v224
      %vm369 = vcmask 1046528
      %v370 = vrot.slane %v273, 1
      %v371 = vrot.slane %v274, 1
      %v372 = vsel %vm369, %v370, %v371
      %v373 = vrot.slane %v275, 1
      %v374 = vsel %vm369, %v371, %v373
      %v375 = vrot.slane %v276, 1
      %v376 = vrot.slane %v277, 1
      %v377 = vsel %vm369, %v375, %v376
      %v378 = vrot.slane %v278, 1
      %v379 = vsel %vm369, %v376, %v378
      %v380 = vrot.slane %v279, 1
      %v381 = vrot.slane %v280, 1
      %v382 = vsel %vm369, %v380, %v381
      %v383 = vrot.slane %v281, 1
      %v384 = vsel %vm369, %v381, %v383
      %v385 = vrot.slane %v282, 1
      %v386 = vrot.slane %v283, 1
      %v387 = vsel %vm369, %v385, %v386
      %v388 = vrot.slane %v284, 1
      %v389 = vsel %vm369, %v386, %v388
      %v390 = vrot.slane %v285, 1
      %v391 = vrot.slane %v286, 1
      %v392 = vsel %vm369, %v390, %v391
      %v393 = vrot.slane %v287, 1
      %v394 = vsel %vm369, %v391, %v393
      %v395 = vrot.slane %v288, 1
      %v396 = vrot.slane %v289, 1
      %v397 = vsel %vm369, %v395, %v396
      %v398 = vrot.slane %v290, 1
      %v399 = vsel %vm369, %v396, %v398
      %v400 = vrot.slane %v291, 1
      %v401 = vrot.slane %v292, 1
      %v402 = vsel %vm369, %v400, %v401
      %v403 = vrot.slane %v293, 1
      %v404 = vsel %vm369, %v401, %v403
      %v405 = vrot.slane %v294, 1
      %v406 = vrot.slane %v295, 1
      %v407 = vsel %vm369, %v405, %v406
      %v408 = vrot.slane %v296, 1
      %v409 = vsel %vm369, %v406, %v408
      %v410 = vrot.slane %v297, 1
      %v411 = vrot.slane %v298, 1
      %v412 = vsel %vm369, %v410, %v411
      %v413 = vrot.slane %v299, 1
      %v414 = vsel %vm369, %v411, %v413
      %v415 = vrot.slane %v300, 1
      %v416 = vrot.slane %v301, 1
      %v417 = vsel %vm369, %v415, %v416
      %v418 = vrot.slane %v302, 1
      %v419 = vsel %vm369, %v416, %v418
      %v420 = vrot.slane %v303, 1
      %v421 = vrot.slane %v304, 1
      %v422 = vsel %vm369, %v420, %v421
      %v423 = vrot.slane %v305, 1
      %v424 = vsel %vm369, %v421, %v423
      %v425 = vrot.slane %v306, 1
      %v426 = vrot.slane %v307, 1
      %v427 = vsel %vm369, %v425, %v426
      %v428 = vrot.slane %v308, 1
      %v429 = vsel %vm369, %v426, %v428
      %v430 = vrot.slane %v309, 1
      %v431 = vrot.slane %v310, 1
      %v432 = vsel %vm369, %v430, %v431
      %v433 = vrot.slane %v311, 1
      %v434 = vsel %vm369, %v431, %v433
      %v435 = vrot.slane %v312, 1
      %v436 = vrot.slane %v313, 1
      %v437 = vsel %vm369, %v435, %v436
      %v438 = vrot.slane %v314, 1
      %v439 = vsel %vm369, %v436, %v438
      %v440 = vrot.slane %v315, 1
      %v441 = vrot.slane %v316, 1
      %v442 = vsel %vm369, %v440, %v441
      %v443 = vrot.slane %v317, 1
      %v444 = vsel %vm369, %v441, %v443
      %v445 = vrot.slane %v318, 1
      %v446 = vrot.slane %v319, 1
      %v447 = vsel %vm369, %v445, %v446
      %v448 = vrot.slane %v320, 1
      %v449 = vsel %vm369, %v446, %v448
      %v482 = vmax.f32 %v273, %v372
      %v483 = vmax.f32 %v274, %v374
      %v484 = vmax.f32 %v276, %v377
      %v485 = vmax.f32 %v277, %v379
      %v486 = vmax.f32 %v279, %v382
      %v487 = vmax.f32 %v280, %v384
      %v488 = vmax.f32 %v282, %v387
      %v489 = vmax.f32 %v283, %v389
      %v490 = vmax.f32 %v285, %v392
      %v491 = vmax.f32 %v286, %v394
      %v492 = vmax.f32 %v288, %v397
      %v493 = vmax.f32 %v289, %v399
      %v494 = vmax.f32 %v291, %v402
      %v495 = vmax.f32 %v292, %v404
      %v496 = vmax.f32 %v294, %v407
      %v497 = vmax.f32 %v295, %v409
      %v498 = vmax.f32 %v297, %v412
      %v499 = vmax.f32 %v298, %v414
      %v500 = vmax.f32 %v300, %v417
      %v501 = vmax.f32 %v301, %v419
      %v502 = vmax.f32 %v303, %v422
      %v503 = vmax.f32 %v304, %v424
      %v504 = vmax.f32 %v306, %v427
      %v505 = vmax.f32 %v307, %v429
      %v506 = vmax.f32 %v309, %v432
      %v507 = vmax.f32 %v310, %v434
      %v508 = vmax.f32 %v312, %v437
      %v509 = vmax.f32 %v313, %v439
      %v510 = vmax.f32 %v315, %v442
      %v511 = vmax.f32 %v316, %v444
      %v512 = vmax.f32 %v318, %v447
      %v513 = vmax.f32 %v319, %v449
      %vm514 = vcmask 1045504
      %v515 = vrot.slane %v273, 2
      %v516 = vrot.slane %v274, 2
      %v517 = vsel %vm514, %v515, %v516
      %v518 = vrot.slane %v275, 2
      %v519 = vsel %vm514, %v516, %v518
      %v520 = vrot.slane %v276, 2
      %v521 = vrot.slane %v277, 2
      %v522 = vsel %vm514, %v520, %v521
      %v523 = vrot.slane %v278, 2
      %v524 = vsel %vm514, %v521, %v523
      %v525 = vrot.slane %v279, 2
      %v526 = vrot.slane %v280, 2
      %v527 = vsel %vm514, %v525, %v526
      %v528 = vrot.slane %v281, 2
      %v529 = vsel %vm514, %v526, %v528
      %v530 = vrot.slane %v282, 2
      %v531 = vrot.slane %v283, 2
      %v532 = vsel %vm514, %v530, %v531
      %v533 = vrot.slane %v284, 2
      %v534 = vsel %vm514, %v531, %v533
      %v535 = vrot.slane %v285, 2
      %v536 = vrot.slane %v286, 2
      %v537 = vsel %vm514, %v535, %v536
      %v538 = vrot.slane %v287, 2
      %v539 = vsel %vm514, %v536, %v538
      %v540 = vrot.slane %v288, 2
      %v541 = vrot.slane %v289, 2
      %v542 = vsel %vm514, %v540, %v541
      %v543 = vrot.slane %v290, 2
      %v544 = vsel %vm514, %v541, %v543
      %v545 = vrot.slane %v291, 2
      %v546 = vrot.slane %v292, 2
      %v547 = vsel %vm514, %v545, %v546
      %v548 = vrot.slane %v293, 2
      %v549 = vsel %vm514, %v546, %v548
      %v550 = vrot.slane %v294, 2
      %v551 = vrot.slane %v295, 2
      %v552 = vsel %vm514, %v550, %v551
      %v553 = vrot.slane %v296, 2
      %v554 = vsel %vm514, %v551, %v553
      %v555 = vrot.slane %v297, 2
      %v556 = vrot.slane %v298, 2
      %v557 = vsel %vm514, %v555, %v556
      %v558 = vrot.slane %v299, 2
      %v559 = vsel %vm514, %v556, %v558
      %v560 = vrot.slane %v300, 2
      %v561 = vrot.slane %v301, 2
      %v562 = vsel %vm514, %v560, %v561
      %v563 = vrot.slane %v302, 2
      %v564 = vsel %vm514, %v561, %v563
      %v565 = vrot.slane %v303, 2
      %v566 = vrot.slane %v304, 2
      %v567 = vsel %vm514, %v565, %v566
      %v568 = vrot.slane %v305, 2
      %v569 = vsel %vm514, %v566, %v568
      %v570 = vrot.slane %v306, 2
      %v571 = vrot.slane %v307, 2
      %v572 = vsel %vm514, %v570, %v571
      %v573 = vrot.slane %v308, 2
      %v574 = vsel %vm514, %v571, %v573
      %v575 = vrot.slane %v309, 2
      %v576 = vrot.slane %v310, 2
      %v577 = vsel %vm514, %v575, %v576
      %v578 = vrot.slane %v311, 2
      %v579 = vsel %vm514, %v576, %v578
      %v580 = vrot.slane %v312, 2
      %v581 = vrot.slane %v313, 2
      %v582 = vsel %vm514, %v580, %v581
      %v583 = vrot.slane %v314, 2
      %v584 = vsel %vm514, %v581, %v583
      %v585 = vrot.slane %v315, 2
      %v586 = vrot.slane %v316, 2
      %v587 = vsel %vm514, %v585, %v586
      %v588 = vrot.slane %v317, 2
      %v589 = vsel %vm514, %v586, %v588
      %v590 = vrot.slane %v318, 2
      %v591 = vrot.slane %v319, 2
      %v592 = vsel %vm514, %v590, %v591
      %v593 = vrot.slane %v320, 2
      %v594 = vsel %vm514, %v591, %v593
      %v627 = vmax.f32 %v482, %v517
      %v628 = vmax.f32 %v483, %v519
      %v629 = vmax.f32 %v484, %v522
      %v630 = vmax.f32 %v485, %v524
      %v631 = vmax.f32 %v486, %v527
      %v632 = vmax.f32 %v487, %v529
      %v633 = vmax.f32 %v488, %v532
      %v634 = vmax.f32 %v489, %v534
      %v635 = vmax.f32 %v490, %v537
      %v636 = vmax.f32 %v491, %v539
      %v637 = vmax.f32 %v492, %v542
      %v638 = vmax.f32 %v493, %v544
      %v639 = vmax.f32 %v494, %v547
      %v640 = vmax.f32 %v495, %v549
      %v641 = vmax.f32 %v496, %v552
      %v642 = vmax.f32 %v497, %v554
      %v643 = vmax.f32 %v498, %v557
      %v644 = vmax.f32 %v499, %v559
      %v645 = vmax.f32 %v500, %v562
      %v646 = vmax.f32 %v501, %v564
      %v647 = vmax.f32 %v502, %v567
      %v648 = vmax.f32 %v503, %v569
      %v649 = vmax.f32 %v504, %v572
      %v650 = vmax.f32 %v505, %v574
      %v651 = vmax.f32 %v506, %v577
      %v652 = vmax.f32 %v507, %v579
      %v653 = vmax.f32 %v508, %v582
      %v654 = vmax.f32 %v509, %v584
      %v655 = vmax.f32 %v510, %v587
      %v656 = vmax.f32 %v511, %v589
      %v657 = vmax.f32 %v512, %v592
      %v658 = vmax.f32 %v513, %v594
      %v659 = vld [vmem:[%s1] sm:$0xf]
      %v660 = vld [vmem:[%s2] sm:$0x1]
      %v662 = vlaneseq
      %v663 = vshrl.u32 %v662, 7
      %v664 = vsub.s32 0, %v663
      %v665 = vrot.slane %v660, %v664
      %vm667 = vcmask 31744
      %v669 = vsel %vm667, %v627, 0
      %v672 = vsel %vm667, %v628, 0
      %v675 = vsel %vm667, %v629, 0
      %v678 = vsel %vm667, %v630, 0
      %v681 = vsel %vm667, %v631, 0
      %v684 = vsel %vm667, %v632, 0
      %v687 = vsel %vm667, %v633, 0
      %v690 = vsel %vm667, %v634, 0
      %v693 = vsel %vm667, %v635, 0
      %v696 = vsel %vm667, %v636, 0
      %v699 = vsel %vm667, %v637, 0
      %v702 = vsel %vm667, %v638, 0
      %v705 = vsel %vm667, %v639, 0
      %v708 = vsel %vm667, %v640, 0
      %v711 = vsel %vm667, %v641, 0
      %v714 = vsel %vm667, %v642, 0
      %v717 = vsel %vm667, %v643, 0
      %v720 = vsel %vm667, %v644, 0
      %v723 = vsel %vm667, %v645, 0
      %v726 = vsel %vm667, %v646, 0
      %v729 = vsel %vm667, %v647, 0
      %v732 = vsel %vm667, %v648, 0
      %v735 = vsel %vm667, %v649, 0
      %v738 = vsel %vm667, %v650, 0
      %v741 = vsel %vm667, %v651, 0
      %v744 = vsel %vm667, %v652, 0
      %v747 = vsel %vm667, %v653, 0
      %v750 = vsel %vm667, %v654, 0
      %v753 = vsel %vm667, %v655, 0
      %v756 = vsel %vm667, %v656, 0
      %v759 = vsel %vm667, %v657, 0
      %v762 = vsel %vm667, %v658, 0
      %vm764 = vcmask 1043456
      %v766 = vsel %vm764, %v659, 0
      %768 = vmatprep.subr.mxu0 0.0
      %769 = vmatpush1.msra.mxu0 %v766
      %770 = vmatprep.subr.mxu0 0.0
      %771 = vmatpush1.msra.mxu0 0.0
      %772 = vmatprep.subr.mxu0 0.0
      %773 = vmatpush1.msra.mxu0 0.0
      %774 = vmatprep.subr.mxu0 0.0
      %775 = vmatpush1.msra.mxu0 0.0
      %776 = vmatprep.subr.mxu0 0.0
      %777 = vmatpush1.msra.mxu0 0.0
      %778 = vmatprep.subr.mxu0 0.0
      %779 = vmatpush1.msra.mxu0 0.0
      %780 = vmatprep.subr.mxu0 0.0
      %781 = vmatpush1.msra.mxu0 0.0
      %782 = vmatprep.subr.mxu0 0.0
      %783 = vmatpush1.msra.mxu0 0.0
      %784 = vmatprep.subr.mxu0 0.0
      %785 = vmatpush1.msra.mxu0 0.0
      %786 = vmatprep.subr.mxu0 0.0
      %787 = vmatpush1.msra.mxu0 0.0
      %788 = vmatprep.subr.mxu0 0.0
      %789 = vmatpush1.msra.mxu0 0.0
      %790 = vmatprep.subr.mxu0 0.0
      %791 = vmatpush1.msra.mxu0 0.0
      %792 = vmatprep.subr.mxu0 0.0
      %793 = vmatpush1.msra.mxu0 0.0
      %794 = vmatprep.subr.mxu0 0.0
      %795 = vmatpush1.msra.mxu0 0.0
      %796 = vmatprep.subr.mxu0 0.0
      %797 = vmatpush1.msra.mxu0 0.0
      %798 = vmatprep.subr.mxu0 0.0
      %799 = vmatpush1.msra.mxu0 0.0
      %800 = vmatprep.subr.mxu0 0.0
      %801 = vmatpush1.msra.mxu0 0.0
      %802 = vmatprep.subr.mxu0 0.0
      %803 = vmatpush1.msra.mxu0 0.0
      %804 = vmatprep.subr.mxu0 0.0
      %805 = vmatpush1.msra.mxu0 0.0
      %806 = vmatprep.subr.mxu0 0.0
      %807 = vmatpush1.msra.mxu0 0.0
      %808 = vmatprep.subr.mxu0 0.0
      %809 = vmatpush1.msra.mxu0 0.0
      %810 = vmatprep.subr.mxu0 0.0
      %811 = vmatpush1.msra.mxu0 0.0
      %812 = vmatprep.subr.mxu0 0.0
      %813 = vmatpush1.msra.mxu0 0.0
      %814 = vmatprep.subr.mxu0 0.0
      %815 = vmatpush1.msra.mxu0 0.0
      %816 = vmatprep.subr.mxu0 0.0
      %817 = vmatpush1.msra.mxu0 0.0
      %818 = vmatprep.subr.mxu0 0.0
      %819 = vmatpush1.msra.mxu0 0.0
      %820 = vmatprep.subr.mxu0 0.0
      %821 = vmatpush1.msra.mxu0 0.0
      %822 = vmatprep.subr.mxu0 0.0
      %823 = vmatpush1.msra.mxu0 0.0
      %824 = vmatprep.subr.mxu0 0.0
      %825 = vmatpush1.msra.mxu0 0.0
      %826 = vmatprep.subr.mxu0 0.0
      %827 = vmatpush1.msra.mxu0 0.0
      %828 = vmatprep.subr.mxu0 0.0
      %829 = vmatpush1.msra.mxu0 0.0
      %830 = vmatprep.subr.mxu0 0.0
      %831 = vmatpush1.msra.mxu0 0.0
      %832 = vmatprep.mubr.f32.mxu0 0.0
      %833 = vmatmul.mubr.f32.gmra.mrb[0].mxu0 %v669
      %v834 = vpop.f32.mrb[0].mxu0
      %v835 = vadd.f32 %v665, %v834
      %v836 = vpop.f32.mrb[0].mxu0
      %837 = vmatprep.mubr.f32.mxu0 0.0
      %838 = vmatmul.mubr.f32.gmra.mrb[0].mxu0 %v672
      %v839 = vpop.f32.mrb[0].mxu0
      %v840 = vadd.f32 %v665, %v839
      %v841 = vpop.f32.mrb[0].mxu0
      %842 = vmatprep.mubr.f32.mxu0 0.0
      %843 = vmatmul.mubr.f32.gmra.mrb[0].mxu0 %v675
      %v844 = vpop.f32.mrb[0].mxu0
      %v845 = vadd.f32 %v665, %v844
      %v846 = vpop.f32.mrb[0].mxu0
      %847 = vmatprep.mubr.f32.mxu0 0.0
      %848 = vmatmul.mubr.f32.gmra.mrb[0].mxu0 %v678
      %v849 = vpop.f32.mrb[0].mxu0
      %v850 = vadd.f32 %v665, %v849
      %v851 = vpop.f32.mrb[0].mxu0
      %852 = vmatprep.mubr.f32.mxu0 0.0
      %853 = vmatmul.mubr.f32.gmra.mrb[0].mxu0 %v681
      %v854 = vpop.f32.mrb[0].mxu0
      %v855 = vadd.f32 %v665, %v854
      %v856 = vpop.f32.mrb[0].mxu0
      %857 = vmatprep.mubr.f32.mxu0 0.0
      %858 = vmatmul.mubr.f32.gmra.mrb[0].mxu0 %v684
      %v859 = vpop.f32.mrb[0].mxu0
      %v860 = vadd.f32 %v665, %v859
      %v861 = vpop.f32.mrb[0].mxu0
      %862 = vmatprep.mubr.f32.mxu0 0.0
      %863 = vmatmul.mubr.f32.gmra.mrb[0].mxu0 %v687
      %v864 = vpop.f32.mrb[0].mxu0
      %v865 = vadd.f32 %v665, %v864
      %v866 = vpop.f32.mrb[0].mxu0
      %867 = vmatprep.mubr.f32.mxu0 0.0
      %868 = vmatmul.mubr.f32.gmra.mrb[0].mxu0 %v690
      %v869 = vpop.f32.mrb[0].mxu0
      %v870 = vadd.f32 %v665, %v869
      %v871 = vpop.f32.mrb[0].mxu0
      %872 = vmatprep.mubr.f32.mxu0 0.0
      %873 = vmatmul.mubr.f32.gmra.mrb[0].mxu0 %v693
      %v874 = vpop.f32.mrb[0].mxu0
      %v875 = vadd.f32 %v665, %v874
      %v876 = vpop.f32.mrb[0].mxu0
      %877 = vmatprep.mubr.f32.mxu0 0.0
      %878 = vmatmul.mubr.f32.gmra.mrb[0].mxu0 %v696
      %v879 = vpop.f32.mrb[0].mxu0
      %v880 = vadd.f32 %v665, %v879
      %v881 = vpop.f32.mrb[0].mxu0
      %882 = vmatprep.mubr.f32.mxu0 0.0
      %883 = vmatmul.mubr.f32.gmra.mrb[0].mxu0 %v699
      %v884 = vpop.f32.mrb[0].mxu0
      %v885 = vadd.f32 %v665, %v884
      %v886 = vpop.f32.mrb[0].mxu0
      %887 = vmatprep.mubr.f32.mxu0 0.0
      %888 = vmatmul.mubr.f32.gmra.mrb[0].mxu0 %v702
      %v889 = vpop.f32.mrb[0].mxu0
      %v890 = vadd.f32 %v665, %v889
      %v891 = vpop.f32.mrb[0].mxu0
      %892 = vmatprep.mubr.f32.mxu0 0.0
      %893 = vmatmul.mubr.f32.gmra.mrb[0].mxu0 %v705
      %v894 = vpop.f32.mrb[0].mxu0
      %v895 = vadd.f32 %v665, %v894
      %v896 = vpop.f32.mrb[0].mxu0
      %897 = vmatprep.mubr.f32.mxu0 0.0
      %898 = vmatmul.mubr.f32.gmra.mrb[0].mxu0 %v708
      %v899 = vpop.f32.mrb[0].mxu0
      %v900 = vadd.f32 %v665, %v899
      %v901 = vpop.f32.mrb[0].mxu0
      %902 = vmatprep.mubr.f32.mxu0 0.0
      %903 = vmatmul.mubr.f32.gmra.mrb[0].mxu0 %v711
      %v904 = vpop.f32.mrb[0].mxu0
      %v905 = vadd.f32 %v665, %v904
      %v906 = vpop.f32.mrb[0].mxu0
      %907 = vmatprep.mubr.f32.mxu0 0.0
      %908 = vmatmul.mubr.f32.gmra.mrb[0].mxu0 %v714
      %v909 = vpop.f32.mrb[0].mxu0
      %v910 = vadd.f32 %v665, %v909
      %v911 = vpop.f32.mrb[0].mxu0
      %912 = vmatprep.mubr.f32.mxu0 0.0
      %913 = vmatmul.mubr.f32.gmra.mrb[0].mxu0 %v717
      %v914 = vpop.f32.mrb[0].mxu0
      %v915 = vadd.f32 %v665, %v914
      %v916 = vpop.f32.mrb[0].mxu0
      %917 = vmatprep.mubr.f32.mxu0 0.0
      %918 = vmatmul.mubr.f32.gmra.mrb[0].mxu0 %v720
      %v919 = vpop.f32.mrb[0].mxu0
      %v920 = vadd.f32 %v665, %v919
      %v921 = vpop.f32.mrb[0].mxu0
      %922 = vmatprep.mubr.f32.mxu0 0.0
      %923 = vmatmul.mubr.f32.gmra.mrb[0].mxu0 %v723
      %v924 = vpop.f32.mrb[0].mxu0
      %v925 = vadd.f32 %v665, %v924
      %v926 = vpop.f32.mrb[0].mxu0
      %927 = vmatprep.mubr.f32.mxu0 0.0
      %928 = vmatmul.mubr.f32.gmra.mrb[0].mxu0 %v726
      %v929 = vpop.f32.mrb[0].mxu0
      %v930 = vadd.f32 %v665, %v929
      %v931 = vpop.f32.mrb[0].mxu0
      %932 = vmatprep.mubr.f32.mxu0 0.0
      %933 = vmatmul.mubr.f32.gmra.mrb[0].mxu0 %v729
      %v934 = vpop.f32.mrb[0].mxu0
      %v935 = vadd.f32 %v665, %v934
      %v936 = vpop.f32.mrb[0].mxu0
      %937 = vmatprep.mubr.f32.mxu0 0.0
      %938 = vmatmul.mubr.f32.gmra.mrb[0].mxu0 %v732
      %v939 = vpop.f32.mrb[0].mxu0
      %v940 = vadd.f32 %v665, %v939
      %v941 = vpop.f32.mrb[0].mxu0
      %942 = vmatprep.mubr.f32.mxu0 0.0
      %943 = vmatmul.mubr.f32.gmra.mrb[0].mxu0 %v735
      %v944 = vpop.f32.mrb[0].mxu0
      %v945 = vadd.f32 %v665, %v944
      %v946 = vpop.f32.mrb[0].mxu0
      %947 = vmatprep.mubr.f32.mxu0 0.0
      %948 = vmatmul.mubr.f32.gmra.mrb[0].mxu0 %v738
      %v949 = vpop.f32.mrb[0].mxu0
      %v950 = vadd.f32 %v665, %v949
      %v951 = vpop.f32.mrb[0].mxu0
      %952 = vmatprep.mubr.f32.mxu0 0.0
      %953 = vmatmul.mubr.f32.gmra.mrb[0].mxu0 %v741
      %v954 = vpop.f32.mrb[0].mxu0
      %v955 = vadd.f32 %v665, %v954
      %v956 = vpop.f32.mrb[0].mxu0
      %957 = vmatprep.mubr.f32.mxu0 0.0
      %958 = vmatmul.mubr.f32.gmra.mrb[0].mxu0 %v744
      %v959 = vpop.f32.mrb[0].mxu0
      %v960 = vadd.f32 %v665, %v959
      %v961 = vpop.f32.mrb[0].mxu0
      %962 = vmatprep.mubr.f32.mxu0 0.0
      %963 = vmatmul.mubr.f32.gmra.mrb[0].mxu0 %v747
      %v964 = vpop.f32.mrb[0].mxu0
      %v965 = vadd.f32 %v665, %v964
      %v966 = vpop.f32.mrb[0].mxu0
      %967 = vmatprep.mubr.f32.mxu0 0.0
      %968 = vmatmul.mubr.f32.gmra.mrb[0].mxu0 %v750
      %v969 = vpop.f32.mrb[0].mxu0
      %v970 = vadd.f32 %v665, %v969
      %v971 = vpop.f32.mrb[0].mxu0
      %972 = vmatprep.mubr.f32.mxu0 0.0
      %973 = vmatmul.mubr.f32.gmra.mrb[0].mxu0 %v753
      %v974 = vpop.f32.mrb[0].mxu0
      %v975 = vadd.f32 %v665, %v974
      %v976 = vpop.f32.mrb[0].mxu0
      %977 = vmatprep.mubr.f32.mxu0 0.0
      %978 = vmatmul.mubr.f32.gmra.mrb[0].mxu0 %v756
      %v979 = vpop.f32.mrb[0].mxu0
      %v980 = vadd.f32 %v665, %v979
      %v981 = vpop.f32.mrb[0].mxu0
      %982 = vmatprep.mubr.f32.mxu0 0.0
      %983 = vmatmul.mubr.f32.gmra.mrb[0].mxu0 %v759
      %v984 = vpop.f32.mrb[0].mxu0
      %v985 = vadd.f32 %v665, %v984
      %v986 = vpop.f32.mrb[0].mxu0
      %987 = vmatprep.mubr.f32.mxu0 0.0
      %988 = vmatmul.mubr.f32.gmra.mrb[0].mxu0 %v762
      %v989 = vpop.f32.mrb[0].mxu0
      %v990 = vadd.f32 %v665, %v989
      %v991 = vpop.f32.mrb[0].mxu0
      %992 = vdwg.mxu0
      %v993 = vmax.f32 %v835, 0.0
      %v994 = vmax.f32 %v840, 0.0
      %v995 = vmax.f32 %v845, 0.0
      %v996 = vmax.f32 %v850, 0.0
      %v997 = vmax.f32 %v855, 0.0
      %v998 = vmax.f32 %v860, 0.0
      %v999 = vmax.f32 %v865, 0.0
      %v1000 = vmax.f32 %v870, 0.0
      %v1001 = vmax.f32 %v875, 0.0
      %v1002 = vmax.f32 %v880, 0.0
      %v1003 = vmax.f32 %v885, 0.0
      %v1004 = vmax.f32 %v890, 0.0
      %v1005 = vmax.f32 %v895, 0.0
      %v1006 = vmax.f32 %v900, 0.0
      %v1007 = vmax.f32 %v905, 0.0
      %v1008 = vmax.f32 %v910, 0.0
      %v1009 = vmax.f32 %v915, 0.0
      %v1010 = vmax.f32 %v920, 0.0
      %v1011 = vmax.f32 %v925, 0.0
      %v1012 = vmax.f32 %v930, 0.0
      %v1013 = vmax.f32 %v935, 0.0
      %v1014 = vmax.f32 %v940, 0.0
      %v1015 = vmax.f32 %v945, 0.0
      %v1016 = vmax.f32 %v950, 0.0
      %v1017 = vmax.f32 %v955, 0.0
      %v1018 = vmax.f32 %v960, 0.0
      %v1019 = vmax.f32 %v965, 0.0
      %v1020 = vmax.f32 %v970, 0.0
      %v1021 = vmax.f32 %v975, 0.0
      %v1022 = vmax.f32 %v980, 0.0
      %v1023 = vmax.f32 %v985, 0.0
      %v1024 = vmax.f32 %v990, 0.0
      %1025 = vst [vmem:[%s170] sm:$0xff] %v993
      %1026 = vst [vmem:[%s170 + $0x8] sm:$0xff] %v994
      %1027 = vst [vmem:[%s170 + $0x10] sm:$0xff] %v995
      %1028 = vst [vmem:[%s170 + $0x18] sm:$0xff] %v996
      %1029 = vst [vmem:[%s170 + $0x20] sm:$0xff] %v997
      %1030 = vst [vmem:[%s170 + $0x28] sm:$0xff] %v998
      %1031 = vst [vmem:[%s170 + $0x30] sm:$0xff] %v999
      %1032 = vst [vmem:[%s170 + $0x38] sm:$0xff] %v1000
      %1033 = vst [vmem:[%s170 + $0x40] sm:$0xff] %v1001
      %1034 = vst [vmem:[%s170 + $0x48] sm:$0xff] %v1002
      %1035 = vst [vmem:[%s170 + $0x50] sm:$0xff] %v1003
      %1036 = vst [vmem:[%s170 + $0x58] sm:$0xff] %v1004
      %1037 = vst [vmem:[%s170 + $0x60] sm:$0xff] %v1005
      %1038 = vst [vmem:[%s170 + $0x68] sm:$0xff] %v1006
      %1039 = vst [vmem:[%s170 + $0x70] sm:$0xff] %v1007
      %1040 = vst [vmem:[%s170 + $0x78] sm:$0xff] %v1008
      %1041 = vst [vmem:[%s170 + $0x80] sm:$0xff] %v1009
      %1042 = vst [vmem:[%s170 + $0x88] sm:$0xff] %v1010
      %1043 = vst [vmem:[%s170 + $0x90] sm:$0xff] %v1011
      %1044 = vst [vmem:[%s170 + $0x98] sm:$0xff] %v1012
      %1045 = vst [vmem:[%s170 + $0xa0] sm:$0xff] %v1013
      %1046 = vst [vmem:[%s170 + $0xa8] sm:$0xff] %v1014
      %1047 = vst [vmem:[%s170 + $0xb0] sm:$0xff] %v1015
      %1048 = vst [vmem:[%s170 + $0xb8] sm:$0xff] %v1016
      %1049 = vst [vmem:[%s170 + $0xc0] sm:$0xff] %v1017
      %1050 = vst [vmem:[%s170 + $0xc8] sm:$0xff] %v1018
      %1051 = vst [vmem:[%s170 + $0xd0] sm:$0xff] %v1019
      %1052 = vst [vmem:[%s170 + $0xd8] sm:$0xff] %v1020
      %1053 = vst [vmem:[%s170 + $0xe0] sm:$0xff] %v1021
      %1054 = vst [vmem:[%s170 + $0xe8] sm:$0xff] %v1022
      %1055 = vst [vmem:[%s170 + $0xf0] sm:$0xff] %v1023
      %1056 = vst [vmem:[%s170 + $0xf8] sm:$0xff] %v1024
      %p1057 = scmp.lt.s32.totalorder %s14, 1
      %s1058 = scalar_select %p1057, %s14, 1
      %s1059 = smul.addr %s1058, 32
      %s1060 = smul.addr %s1059, 8
      %s1061 = scalar_lea.vmem %s3, %s1060
      // Predicated region
      $region33: #{inception_forward.9} parent=31 // pred_check
        %p1062 = pneg %p100
      $region34: #{inception_forward.9} parent=31 // pred_check_branch
        %1064 = sbr.rel (%p1062) target = $region36
      $region35: #{inception_forward.9} parent=31 // pred_region
        _
      $region36: #{inception_forward.9} parent=31 // pred_fallthru
        _
    $region32: #{inception_forward.9} parent=5 // pred_fallthru
      _
    %p1065 = scmp.le.s32.totalorder 2, %s9
    // Predicated region
    $region37: #{inception_forward.9} parent=5 // pred_check
      %p1066 = pneg %p1065
    $region38: #{inception_forward.9} parent=5 // pred_check_branch
      %1068 = sbr.rel (%p1066) target = $region40
    $region39: #{inception_forward.9} parent=5 // pred_region
      %s1069 = ssub.s32 %s9, 2
      // Predicated region
      $region41: #{inception_forward.9} parent=39 // pred_check
        %p1070 = pneg %p106
      $region42: #{inception_forward.9} parent=39 // pred_check_branch
        %1072 = sbr.rel (%p1070) target = $region44
      $region43: #{inception_forward.9} parent=39 // pred_region
        %p1073 = scmp.lt.s32.totalorder %s15, 1
        %s1074 = scalar_select %p1073, %s15, 1
        %s1075 = smul.addr %s1074, 32
        %s1076 = smul.addr %s1075, 8
        %s1077 = scalar_lea.vmem %s3, %s1076
      $region44: #{inception_forward.9} parent=39 // pred_fallthru
        _
    $region40: #{inception_forward.9} parent=5 // pred_fallthru
      _
  $region6: #{inception_forward.9} parent=0 // loop_footer
    %s13 = sadd.s32 1, %s9
  $region7: #{inception_forward.9} parent=0 // loop_footer_branch
    %8 = sbr.rel target = $region3
  $region8: #{inception_forward.9} parent=0 // loop_exit
    _

// kernel: inception_forward.7
$region0: #{inception_forward.7}
  #allocation0 [shape = 'u32[]', space=smem, size = 0x4, offset = 0x4, fixed_abs, tag = 'smem constant byte address 0x4 - core index']
  #allocation1 [shape = 'u32[144,128]{1,0:T(1,128)}', space=vmem, size = 0x12000, scoped, tag = 'internal scratch']
  %s0 = inlined_call_operand.vmem [shape: f32[2,18,18,4], index: 0, kind: input, shape index: {}]
  %s1 = inlined_call_operand.vmem [shape: f32[9,4,128], index: 1, kind: input, shape index: {}]
  %s2 = inlined_call_operand.vmem [shape: f32[1,128], index: 2, kind: input, shape index: {}]
  %s3 = inlined_call_operand.vmem [shape: f32[2,16,16,128], index: 3, kind: output, shape index: {}]
  %s4 = sld [smem:[#allocation0]]
  $region45: #{inception_forward.7} parent=0
    _
  %s6 = ssub.s32 1, %s4
  %s7 = scalar_select 0, %s6, %s4
  loop: start=0, step=1, limit=4
  $region2: #{inception_forward.7} parent=0 // loop_pre_header
    _
  $region3: #{inception_forward.7} parent=0 // loop_header
    %s9 = sphi 0, %s13
    %p10 = scmp.ge.s32.totalorder %s9, 4
    %s19 = sphi 0, %s21
    %s22 = sphi 0, %s19
    %s23 = sphi 0, %s22
    %s39 = sphi 0, %s23
    %s43 = sphi 0, %s43
    %s45 = sphi 0, %s43
    %s46 = sphi 0, %s45
    %s60 = sphi 0, %s46
    %s64 = sphi 0, %s64
    %s66 = sphi 0, %s64
    %s67 = sphi 0, %s66
    %s81 = sphi 0, %s67
    %s87 = sphi 0, %s89
    %s90 = sphi 0, %s87
    %s91 = sphi 0, %s90
    %s107 = sphi 0, %s91
  $region4: #{inception_forward.7} parent=0 // loop_header_branch
    %12 = sbr.rel (%p10) target = $region8
  $region5: #{inception_forward.7} parent=0 // loop_body
    %s14 = ssub.s32 %s9, 1
    %s15 = ssub.s32 %s9, 2
    %s16 = sadd.s32 %s9, 1
    %s17 = ssub.s32 %s9, %s16
    %p18 = scmp.eq.s32.totalorder %s17, 0
    %s20 = sadd.s32 %s19, 1
    %s21 = scalar_select %p18, %s19, %s20
    %p24 = pneg %p18
    %p25 = scmp.eq.s32.totalorder %s9, 1
    %p26 = por %p24, %p25
    %p27 = scmp.ne.s32.totalorder %s19, %s22
    %p28 = scmp.eq.s32.totalorder %s9, 0
    %p29 = por %p27, %p28
    %p30 = scmp.ne.s32.totalorder %s19, %s22
    %p31 = scmp.eq.s32.totalorder %s14, 1
    %p32 = por %p30, %p31
    %p33 = scmp.ne.s32.totalorder %s22, %s23
    %p34 = scmp.eq.s32.totalorder %s14, 0
    %p35 = por %p33, %p34
    %p36 = scmp.ne.s32.totalorder %s22, %s23
    %p37 = scmp.eq.s32.totalorder %s15, 1
    %p38 = por %p36, %p37
    %p40 = scmp.ne.s32.totalorder %s23, %s39
    %p41 = scmp.eq.s32.totalorder %s15, 0
    %p42 = por %p40, %p41
    %s44 = sadd.s32 %s43, 1
    %p47 = scmp.eq.s32.totalorder %s9, 1
    %p48 = scmp.ne.s32.totalorder %s43, %s45
    %p49 = scmp.eq.s32.totalorder %s9, 0
    %p50 = por %p48, %p49
    %p51 = scmp.ne.s32.totalorder %s43, %s45
    %p52 = scmp.eq.s32.totalorder %s14, 1
    %p53 = por %p51, %p52
    %p54 = scmp.ne.s32.totalorder %s45, %s46
    %p55 = scmp.eq.s32.totalorder %s14, 0
    %p56 = por %p54, %p55
    %p57 = scmp.ne.s32.totalorder %s45, %s46
    %p58 = scmp.eq.s32.totalorder %s15, 1
    %p59 = por %p57, %p58
    %p61 = scmp.ne.s32.totalorder %s46, %s60
    %p62 = scmp.eq.s32.totalorder %s15, 0
    %p63 = por %p61, %p62
    %s65 = sadd.s32 %s64, 1
    %p68 = scmp.eq.s32.totalorder %s9, 1
    %p69 = scmp.ne.s32.totalorder %s64, %s66
    %p70 = scmp.eq.s32.totalorder %s9, 0
    %p71 = por %p69, %p70
    %p72 = scmp.ne.s32.totalorder %s64, %s66
    %p73 = scmp.eq.s32.totalorder %s14, 1
    %p74 = por %p72, %p73
    %p75 = scmp.ne.s32.totalorder %s66, %s67
    %p76 = scmp.eq.s32.totalorder %s14, 0
    %p77 = por %p75, %p76
    %p78 = scmp.ne.s32.totalorder %s66, %s67
    %p79 = scmp.eq.s32.totalorder %s15, 1
    %p80 = por %p78, %p79
    %p82 = scmp.ne.s32.totalorder %s67, %s81
    %p83 = scmp.eq.s32.totalorder %s15, 0
    %p84 = por %p82, %p83
    %s85 = ssub.s32 %s9, %s16
    %p86 = scmp.eq.s32.totalorder %s85, 0
    %s88 = sadd.s32 %s87, 1
    %s89 = scalar_select %p86, %s87, %s88
    %p92 = pneg %p86
    %p93 = scmp.eq.s32.totalorder %s9, 1
    %p94 = por %p92, %p93
    %p95 = scmp.ne.s32.totalorder %s87, %s90
    %p96 = scmp.eq.s32.totalorder %s9, 0
    %p97 = por %p95, %p96
    %p98 = scmp.ne.s32.totalorder %s87, %s90
    %p99 = scmp.eq.s32.totalorder %s14, 1
    %p100 = por %p98, %p99
    %p101 = scmp.ne.s32.totalorder %s90, %s91
    %p102 = scmp.eq.s32.totalorder %s14, 0
    %p103 = por %p101, %p102
    %p104 = scmp.ne.s32.totalorder %s90, %s91
    %p105 = scmp.eq.s32.totalorder %s15, 1
    %p106 = por %p104, %p105
    %p108 = scmp.ne.s32.totalorder %s91, %s107
    %p109 = scmp.eq.s32.totalorder %s15, 0
    %p110 = por %p108, %p109
    %p111 = scmp.le.s32.totalorder 1, %s9
    %p112 = scmp.lt.s32.totalorder %s9, 3
    %p113 = pnand %p111, %p112
    %p114 = pneg %p113
    // Predicated region
    $region9: #{inception_forward.7} parent=5 // pred_check
      _
    $region10: #{inception_forward.7} parent=5 // pred_check_branch
      %116 = sbr.rel (%p113) target = $region12
    $region11: #{inception_forward.7} parent=5 // pred_region
      %s117 = ssub.s32 %s9, 1
      // Predicated region
      $region13: #{inception_forward.7} parent=11 // pred_check
        %p118 = pneg %p56
      $region14: #{inception_forward.7} parent=11 // pred_check_branch
        %120 = sbr.rel (%p118) target = $region16
      $region15: #{inception_forward.7} parent=11 // pred_region
        _
      $region16: #{inception_forward.7} parent=11 // pred_fallthru
        _
      // Predicated region
      $region17: #{inception_forward.7} parent=11 // pred_check
        %p121 = pneg %p77
      $region18: #{inception_forward.7} parent=11 // pred_check_branch
        %123 = sbr.rel (%p121) target = $region20
      $region19: #{inception_forward.7} parent=11 // pred_region
        _
      $region20: #{inception_forward.7} parent=11 // pred_fallthru
        _
    $region12: #{inception_forward.7} parent=5 // pred_fallthru
      _
    %p124 = scmp.lt.s32.totalorder %s9, 2
    // Predicated region
    $region21: #{inception_forward.7} parent=5 // pred_check
      %p125 = pneg %p124
    $region22: #{inception_forward.7} parent=5 // pred_check_branch
      %127 = sbr.rel (%p125) target = $region24
    $region23: #{inception_forward.7} parent=5 // pred_region
      // Predicated region
      $region25: #{inception_forward.7} parent=23 // pred_check
        %p128 = pneg %p29
      $region26: #{inception_forward.7} parent=23 // pred_check_branch
        %130 = sbr.rel (%p128) target = $region28
      $region27: #{inception_forward.7} parent=23 // pred_region
        %p131 = scmp.lt.s32.totalorder %s9, 1
        %s132 = scalar_select %p131, %s9, 1
        %s133 = smul.addr %s132, 54
        %s134 = smul.addr %s133, 8
        %s135 = scalar_lea.vmem %s0, %s134
      $region28: #{inception_forward.7} parent=23 // pred_fallthru
        _
    $region24: #{inception_forward.7} parent=5 // pred_fallthru
      _
    %p136 = scmp.le.s32.totalorder 1, %s9
    %p137 = scmp.lt.s32.totalorder %s9, 3
    %p138 = pnand %p136, %p137
    %p139 = pneg %p138
    // Predicated region
    $region29: #{inception_forward.7} parent=5 // pred_check
      _
    $region30: #{inception_forward.7} parent=5 // pred_check_branch
      %141 = sbr.rel (%p138) target = $region32
    $region31: #{inception_forward.7} parent=5 // pred_region
      %s142 = ssub.s32 %s9, 1
      %p143 = scmp.lt.s32.totalorder %s14, 1
      %s144 = scalar_select %p143, %s14, 1
      %s145 = smul.addr %s144, 54
      %s146 = smul.addr %s145, 8
      %s147 = scalar_lea.vmem %s0, %s146
      %p148 = pneg %p35
      %p149 = pneg %p32
      %p150 = pneg %p56
      %p151 = pneg %p53
      %p152 = pneg %p77
      %p153 = pneg %p74
      %p154 = pneg %p103
      %p155 = pneg %p100
      %p156 = scmp.lt.s32.totalorder %s14, 1
      %s157 = scalar_select %p156, %s14, 1
      %s158 = smul.addr %s157, 32
      %s159 = smul.addr %s158, 8
      %s160 = scalar_lea.vmem %s3, %s159
      %p161 = scmp.lt.s32.totalorder %s14, 1
      %s162 = scalar_select %p161, %s14, 1
      %s163 = smul.addr %s162, 54
      %s164 = smul.addr %s163, 8
      %s165 = scalar_lea.vmem %s0, %s164
      %p166 = scmp.lt.s32.totalorder %s14, 1
      %s167 = scalar_select %p166, %s14, 1
      %s168 = smul.addr %s167, 32
      %s169 = smul.addr %s168, 8
      %s170 = scalar_lea.vmem %s3, %s169
      %v171 = vld [vmem:[%s165] sm:$0xff]
      %v172 = vld [vmem:[%s165 + $0x8] sm:$0xff]
      %v173 = vld [vmem:[%s165 + $0x18] sm:$0xff]
      %v174 = vld [vmem:[%s165 + $0x20] sm:$0xff]
      %v175 = vld [vmem:[%s165 + $0x30] sm:$0xff]
      %v176 = vld [vmem:[%s165 + $0x38] sm:$0xff]
      %v177 = vld [vmem:[%s165 + $0x48] sm:$0xff]
      %v178 = vld [vmem:[%s165 + $0x50] sm:$0xff]
      %v179 = vld [vmem:[%s165 + $0x60] sm:$0xff]
      %v180 = vld [vmem:[%s165 + $0x68] sm:$0xff]
      %v181 = vld [vmem:[%s165 + $0x78] sm:$0xff]
      %v182 = vld [vmem:[%s165 + $0x80] sm:$0xff]
      %v183 = vld [vmem:[%s165 + $0x90] sm:$0xff]
      %v184 = vld [vmem:[%s165 + $0x98] sm:$0xff]
      %v185 = vld [vmem:[%s165 + $0xa8] sm:$0xff]
      %v186 = vld [vmem:[%s165 + $0xb0] sm:$0xff]
      %v187 = vld [vmem:[%s165 + $0xc0] sm:$0xff]
      %v188 = vld [vmem:[%s165 + $0xc8] sm:$0xff]
      %v189 = vld [vmem:[%s165 + $0xd8] sm:$0xff]
      %v190 = vld [vmem:[%s165 + $0xe0] sm:$0xff]
      %v191 = vld [vmem:[%s165 + $0xf0] sm:$0xff]
      %v192 = vld [vmem:[%s165 + $0xf8] sm:$0xff]
      %v193 = vld [vmem:[%s165 + $0x108] sm:$0xff]
      %v194 = vld [vmem:[%s165 + $0x110] sm:$0xff]
      %v195 = vld [vmem:[%s165 + $0x120] sm:$0xff]
      %v196 = vld [vmem:[%s165 + $0x128] sm:$0xff]
      %v197 = vld [vmem:[%s165 + $0x138] sm:$0xff]
      %v198 = vld [vmem:[%s165 + $0x140] sm:$0xff]
      %v199 = vld [vmem:[%s165 + $0x150] sm:$0xff]
      %v200 = vld [vmem:[%s165 + $0x158] sm:$0xff]
      %v201 = vld [vmem:[%s165 + $0x168] sm:$0xff]
      %v202 = vld [vmem:[%s165 + $0x170] sm:$0xff]
      %v203 = vld [vmem:[%s1] sm:$0xf]
      %v204 = vld [vmem:[%s165 + $0x1] sm:$0xff]
      %v205 = vld [vmem:[%s165 + $0x9] sm:$0xff]
      %v206 = vld [vmem:[%s165 + $0x19] sm:$0xff]
      %v207 = vld [vmem:[%s165 + $0x21] sm:$0xff]
      %v208 = vld [vmem:[%s165 + $0x31] sm:$0xff]
      %v209 = vld [vmem:[%s165 + $0x39] sm:$0xff]
      %v210 = vld [vmem:[%s165 + $0x49] sm:$0xff]
      %v211 = vld [vmem:[%s165 + $0x51] sm:$0xff]
      %v212 = vld [vmem:[%s165 + $0x61] sm:$0xff]
      %v213 = vld [vmem:[%s165 + $0x69] sm:$0xff]
      %v214 = vld [vmem:[%s165 + $0x79] sm:$0xff]
      %v215 = vld [vmem:[%s165 + $0x81] sm:$0xff]
      %v216 = vld [vmem:[%s165 + $0x91] sm:$0xff]
      %v217 = vld [vmem:[%s165 + $0x99] sm:$0xff]
      %v218 = vld [vmem:[%s165 + $0xa9] sm:$0xff]
      %v219 = vld [vmem:[%s165 + $0xb1] sm:$0xff]
      %v220 = vld [vmem:[%s165 + $0xc1] sm:$0xff]
      %v221 = vld [vmem:[%s165 + $0xc9] sm:$0xff]
      %v222 = vld [vmem:[%s165 + $0xd9] sm:$0xff]
      %v223 = vld [vmem:[%s165 + $0xe1] sm:$0xff]
      %v224 = vld [vmem:[%s165 + $0xf1] sm:$0xff]
      %v225 = vld [vmem:[%s165 + $0xf9] sm:$0xff]
      %v226 = vld [vmem:[%s165 + $0x109] sm:$0xff]
      %v227 = vld [vmem:[%s165 + $0x111] sm:$0xff]
      %v228 = vld [vmem:[%s165 + $0x121] sm:$0xff]
      %v229 = vld [vmem:[%s165 + $0x129] sm:$0xff]
      %v230 = vld [vmem:[%s165 + $0x139] sm:$0xff]
      %v231 = vld [vmem:[%s165 + $0x141] sm:$0xff]
      %v232 = vld [vmem:[%s165 + $0x151] sm:$0xff]
      %v233 = vld [vmem:[%s165 + $0x159] sm:$0xff]
      %v234 = vld [vmem:[%s165 + $0x169] sm:$0xff]
      %v235 = vld [vmem:[%s165 + $0x171] sm:$0xff]
      %s236 = scalar_lea.vmem %s1, 4
      %v237 = vld [vmem:[%s236] sm:$0xf]
      %vm238 = vcmask 31744
      %v240 = vsel %vm238, %v204, 0
      %v243 = vsel %vm238, %v205, 0
      %v246 = vsel %vm238, %v206, 0
      %v249 = vsel %vm238, %v207, 0
      %v252 = vsel %vm238, %v208, 0
      %v255 = vsel %vm238, %v209, 0
      %v258 = vsel %vm238, %v210, 0
      %v261 = vsel %vm238, %v211, 0
      %v264 = vsel %vm238, %v212, 0
      %v267 = vsel %vm238, %v213, 0
      %v270 = vsel %vm238, %v214, 0
      %v273 = vsel %vm238, %v215, 0
      %v276 = vsel %vm238, %v216, 0
      %v279 = vsel %vm238, %v217, 0
      %v282 = vsel %vm238, %v218, 0
      %v285 = vsel %vm238, %v219, 0
      %v288 = vsel %vm238, %v220, 0
      %v291 = vsel %vm238, %v221, 0
      %v294 = vsel %vm238, %v222, 0
      %v297 = vsel %vm238, %v223, 0
      %v300 = vsel %vm238, %v224, 0
      %v303 = vsel %vm238, %v225, 0
      %v306 = vsel %vm238, %v226, 0
      %v309 = vsel %vm238, %v227, 0
      %v312 = vsel %vm238, %v228, 0
      %v315 = vsel %vm238, %v229, 0
      %v318 = vsel %vm238, %v230, 0
      %v321 = vsel %vm238, %v231, 0
      %v324 = vsel %vm238, %v232, 0
      %v327 = vsel %vm238, %v233, 0
      %v330 = vsel %vm238, %v234, 0
      %v333 = vsel %vm238, %v235, 0
      %vm335 = vcmask 1043456
      %v337 = vsel %vm335, %v237, 0
      %339 = vmatprep.subr.mxu0 0.0
      %340 = vmatpush1.msra.mxu0 %v337
      %341 = vmatprep.subr.mxu0 0.0
      %342 = vmatpush1.msra.mxu0 0.0
      %343 = vmatprep.subr.mxu0 0.0
      %344 = vmatpush1.msra.mxu0 0.0
      %345 = vmatprep.subr.mxu0 0.0
      %346 = vmatpush1.msra.mxu0 0.0
      %347 = vmatprep.subr.mxu0 0.0
      %348 = vmatpush1.msra.mxu0 0.0
      %349 = vmatprep.subr.mxu0 0.0
      %350 = vmatpush1.msra.mxu0 0.0
      %351 = vmatprep.subr.mxu0 0.0
      %352 = vmatpush1.msra.mxu0 0.0
      %353 = vmatprep.subr.mxu0 0.0
      %354 = vmatpush1.msra.mxu0 0.0
      %355 = vmatprep.subr.mxu0 0.0
      %356 = vmatpush1.msra.mxu0 0.0
      %357 = vmatprep.subr.mxu0 0.0
      %358 = vmatpush1.msra.mxu0 0.0
      %359 = vmatprep.subr.mxu0 0.0
      %360 = vmatpush1.msra.mxu0 0.0
      %361 = vmatprep.subr.mxu0 0.0
      %362 = vmatpush1.msra.mxu0 0.0
      %363 = vmatprep.subr.mxu0 0.0
      %364 = vmatpush1.msra.mxu0 0.0
      %365 = vmatprep.subr.mxu0 0.0
      %366 = vmatpush1.msra.mxu0 0.0
      %367 = vmatprep.subr.mxu0 0.0
      %368 = vmatpush1.msra.mxu0 0.0
      %369 = vmatprep.subr.mxu0 0.0
      %370 = vmatpush1.msra.mxu0 0.0
      %371 = vmatprep.subr.mxu0 0.0
      %372 = vmatpush1.msra.mxu0 0.0
      %373 = vmatprep.subr.mxu0 0.0
      %374 = vmatpush1.msra.mxu0 0.0
      %375 = vmatprep.subr.mxu0 0.0
      %376 = vmatpush1.msra.mxu0 0.0
      %377 = vmatprep.subr.mxu0 0.0
      %378 = vmatpush1.msra.mxu0 0.0
      %379 = vmatprep.subr.mxu0 0.0
      %380 = vmatpush1.msra.mxu0 0.0
      %381 = vmatprep.subr.mxu0 0.0
      %382 = vmatpush1.msra.mxu0 0.0
      %383 = vmatprep.subr.mxu0 0.0
      %384 = vmatpush1.msra.mxu0 0.0
      %385 = vmatprep.subr.mxu0 0.0
      %386 = vmatpush1.msra.mxu0 0.0
      %387 = vmatprep.subr.mxu0 0.0
      %388 = vmatpush1.msra.mxu0 0.0
      %389 = vmatprep.subr.mxu0 0.0
      %390 = vmatpush1.msra.mxu0 0.0
      %391 = vmatprep.subr.mxu0 0.0
      %392 = vmatpush1.msra.mxu0 0.0
      %393 = vmatprep.subr.mxu0 0.0
      %394 = vmatpush1.msra.mxu0 0.0
      %395 = vmatprep.subr.mxu0 0.0
      %396 = vmatpush1.msra.mxu0 0.0
      %397 = vmatprep.subr.mxu0 0.0
      %398 = vmatpush1.msra.mxu0 0.0
      %399 = vmatprep.subr.mxu0 0.0
      %400 = vmatpush1.msra.mxu0 0.0
      %401 = vmatprep.subr.mxu0 0.0
      %402 = vmatpush1.msra.mxu0 0.0
      %403 = vmatprep.mubr.f32.mxu0 0.0
      %404 = vmatmul.mubr.f32.gmra.mrb[0].mxu0 %v240
      %v405 = vpop.f32.mrb[0].mxu0
      %v406 = vadd.f32 0.0, %v405
      %v407 = vpop.f32.mrb[0].mxu0
      %408 = vmatprep.mubr.f32.mxu0 0.0
      %409 = vmatmul.mubr.f32.gmra.mrb[0].mxu0 %v243
      %v410 = vpop.f32.mrb[0].mxu0
      %v411 = vadd.f32 0.0, %v410
      %v412 = vpop.f32.mrb[0].mxu0
      %413 = vmatprep.mubr.f32.mxu0 0.0
      %414 = vmatmul.mubr.f32.gmra.mrb[0].mxu0 %v246
      %v415 = vpop.f32.mrb[0].mxu0
      %v416 = vadd.f32 0.0, %v415
      %v417 = vpop.f32.mrb[0].mxu0
      %418 = vmatprep.mubr.f32.mxu0 0.0
      %419 = vmatmul.mubr.f32.gmra.mrb[0].mxu0 %v249
      %v420 = vpop.f32.mrb[0].mxu0
      %v421 = vadd.f32 0.0, %v420
      %v422 = vpop.f32.mrb[0].mxu0
      %423 = vmatprep.mubr.f32.mxu0 0.0
      %424 = vmatmul.mubr.f32.gmra.mrb[0].mxu0 %v252
      %v425 = vpop.f32.mrb[0].mxu0
      %v426 = vadd.f32 0.0, %v425
      %v427 = vpop.f32.mrb[0].mxu0
      %428 = vmatprep.mubr.f32.mxu0 0.0
      %429 = vmatmul.mubr.f32.gmra.mrb[0].mxu0 %v255
      %v430 = vpop.f32.mrb[0].mxu0
      %v431 = vadd.f32 0.0, %v430
      %v432 = vpop.f32.mrb[0].mxu0
      %433 = vmatprep.mubr.f32.mxu0 0.0
      %434 = vmatmul.mubr.f32.gmra.mrb[0].mxu0 %v258
      %v435 = vpop.f32.mrb[0].mxu0
      %v436 = vadd.f32 0.0, %v435
      %v437 = vpop.f32.mrb[0].mxu0
      %438 = vmatprep.mubr.f32.mxu0 0.0
      %439 = vmatmul.mubr.f32.gmra.mrb[0].mxu0 %v261
      %v440 = vpop.f32.mrb[0].mxu0
      %v441 = vadd.f32 0.0, %v440
      %v442 = vpop.f32.mrb[0].mxu0
      %443 = vmatprep.mubr.f32.mxu0 0.0
      %444 = vmatmul.mubr.f32.gmra.mrb[0].mxu0 %v264
      %v445 = vpop.f32.mrb[0].mxu0
      %v446 = vadd.f32 0.0, %v445
      %v447 = vpop.f32.mrb[0].mxu0
      %448 = vmatprep.mubr.f32.mxu0 0.0
      %449 = vmatmul.mubr.f32.gmra.mrb[0].mxu0 %v267
      %v450 = vpop.f32.mrb[0].mxu0
      %v451 = vadd.f32 0.0, %v450
      %v452 = vpop.f32.mrb[0].mxu0
      %453 = vmatprep.mubr.f32.mxu0 0.0
      %454 = vmatmul.mubr.f32.gmra.mrb[0].mxu0 %v270
      %v455 = vpop.f32.mrb[0].mxu0
      %v456 = vadd.f32 0.0, %v455
      %v457 = vpop.f32.mrb[0].mxu0
      %458 = vmatprep.mubr.f32.mxu0 0.0
      %459 = vmatmul.mubr.f32.gmra.mrb[0].mxu0 %v273
      %v460 = vpop.f32.mrb[0].mxu0
      %v461 = vadd.f32 0.0, %v460
      %v462 = vpop.f32.mrb[0].mxu0
      %463 = vmatprep.mubr.f32.mxu0 0.0
      %464 = vmatmul.mubr.f32.gmra.mrb[0].mxu0 %v276
      %v465 = vpop.f32.mrb[0].mxu0
      %v466 = vadd.f32 0.0, %v465
      %v467 = vpop.f32.mrb[0].mxu0
      %468 = vmatprep.mubr.f32.mxu0 0.0
      %469 = vmatmul.mubr.f32.gmra.mrb[0].mxu0 %v279
      %v470 = vpop.f32.mrb[0].mxu0
      %v471 = vadd.f32 0.0, %v470
      %v472 = vpop.f32.mrb[0].mxu0
      %473 = vmatprep.mubr.f32.mxu0 0.0
      %474 = vmatmul.mubr.f32.gmra.mrb[0].mxu0 %v282
      %v475 = vpop.f32.mrb[0].mxu0
      %v476 = vadd.f32 0.0, %v475
      %v477 = vpop.f32.mrb[0].mxu0
      %478 = vmatprep.mubr.f32.mxu0 0.0
      %479 = vmatmul.mubr.f32.gmra.mrb[0].mxu0 %v285
      %v480 = vpop.f32.mrb[0].mxu0
      %v481 = vadd.f32 0.0, %v480
      %v482 = vpop.f32.mrb[0].mxu0
      %483 = vmatprep.mubr.f32.mxu0 0.0
      %484 = vmatmul.mubr.f32.gmra.mrb[0].mxu0 %v288
      %v485 = vpop.f32.mrb[0].mxu0
      %v486 = vadd.f32 0.0, %v485
      %v487 = vpop.f32.mrb[0].mxu0
      %488 = vmatprep.mubr.f32.mxu0 0.0
      %489 = vmatmul.mubr.f32.gmra.mrb[0].mxu0 %v291
      %v490 = vpop.f32.mrb[0].mxu0
      %v491 = vadd.f32 0.0, %v490
      %v492 = vpop.f32.mrb[0].mxu0
      %493 = vmatprep.mubr.f32.mxu0 0.0
      %494 = vmatmul.mubr.f32.gmra.mrb[0].mxu0 %v294
      %v495 = vpop.f32.mrb[0].mxu0
      %v496 = vadd.f32 0.0, %v495
      %v497 = vpop.f32.mrb[0].mxu0
      %498 = vmatprep.mubr.f32.mxu0 0.0
      %499 = vmatmul.mubr.f32.gmra.mrb[0].mxu0 %v297
      %v500 = vpop.f32.mrb[0].mxu0
      %v501 = vadd.f32 0.0, %v500
      %v502 = vpop.f32.mrb[0].mxu0
      %503 = vmatprep.mubr.f32.mxu0 0.0
      %504 = vmatmul.mubr.f32.gmra.mrb[0].mxu0 %v300
      %v505 = vpop.f32.mrb[0].mxu0
      %v506 = vadd.f32 0.0, %v505
      %v507 = vpop.f32.mrb[0].mxu0
      %508 = vmatprep.mubr.f32.mxu0 0.0
      %509 = vmatmul.mubr.f32.gmra.mrb[0].mxu0 %v303
      %v510 = vpop.f32.mrb[0].mxu0
      %v511 = vadd.f32 0.0, %v510
      %v512 = vpop.f32.mrb[0].mxu0
      %513 = vmatprep.mubr.f32.mxu0 0.0
      %514 = vmatmul.mubr.f32.gmra.mrb[0].mxu0 %v306
      %v515 = vpop.f32.mrb[0].mxu0
      %v516 = vadd.f32 0.0, %v515
      %v517 = vpop.f32.mrb[0].mxu0
      %518 = vmatprep.mubr.f32.mxu0 0.0
      %519 = vmatmul.mubr.f32.gmra.mrb[0].mxu0 %v309
      %v520 = vpop.f32.mrb[0].mxu0
      %v521 = vadd.f32 0.0, %v520
      %v522 = vpop.f32.mrb[0].mxu0
      %523 = vmatprep.mubr.f32.mxu0 0.0
      %524 = vmatmul.mubr.f32.gmra.mrb[0].mxu0 %v312
      %v525 = vpop.f32.mrb[0].mxu0
      %v526 = vadd.f32 0.0, %v525
      %v527 = vpop.f32.mrb[0].mxu0
      %528 = vmatprep.mubr.f32.mxu0 0.0
      %529 = vmatmul.mubr.f32.gmra.mrb[0].mxu0 %v315
      %v530 = vpop.f32.mrb[0].mxu0
      %v531 = vadd.f32 0.0, %v530
      %v532 = vpop.f32.mrb[0].mxu0
      %533 = vmatprep.mubr.f32.mxu0 0.0
      %534 = vmatmul.mubr.f32.gmra.mrb[0].mxu0 %v318
      %v535 = vpop.f32.mrb[0].mxu0
      %v536 = vadd.f32 0.0, %v535
      %v537 = vpop.f32.mrb[0].mxu0
      %538 = vmatprep.mubr.f32.mxu0 0.0
      %539 = vmatmul.mubr.f32.gmra.mrb[0].mxu0 %v321
      %v540 = vpop.f32.mrb[0].mxu0
      %v541 = vadd.f32 0.0, %v540
      %v542 = vpop.f32.mrb[0].mxu0
      %543 = vmatprep.mubr.f32.mxu0 0.0
      %544 = vmatmul.mubr.f32.gmra.mrb[0].mxu0 %v324
      %v545 = vpop.f32.mrb[0].mxu0
      %v546 = vadd.f32 0.0, %v545
      %v547 = vpop.f32.mrb[0].mxu0
      %548 = vmatprep.mubr.f32.mxu0 0.0
      %549 = vmatmul.mubr.f32.gmra.mrb[0].mxu0 %v327
      %v550 = vpop.f32.mrb[0].mxu0
      %v551 = vadd.f32 0.0, %v550
      %v552 = vpop.f32.mrb[0].mxu0
      %553 = vmatprep.mubr.f32.mxu0 0.0
      %554 = vmatmul.mubr.f32.gmra.mrb[0].mxu0 %v330
      %v555 = vpop.f32.mrb[0].mxu0
      %v556 = vadd.f32 0.0, %v555
      %v557 = vpop.f32.mrb[0].mxu0
      %558 = vmatprep.mubr.f32.mxu0 0.0
      %559 = vmatmul.mubr.f32.gmra.mrb[0].mxu0 %v333
      %v560 = vpop.f32.mrb[0].mxu0
      %v561 = vadd.f32 0.0, %v560
      %v562 = vpop.f32.mrb[0].mxu0
      %563 = vdwg.mxu0
      %v565 = vsel %vm238, %v171, 0
      %v568 = vsel %vm238, %v172, 0
      %v571 = vsel %vm238, %v173, 0
      %v574 = vsel %vm238, %v174, 0
      %v577 = vsel %vm238, %v175, 0
      %v580 = vsel %vm238, %v176, 0
      %v583 = vsel %vm238, %v177, 0
      %v586 = vsel %vm238, %v178, 0
      %v589 = vsel %vm238, %v179, 0
      %v592 = vsel %vm238, %v180, 0
      %v595 = vsel %vm238, %v181, 0
      %v598 = vsel %vm238, %v182, 0
      %v601 = vsel %vm238, %v183, 0
      %v604 = vsel %vm238, %v184, 0
      %v607 = vsel %vm238, %v185, 0
      %v610 = vsel %vm238, %v186, 0
      %v613 = vsel %vm238, %v187, 0
      %v616 = vsel %vm238, %v188, 0
      %v619 = vsel %vm238, %v189, 0
      %v622 = vsel %vm238, %v190, 0
      %v625 = vsel %vm238, %v191, 0
      %v628 = vsel %vm238, %v192, 0
      %v631 = vsel %vm238, %v193, 0
      %v634 = vsel %vm238, %v194, 0
      %v637 = vsel %vm238, %v195, 0
      %v640 = vsel %vm238, %v196, 0
      %v643 = vsel %vm238, %v197, 0
      %v646 = vsel %vm238, %v198, 0
      %v649 = vsel %vm238, %v199, 0
      %v652 = vsel %vm238, %v200, 0
      %v655 = vsel %vm238, %v201, 0
      %v658 = vsel %vm238, %v202, 0
      %v661 = vsel %vm335, %v203, 0
      %663 = vmatprep.subr.mxu0 0.0
      %664 = vmatpush1.msra.mxu0 %v661
      %665 = vmatprep.subr.mxu0 0.0
      %666 = vmatpush1.msra.mxu0 0.0
      %667 = vmatprep.subr.mxu0 0.0
      %668 = vmatpush1.msra.mxu0 0.0
      %669 = vmatprep.subr.mxu0 0.0
      %670 = vmatpush1.msra.mxu0 0.0
      %671 = vmatprep.subr.mxu0 0.0
      %672 = vmatpush1.msra.mxu0 0.0
      %673 = vmatprep.subr.mxu0 0.0
      %674 = vmatpush1.msra.mxu0 0.0
      %675 = vmatprep.subr.mxu0 0.0
      %676 = vmatpush1.msra.mxu0 0.0
      %677 = vmatprep.subr.mxu0 0.0
      %678 = vmatpush1.msra.mxu0 0.0
      %679 = vmatprep.subr.mxu0 0.0
      %680 = vmatpush1.msra.mxu0 0.0
      %681 = vmatprep.subr.mxu0 0.0
      %682 = vmatpush1.msra.mxu0 0.0
      %683 = vmatprep.subr.mxu0 0.0
      %684 = vmatpush1.msra.mxu0 0.0
      %685 = vmatprep.subr.mxu0 0.0
      %686 = vmatpush1.msra.mxu0 0.0
      %687 = vmatprep.subr.mxu0 0.0
      %688 = vmatpush1.msra.mxu0 0.0
      %689 = vmatprep.subr.mxu0 0.0
      %690 = vmatpush1.msra.mxu0 0.0
      %691 = vmatprep.subr.mxu0 0.0
      %692 = vmatpush1.msra.mxu0 0.0
      %693 = vmatprep.subr.mxu0 0.0
      %694 = vmatpush1.msra.mxu0 0.0
      %695 = vmatprep.subr.mxu0 0.0
      %696 = vmatpush1.msra.mxu0 0.0
      %697 = vmatprep.subr.mxu0 0.0
      %698 = vmatpush1.msra.mxu0 0.0
      %699 = vmatprep.subr.mxu0 0.0
      %700 = vmatpush1.msra.mxu0 0.0
      %701 = vmatprep.subr.mxu0 0.0
      %702 = vmatpush1.msra.mxu0 0.0
      %703 = vmatprep.subr.mxu0 0.0
      %704 = vmatpush1.msra.mxu0 0.0
      %705 = vmatprep.subr.mxu0 0.0
      %706 = vmatpush1.msra.mxu0 0.0
      %707 = vmatprep.subr.mxu0 0.0
      %708 = vmatpush1.msra.mxu0 0.0
      %709 = vmatprep.subr.mxu0 0.0
      %710 = vmatpush1.msra.mxu0 0.0
      %711 = vmatprep.subr.mxu0 0.0
      %712 = vmatpush1.msra.mxu0 0.0
      %713 = vmatprep.subr.mxu0 0.0
      %714 = vmatpush1.msra.mxu0 0.0
      %715 = vmatprep.subr.mxu0 0.0
      %716 = vmatpush1.msra.mxu0 0.0
      %717 = vmatprep.subr.mxu0 0.0
      %718 = vmatpush1.msra.mxu0 0.0
      %719 = vmatprep.subr.mxu0 0.0
      %720 = vmatpush1.msra.mxu0 0.0
      %721 = vmatprep.subr.mxu0 0.0
      %722 = vmatpush1.msra.mxu0 0.0
      %723 = vmatprep.subr.mxu0 0.0
      %724 = vmatpush1.msra.mxu0 0.0
      %725 = vmatprep.subr.mxu0 0.0
      %726 = vmatpush1.msra.mxu0 0.0
      %727 = vmatprep.mubr.f32.mxu0 0.0
      %728 = vmatmul.mubr.f32.gmra.mrb[0].mxu0 %v565
      %v729 = vpop.f32.mrb[0].mxu0
      %v730 = vadd.f32 %v406, %v729
      %v731 = vpop.f32.mrb[0].mxu0
      %732 = vmatprep.mubr.f32.mxu0 0.0
      %733 = vmatmul.mubr.f32.gmra.mrb[0].mxu0 %v568
      %v734 = vpop.f32.mrb[0].mxu0
      %v735 = vadd.f32 %v411, %v734
      %v736 = vpop.f32.mrb[0].mxu0
      %737 = vmatprep.mubr.f32.mxu0 0.0
      %738 = vmatmul.mubr.f32.gmra.mrb[0].mxu0 %v571
      %v739 = vpop.f32.mrb[0].mxu0
      %v740 = vadd.f32 %v416, %v739
      %v741 = vpop.f32.mrb[0].mxu0
      %742 = vmatprep.mubr.f32.mxu0 0.0
      %743 = vmatmul.mubr.f32.gmra.mrb[0].mxu0 %v574
      %v744 = vpop.f32.mrb[0].mxu0
      %v745 = vadd.f32 %v421, %v744
      %v746 = vpop.f32.mrb[0].mxu0
      %747 = vmatprep.mubr.f32.mxu0 0.0
      %748 = vmatmul.mubr.f32.gmra.mrb[0].mxu0 %v577
      %v749 = vpop.f32.mrb[0].mxu0
      %v750 = vadd.f32 %v426, %v749
      %v751 = vpop.f32.mrb[0].mxu0
      %752 = vmatprep.mubr.f32.mxu0 0.0
      %753 = vmatmul.mubr.f32.gmra.mrb[0].mxu0 %v580
      %v754 = vpop.f32.mrb[0].mxu0
      %v755 = vadd.f32 %v431, %v754
      %v756 = vpop.f32.mrb[0].mxu0
      %757 = vmatprep.mubr.f32.mxu0 0.0
      %758 = vmatmul.mubr.f32.gmra.mrb[0].mxu0 %v583
      %v759 = vpop.f32.mrb[0].mxu0
      %v760 = vadd.f32 %v436, %v759
      %v761 = vpop.f32.mrb[0].mxu0
      %762 = vmatprep.mubr.f32.mxu0 0.0
      %763 = vmatmul.mubr.f32.gmra.mrb[0].mxu0 %v586
      %v764 = vpop.f32.mrb[0].mxu0
      %v765 = vadd.f32 %v441, %v764
      %v766 = vpop.f32.mrb[0].mxu0
      %767 = vmatprep.mubr.f32.mxu0 0.0
      %768 = vmatmul.mubr.f32.gmra.mrb[0].mxu0 %v589
      %v769 = vpop.f32.mrb[0].mxu0
      %v770 = vadd.f32 %v446, %v769
      %v771 = vpop.f32.mrb[0].mxu0
      %772 = vmatprep.mubr.f32.mxu0 0.0
      %773 = vmatmul.mubr.f32.gmra.mrb[0].mxu0 %v592
      %v774 = vpop.f32.mrb[0].mxu0
      %v775 = vadd.f32 %v451, %v774
      %v776 = vpop.f32.mrb[0].mxu0
      %777 = vmatprep.mubr.f32.mxu0 0.0
      %778 = vmatmul.mubr.f32.gmra.mrb[0].mxu0 %v595
      %v779 = vpop.f32.mrb[0].mxu0
      %v780 = vadd.f32 %v456, %v779
      %v781 = vpop.f32.mrb[0].mxu0
      %782 = vmatprep.mubr.f32.mxu0 0.0
      %783 = vmatmul.mubr.f32.gmra.mrb[0].mxu0 %v598
      %v784 = vpop.f32.mrb[0].mxu0
      %v785 = vadd.f32 %v461, %v784
      %v786 = vpop.f32.mrb[0].mxu0
      %787 = vmatprep.mubr.f32.mxu0 0.0
      %788 = vmatmul.mubr.f32.gmra.mrb[0].mxu0 %v601
      %v789 = vpop.f32.mrb[0].mxu0
      %v790 = vadd.f32 %v466, %v789
      %v791 = vpop.f32.mrb[0].mxu0
      %792 = vmatprep.mubr.f32.mxu0 0.0
      %793 = vmatmul.mubr.f32.gmra.mrb[0].mxu0 %v604
      %v794 = vpop.f32.mrb[0].mxu0
      %v795 = vadd.f32 %v471, %v794
      %v796 = vpop.f32.mrb[0].mxu0
      %797 = vmatprep.mubr.f32.mxu0 0.0
      %798 = vmatmul.mubr.f32.gmra.mrb[0].mxu0 %v607
      %v799 = vpop.f32.mrb[0].mxu0
      %v800 = vadd.f32 %v476, %v799
      %v801 = vpop.f32.mrb[0].mxu0
      %802 = vmatprep.mubr.f32.mxu0 0.0
      %803 = vmatmul.mubr.f32.gmra.mrb[0].mxu0 %v610
      %v804 = vpop.f32.mrb[0].mxu0
      %v805 = vadd.f32 %v481, %v804
      %v806 = vpop.f32.mrb[0].mxu0
      %807 = vmatprep.mubr.f32.mxu0 0.0
      %808 = vmatmul.mubr.f32.gmra.mrb[0].mxu0 %v613
      %v809 = vpop.f32.mrb[0].mxu0
      %v810 = vadd.f32 %v486, %v809
      %v811 = vpop.f32.mrb[0].mxu0
      %812 = vmatprep.mubr.f32.mxu0 0.0
      %813 = vmatmul.mubr.f32.gmra.mrb[0].mxu0 %v616
      %v814 = vpop.f32.mrb[0].mxu0
      %v815 = vadd.f32 %v491, %v814
      %v816 = vpop.f32.mrb[0].mxu0
      %817 = vmatprep.mubr.f32.mxu0 0.0
      %818 = vmatmul.mubr.f32.gmra.mrb[0].mxu0 %v619
      %v819 = vpop.f32.mrb[0].mxu0
      %v820 = vadd.f32 %v496, %v819
      %v821 = vpop.f32.mrb[0].mxu0
      %822 = vmatprep.mubr.f32.mxu0 0.0
      %823 = vmatmul.mubr.f32.gmra.mrb[0].mxu0 %v622
      %v824 = vpop.f32.mrb[0].mxu0
      %v825 = vadd.f32 %v501, %v824
      %v826 = vpop.f32.mrb[0].mxu0
      %827 = vmatprep.mubr.f32.mxu0 0.0
      %828 = vmatmul.mubr.f32.gmra.mrb[0].mxu0 %v625
      %v829 = vpop.f32.mrb[0].mxu0
      %v830 = vadd.f32 %v506, %v829
      %v831 = vpop.f32.mrb[0].mxu0
      %832 = vmatprep.mubr.f32.mxu0 0.0
      %833 = vmatmul.mubr.f32.gmra.mrb[0].mxu0 %v628
      %v834 = vpop.f32.mrb[0].mxu0
      %v835 = vadd.f32 %v511, %v834
      %v836 = vpop.f32.mrb[0].mxu0
      %837 = vmatprep.mubr.f32.mxu0 0.0
      %838 = vmatmul.mubr.f32.gmra.mrb[0].mxu0 %v631
      %v839 = vpop.f32.mrb[0].mxu0
      %v840 = vadd.f32 %v516, %v839
      %v841 = vpop.f32.mrb[0].mxu0
      %842 = vmatprep.mubr.f32.mxu0 0.0
      %843 = vmatmul.mubr.f32.gmra.mrb[0].mxu0 %v634
      %v844 = vpop.f32.mrb[0].mxu0
      %v845 = vadd.f32 %v521, %v844
      %v846 = vpop.f32.mrb[0].mxu0
      %847 = vmatprep.mubr.f32.mxu0 0.0
      %848 = vmatmul.mubr.f32.gmra.mrb[0].mxu0 %v637
      %v849 = vpop.f32.mrb[0].mxu0
      %v850 = vadd.f32 %v526, %v849
      %v851 = vpop.f32.mrb[0].mxu0
      %852 = vmatprep.mubr.f32.mxu0 0.0
      %853 = vmatmul.mubr.f32.gmra.mrb[0].mxu0 %v640
      %v854 = vpop.f32.mrb[0].mxu0
      %v855 = vadd.f32 %v531, %v854
      %v856 = vpop.f32.mrb[0].mxu0
      %857 = vmatprep.mubr.f32.mxu0 0.0
      %858 = vmatmul.mubr.f32.gmra.mrb[0].mxu0 %v643
      %v859 = vpop.f32.mrb[0].mxu0
      %v860 = vadd.f32 %v536, %v859
      %v861 = vpop.f32.mrb[0].mxu0
      %862 = vmatprep.mubr.f32.mxu0 0.0
      %863 = vmatmul.mubr.f32.gmra.mrb[0].mxu0 %v646
      %v864 = vpop.f32.mrb[0].mxu0
      %v865 = vadd.f32 %v541, %v864
      %v866 = vpop.f32.mrb[0].mxu0
      %867 = vmatprep.mubr.f32.mxu0 0.0
      %868 = vmatmul.mubr.f32.gmra.mrb[0].mxu0 %v649
      %v869 = vpop.f32.mrb[0].mxu0
      %v870 = vadd.f32 %v546, %v869
      %v871 = vpop.f32.mrb[0].mxu0
      %872 = vmatprep.mubr.f32.mxu0 0.0
      %873 = vmatmul.mubr.f32.gmra.mrb[0].mxu0 %v652
      %v874 = vpop.f32.mrb[0].mxu0
      %v875 = vadd.f32 %v551, %v874
      %v876 = vpop.f32.mrb[0].mxu0
      %877 = vmatprep.mubr.f32.mxu0 0.0
      %878 = vmatmul.mubr.f32.gmra.mrb[0].mxu0 %v655
      %v879 = vpop.f32.mrb[0].mxu0
      %v880 = vadd.f32 %v556, %v879
      %v881 = vpop.f32.mrb[0].mxu0
      %882 = vmatprep.mubr.f32.mxu0 0.0
      %883 = vmatmul.mubr.f32.gmra.mrb[0].mxu0 %v658
      %v884 = vpop.f32.mrb[0].mxu0
      %v885 = vadd.f32 %v561, %v884
      %v886 = vpop.f32.mrb[0].mxu0
      %887 = vdwg.mxu0
      %v888 = vld [vmem:[%s165 + $0x2] sm:$0xff]
      %v889 = vld [vmem:[%s165 + $0xa] sm:$0xff]
      %v890 = vld [vmem:[%s165 + $0x1a] sm:$0xff]
      %v891 = vld [vmem:[%s165 + $0x22] sm:$0xff]
      %v892 = vld [vmem:[%s165 + $0x32] sm:$0xff]
      %v893 = vld [vmem:[%s165 + $0x3a] sm:$0xff]
      %v894 = vld [vmem:[%s165 + $0x4a] sm:$0xff]
      %v895 = vld [vmem:[%s165 + $0x52] sm:$0xff]
      %v896 = vld [vmem:[%s165 + $0x62] sm:$0xff]
      %v897 = vld [vmem:[%s165 + $0x6a] sm:$0xff]
      %v898 = vld [vmem:[%s165 + $0x7a] sm:$0xff]
      %v899 = vld [vmem:[%s165 + $0x82] sm:$0xff]
      %v900 = vld [vmem:[%s165 + $0x92] sm:$0xff]
      %v901 = vld [vmem:[%s165 + $0x9a] sm:$0xff]
      %v902 = vld [vmem:[%s165 + $0xaa] sm:$0xff]
      %v903 = vld [vmem:[%s165 + $0xb2] sm:$0xff]
      %v904 = vld [vmem:[%s165 + $0xc2] sm:$0xff]
      %v905 = vld [vmem:[%s165 + $0xca] sm:$0xff]
      %v906 = vld [vmem:[%s165 + $0xda] sm:$0xff]
      %v907 = vld [vmem:[%s165 + $0xe2] sm:$0xff]
      %v908 = vld [vmem:[%s165 + $0xf2] sm:$0xff]
      %v909 = vld [vmem:[%s165 + $0xfa] sm:$0xff]
      %v910 = vld [vmem:[%s165 + $0x10a] sm:$0xff]
      %v911 = vld [vmem:[%s165 + $0x112] sm:$0xff]
      %v912 = vld [vmem:[%s165 + $0x122] sm:$0xff]
      %v913 = vld [vmem:[%s165 + $0x12a] sm:$0xff]
      %v914 = vld [vmem:[%s165 + $0x13a] sm:$0xff]
      %v915 = vld [vmem:[%s165 + $0x142] sm:$0xff]
      %v916 = vld [vmem:[%s165 + $0x152] sm:$0xff]
      %v917 = vld [vmem:[%s165 + $0x15a] sm:$0xff]
      %v918 = vld [vmem:[%s165 + $0x16a] sm:$0xff]
      %v919 = vld [vmem:[%s165 + $0x172] sm:$0xff]
      %s920 = scalar_lea.vmem %s1, 8
      %v921 = vld [vmem:[%s920] sm:$0xf]
      %v923 = vsel %vm238, %v888, 0
      %v926 = vsel %vm238, %v889, 0
      %v929 = vsel %vm238, %v890, 0
      %v932 = vsel %vm238, %v891, 0
      %v935 = vsel %vm238, %v892, 0
      %v938 = vsel %vm238, %v893, 0
      %v941 = vsel %vm238, %v894, 0
      %v944 = vsel %vm238, %v895, 0
      %v947 = vsel %vm238, %v896, 0
      %v950 = vsel %vm238, %v897, 0
      %v953 = vsel %vm238, %v898, 0
      %v956 = vsel %vm238, %v899, 0
      %v959 = vsel %vm238, %v900, 0
      %v962 = vsel %vm238, %v901, 0
      %v965 = vsel %vm238, %v902, 0
      %v968 = vsel %vm238, %v903, 0
      %v971 = vsel %vm238, %v904, 0
      %v974 = vsel %vm238, %v905, 0
      %v977 = vsel %vm238, %v906, 0
      %v980 = vsel %vm238, %v907, 0
      %v983 = vsel %vm238, %v908, 0
      %v986 = vsel %vm238, %v909, 0
      %v989 = vsel %vm238, %v910, 0
      %v992 = vsel %vm238, %v911, 0
      %v995 = vsel %vm238, %v912, 0
      %v998 = vsel %vm238, %v913, 0
      %v1001 = vsel %vm238, %v914, 0
      %v1004 = vsel %vm238, %v915, 0
      %v1007 = vsel %vm238, %v916, 0
      %v1010 = vsel %vm238, %v917, 0
      %v1013 = vsel %vm238, %v918, 0
      %v1016 = vsel %vm238, %v919, 0
      %v1019 = vsel %vm335, %v921, 0
      %1021 = vmatprep.subr.mxu0 0.0
      %1022 = vmatpush1.msra.mxu0 %v1019
      %1023 = vmatprep.subr.mxu0 0.0
      %1024 = vmatpush1.msra.mxu0 0.0
      %1025 = vmatprep.subr.mxu0 0.0
      %1026 = vmatpush1.msra.mxu0 0.0
      %1027 = vmatprep.subr.mxu0 0.0
      %1028 = vmatpush1.msra.mxu0 0.0
      %1029 = vmatprep.subr.mxu0 0.0
      %1030 = vmatpush1.msra.mxu0 0.0
      %1031 = vmatprep.subr.mxu0 0.0
      %1032 = vmatpush1.msra.mxu0 0.0
      %1033 = vmatprep.subr.mxu0 0.0
      %1034 = vmatpush1.msra.mxu0 0.0
      %1035 = vmatprep.subr.mxu0 0.0
      %1036 = vmatpush1.msra.mxu0 0.0
      %1037 = vmatprep.subr.mxu0 0.0
      %1038 = vmatpush1.msra.mxu0 0.0
      %1039 = vmatprep.subr.mxu0 0.0
      %1040 = vmatpush1.msra.mxu0 0.0
      %1041 = vmatprep.subr.mxu0 0.0
      %1042 = vmatpush1.msra.mxu0 0.0
      %1043 = vmatprep.subr.mxu0 0.0
      %1044 = vmatpush1.msra.mxu0 0.0
      %1045 = vmatprep.subr.mxu0 0.0
      %1046 = vmatpush1.msra.mxu0 0.0
      %1047 = vmatprep.subr.mxu0 0.0
      %1048 = vmatpush1.msra.mxu0 0.0
      %1049 = vmatprep.subr.mxu0 0.0
      %1050 = vmatpush1.msra.mxu0 0.0
      %1051 = vmatprep.subr.mxu0 0.0
      %1052 = vmatpush1.msra.mxu0 0.0
      %1053 = vmatprep.subr.mxu0 0.0
      %1054 = vmatpush1.msra.mxu0 0.0
      %1055 = vmatprep.subr.mxu0 0.0
      %1056 = vmatpush1.msra.mxu0 0.0
      %1057 = vmatprep.subr.mxu0 0.0
      %1058 = vmatpush1.msra.mxu0 0.0
      %1059 = vmatprep.subr.mxu0 0.0
      %1060 = vmatpush1.msra.mxu0 0.0
      %1061 = vmatprep.subr.mxu0 0.0
      %1062 = vmatpush1.msra.mxu0 0.0
      %1063 = vmatprep.subr.mxu0 0.0
      %1064 = vmatpush1.msra.mxu0 0.0
      %1065 = vmatprep.subr.mxu0 0.0
      %1066 = vmatpush1.msra.mxu0 0.0
      %1067 = vmatprep.subr.mxu0 0.0
      %1068 = vmatpush1.msra.mxu0 0.0
      %1069 = vmatprep.subr.mxu0 0.0
      %1070 = vmatpush1.msra.mxu0 0.0
      %1071 = vmatprep.subr.mxu0 0.0
      %1072 = vmatpush1.msra.mxu0 0.0
      %1073 = vmatprep.subr.mxu0 0.0
      %1074 = vmatpush1.msra.mxu0 0.0
      %1075 = vmatprep.subr.mxu0 0.0
      %1076 = vmatpush1.msra.mxu0 0.0
      %1077 = vmatprep.subr.mxu0 0.0
      %1078 = vmatpush1.msra.mxu0 0.0
      %1079 = vmatprep.subr.mxu0 0.0
      %1080 = vmatpush1.msra.mxu0 0.0
      %1081 = vmatprep.subr.mxu0 0.0
      %1082 = vmatpush1.msra.mxu0 0.0
      %1083 = vmatprep.subr.mxu0 0.0
      %1084 = vmatpush1.msra.mxu0 0.0
      %1085 = vmatprep.mubr.f32.mxu0 0.0
      %1086 = vmatmul.mubr.f32.gmra.mrb[0].mxu0 %v923
      %v1087 = vpop.f32.mrb[0].mxu0
      %v1088 = vadd.f32 0.0, %v1087
      %v1089 = vpop.f32.mrb[0].mxu0
      %1090 = vmatprep.mubr.f32.mxu0 0.0
      %1091 = vmatmul.mubr.f32.gmra.mrb[0].mxu0 %v926
      %v1092 = vpop.f32.mrb[0].mxu0
      %v1093 = vadd.f32 0.0, %v1092
      %v1094 = vpop.f32.mrb[0].mxu0
      %1095 = vmatprep.mubr.f32.mxu0 0.0
      %1096 = vmatmul.mubr.f32.gmra.mrb[0].mxu0 %v929
      %v1097 = vpop.f32.mrb[0].mxu0
      %v1098 = vadd.f32 0.0, %v1097
      %v1099 = vpop.f32.mrb[0].mxu0
      %1100 = vmatprep.mubr.f32.mxu0 0.0
      %1101 = vmatmul.mubr.f32.gmra.mrb[0].mxu0 %v932
      %v1102 = vpop.f32.mrb[0].mxu0
      %v1103 = vadd.f32 0.0, %v1102
      %v1104 = vpop.f32.mrb[0].mxu0
      %1105 = vmatprep.mubr.f32.mxu0 0.0
      %1106 = vmatmul.mubr.f32.gmra.mrb[0].mxu0 %v935
      %v1107 = vpop.f32.mrb[0].mxu0
      %v1108 = vadd.f32 0.0, %v1107
      %v1109 = vpop.f32.mrb[0].mxu0
      %1110 = vmatprep.mubr.f32.mxu0 0.0
      %1111 = vmatmul.mubr.f32.gmra.mrb[0].mxu0 %v938
      %v1112 = vpop.f32.mrb[0].mxu0
      %v1113 = vadd.f32 0.0, %v1112
      %v1114 = vpop.f32.mrb[0].mxu0
      %1115 = vmatprep.mubr.f32.mxu0 0.0
      %1116 = vmatmul.mubr.f32.gmra.mrb[0].mxu0 %v941
      %v1117 = vpop.f32.mrb[0].mxu0
      %v1118 = vadd.f32 0.0, %v1117
      %v1119 = vpop.f32.mrb[0].mxu0
      %1120 = vmatprep.mubr.f32.mxu0 0.0
      %1121 = vmatmul.mubr.f32.gmra.mrb[0].mxu0 %v944
      %v1122 = vpop.f32.mrb[0].mxu0
      %v1123 = vadd.f32 0.0, %v1122
      %v1124 = vpop.f32.mrb[0].mxu0
      %1125 = vmatprep.mubr.f32.mxu0 0.0
      %1126 = vmatmul.mubr.f32.gmra.mrb[0].mxu0 %v947
      %v1127 = vpop.f32.mrb[0].mxu0
      %v1128 = vadd.f32 0.0, %v1127
      %v1129 = vpop.f32.mrb[0].mxu0
      %1130 = vmatprep.mubr.f32.mxu0 0.0
      %1131 = vmatmul.mubr.f32.gmra.mrb[0].mxu0 %v950
      %v1132 = vpop.f32.mrb[0].mxu0
      %v1133 = vadd.f32 0.0, %v1132
      %v1134 = vpop.f32.mrb[0].mxu0
      %1135 = vmatprep.mubr.f32.mxu0 0.0
      %1136 = vmatmul.mubr.f32.gmra.mrb[0].mxu0 %v953
      %v1137 = vpop.f32.mrb[0].mxu0
      %v1138 = vadd.f32 0.0, %v1137
      %v1139 = vpop.f32.mrb[0].mxu0
      %1140 = vmatprep.mubr.f32.mxu0 0.0
      %1141 = vmatmul.mubr.f32.gmra.mrb[0].mxu0 %v956
      %v1142 = vpop.f32.mrb[0].mxu0
      %v1143 = vadd.f32 0.0, %v1142
      %v1144 = vpop.f32.mrb[0].mxu0
      %1145 = vmatprep.mubr.f32.mxu0 0.0
      %1146 = vmatmul.mubr.f32.gmra.mrb[0].mxu0 %v959
      %v1147 = vpop.f32.mrb[0].mxu0
      %v1148 = vadd.f32 0.0, %v1147
      %v1149 = vpop.f32.mrb[0].mxu0
      %1150 = vmatprep.mubr.f32.mxu0 0.0
      %1151 = vmatmul.mubr.f32.gmra.mrb[0].mxu0 %v962
      %v1152 = vpop.f32.mrb[0].mxu0
      %v1153 = vadd.f32 0.0, %v1152
      %v1154 = vpop.f32.mrb[0].mxu0
      %1155 = vmatprep.mubr.f32.mxu0 0.0
      %1156 = vmatmul.mubr.f32.gmra.mrb[0].mxu0 %v965
      %v1157 = vpop.f32.mrb[0].mxu0
      %v1158 = vadd.f32 0.0, %v1157
      %v1159 = vpop.f32.mrb[0].mxu0
      %1160 = vmatprep.mubr.f32.mxu0 0.0
      %1161 = vmatmul.mubr.f32.gmra.mrb[0].mxu0 %v968
      %v1162 = vpop.f32.mrb[0].mxu0
      %v1163 = vadd.f32 0.0, %v1162
      %v1164 = vpop.f32.mrb[0].mxu0
      %1165 = vmatprep.mubr.f32.mxu0 0.0
      %1166 = vmatmul.mubr.f32.gmra.mrb[0].mxu0 %v971
      %v1167 = vpop.f32.mrb[0].mxu0
      %v1168 = vadd.f32 0.0, %v1167
      %v1169 = vpop.f32.mrb[0].mxu0
      %1170 = vmatprep.mubr.f32.mxu0 0.0
      %1171 = vmatmul.mubr.f32.gmra.mrb[0].mxu0 %v974
      %v1172 = vpop.f32.mrb[0].mxu0
      %v1173 = vadd.f32 0.0, %v1172
      %v1174 = vpop.f32.mrb[0].mxu0
      %1175 = vmatprep.mubr.f32.mxu0 0.0
      %1176 = vmatmul.mubr.f32.gmra.mrb[0].mxu0 %v977
      %v1177 = vpop.f32.mrb[0].mxu0
      %v1178 = vadd.f32 0.0, %v1177
      %v1179 = vpop.f32.mrb[0].mxu0
      %1180 = vmatprep.mubr.f32.mxu0 0.0
      %1181 = vmatmul.mubr.f32.gmra.mrb[0].mxu0 %v980
      %v1182 = vpop.f32.mrb[0].mxu0
      %v1183 = vadd.f32 0.0, %v1182
      %v1184 = vpop.f32.mrb[0].mxu0
      %1185 = vmatprep.mubr.f32.mxu0 0.0
      %1186 = vmatmul.mubr.f32.gmra.mrb[0].mxu0 %v983
      %v1187 = vpop.f32.mrb[0].mxu0
      %v1188 = vadd.f32 0.0, %v1187
      %v1189 = vpop.f32.mrb[0].mxu0
      %1190 = vmatprep.mubr.f32.mxu0 0.0
      %1191 = vmatmul.mubr.f32.gmra.mrb[0].mxu0 %v986
      %v1192 = vpop.f32.mrb[0].mxu0
      %v1193 = vadd.f32 0.0, %v1192
      %v1194 = vpop.f32.mrb[0].mxu0
      %1195 = vmatprep.mubr.f32.mxu0 0.0
      %1196 = vmatmul.mubr.f32.gmra.mrb[0].mxu0 %v989
      %v1197 = vpop.f32.mrb[0].mxu0
      %v1198 = vadd.f32 0.0, %v1197
      %v1199 = vpop.f32.mrb[0].mxu0
      %1200 = vmatprep.mubr.f32.mxu0 0.0
      %1201 = vmatmul.mubr.f32.gmra.mrb[0].mxu0 %v992
      %v1202 = vpop.f32.mrb[0].mxu0
      %v1203 = vadd.f32 0.0, %v1202
      %v1204 = vpop.f32.mrb[0].mxu0
      %1205 = vmatprep.mubr.f32.mxu0 0.0
      %1206 = vmatmul.mubr.f32.gmra.mrb[0].mxu0 %v995
      %v1207 = vpop.f32.mrb[0].mxu0
      %v1208 = vadd.f32 0.0, %v1207
      %v1209 = vpop.f32.mrb[0].mxu0
      %1210 = vmatprep.mubr.f32.mxu0 0.0
      %1211 = vmatmul.mubr.f32.gmra.mrb[0].mxu0 %v998
      %v1212 = vpop.f32.mrb[0].mxu0
      %v1213 = vadd.f32 0.0, %v1212
      %v1214 = vpop.f32.mrb[0].mxu0
      %1215 = vmatprep.mubr.f32.mxu0 0.0
      %1216 = vmatmul.mubr.f32.gmra.mrb[0].mxu0 %v1001
      %v1217 = vpop.f32.mrb[0].mxu0
      %v1218 = vadd.f32 0.0, %v1217
      %v1219 = vpop.f32.mrb[0].mxu0
      %1220 = vmatprep.mubr.f32.mxu0 0.0
      %1221 = vmatmul.mubr.f32.gmra.mrb[0].mxu0 %v1004
      %v1222 = vpop.f32.mrb[0].mxu0
      %v1223 = vadd.f32 0.0, %v1222
      %v1224 = vpop.f32.mrb[0].mxu0
      %1225 = vmatprep.mubr.f32.mxu0 0.0
      %1226 = vmatmul.mubr.f32.gmra.mrb[0].mxu0 %v1007
      %v1227 = vpop.f32.mrb[0].mxu0
      %v1228 = vadd.f32 0.0, %v1227
      %v1229 = vpop.f32.mrb[0].mxu0
      %1230 = vmatprep.mubr.f32.mxu0 0.0
      %1231 = vmatmul.mubr.f32.gmra.mrb[0].mxu0 %v1010
      %v1232 = vpop.f32.mrb[0].mxu0
      %v1233 = vadd.f32 0.0, %v1232
      %v1234 = vpop.f32.mrb[0].mxu0
      %1235 = vmatprep.mubr.f32.mxu0 0.0
      %1236 = vmatmul.mubr.f32.gmra.mrb[0].mxu0 %v1013
      %v1237 = vpop.f32.mrb[0].mxu0
      %v1238 = vadd.f32 0.0, %v1237
      %v1239 = vpop.f32.mrb[0].mxu0
      %1240 = vmatprep.mubr.f32.mxu0 0.0
      %1241 = vmatmul.mubr.f32.gmra.mrb[0].mxu0 %v1016
      %v1242 = vpop.f32.mrb[0].mxu0
      %v1243 = vadd.f32 0.0, %v1242
      %v1244 = vpop.f32.mrb[0].mxu0
      %1245 = vdwg.mxu0
      %v1246 = vadd.f32 %v730, %v1088
      %v1247 = vadd.f32 %v735, %v1093
      %v1248 = vadd.f32 %v740, %v1098
      %v1249 = vadd.f32 %v745, %v1103
      %v1250 = vadd.f32 %v750, %v1108
      %v1251 = vadd.f32 %v755, %v1113
      %v1252 = vadd.f32 %v760, %v1118
      %v1253 = vadd.f32 %v765, %v1123
      %v1254 = vadd.f32 %v770, %v1128
      %v1255 = vadd.f32 %v775, %v1133
      %v1256 = vadd.f32 %v780, %v1138
      %v1257 = vadd.f32 %v785, %v1143
      %v1258 = vadd.f32 %v790, %v1148
      %v1259 = vadd.f32 %v795, %v1153
      %v1260 = vadd.f32 %v800, %v1158
      %v1261 = vadd.f32 %v805, %v1163
      %v1262 = vadd.f32 %v810, %v1168
      %v1263 = vadd.f32 %v815, %v1173
      %v1264 = vadd.f32 %v820, %v1178
      %v1265 = vadd.f32 %v825, %v1183
      %v1266 = vadd.f32 %v830, %v1188
      %v1267 = vadd.f32 %v835, %v1193
      %v1268 = vadd.f32 %v840, %v1198
      %v1269 = vadd.f32 %v845, %v1203
      %v1270 = vadd.f32 %v850, %v1208
      %v1271 = vadd.f32 %v855, %v1213
      %v1272 = vadd.f32 %v860, %v1218
      %v1273 = vadd.f32 %v865, %v1223
      %v1274 = vadd.f32 %v870, %v1228
      %v1275 = vadd.f32 %v875, %v1233
      %v1276 = vadd.f32 %v880, %v1238
      %v1277 = vadd.f32 %v885, %v1243
      %s1278 = scalar_lea.vmem %s165, 24
      %v1279 = vld [vmem:[%s1278] sm:$0xff]
      %v1280 = vld [vmem:[%s1278 + $0x8] sm:$0xff]
      %v1281 = vld [vmem:[%s1278 + $0x18] sm:$0xff]
      %v1282 = vld [vmem:[%s1278 + $0x20] sm:$0xff]
      %v1283 = vld [vmem:[%s1278 + $0x30] sm:$0xff]
      %v1284 = vld [vmem:[%s1278 + $0x38] sm:$0xff]
      %v1285 = vld [vmem:[%s1278 + $0x48] sm:$0xff]
      %v1286 = vld [vmem:[%s1278 + $0x50] sm:$0xff]
      %v1287 = vld [vmem:[%s1278 + $0x60] sm:$0xff]
      %v1288 = vld [vmem:[%s1278 + $0x68] sm:$0xff]
      %v1289 = vld [vmem:[%s1278 + $0x78] sm:$0xff]
      %v1290 = vld [vmem:[%s1278 + $0x80] sm:$0xff]
      %v1291 = vld [vmem:[%s1278 + $0x90] sm:$0xff]
      %v1292 = vld [vmem:[%s1278 + $0x98] sm:$0xff]
      %v1293 = vld [vmem:[%s1278 + $0xa8] sm:$0xff]
      %v1294 = vld [vmem:[%s1278 + $0xb0] sm:$0xff]
      %v1295 = vld [vmem:[%s1278 + $0xc0] sm:$0xff]
      %v1296 = vld [vmem:[%s1278 + $0xc8] sm:$0xff]
      %v1297 = vld [vmem:[%s1278 + $0xd8] sm:$0xff]
      %v1298 = vld [vmem:[%s1278 + $0xe0] sm:$0xff]
      %v1299 = vld [vmem:[%s1278 + $0xf0] sm:$0xff]
      %v1300 = vld [vmem:[%s1278 + $0xf8] sm:$0xff]
      %v1301 = vld [vmem:[%s1278 + $0x108] sm:$0xff]
      %v1302 = vld [vmem:[%s1278 + $0x110] sm:$0xff]
      %v1303 = vld [vmem:[%s1278 + $0x120] sm:$0xff]
      %v1304 = vld [vmem:[%s1278 + $0x128] sm:$0xff]
      %v1305 = vld [vmem:[%s1278 + $0x138] sm:$0xff]
      %v1306 = vld [vmem:[%s1278 + $0x140] sm:$0xff]
      %v1307 = vld [vmem:[%s1278 + $0x150] sm:$0xff]
      %v1308 = vld [vmem:[%s1278 + $0x158] sm:$0xff]
      %v1309 = vld [vmem:[%s1278 + $0x168] sm:$0xff]
      %v1310 = vld [vmem:[%s1278 + $0x170] sm:$0xff]
      %s1311 = scalar_lea.vmem %s1, 12
      %v1312 = vld [vmem:[%s1311] sm:$0xf]
      %v1314 = vsel %vm238, %v1279, 0
      %v1317 = vsel %vm238, %v1280, 0
      %v1320 = vsel %vm238, %v1281, 0
      %v1323 = vsel %vm238, %v1282, 0
      %v1326 = vsel %vm238, %v1283, 0
      %v1329 = vsel %vm238, %v1284, 0
      %v1332 = vsel %vm238, %v1285, 0
      %v1335 = vsel %vm238, %v1286, 0
      %v1338 = vsel %vm238, %v1287, 0
      %v1341 = vsel %vm238, %v1288, 0
      %v1344 = vsel %vm238, %v1289, 0
      %v1347 = vsel %vm238, %v1290, 0
      %v1350 = vsel %vm238, %v1291, 0
      %v1353 = vsel %vm238, %v1292, 0
      %v1356 = vsel %vm238, %v1293, 0
      %v1359 = vsel %vm238, %v1294, 0
      %v1362 = vsel %vm238, %v1295, 0
      %v1365 = vsel %vm238, %v1296, 0
      %v1368 = vsel %vm238, %v1297, 0
      %v1371 = vsel %vm238, %v1298, 0
      %v1374 = vsel %vm238, %v1299, 0
      %v1377 = vsel %vm238, %v1300, 0
      %v1380 = vsel %vm238, %v1301, 0
      %v1383 = vsel %vm238, %v1302, 0
      %v1386 = vsel %vm238, %v1303, 0
      %v1389 = vsel %vm238, %v1304, 0
      %v1392 = vsel %vm238, %v1305, 0
      %v1395 = vsel %vm238, %v1306, 0
      %v1398 = vsel %vm238, %v1307, 0
      %v1401 = vsel %vm238, %v1308, 0
      %v1404 = vsel %vm238, %v1309, 0
      %v1407 = vsel %vm238, %v1310, 0
      %v1410 = vsel %vm335, %v1312, 0
      %1412 = vmatprep.subr.mxu0 0.0
      %1413 = vmatpush1.msra.mxu0 %v1410
      %1414 = vmatprep.subr.mxu0 0.0
      %1415 = vmatpush1.msra.mxu0 0.0
      %1416 = vmatprep.subr.mxu0 0.0
      %1417 = vmatpush1.msra.mxu0 0.0
      %1418 = vmatprep.subr.mxu0 0.0
      %1419 = vmatpush1.msra.mxu0 0.0
      %1420 = vmatprep.subr.mxu0 0.0
      %1421 = vmatpush1.msra.mxu0 0.0
      %1422 = vmatprep.subr.mxu0 0.0
      %1423 = vmatpush1.msra.mxu0 0.0
      %1424 = vmatprep.subr.mxu0 0.0
      %1425 = vmatpush1.msra.mxu0 0.0
      %1426 = vmatprep.subr.mxu0 0.0
      %1427 = vmatpush1.msra.mxu0 0.0
      %1428 = vmatprep.subr.mxu0 0.0
      %1429 = vmatpush1.msra.mxu0 0.0
      %1430 = vmatprep.subr.mxu0 0.0
      %1431 = vmatpush1.msra.mxu0 0.0
      %1432 = vmatprep.subr.mxu0 0.0
      %1433 = vmatpush1.msra.mxu0 0.0
      %1434 = vmatprep.subr.mxu0 0.0
      %1435 = vmatpush1.msra.mxu0 0.0
      %1436 = vmatprep.subr.mxu0 0.0
      %1437 = vmatpush1.msra.mxu0 0.0
      %1438 = vmatprep.subr.mxu0 0.0
      %1439 = vmatpush1.msra.mxu0 0.0
      %1440 = vmatprep.subr.mxu0 0.0
      %1441 = vmatpush1.msra.mxu0 0.0
      %1442 = vmatprep.subr.mxu0 0.0
      %1443 = vmatpush1.msra.mxu0 0.0
      %1444 = vmatprep.subr.mxu0 0.0
      %1445 = vmatpush1.msra.mxu0 0.0
      %1446 = vmatprep.subr.mxu0 0.0
      %1447 = vmatpush1.msra.mxu0 0.0
      %1448 = vmatprep.subr.mxu0 0.0
      %1449 = vmatpush1.msra.mxu0 0.0
      %1450 = vmatprep.subr.mxu0 0.0
      %1451 = vmatpush1.msra.mxu0 0.0
      %1452 = vmatprep.subr.mxu0 0.0
      %1453 = vmatpush1.msra.mxu0 0.0
      %1454 = vmatprep.subr.mxu0 0.0
      %1455 = vmatpush1.msra.mxu0 0.0
      %1456 = vmatprep.subr.mxu0 0.0
      %1457 = vmatpush1.msra.mxu0 0.0
      %1458 = vmatprep.subr.mxu0 0.0
      %1459 = vmatpush1.msra.mxu0 0.0
      %1460 = vmatprep.subr.mxu0 0.0
      %1461 = vmatpush1.msra.mxu0 0.0
      %1462 = vmatprep.subr.mxu0 0.0
      %1463 = vmatpush1.msra.mxu0 0.0
      %1464 = vmatprep.subr.mxu0 0.0
      %1465 = vmatpush1.msra.mxu0 0.0
      %1466 = vmatprep.subr.mxu0 0.0
      %1467 = vmatpush1.msra.mxu0 0.0
      %1468 = vmatprep.subr.mxu0 0.0
      %1469 = vmatpush1.msra.mxu0 0.0
      %1470 = vmatprep.subr.mxu0 0.0
      %1471 = vmatpush1.msra.mxu0 0.0
      %1472 = vmatprep.subr.mxu0 0.0
      %1473 = vmatpush1.msra.mxu0 0.0
      %1474 = vmatprep.subr.mxu0 0.0
      %1475 = vmatpush1.msra.mxu0 0.0
      %1476 = vmatprep.mubr.f32.mxu0 0.0
      %1477 = vmatmul.mubr.f32.gmra.mrb[0].mxu0 %v1314
      %v1478 = vpop.f32.mrb[0].mxu0
      %v1479 = vadd.f32 0.0, %v1478
      %v1480 = vpop.f32.mrb[0].mxu0
      %1481 = vmatprep.mubr.f32.mxu0 0.0
      %1482 = vmatmul.mubr.f32.gmra.mrb[0].mxu0 %v1317
      %v1483 = vpop.f32.mrb[0].mxu0
      %v1484 = vadd.f32 0.0, %v1483
      %v1485 = vpop.f32.mrb[0].mxu0
      %1486 = vmatprep.mubr.f32.mxu0 0.0
      %1487 = vmatmul.mubr.f32.gmra.mrb[0].mxu0 %v1320
      %v1488 = vpop.f32.mrb[0].mxu0
      %v1489 = vadd.f32 0.0, %v1488
      %v1490 = vpop.f32.mrb[0].mxu0
      %1491 = vmatprep.mubr.f32.mxu0 0.0
      %1492 = vmatmul.mubr.f32.gmra.mrb[0].mxu0 %v1323
      %v1493 = vpop.f32.mrb[0].mxu0
      %v1494 = vadd.f32 0.0, %v1493
      %v1495 = vpop.f32.mrb[0].mxu0
      %1496 = vmatprep.mubr.f32.mxu0 0.0
      %1497 = vmatmul.mubr.f32.gmra.mrb[0].mxu0 %v1326
      %v1498 = vpop.f32.mrb[0].mxu0
      %v1499 = vadd.f32 0.0, %v1498
      %v1500 = vpop.f32.mrb[0].mxu0
      %1501 = vmatprep.mubr.f32.mxu0 0.0
      %1502 = vmatmul.mubr.f32.gmra.mrb[0].mxu0 %v1329
      %v1503 = vpop.f32.mrb[0].mxu0
      %v1504 = vadd.f32 0.0, %v1503
      %v1505 = vpop.f32.mrb[0].mxu0
      %1506 = vmatprep.mubr.f32.mxu0 0.0
      %1507 = vmatmul.mubr.f32.gmra.mrb[0].mxu0 %v1332
      %v1508 = vpop.f32.mrb[0].mxu0
      %v1509 = vadd.f32 0.0, %v1508
      %v1510 = vpop.f32.mrb[0].mxu0
      %1511 = vmatprep.mubr.f32.mxu0 0.0
      %1512 = vmatmul.mubr.f32.gmra.mrb[0].mxu0 %v1335
      %v1513 = vpop.f32.mrb[0].mxu0
      %v1514 = vadd.f32 0.0, %v1513
      %v1515 = vpop.f32.mrb[0].mxu0
      %1516 = vmatprep.mubr.f32.mxu0 0.0
      %1517 = vmatmul.mubr.f32.gmra.mrb[0].mxu0 %v1338
      %v1518 = vpop.f32.mrb[0].mxu0
      %v1519 = vadd.f32 0.0, %v1518
      %v1520 = vpop.f32.mrb[0].mxu0
      %1521 = vmatprep.mubr.f32.mxu0 0.0
      %1522 = vmatmul.mubr.f32.gmra.mrb[0].mxu0 %v1341
      %v1523 = vpop.f32.mrb[0].mxu0
      %v1524 = vadd.f32 0.0, %v1523
      %v1525 = vpop.f32.mrb[0].mxu0
      %1526 = vmatprep.mubr.f32.mxu0 0.0
      %1527 = vmatmul.mubr.f32.gmra.mrb[0].mxu0 %v1344
      %v1528 = vpop.f32.mrb[0].mxu0
      %v1529 = vadd.f32 0.0, %v1528
      %v1530 = vpop.f32.mrb[0].mxu0
      %1531 = vmatprep.mubr.f32.mxu0 0.0
      %1532 = vmatmul.mubr.f32.gmra.mrb[0].mxu0 %v1347
      %v1533 = vpop.f32.mrb[0].mxu0
      %v1534 = vadd.f32 0.0, %v1533
      %v1535 = vpop.f32.mrb[0].mxu0
      %1536 = vmatprep.mubr.f32.mxu0 0.0
      %1537 = vmatmul.mubr.f32.gmra.mrb[0].mxu0 %v1350
      %v1538 = vpop.f32.mrb[0].mxu0
      %v1539 = vadd.f32 0.0, %v1538
      %v1540 = vpop.f32.mrb[0].mxu0
      %1541 = vmatprep.mubr.f32.mxu0 0.0
      %1542 = vmatmul.mubr.f32.gmra.mrb[0].mxu0 %v1353
      %v1543 = vpop.f32.mrb[0].mxu0
      %v1544 = vadd.f32 0.0, %v1543
      %v1545 = vpop.f32.mrb[0].mxu0
      %1546 = vmatprep.mubr.f32.mxu0 0.0
      %1547 = vmatmul.mubr.f32.gmra.mrb[0].mxu0 %v1356
      %v1548 = vpop.f32.mrb[0].mxu0
      %v1549 = vadd.f32 0.0, %v1548
      %v1550 = vpop.f32.mrb[0].mxu0
      %1551 = vmatprep.mubr.f32.mxu0 0.0
      %1552 = vmatmul.mubr.f32.gmra.mrb[0].mxu0 %v1359
      %v1553 = vpop.f32.mrb[0].mxu0
      %v1554 = vadd.f32 0.0, %v1553
      %v1555 = vpop.f32.mrb[0].mxu0
      %1556 = vmatprep.mubr.f32.mxu0 0.0
      %1557 = vmatmul.mubr.f32.gmra.mrb[0].mxu0 %v1362
      %v1558 = vpop.f32.mrb[0].mxu0
      %v1559 = vadd.f32 0.0, %v1558
      %v1560 = vpop.f32.mrb[0].mxu0
      %1561 = vmatprep.mubr.f32.mxu0 0.0
      %1562 = vmatmul.mubr.f32.gmra.mrb[0].mxu0 %v1365
      %v1563 = vpop.f32.mrb[0].mxu0
      %v1564 = vadd.f32 0.0, %v1563
      %v1565 = vpop.f32.mrb[0].mxu0
      %1566 = vmatprep.mubr.f32.mxu0 0.0
      %1567 = vmatmul.mubr.f32.gmra.mrb[0].mxu0 %v1368
      %v1568 = vpop.f32.mrb[0].mxu0
      %v1569 = vadd.f32 0.0, %v1568
      %v1570 = vpop.f32.mrb[0].mxu0
      %1571 = vmatprep.mubr.f32.mxu0 0.0
      %1572 = vmatmul.mubr.f32.gmra.mrb[0].mxu0 %v1371
      %v1573 = vpop.f32.mrb[0].mxu0
      %v1574 = vadd.f32 0.0, %v1573
      %v1575 = vpop.f32.mrb[0].mxu0
      %1576 = vmatprep.mubr.f32.mxu0 0.0
      %1577 = vmatmul.mubr.f32.gmra.mrb[0].mxu0 %v1374
      %v1578 = vpop.f32.mrb[0].mxu0
      %v1579 = vadd.f32 0.0, %v1578
      %v1580 = vpop.f32.mrb[0].mxu0
      %1581 = vmatprep.mubr.f32.mxu0 0.0
      %1582 = vmatmul.mubr.f32.gmra.mrb[0].mxu0 %v1377
      %v1583 = vpop.f32.mrb[0].mxu0
      %v1584 = vadd.f32 0.0, %v1583
      %v1585 = vpop.f32.mrb[0].mxu0
      %1586 = vmatprep.mubr.f32.mxu0 0.0
      %1587 = vmatmul.mubr.f32.gmra.mrb[0].mxu0 %v1380
      %v1588 = vpop.f32.mrb[0].mxu0
      %v1589 = vadd.f32 0.0, %v1588
      %v1590 = vpop.f32.mrb[0].mxu0
      %1591 = vmatprep.mubr.f32.mxu0 0.0
      %1592 = vmatmul.mubr.f32.gmra.mrb[0].mxu0 %v1383
      %v1593 = vpop.f32.mrb[0].mxu0
      %v1594 = vadd.f32 0.0, %v1593
      %v1595 = vpop.f32.mrb[0].mxu0
      %1596 = vmatprep.mubr.f32.mxu0 0.0
      %1597 = vmatmul.mubr.f32.gmra.mrb[0].mxu0 %v1386
      %v1598 = vpop.f32.mrb[0].mxu0
      %v1599 = vadd.f32 0.0, %v1598
      %v1600 = vpop.f32.mrb[0].mxu0
      %1601 = vmatprep.mubr.f32.mxu0 0.0
      %1602 = vmatmul.mubr.f32.gmra.mrb[0].mxu0 %v1389
      %v1603 = vpop.f32.mrb[0].mxu0
      %v1604 = vadd.f32 0.0, %v1603
      %v1605 = vpop.f32.mrb[0].mxu0
      %1606 = vmatprep.mubr.f32.mxu0 0.0
      %1607 = vmatmul.mubr.f32.gmra.mrb[0].mxu0 %v1392
      %v1608 = vpop.f32.mrb[0].mxu0
      %v1609 = vadd.f32 0.0, %v1608
      %v1610 = vpop.f32.mrb[0].mxu0
      %1611 = vmatprep.mubr.f32.mxu0 0.0
      %1612 = vmatmul.mubr.f32.gmra.mrb[0].mxu0 %v1395
      %v1613 = vpop.f32.mrb[0].mxu0
      %v1614 = vadd.f32 0.0, %v1613
      %v1615 = vpop.f32.mrb[0].mxu0
      %1616 = vmatprep.mubr.f32.mxu0 0.0
      %1617 = vmatmul.mubr.f32.gmra.mrb[0].mxu0 %v1398
      %v1618 = vpop.f32.mrb[0].mxu0
      %v1619 = vadd.f32 0.0, %v1618
      %v1620 = vpop.f32.mrb[0].mxu0
      %1621 = vmatprep.mubr.f32.mxu0 0.0
      %1622 = vmatmul.mubr.f32.gmra.mrb[0].mxu0 %v1401
      %v1623 = vpop.f32.mrb[0].mxu0
      %v1624 = vadd.f32 0.0, %v1623
      %v1625 = vpop.f32.mrb[0].mxu0
      %1626 = vmatprep.mubr.f32.mxu0 0.0
      %1627 = vmatmul.mubr.f32.gmra.mrb[0].mxu0 %v1404
      %v1628 = vpop.f32.mrb[0].mxu0
      %v1629 = vadd.f32 0.0, %v1628
      %v1630 = vpop.f32.mrb[0].mxu0
      %1631 = vmatprep.mubr.f32.mxu0 0.0
      %1632 = vmatmul.mubr.f32.gmra.mrb[0].mxu0 %v1407
      %v1633 = vpop.f32.mrb[0].mxu0
      %v1634 = vadd.f32 0.0, %v1633
      %v1635 = vpop.f32.mrb[0].mxu0
      %1636 = vdwg.mxu0
      %v1637 = vadd.f32 %v1246, %v1479
      %v1638 = vadd.f32 %v1247, %v1484
      %v1639 = vadd.f32 %v1248, %v1489
      %v1640 = vadd.f32 %v1249, %v1494
      %v1641 = vadd.f32 %v1250, %v1499
      %v1642 = vadd.f32 %v1251, %v1504
      %v1643 = vadd.f32 %v1252, %v1509
      %v1644 = vadd.f32 %v1253, %v1514
      %v1645 = vadd.f32 %v1254, %v1519
      %v1646 = vadd.f32 %v1255, %v1524
      %v1647 = vadd.f32 %v1256, %v1529
      %v1648 = vadd.f32 %v1257, %v1534
      %v1649 = vadd.f32 %v1258, %v1539
      %v1650 = vadd.f32 %v1259, %v1544
      %v1651 = vadd.f32 %v1260, %v1549
      %v1652 = vadd.f32 %v1261, %v1554
      %v1653 = vadd.f32 %v1262, %v1559
      %v1654 = vadd.f32 %v1263, %v1564
      %v1655 = vadd.f32 %v1264, %v1569
      %v1656 = vadd.f32 %v1265, %v1574
      %v1657 = vadd.f32 %v1266, %v1579
      %v1658 = vadd.f32 %v1267, %v1584
      %v1659 = vadd.f32 %v1268, %v1589
      %v1660 = vadd.f32 %v1269, %v1594
      %v1661 = vadd.f32 %v1270, %v1599
      %v1662 = vadd.f32 %v1271, %v1604
      %v1663 = vadd.f32 %v1272, %v1609
      %v1664 = vadd.f32 %v1273, %v1614
      %v1665 = vadd.f32 %v1274, %v1619
      %v1666 = vadd.f32 %v1275, %v1624
      %v1667 = vadd.f32 %v1276, %v1629
      %v1668 = vadd.f32 %v1277, %v1634
      %v1669 = vld [vmem:[%s1278 + $0x1] sm:$0xff]
      %v1670 = vld [vmem:[%s1278 + $0x9] sm:$0xff]
      %v1671 = vld [vmem:[%s1278 + $0x19] sm:$0xff]
      %v1672 = vld [vmem:[%s1278 + $0x21] sm:$0xff]
      %v1673 = vld [vmem:[%s1278 + $0x31] sm:$0xff]
      %v1674 = vld [vmem:[%s1278 + $0x39] sm:$0xff]
      %v1675 = vld [vmem:[%s1278 + $0x49] sm:$0xff]
      %v1676 = vld [vmem:[%s1278 + $0x51] sm:$0xff]
      %v1677 = vld [vmem:[%s1278 + $0x61] sm:$0xff]
      %v1678 = vld [vmem:[%s1278 + $0x69] sm:$0xff]
      %v1679 = vld [vmem:[%s1278 + $0x79] sm:$0xff]
      %v1680 = vld [vmem:[%s1278 + $0x81] sm:$0xff]
      %v1681 = vld [vmem:[%s1278 + $0x91] sm:$0xff]
      %v1682 = vld [vmem:[%s1278 + $0x99] sm:$0xff]
      %v1683 = vld [vmem:[%s1278 + $0xa9] sm:$0xff]
      %v1684 = vld [vmem:[%s1278 + $0xb1] sm:$0xff]
      %v1685 = vld [vmem:[%s1278 + $0xc1] sm:$0xff]
      %v1686 = vld [vmem:[%s1278 + $0xc9] sm:$0xff]
      %v1687 = vld [vmem:[%s1278 + $0xd9] sm:$0xff]
      %v1688 = vld [vmem:[%s1278 + $0xe1] sm:$0xff]
      %v1689 = vld [vmem:[%s1278 + $0xf1] sm:$0xff]
      %v1690 = vld [vmem:[%s1278 + $0xf9] sm:$0xff]
      %v1691 = vld [vmem:[%s1278 + $0x109] sm:$0xff]
      %v1692 = vld [vmem:[%s1278 + $0x111] sm:$0xff]
      %v1693 = vld [vmem:[%s1278 + $0x121] sm:$0xff]
      %v1694 = vld [vmem:[%s1278 + $0x129] sm:$0xff]
      %v1695 = vld [vmem:[%s1278 + $0x139] sm:$0xff]
      %v1696 = vld [vmem:[%s1278 + $0x141] sm:$0xff]
      %v1697 = vld [vmem:[%s1278 + $0x151] sm:$0xff]
      %v1698 = vld [vmem:[%s1278 + $0x159] sm:$0xff]
      %v1699 = vld [vmem:[%s1278 + $0x169] sm:$0xff]
      %v1700 = vld [vmem:[%s1278 + $0x171] sm:$0xff]
      %s1701 = scalar_lea.vmem %s1, 16
      %v1702 = vld [vmem:[%s1701] sm:$0xf]
      %v1704 = vsel %vm238, %v1669, 0
      %v1707 = vsel %vm238, %v1670, 0
      %v1710 = vsel %vm238, %v1671, 0
      %v1713 = vsel %vm238, %v1672, 0
      %v1716 = vsel %vm238, %v1673, 0
      %v1719 = vsel %vm238, %v1674, 0
      %v1722 = vsel %vm238, %v1675, 0
      %v1725 = vsel %vm238, %v1676, 0
      %v1728 = vsel %vm238, %v1677, 0
      %v1731 = vsel %vm238, %v1678, 0
      %v1734 = vsel %vm238, %v1679, 0
      %v1737 = vsel %vm238, %v1680, 0
      %v1740 = vsel %vm238, %v1681, 0
      %v1743 = vsel %vm238, %v1682, 0
      %v1746 = vsel %vm238, %v1683, 0
      %v1749 = vsel %vm238, %v1684, 0
      %v1752 = vsel %vm238, %v1685, 0
      %v1755 = vsel %vm238, %v1686, 0
      %v1758 = vsel %vm238, %v1687, 0
      %v1761 = vsel %vm238, %v1688, 0
      %v1764 = vsel %vm238, %v1689, 0
      %v1767 = vsel %vm238, %v1690, 0
      %v1770 = vsel %vm238, %v1691, 0
      %v1773 = vsel %vm238, %v1692, 0
      %v1776 = vsel %vm238, %v1693, 0
      %v1779 = vsel %vm238, %v1694, 0
      %v1782 = vsel %vm238, %v1695, 0
      %v1785 = vsel %vm238, %v1696, 0
      %v1788 = vsel %vm238, %v1697, 0
      %v1791 = vsel %vm238, %v1698, 0
      %v1794 = vsel %vm238, %v1699, 0
      %v1797 = vsel %vm238, %v1700, 0
      %v1800 = vsel %vm335, %v1702, 0
      %1802 = vmatprep.subr.mxu0 0.0
      %1803 = vmatpush1.msra.mxu0 %v1800
      %1804 = vmatprep.subr.mxu0 0.0
      %1805 = vmatpush1.msra.mxu0 0.0
      %1806 = vmatprep.subr.mxu0 0.0
      %1807 = vmatpush1.msra.mxu0 0.0
      %1808 = vmatprep.subr.mxu0 0.0
      %1809 = vmatpush1.msra.mxu0 0.0
      %1810 = vmatprep.subr.mxu0 0.0
      %1811 = vmatpush1.msra.mxu0 0.0
      %1812 = vmatprep.subr.mxu0 0.0
      %1813 = vmatpush1.msra.mxu0 0.0
      %1814 = vmatprep.subr.mxu0 0.0
      %1815 = vmatpush1.msra.mxu0 0.0
      %1816 = vmatprep.subr.mxu0 0.0
      %1817 = vmatpush1.msra.mxu0 0.0
      %1818 = vmatprep.subr.mxu0 0.0
      %1819 = vmatpush1.msra.mxu0 0.0
      %1820 = vmatprep.subr.mxu0 0.0
      %1821 = vmatpush1.msra.mxu0 0.0
      %1822 = vmatprep.subr.mxu0 0.0
      %1823 = vmatpush1.msra.mxu0 0.0
      %1824 = vmatprep.subr.mxu0 0.0
      %1825 = vmatpush1.msra.mxu0 0.0
      %1826 = vmatprep.subr.mxu0 0.0
      %1827 = vmatpush1.msra.mxu0 0.0
      %1828 = vmatprep.subr.mxu0 0.0
      %1829 = vmatpush1.msra.mxu0 0.0
      %1830 = vmatprep.subr.mxu0 0.0
      %1831 = vmatpush1.msra.mxu0 0.0
      %1832 = vmatprep.subr.mxu0 0.0
      %1833 = vmatpush1.msra.mxu0 0.0
      %1834 = vmatprep.subr.mxu0 0.0
      %1835 = vmatpush1.msra.mxu0 0.0
      %1836 = vmatprep.subr.mxu0 0.0
      %1837 = vmatpush1.msra.mxu0 0.0
      %1838 = vmatprep.subr.mxu0 0.0
      %1839 = vmatpush1.msra.mxu0 0.0
      %1840 = vmatprep.subr.mxu0 0.0
      %1841 = vmatpush1.msra.mxu0 0.0
      %1842 = vmatprep.subr.mxu0 0.0
      %1843 = vmatpush1.msra.mxu0 0.0
      %1844 = vmatprep.subr.mxu0 0.0
      %1845 = vmatpush1.msra.mxu0 0.0
      %1846 = vmatprep.subr.mxu0 0.0
      %1847 = vmatpush1.msra.mxu0 0.0
      %1848 = vmatprep.subr.mxu0 0.0
      %1849 = vmatpush1.msra.mxu0 0.0
      %1850 = vmatprep.subr.mxu0 0.0
      %1851 = vmatpush1.msra.mxu0 0.0
      %1852 = vmatprep.subr.mxu0 0.0
      %1853 = vmatpush1.msra.mxu0 0.0
      %1854 = vmatprep.subr.mxu0 0.0
      %1855 = vmatpush1.msra.mxu0 0.0
      %1856 = vmatprep.subr.mxu0 0.0
      %1857 = vmatpush1.msra.mxu0 0.0
      %1858 = vmatprep.subr.mxu0 0.0
      %1859 = vmatpush1.msra.mxu0 0.0
      %1860 = vmatprep.subr.mxu0 0.0
      %1861 = vmatpush1.msra.mxu0 0.0
      %1862 = vmatprep.subr.mxu0 0.0
      %1863 = vmatpush1.msra.mxu0 0.0
      %1864 = vmatprep.subr.mxu0 0.0
      %1865 = vmatpush1.msra.mxu0 0.0
      %1866 = vmatprep.mubr.f32.mxu0 0.0
      %1867 = vmatmul.mubr.f32.gmra.mrb[0].mxu0 %v1704
      %v1868 = vpop.f32.mrb[0].mxu0
      %v1869 = vadd.f32 0.0, %v1868
      %v1870 = vpop.f32.mrb[0].mxu0
      %1871 = vmatprep.mubr.f32.mxu0 0.0
      %1872 = vmatmul.mubr.f32.gmra.mrb[0].mxu0 %v1707
      %v1873 = vpop.f32.mrb[0].mxu0
      %v1874 = vadd.f32 0.0, %v1873
      %v1875 = vpop.f32.mrb[0].mxu0
      %1876 = vmatprep.mubr.f32.mxu0 0.0
      %1877 = vmatmul.mubr.f32.gmra.mrb[0].mxu0 %v1710
      %v1878 = vpop.f32.mrb[0].mxu0
      %v1879 = vadd.f32 0.0, %v1878
      %v1880 = vpop.f32.mrb[0].mxu0
      %1881 = vmatprep.mubr.f32.mxu0 0.0
      %1882 = vmatmul.mubr.f32.gmra.mrb[0].mxu0 %v1713
      %v1883 = vpop.f32.mrb[0].mxu0
      %v1884 = vadd.f32 0.0, %v1883
      %v1885 = vpop.f32.mrb[0].mxu0
      %1886 = vmatprep.mubr.f32.mxu0 0.0
      %1887 = vmatmul.mubr.f32.gmra.mrb[0].mxu0 %v1716
      %v1888 = vpop.f32.mrb[0].mxu0
      %v1889 = vadd.f32 0.0, %v1888
      %v1890 = vpop.f32.mrb[0].mxu0
      %1891 = vmatprep.mubr.f32.mxu0 0.0
      %1892 = vmatmul.mubr.f32.gmra.mrb[0].mxu0 %v1719
      %v1893 = vpop.f32.mrb[0].mxu0
      %v1894 = vadd.f32 0.0, %v1893
      %v1895 = vpop.f32.mrb[0].mxu0
      %1896 = vmatprep.mubr.f32.mxu0 0.0
      %1897 = vmatmul.mubr.f32.gmra.mrb[0].mxu0 %v1722
      %v1898 = vpop.f32.mrb[0].mxu0
      %v1899 = vadd.f32 0.0, %v1898
      %v1900 = vpop.f32.mrb[0].mxu0
      %1901 = vmatprep.mubr.f32.mxu0 0.0
      %1902 = vmatmul.mubr.f32.gmra.mrb[0].mxu0 %v1725
      %v1903 = vpop.f32.mrb[0].mxu0
      %v1904 = vadd.f32 0.0, %v1903
      %v1905 = vpop.f32.mrb[0].mxu0
      %1906 = vmatprep.mubr.f32.mxu0 0.0
      %1907 = vmatmul.mubr.f32.gmra.mrb[0].mxu0 %v1728
      %v1908 = vpop.f32.mrb[0].mxu0
      %v1909 = vadd.f32 0.0, %v1908
      %v1910 = vpop.f32.mrb[0].mxu0
      %1911 = vmatprep.mubr.f32.mxu0 0.0
      %1912 = vmatmul.mubr.f32.gmra.mrb[0].mxu0 %v1731
      %v1913 = vpop.f32.mrb[0].mxu0
      %v1914 = vadd.f32 0.0, %v1913
      %v1915 = vpop.f32.mrb[0].mxu0
      %1916 = vmatprep.mubr.f32.mxu0 0.0
      %1917 = vmatmul.mubr.f32.gmra.mrb[0].mxu0 %v1734
      %v1918 = vpop.f32.mrb[0].mxu0
      %v1919 = vadd.f32 0.0, %v1918
      %v1920 = vpop.f32.mrb[0].mxu0
      %1921 = vmatprep.mubr.f32.mxu0 0.0
      %1922 = vmatmul.mubr.f32.gmra.mrb[0].mxu0 %v1737
      %v1923 = vpop.f32.mrb[0].mxu0
      %v1924 = vadd.f32 0.0, %v1923
      %v1925 = vpop.f32.mrb[0].mxu0
      %1926 = vmatprep.mubr.f32.mxu0 0.0
      %1927 = vmatmul.mubr.f32.gmra.mrb[0].mxu0 %v1740
      %v1928 = vpop.f32.mrb[0].mxu0
      %v1929 = vadd.f32 0.0, %v1928
      %v1930 = vpop.f32.mrb[0].mxu0
      %1931 = vmatprep.mubr.f32.mxu0 0.0
      %1932 = vmatmul.mubr.f32.gmra.mrb[0].mxu0 %v1743
      %v1933 = vpop.f32.mrb[0].mxu0
      %v1934 = vadd.f32 0.0, %v1933
      %v1935 = vpop.f32.mrb[0].mxu0
      %1936 = vmatprep.mubr.f32.mxu0 0.0
      %1937 = vmatmul.mubr.f32.gmra.mrb[0].mxu0 %v1746
      %v1938 = vpop.f32.mrb[0].mxu0
      %v1939 = vadd.f32 0.0, %v1938
      %v1940 = vpop.f32.mrb[0].mxu0
      %1941 = vmatprep.mubr.f32.mxu0 0.0
      %1942 = vmatmul.mubr.f32.gmra.mrb[0].mxu0 %v1749
      %v1943 = vpop.f32.mrb[0].mxu0
      %v1944 = vadd.f32 0.0, %v1943
      %v1945 = vpop.f32.mrb[0].mxu0
      %1946 = vmatprep.mubr.f32.mxu0 0.0
      %1947 = vmatmul.mubr.f32.gmra.mrb[0].mxu0 %v1752
      %v1948 = vpop.f32.mrb[0].mxu0
      %v1949 = vadd.f32 0.0, %v1948
      %v1950 = vpop.f32.mrb[0].mxu0
      %1951 = vmatprep.mubr.f32.mxu0 0.0
      %1952 = vmatmul.mubr.f32.gmra.mrb[0].mxu0 %v1755
      %v1953 = vpop.f32.mrb[0].mxu0
      %v1954 = vadd.f32 0.0, %v1953
      %v1955 = vpop.f32.mrb[0].mxu0
      %1956 = vmatprep.mubr.f32.mxu0 0.0
      %1957 = vmatmul.mubr.f32.gmra.mrb[0].mxu0 %v1758
      %v1958 = vpop.f32.mrb[0].mxu0
      %v1959 = vadd.f32 0.0, %v1958
      %v1960 = vpop.f32.mrb[0].mxu0
      %1961 = vmatprep.mubr.f32.mxu0 0.0
      %1962 = vmatmul.mubr.f32.gmra.mrb[0].mxu0 %v1761
      %v1963 = vpop.f32.mrb[0].mxu0
      %v1964 = vadd.f32 0.0, %v1963
      %v1965 = vpop.f32.mrb[0].mxu0
      %1966 = vmatprep.mubr.f32.mxu0 0.0
      %1967 = vmatmul.mubr.f32.gmra.mrb[0].mxu0 %v1764
      %v1968 = vpop.f32.mrb[0].mxu0
      %v1969 = vadd.f32 0.0, %v1968
      %v1970 = vpop.f32.mrb[0].mxu0
      %1971 = vmatprep.mubr.f32.mxu0 0.0
      %1972 = vmatmul.mubr.f32.gmra.mrb[0].mxu0 %v1767
      %v1973 = vpop.f32.mrb[0].mxu0
      %v1974 = vadd.f32 0.0, %v1973
      %v1975 = vpop.f32.mrb[0].mxu0
      %1976 = vmatprep.mubr.f32.mxu0 0.0
      %1977 = vmatmul.mubr.f32.gmra.mrb[0].mxu0 %v1770
      %v1978 = vpop.f32.mrb[0].mxu0
      %v1979 = vadd.f32 0.0, %v1978
      %v1980 = vpop.f32.mrb[0].mxu0
      %1981 = vmatprep.mubr.f32.mxu0 0.0
      %1982 = vmatmul.mubr.f32.gmra.mrb[0].mxu0 %v1773
      %v1983 = vpop.f32.mrb[0].mxu0
      %v1984 = vadd.f32 0.0, %v1983
      %v1985 = vpop.f32.mrb[0].mxu0
      %1986 = vmatprep.mubr.f32.mxu0 0.0
      %1987 = vmatmul.mubr.f32.gmra.mrb[0].mxu0 %v1776
      %v1988 = vpop.f32.mrb[0].mxu0
      %v1989 = vadd.f32 0.0, %v1988
      %v1990 = vpop.f32.mrb[0].mxu0
      %1991 = vmatprep.mubr.f32.mxu0 0.0
      %1992 = vmatmul.mubr.f32.gmra.mrb[0].mxu0 %v1779
      %v1993 = vpop.f32.mrb[0].mxu0
      %v1994 = vadd.f32 0.0, %v1993
      %v1995 = vpop.f32.mrb[0].mxu0
      %1996 = vmatprep.mubr.f32.mxu0 0.0
      %1997 = vmatmul.mubr.f32.gmra.mrb[0].mxu0 %v1782
      %v1998 = vpop.f32.mrb[0].mxu0
      %v1999 = vadd.f32 0.0, %v1998
      %v2000 = vpop.f32.mrb[0].mxu0
      %2001 = vmatprep.mubr.f32.mxu0 0.0
      %2002 = vmatmul.mubr.f32.gmra.mrb[0].mxu0 %v1785
      %v2003 = vpop.f32.mrb[0].mxu0
      %v2004 = vadd.f32 0.0, %v2003
      %v2005 = vpop.f32.mrb[0].mxu0
      %2006 = vmatprep.mubr.f32.mxu0 0.0
      %2007 = vmatmul.mubr.f32.gmra.mrb[0].mxu0 %v1788
      %v2008 = vpop.f32.mrb[0].mxu0
      %v2009 = vadd.f32 0.0, %v2008
      %v2010 = vpop.f32.mrb[0].mxu0
      %2011 = vmatprep.mubr.f32.mxu0 0.0
      %2012 = vmatmul.mubr.f32.gmra.mrb[0].mxu0 %v1791
      %v2013 = vpop.f32.mrb[0].mxu0
      %v2014 = vadd.f32 0.0, %v2013
      %v2015 = vpop.f32.mrb[0].mxu0
      %2016 = vmatprep.mubr.f32.mxu0 0.0
      %2017 = vmatmul.mubr.f32.gmra.mrb[0].mxu0 %v1794
      %v2018 = vpop.f32.mrb[0].mxu0
      %v2019 = vadd.f32 0.0, %v2018
      %v2020 = vpop.f32.mrb[0].mxu0
      %2021 = vmatprep.mubr.f32.mxu0 0.0
      %2022 = vmatmul.mubr.f32.gmra.mrb[0].mxu0 %v1797
      %v2023 = vpop.f32.mrb[0].mxu0
      %v2024 = vadd.f32 0.0, %v2023
      %v2025 = vpop.f32.mrb[0].mxu0
      %2026 = vdwg.mxu0
      %v2027 = vadd.f32 %v1637, %v1869
      %v2028 = vadd.f32 %v1638, %v1874
      %v2029 = vadd.f32 %v1639, %v1879
      %v2030 = vadd.f32 %v1640, %v1884
      %v2031 = vadd.f32 %v1641, %v1889
      %v2032 = vadd.f32 %v1642, %v1894
      %v2033 = vadd.f32 %v1643, %v1899
      %v2034 = vadd.f32 %v1644, %v1904
      %v2035 = vadd.f32 %v1645, %v1909
      %v2036 = vadd.f32 %v1646, %v1914
      %v2037 = vadd.f32 %v1647, %v1919
      %v2038 = vadd.f32 %v1648, %v1924
      %v2039 = vadd.f32 %v1649, %v1929
      %v2040 = vadd.f32 %v1650, %v1934
      %v2041 = vadd.f32 %v1651, %v1939
      %v2042 = vadd.f32 %v1652, %v1944
      %v2043 = vadd.f32 %v1653, %v1949
      %v2044 = vadd.f32 %v1654, %v1954
      %v2045 = vadd.f32 %v1655, %v1959
      %v2046 = vadd.f32 %v1656, %v1964
      %v2047 = vadd.f32 %v1657, %v1969
      %v2048 = vadd.f32 %v1658, %v1974
      %v2049 = vadd.f32 %v1659, %v1979
      %v2050 = vadd.f32 %v1660, %v1984
      %v2051 = vadd.f32 %v1661, %v1989
      %v2052 = vadd.f32 %v1662, %v1994
      %v2053 = vadd.f32 %v1663, %v1999
      %v2054 = vadd.f32 %v1664, %v2004
      %v2055 = vadd.f32 %v1665, %v2009
      %v2056 = vadd.f32 %v1666, %v2014
      %v2057 = vadd.f32 %v1667, %v2019
      %v2058 = vadd.f32 %v1668, %v2024
      %v2059 = vld [vmem:[%s1278 + $0x2] sm:$0xff]
      %v2060 = vld [vmem:[%s1278 + $0xa] sm:$0xff]
      %v2061 = vld [vmem:[%s1278 + $0x1a] sm:$0xff]
      %v2062 = vld [vmem:[%s1278 + $0x22] sm:$0xff]
      %v2063 = vld [vmem:[%s1278 + $0x32] sm:$0xff]
      %v2064 = vld [vmem:[%s1278 + $0x3a] sm:$0xff]
      %v2065 = vld [vmem:[%s1278 + $0x4a] sm:$0xff]
      %v2066 = vld [vmem:[%s1278 + $0x52] sm:$0xff]
      %v2067 = vld [vmem:[%s1278 + $0x62] sm:$0xff]
      %v2068 = vld [vmem:[%s1278 + $0x6a] sm:$0xff]
      %v2069 = vld [vmem:[%s1278 + $0x7a] sm:$0xff]
      %v2070 = vld [vmem:[%s1278 + $0x82] sm:$0xff]
      %v2071 = vld [vmem:[%s1278 + $0x92] sm:$0xff]
      %v2072 = vld [vmem:[%s1278 + $0x9a] sm:$0xff]
      %v2073 = vld [vmem:[%s1278 + $0xaa] sm:$0xff]
      %v2074 = vld [vmem:[%s1278 + $0xb2] sm:$0xff]
      %v2075 = vld [vmem:[%s1278 + $0xc2] sm:$0xff]
      %v2076 = vld [vmem:[%s1278 + $0xca] sm:$0xff]
      %v2077 = vld [vmem:[%s1278 + $0xda] sm:$0xff]
      %v2078 = vld [vmem:[%s1278 + $0xe2] sm:$0xff]
      %v2079 = vld [vmem:[%s1278 + $0xf2] sm:$0xff]
      %v2080 = vld [vmem:[%s1278 + $0xfa] sm:$0xff]
      %v2081 = vld [vmem:[%s1278 + $0x10a] sm:$0xff]
      %v2082 = vld [vmem:[%s1278 + $0x112] sm:$0xff]
      %v2083 = vld [vmem:[%s1278 + $0x122] sm:$0xff]
      %v2084 = vld [vmem:[%s1278 + $0x12a] sm:$0xff]
      %v2085 = vld [vmem:[%s1278 + $0x13a] sm:$0xff]
      %v2086 = vld [vmem:[%s1278 + $0x142] sm:$0xff]
      %v2087 = vld [vmem:[%s1278 + $0x152] sm:$0xff]
      %v2088 = vld [vmem:[%s1278 + $0x15a] sm:$0xff]
      %v2089 = vld [vmem:[%s1278 + $0x16a] sm:$0xff]
      %v2090 = vld [vmem:[%s1278 + $0x172] sm:$0xff]
      %s2091 = scalar_lea.vmem %s1, 20
      %v2092 = vld [vmem:[%s2091] sm:$0xf]
      %v2094 = vsel %vm238, %v2059, 0
      %v2097 = vsel %vm238, %v2060, 0
      %v2100 = vsel %vm238, %v2061, 0
      %v2103 = vsel %vm238, %v2062, 0
      %v2106 = vsel %vm238, %v2063, 0
      %v2109 = vsel %vm238, %v2064, 0
      %v2112 = vsel %vm238, %v2065, 0
      %v2115 = vsel %vm238, %v2066, 0
      %v2118 = vsel %vm238, %v2067, 0
      %v2121 = vsel %vm238, %v2068, 0
      %v2124 = vsel %vm238, %v2069, 0
      %v2127 = vsel %vm238, %v2070, 0
      %v2130 = vsel %vm238, %v2071, 0
      %v2133 = vsel %vm238, %v2072, 0
      %v2136 = vsel %vm238, %v2073, 0
      %v2139 = vsel %vm238, %v2074, 0
      %v2142 = vsel %vm238, %v2075, 0
      %v2145 = vsel %vm238, %v2076, 0
      %v2148 = vsel %vm238, %v2077, 0
      %v2151 = vsel %vm238, %v2078, 0
      %v2154 = vsel %vm238, %v2079, 0
      %v2157 = vsel %vm238, %v2080, 0
      %v2160 = vsel %vm238, %v2081, 0
      %v2163 = vsel %vm238, %v2082, 0
      %v2166 = vsel %vm238, %v2083, 0
      %v2169 = vsel %vm238, %v2084, 0
      %v2172 = vsel %vm238, %v2085, 0
      %v2175 = vsel %vm238, %v2086, 0
      %v2178 = vsel %vm238, %v2087, 0
      %v2181 = vsel %vm238, %v2088, 0
      %v2184 = vsel %vm238, %v2089, 0
      %v2187 = vsel %vm238, %v2090, 0
      %v2190 = vsel %vm335, %v2092, 0
      %2192 = vmatprep.subr.mxu0 0.0
      %2193 = vmatpush1.msra.mxu0 %v2190
      %2194 = vmatprep.subr.mxu0 0.0
      %2195 = vmatpush1.msra.mxu0 0.0
      %2196 = vmatprep.subr.mxu0 0.0
      %2197 = vmatpush1.msra.mxu0 0.0
      %2198 = vmatprep.subr.mxu0 0.0
      %2199 = vmatpush1.msra.mxu0 0.0
      %2200 = vmatprep.subr.mxu0 0.0
      %2201 = vmatpush1.msra.mxu0 0.0
      %2202 = vmatprep.subr.mxu0 0.0
      %2203 = vmatpush1.msra.mxu0 0.0
      %2204 = vmatprep.subr.mxu0 0.0
      %2205 = vmatpush1.msra.mxu0 0.0
      %2206 = vmatprep.subr.mxu0 0.0
      %2207 = vmatpush1.msra.mxu0 0.0
      %2208 = vmatprep.subr.mxu0 0.0
      %2209 = vmatpush1.msra.mxu0 0.0
      %2210 = vmatprep.subr.mxu0 0.0
      %2211 = vmatpush1.msra.mxu0 0.0
      %2212 = vmatprep.subr.mxu0 0.0
      %2213 = vmatpush1.msra.mxu0 0.0
      %2214 = vmatprep.subr.mxu0 0.0
      %2215 = vmatpush1.msra.mxu0 0.0
      %2216 = vmatprep.subr.mxu0 0.0
      %2217 = vmatpush1.msra.mxu0 0.0
      %2218 = vmatprep.subr.mxu0 0.0
      %2219 = vmatpush1.msra.mxu0 0.0
      %2220 = vmatprep.subr.mxu0 0.0
      %2221 = vmatpush1.msra.mxu0 0.0
      %2222 = vmatprep.subr.mxu0 0.0
      %2223 = vmatpush1.msra.mxu0 0.0
      %2224 = vmatprep.subr.mxu0 0.0
      %2225 = vmatpush1.msra.mxu0 0.0
      %2226 = vmatprep.subr.mxu0 0.0
      %2227 = vmatpush1.msra.mxu0 0.0
      %2228 = vmatprep.subr.mxu0 0.0
      %2229 = vmatpush1.msra.mxu0 0.0
      %2230 = vmatprep.subr.mxu0 0.0
      %2231 = vmatpush1.msra.mxu0 0.0
      %2232 = vmatprep.subr.mxu0 0.0
      %2233 = vmatpush1.msra.mxu0 0.0
      %2234 = vmatprep.subr.mxu0 0.0
      %2235 = vmatpush1.msra.mxu0 0.0
      %2236 = vmatprep.subr.mxu0 0.0
      %2237 = vmatpush1.msra.mxu0 0.0
      %2238 = vmatprep.subr.mxu0 0.0
      %2239 = vmatpush1.msra.mxu0 0.0
      %2240 = vmatprep.subr.mxu0 0.0
      %2241 = vmatpush1.msra.mxu0 0.0
      %2242 = vmatprep.subr.mxu0 0.0
      %2243 = vmatpush1.msra.mxu0 0.0
      %2244 = vmatprep.subr.mxu0 0.0
      %2245 = vmatpush1.msra.mxu0 0.0
      %2246 = vmatprep.subr.mxu0 0.0
      %2247 = vmatpush1.msra.mxu0 0.0
      %2248 = vmatprep.subr.mxu0 0.0
      %2249 = vmatpush1.msra.mxu0 0.0
      %2250 = vmatprep.subr.mxu0 0.0
      %2251 = vmatpush1.msra.mxu0 0.0
      %2252 = vmatprep.subr.mxu0 0.0
      %2253 = vmatpush1.msra.mxu0 0.0
      %2254 = vmatprep.subr.mxu0 0.0
      %2255 = vmatpush1.msra.mxu0 0.0
      %2256 = vmatprep.mubr.f32.mxu0 0.0
      %2257 = vmatmul.mubr.f32.gmra.mrb[0].mxu0 %v2094
      %v2258 = vpop.f32.mrb[0].mxu0
      %v2259 = vadd.f32 0.0, %v2258
      %v2260 = vpop.f32.mrb[0].mxu0
      %2261 = vmatprep.mubr.f32.mxu0 0.0
      %2262 = vmatmul.mubr.f32.gmra.mrb[0].mxu0 %v2097
      %v2263 = vpop.f32.mrb[0].mxu0
      %v2264 = vadd.f32 0.0, %v2263
      %v2265 = vpop.f32.mrb[0].mxu0
      %2266 = vmatprep.mubr.f32.mxu0 0.0
      %2267 = vmatmul.mubr.f32.gmra.mrb[0].mxu0 %v2100
      %v2268 = vpop.f32.mrb[0].mxu0
      %v2269 = vadd.f32 0.0, %v2268
      %v2270 = vpop.f32.mrb[0].mxu0
      %2271 = vmatprep.mubr.f32.mxu0 0.0
      %2272 = vmatmul.mubr.f32.gmra.mrb[0].mxu0 %v2103
      %v2273 = vpop.f32.mrb[0].mxu0
      %v2274 = vadd.f32 0.0, %v2273
      %v2275 = vpop.f32.mrb[0].mxu0
      %2276 = vmatprep.mubr.f32.mxu0 0.0
      %2277 = vmatmul.mubr.f32.gmra.mrb[0].mxu0 %v2106
      %v2278 = vpop.f32.mrb[0].mxu0
      %v2279 = vadd.f32 0.0, %v2278
      %v2280 = vpop.f32.mrb[0].mxu0
      %2281 = vmatprep.mubr.f32.mxu0 0.0
      %2282 = vmatmul.mubr.f32.gmra.mrb[0].mxu0 %v2109
      %v2283 = vpop.f32.mrb[0].mxu0
      %v2284 = vadd.f32 0.0, %v2283
      %v2285 = vpop.f32.mrb[0].mxu0
      %2286 = vmatprep.mubr.f32.mxu0 0.0
      %2287 = vmatmul.mubr.f32.gmra.mrb[0].mxu0 %v2112
      %v2288 = vpop.f32.mrb[0].mxu0
      %v2289 = vadd.f32 0.0, %v2288
      %v2290 = vpop.f32.mrb[0].mxu0
      %2291 = vmatprep.mubr.f32.mxu0 0.0
      %2292 = vmatmul.mubr.f32.gmra.mrb[0].mxu0 %v2115
      %v2293 = vpop.f32.mrb[0].mxu0
      %v2294 = vadd.f32 0.0, %v2293
      %v2295 = vpop.f32.mrb[0].mxu0
      %2296 = vmatprep.mubr.f32.mxu0 0.0
      %2297 = vmatmul.mubr.f32.gmra.mrb[0].mxu0 %v2118
      %v2298 = vpop.f32.mrb[0].mxu0
      %v2299 = vadd.f32 0.0, %v2298
      %v2300 = vpop.f32.mrb[0].mxu0
      %2301 = vmatprep.mubr.f32.mxu0 0.0
      %2302 = vmatmul.mubr.f32.gmra.mrb[0].mxu0 %v2121
      %v2303 = vpop.f32.mrb[0].mxu0
      %v2304 = vadd.f32 0.0, %v2303
      %v2305 = vpop.f32.mrb[0].mxu0
      %2306 = vmatprep.mubr.f32.mxu0 0.0
      %2307 = vmatmul.mubr.f32.gmra.mrb[0].mxu0 %v2124
      %v2308 = vpop.f32.mrb[0].mxu0
      %v2309 = vadd.f32 0.0, %v2308
      %v2310 = vpop.f32.mrb[0].mxu0
      %2311 = vmatprep.mubr.f32.mxu0 0.0
      %2312 = vmatmul.mubr.f32.gmra.mrb[0].mxu0 %v2127
      %v2313 = vpop.f32.mrb[0].mxu0
      %v2314 = vadd.f32 0.0, %v2313
      %v2315 = vpop.f32.mrb[0].mxu0
      %2316 = vmatprep.mubr.f32.mxu0 0.0
      %2317 = vmatmul.mubr.f32.gmra.mrb[0].mxu0 %v2130
      %v2318 = vpop.f32.mrb[0].mxu0
      %v2319 = vadd.f32 0.0, %v2318
      %v2320 = vpop.f32.mrb[0].mxu0
      %2321 = vmatprep.mubr.f32.mxu0 0.0
      %2322 = vmatmul.mubr.f32.gmra.mrb[0].mxu0 %v2133
      %v2323 = vpop.f32.mrb[0].mxu0
      %v2324 = vadd.f32 0.0, %v2323
      %v2325 = vpop.f32.mrb[0].mxu0
      %2326 = vmatprep.mubr.f32.mxu0 0.0
      %2327 = vmatmul.mubr.f32.gmra.mrb[0].mxu0 %v2136
      %v2328 = vpop.f32.mrb[0].mxu0
      %v2329 = vadd.f32 0.0, %v2328
      %v2330 = vpop.f32.mrb[0].mxu0
      %2331 = vmatprep.mubr.f32.mxu0 0.0
      %2332 = vmatmul.mubr.f32.gmra.mrb[0].mxu0 %v2139
      %v2333 = vpop.f32.mrb[0].mxu0
      %v2334 = vadd.f32 0.0, %v2333
      %v2335 = vpop.f32.mrb[0].mxu0
      %2336 = vmatprep.mubr.f32.mxu0 0.0
      %2337 = vmatmul.mubr.f32.gmra.mrb[0].mxu0 %v2142
      %v2338 = vpop.f32.mrb[0].mxu0
      %v2339 = vadd.f32 0.0, %v2338
      %v2340 = vpop.f32.mrb[0].mxu0
      %2341 = vmatprep.mubr.f32.mxu0 0.0
      %2342 = vmatmul.mubr.f32.gmra.mrb[0].mxu0 %v2145
      %v2343 = vpop.f32.mrb[0].mxu0
      %v2344 = vadd.f32 0.0, %v2343
      %v2345 = vpop.f32.mrb[0].mxu0
      %2346 = vmatprep.mubr.f32.mxu0 0.0
      %2347 = vmatmul.mubr.f32.gmra.mrb[0].mxu0 %v2148
      %v2348 = vpop.f32.mrb[0].mxu0
      %v2349 = vadd.f32 0.0, %v2348
      %v2350 = vpop.f32.mrb[0].mxu0
      %2351 = vmatprep.mubr.f32.mxu0 0.0
      %2352 = vmatmul.mubr.f32.gmra.mrb[0].mxu0 %v2151
      %v2353 = vpop.f32.mrb[0].mxu0
      %v2354 = vadd.f32 0.0, %v2353
      %v2355 = vpop.f32.mrb[0].mxu0
      %2356 = vmatprep.mubr.f32.mxu0 0.0
      %2357 = vmatmul.mubr.f32.gmra.mrb[0].mxu0 %v2154
      %v2358 = vpop.f32.mrb[0].mxu0
      %v2359 = vadd.f32 0.0, %v2358
      %v2360 = vpop.f32.mrb[0].mxu0
      %2361 = vmatprep.mubr.f32.mxu0 0.0
      %2362 = vmatmul.mubr.f32.gmra.mrb[0].mxu0 %v2157
      %v2363 = vpop.f32.mrb[0].mxu0
      %v2364 = vadd.f32 0.0, %v2363
      %v2365 = vpop.f32.mrb[0].mxu0
      %2366 = vmatprep.mubr.f32.mxu0 0.0
      %2367 = vmatmul.mubr.f32.gmra.mrb[0].mxu0 %v2160
      %v2368 = vpop.f32.mrb[0].mxu0
      %v2369 = vadd.f32 0.0, %v2368
      %v2370 = vpop.f32.mrb[0].mxu0
      %2371 = vmatprep.mubr.f32.mxu0 0.0
      %2372 = vmatmul.mubr.f32.gmra.mrb[0].mxu0 %v2163
      %v2373 = vpop.f32.mrb[0].mxu0
      %v2374 = vadd.f32 0.0, %v2373
      %v2375 = vpop.f32.mrb[0].mxu0
      %2376 = vmatprep.mubr.f32.mxu0 0.0
      %2377 = vmatmul.mubr.f32.gmra.mrb[0].mxu0 %v2166
      %v2378 = vpop.f32.mrb[0].mxu0
      %v2379 = vadd.f32 0.0, %v2378
      %v2380 = vpop.f32.mrb[0].mxu0
      %2381 = vmatprep.mubr.f32.mxu0 0.0
      %2382 = vmatmul.mubr.f32.gmra.mrb[0].mxu0 %v2169
      %v2383 = vpop.f32.mrb[0].mxu0
      %v2384 = vadd.f32 0.0, %v2383
      %v2385 = vpop.f32.mrb[0].mxu0
      %2386 = vmatprep.mubr.f32.mxu0 0.0
      %2387 = vmatmul.mubr.f32.gmra.mrb[0].mxu0 %v2172
      %v2388 = vpop.f32.mrb[0].mxu0
      %v2389 = vadd.f32 0.0, %v2388
      %v2390 = vpop.f32.mrb[0].mxu0
      %2391 = vmatprep.mubr.f32.mxu0 0.0
      %2392 = vmatmul.mubr.f32.gmra.mrb[0].mxu0 %v2175
      %v2393 = vpop.f32.mrb[0].mxu0
      %v2394 = vadd.f32 0.0, %v2393
      %v2395 = vpop.f32.mrb[0].mxu0
      %2396 = vmatprep.mubr.f32.mxu0 0.0
      %2397 = vmatmul.mubr.f32.gmra.mrb[0].mxu0 %v2178
      %v2398 = vpop.f32.mrb[0].mxu0
      %v2399 = vadd.f32 0.0, %v2398
      %v2400 = vpop.f32.mrb[0].mxu0
      %2401 = vmatprep.mubr.f32.mxu0 0.0
      %2402 = vmatmul.mubr.f32.gmra.mrb[0].mxu0 %v2181
      %v2403 = vpop.f32.mrb[0].mxu0
      %v2404 = vadd.f32 0.0, %v2403
      %v2405 = vpop.f32.mrb[0].mxu0
      %2406 = vmatprep.mubr.f32.mxu0 0.0
      %2407 = vmatmul.mubr.f32.gmra.mrb[0].mxu0 %v2184
      %v2408 = vpop.f32.mrb[0].mxu0
      %v2409 = vadd.f32 0.0, %v2408
      %v2410 = vpop.f32.mrb[0].mxu0
      %2411 = vmatprep.mubr.f32.mxu0 0.0
      %2412 = vmatmul.mubr.f32.gmra.mrb[0].mxu0 %v2187
      %v2413 = vpop.f32.mrb[0].mxu0
      %v2414 = vadd.f32 0.0, %v2413
      %v2415 = vpop.f32.mrb[0].mxu0
      %2416 = vdwg.mxu0
      %v2417 = vadd.f32 %v2027, %v2259
      %v2418 = vadd.f32 %v2028, %v2264
      %v2419 = vadd.f32 %v2029, %v2269
      %v2420 = vadd.f32 %v2030, %v2274
      %v2421 = vadd.f32 %v2031, %v2279
      %v2422 = vadd.f32 %v2032, %v2284
      %v2423 = vadd.f32 %v2033, %v2289
      %v2424 = vadd.f32 %v2034, %v2294
      %v2425 = vadd.f32 %v2035, %v2299
      %v2426 = vadd.f32 %v2036, %v2304
      %v2427 = vadd.f32 %v2037, %v2309
      %v2428 = vadd.f32 %v2038, %v2314
      %v2429 = vadd.f32 %v2039, %v2319
      %v2430 = vadd.f32 %v2040, %v2324
      %v2431 = vadd.f32 %v2041, %v2329
      %v2432 = vadd.f32 %v2042, %v2334
      %v2433 = vadd.f32 %v2043, %v2339
      %v2434 = vadd.f32 %v2044, %v2344
      %v2435 = vadd.f32 %v2045, %v2349
      %v2436 = vadd.f32 %v2046, %v2354
      %v2437 = vadd.f32 %v2047, %v2359
      %v2438 = vadd.f32 %v2048, %v2364
      %v2439 = vadd.f32 %v2049, %v2369
      %v2440 = vadd.f32 %v2050, %v2374
      %v2441 = vadd.f32 %v2051, %v2379
      %v2442 = vadd.f32 %v2052, %v2384
      %v2443 = vadd.f32 %v2053, %v2389
      %v2444 = vadd.f32 %v2054, %v2394
      %v2445 = vadd.f32 %v2055, %v2399
      %v2446 = vadd.f32 %v2056, %v2404
      %v2447 = vadd.f32 %v2057, %v2409
      %v2448 = vadd.f32 %v2058, %v2414
      %s2449 = scalar_lea.vmem %s165, 48
      %v2450 = vld [vmem:[%s2449] sm:$0xff]
      %v2451 = vld [vmem:[%s2449 + $0x8] sm:$0xff]
      %v2452 = vld [vmem:[%s2449 + $0x18] sm:$0xff]
      %v2453 = vld [vmem:[%s2449 + $0x20] sm:$0xff]
      %v2454 = vld [vmem:[%s2449 + $0x30] sm:$0xff]
      %v2455 = vld [vmem:[%s2449 + $0x38] sm:$0xff]
      %v2456 = vld [vmem:[%s2449 + $0x48] sm:$0xff]
      %v2457 = vld [vmem:[%s2449 + $0x50] sm:$0xff]
      %v2458 = vld [vmem:[%s2449 + $0x60] sm:$0xff]
      %v2459 = vld [vmem:[%s2449 + $0x68] sm:$0xff]
      %v2460 = vld [vmem:[%s2449 + $0x78] sm:$0xff]
      %v2461 = vld [vmem:[%s2449 + $0x80] sm:$0xff]
      %v2462 = vld [vmem:[%s2449 + $0x90] sm:$0xff]
      %v2463 = vld [vmem:[%s2449 + $0x98] sm:$0xff]
      %v2464 = vld [vmem:[%s2449 + $0xa8] sm:$0xff]
      %v2465 = vld [vmem:[%s2449 + $0xb0] sm:$0xff]
      %v2466 = vld [vmem:[%s2449 + $0xc0] sm:$0xff]
      %v2467 = vld [vmem:[%s2449 + $0xc8] sm:$0xff]
      %v2468 = vld [vmem:[%s2449 + $0xd8] sm:$0xff]
      %v2469 = vld [vmem:[%s2449 + $0xe0] sm:$0xff]
      %v2470 = vld [vmem:[%s2449 + $0xf0] sm:$0xff]
      %v2471 = vld [vmem:[%s2449 + $0xf8] sm:$0xff]
      %v2472 = vld [vmem:[%s2449 + $0x108] sm:$0xff]
      %v2473 = vld [vmem:[%s2449 + $0x110] sm:$0xff]
      %v2474 = vld [vmem:[%s2449 + $0x120] sm:$0xff]
      %v2475 = vld [vmem:[%s2449 + $0x128] sm:$0xff]
      %v2476 = vld [vmem:[%s2449 + $0x138] sm:$0xff]
      %v2477 = vld [vmem:[%s2449 + $0x140] sm:$0xff]
      %v2478 = vld [vmem:[%s2449 + $0x150] sm:$0xff]
      %v2479 = vld [vmem:[%s2449 + $0x158] sm:$0xff]
      %v2480 = vld [vmem:[%s2449 + $0x168] sm:$0xff]
      %v2481 = vld [vmem:[%s2449 + $0x170] sm:$0xff]
      %s2482 = scalar_lea.vmem %s1, 24
      %v2483 = vld [vmem:[%s2482] sm:$0xf]
      %v2485 = vsel %vm238, %v2450, 0
      %v2488 = vsel %vm238, %v2451, 0
      %v2491 = vsel %vm238, %v2452, 0
      %v2494 = vsel %vm238, %v2453, 0
      %v2497 = vsel %vm238, %v2454, 0
      %v2500 = vsel %vm238, %v2455, 0
      %v2503 = vsel %vm238, %v2456, 0
      %v2506 = vsel %vm238, %v2457, 0
      %v2509 = vsel %vm238, %v2458, 0
      %v2512 = vsel %vm238, %v2459, 0
      %v2515 = vsel %vm238, %v2460, 0
      %v2518 = vsel %vm238, %v2461, 0
      %v2521 = vsel %vm238, %v2462, 0
      %v2524 = vsel %vm238, %v2463, 0
      %v2527 = vsel %vm238, %v2464, 0
      %v2530 = vsel %vm238, %v2465, 0
      %v2533 = vsel %vm238, %v2466, 0
      %v2536 = vsel %vm238, %v2467, 0
      %v2539 = vsel %vm238, %v2468, 0
      %v2542 = vsel %vm238, %v2469, 0
      %v2545 = vsel %vm238, %v2470, 0
      %v2548 = vsel %vm238, %v2471, 0
      %v2551 = vsel %vm238, %v2472, 0
      %v2554 = vsel %vm238, %v2473, 0
      %v2557 = vsel %vm238, %v2474, 0
      %v2560 = vsel %vm238, %v2475, 0
      %v2563 = vsel %vm238, %v2476, 0
      %v2566 = vsel %vm238, %v2477, 0
      %v2569 = vsel %vm238, %v2478, 0
      %v2572 = vsel %vm238, %v2479, 0
      %v2575 = vsel %vm238, %v2480, 0
      %v2578 = vsel %vm238, %v2481, 0
      %v2581 = vsel %vm335, %v2483, 0
      %2583 = vmatprep.subr.mxu0 0.0
      %2584 = vmatpush1.msra.mxu0 %v2581
      %2585 = vmatprep.subr.mxu0 0.0
      %2586 = vmatpush1.msra.mxu0 0.0
      %2587 = vmatprep.subr.mxu0 0.0
      %2588 = vmatpush1.msra.mxu0 0.0
      %2589 = vmatprep.subr.mxu0 0.0
      %2590 = vmatpush1.msra.mxu0 0.0
      %2591 = vmatprep.subr.mxu0 0.0
      %2592 = vmatpush1.msra.mxu0 0.0
      %2593 = vmatprep.subr.mxu0 0.0
      %2594 = vmatpush1.msra.mxu0 0.0
      %2595 = vmatprep.subr.mxu0 0.0
      %2596 = vmatpush1.msra.mxu0 0.0
      %2597 = vmatprep.subr.mxu0 0.0
      %2598 = vmatpush1.msra.mxu0 0.0
      %2599 = vmatprep.subr.mxu0 0.0
      %2600 = vmatpush1.msra.mxu0 0.0
      %2601 = vmatprep.subr.mxu0 0.0
      %2602 = vmatpush1.msra.mxu0 0.0
      %2603 = vmatprep.subr.mxu0 0.0
      %2604 = vmatpush1.msra.mxu0 0.0
      %2605 = vmatprep.subr.mxu0 0.0
      %2606 = vmatpush1.msra.mxu0 0.0
      %2607 = vmatprep.subr.mxu0 0.0
      %2608 = vmatpush1.msra.mxu0 0.0
      %2609 = vmatprep.subr.mxu0 0.0
      %2610 = vmatpush1.msra.mxu0 0.0
      %2611 = vmatprep.subr.mxu0 0.0
      %2612 = vmatpush1.msra.mxu0 0.0
      %2613 = vmatprep.subr.mxu0 0.0
      %2614 = vmatpush1.msra.mxu0 0.0
      %2615 = vmatprep.subr.mxu0 0.0
      %2616 = vmatpush1.msra.mxu0 0.0
      %2617 = vmatprep.subr.mxu0 0.0
      %2618 = vmatpush1.msra.mxu0 0.0
      %2619 = vmatprep.subr.mxu0 0.0
      %2620 = vmatpush1.msra.mxu0 0.0
      %2621 = vmatprep.subr.mxu0 0.0
      %2622 = vmatpush1.msra.mxu0 0.0
      %2623 = vmatprep.subr.mxu0 0.0
      %2624 = vmatpush1.msra.mxu0 0.0
      %2625 = vmatprep.subr.mxu0 0.0
      %2626 = vmatpush1.msra.mxu0 0.0
      %2627 = vmatprep.subr.mxu0 0.0
      %2628 = vmatpush1.msra.mxu0 0.0
      %2629 = vmatprep.subr.mxu0 0.0
      %2630 = vmatpush1.msra.mxu0 0.0
      %2631 = vmatprep.subr.mxu0 0.0
      %2632 = vmatpush1.msra.mxu0 0.0
      %2633 = vmatprep.subr.mxu0 0.0
      %2634 = vmatpush1.msra.mxu0 0.0
      %2635 = vmatprep.subr.mxu0 0.0
      %2636 = vmatpush1.msra.mxu0 0.0
      %2637 = vmatprep.subr.mxu0 0.0
      %2638 = vmatpush1.msra.mxu0 0.0
      %2639 = vmatprep.subr.mxu0 0.0
      %2640 = vmatpush1.msra.mxu0 0.0
      %2641 = vmatprep.subr.mxu0 0.0
      %2642 = vmatpush1.msra.mxu0 0.0
      %2643 = vmatprep.subr.mxu0 0.0
      %2644 = vmatpush1.msra.mxu0 0.0
      %2645 = vmatprep.subr.mxu0 0.0
      %2646 = vmatpush1.msra.mxu0 0.0
      %2647 = vmatprep.mubr.f32.mxu0 0.0
      %2648 = vmatmul.mubr.f32.gmra.mrb[0].mxu0 %v2485
      %v2649 = vpop.f32.mrb[0].mxu0
      %v2650 = vadd.f32 0.0, %v2649
      %v2651 = vpop.f32.mrb[0].mxu0
      %2652 = vmatprep.mubr.f32.mxu0 0.0
      %2653 = vmatmul.mubr.f32.gmra.mrb[0].mxu0 %v2488
      %v2654 = vpop.f32.mrb[0].mxu0
      %v2655 = vadd.f32 0.0, %v2654
      %v2656 = vpop.f32.mrb[0].mxu0
      %2657 = vmatprep.mubr.f32.mxu0 0.0
      %2658 = vmatmul.mubr.f32.gmra.mrb[0].mxu0 %v2491
      %v2659 = vpop.f32.mrb[0].mxu0
      %v2660 = vadd.f32 0.0, %v2659
      %v2661 = vpop.f32.mrb[0].mxu0
      %2662 = vmatprep.mubr.f32.mxu0 0.0
      %2663 = vmatmul.mubr.f32.gmra.mrb[0].mxu0 %v2494
      %v2664 = vpop.f32.mrb[0].mxu0
      %v2665 = vadd.f32 0.0, %v2664
      %v2666 = vpop.f32.mrb[0].mxu0
      %2667 = vmatprep.mubr.f32.mxu0 0.0
      %2668 = vmatmul.mubr.f32.gmra.mrb[0].mxu0 %v2497
      %v2669 = vpop.f32.mrb[0].mxu0
      %v2670 = vadd.f32 0.0, %v2669
      %v2671 = vpop.f32.mrb[0].mxu0
      %2672 = vmatprep.mubr.f32.mxu0 0.0
      %2673 = vmatmul.mubr.f32.gmra.mrb[0].mxu0 %v2500
      %v2674 = vpop.f32.mrb[0].mxu0
      %v2675 = vadd.f32 0.0, %v2674
      %v2676 = vpop.f32.mrb[0].mxu0
      %2677 = vmatprep.mubr.f32.mxu0 0.0
      %2678 = vmatmul.mubr.f32.gmra.mrb[0].mxu0 %v2503
      %v2679 = vpop.f32.mrb[0].mxu0
      %v2680 = vadd.f32 0.0, %v2679
      %v2681 = vpop.f32.mrb[0].mxu0
      %2682 = vmatprep.mubr.f32.mxu0 0.0
      %2683 = vmatmul.mubr.f32.gmra.mrb[0].mxu0 %v2506
      %v2684 = vpop.f32.mrb[0].mxu0
      %v2685 = vadd.f32 0.0, %v2684
      %v2686 = vpop.f32.mrb[0].mxu0
      %2687 = vmatprep.mubr.f32.mxu0 0.0
      %2688 = vmatmul.mubr.f32.gmra.mrb[0].mxu0 %v2509
      %v2689 = vpop.f32.mrb[0].mxu0
      %v2690 = vadd.f32 0.0, %v2689
      %v2691 = vpop.f32.mrb[0].mxu0
      %2692 = vmatprep.mubr.f32.mxu0 0.0
      %2693 = vmatmul.mubr.f32.gmra.mrb[0].mxu0 %v2512
      %v2694 = vpop.f32.mrb[0].mxu0
      %v2695 = vadd.f32 0.0, %v2694
      %v2696 = vpop.f32.mrb[0].mxu0
      %2697 = vmatprep.mubr.f32.mxu0 0.0
      %2698 = vmatmul.mubr.f32.gmra.mrb[0].mxu0 %v2515
      %v2699 = vpop.f32.mrb[0].mxu0
      %v2700 = vadd.f32 0.0, %v2699
      %v2701 = vpop.f32.mrb[0].mxu0
      %2702 = vmatprep.mubr.f32.mxu0 0.0
      %2703 = vmatmul.mubr.f32.gmra.mrb[0].mxu0 %v2518
      %v2704 = vpop.f32.mrb[0].mxu0
      %v2705 = vadd.f32 0.0, %v2704
      %v2706 = vpop.f32.mrb[0].mxu0
      %2707 = vmatprep.mubr.f32.mxu0 0.0
      %2708 = vmatmul.mubr.f32.gmra.mrb[0].mxu0 %v2521
      %v2709 = vpop.f32.mrb[0].mxu0
      %v2710 = vadd.f32 0.0, %v2709
      %v2711 = vpop.f32.mrb[0].mxu0
      %2712 = vmatprep.mubr.f32.mxu0 0.0
      %2713 = vmatmul.mubr.f32.gmra.mrb[0].mxu0 %v2524
      %v2714 = vpop.f32.mrb[0].mxu0
      %v2715 = vadd.f32 0.0, %v2714
      %v2716 = vpop.f32.mrb[0].mxu0
      %2717 = vmatprep.mubr.f32.mxu0 0.0
      %2718 = vmatmul.mubr.f32.gmra.mrb[0].mxu0 %v2527
      %v2719 = vpop.f32.mrb[0].mxu0
      %v2720 = vadd.f32 0.0, %v2719
      %v2721 = vpop.f32.mrb[0].mxu0
      %2722 = vmatprep.mubr.f32.mxu0 0.0
      %2723 = vmatmul.mubr.f32.gmra.mrb[0].mxu0 %v2530
      %v2724 = vpop.f32.mrb[0].mxu0
      %v2725 = vadd.f32 0.0, %v2724
      %v2726 = vpop.f32.mrb[0].mxu0
      %2727 = vmatprep.mubr.f32.mxu0 0.0
      %2728 = vmatmul.mubr.f32.gmra.mrb[0].mxu0 %v2533
      %v2729 = vpop.f32.mrb[0].mxu0
      %v2730 = vadd.f32 0.0, %v2729
      %v2731 = vpop.f32.mrb[0].mxu0
      %2732 = vmatprep.mubr.f32.mxu0 0.0
      %2733 = vmatmul.mubr.f32.gmra.mrb[0].mxu0 %v2536
      %v2734 = vpop.f32.mrb[0].mxu0
      %v2735 = vadd.f32 0.0, %v2734
      %v2736 = vpop.f32.mrb[0].mxu0
      %2737 = vmatprep.mubr.f32.mxu0 0.0
      %2738 = vmatmul.mubr.f32.gmra.mrb[0].mxu0 %v2539
      %v2739 = vpop.f32.mrb[0].mxu0
      %v2740 = vadd.f32 0.0, %v2739
      %v2741 = vpop.f32.mrb[0].mxu0
      %2742 = vmatprep.mubr.f32.mxu0 0.0
      %2743 = vmatmul.mubr.f32.gmra.mrb[0].mxu0 %v2542
      %v2744 = vpop.f32.mrb[0].mxu0
      %v2745 = vadd.f32 0.0, %v2744
      %v2746 = vpop.f32.mrb[0].mxu0
      %2747 = vmatprep.mubr.f32.mxu0 0.0
      %2748 = vmatmul.mubr.f32.gmra.mrb[0].mxu0 %v2545
      %v2749 = vpop.f32.mrb[0].mxu0
      %v2750 = vadd.f32 0.0, %v2749
      %v2751 = vpop.f32.mrb[0].mxu0
      %2752 = vmatprep.mubr.f32.mxu0 0.0
      %2753 = vmatmul.mubr.f32.gmra.mrb[0].mxu0 %v2548
      %v2754 = vpop.f32.mrb[0].mxu0
      %v2755 = vadd.f32 0.0, %v2754
      %v2756 = vpop.f32.mrb[0].mxu0
      %2757 = vmatprep.mubr.f32.mxu0 0.0
      %2758 = vmatmul.mubr.f32.gmra.mrb[0].mxu0 %v2551
      %v2759 = vpop.f32.mrb[0].mxu0
      %v2760 = vadd.f32 0.0, %v2759
      %v2761 = vpop.f32.mrb[0].mxu0
      %2762 = vmatprep.mubr.f32.mxu0 0.0
      %2763 = vmatmul.mubr.f32.gmra.mrb[0].mxu0 %v2554
      %v2764 = vpop.f32.mrb[0].mxu0
      %v2765 = vadd.f32 0.0, %v2764
      %v2766 = vpop.f32.mrb[0].mxu0
      %2767 = vmatprep.mubr.f32.mxu0 0.0
      %2768 = vmatmul.mubr.f32.gmra.mrb[0].mxu0 %v2557
      %v2769 = vpop.f32.mrb[0].mxu0
      %v2770 = vadd.f32 0.0, %v2769
      %v2771 = vpop.f32.mrb[0].mxu0
      %2772 = vmatprep.mubr.f32.mxu0 0.0
      %2773 = vmatmul.mubr.f32.gmra.mrb[0].mxu0 %v2560
      %v2774 = vpop.f32.mrb[0].mxu0
      %v2775 = vadd.f32 0.0, %v2774
      %v2776 = vpop.f32.mrb[0].mxu0
      %2777 = vmatprep.mubr.f32.mxu0 0.0
      %2778 = vmatmul.mubr.f32.gmra.mrb[0].mxu0 %v2563
      %v2779 = vpop.f32.mrb[0].mxu0
      %v2780 = vadd.f32 0.0, %v2779
      %v2781 = vpop.f32.mrb[0].mxu0
      %2782 = vmatprep.mubr.f32.mxu0 0.0
      %2783 = vmatmul.mubr.f32.gmra.mrb[0].mxu0 %v2566
      %v2784 = vpop.f32.mrb[0].mxu0
      %v2785 = vadd.f32 0.0, %v2784
      %v2786 = vpop.f32.mrb[0].mxu0
      %2787 = vmatprep.mubr.f32.mxu0 0.0
      %2788 = vmatmul.mubr.f32.gmra.mrb[0].mxu0 %v2569
      %v2789 = vpop.f32.mrb[0].mxu0
      %v2790 = vadd.f32 0.0, %v2789
      %v2791 = vpop.f32.mrb[0].mxu0
      %2792 = vmatprep.mubr.f32.mxu0 0.0
      %2793 = vmatmul.mubr.f32.gmra.mrb[0].mxu0 %v2572
      %v2794 = vpop.f32.mrb[0].mxu0
      %v2795 = vadd.f32 0.0, %v2794
      %v2796 = vpop.f32.mrb[0].mxu0
      %2797 = vmatprep.mubr.f32.mxu0 0.0
      %2798 = vmatmul.mubr.f32.gmra.mrb[0].mxu0 %v2575
      %v2799 = vpop.f32.mrb[0].mxu0
      %v2800 = vadd.f32 0.0, %v2799
      %v2801 = vpop.f32.mrb[0].mxu0
      %2802 = vmatprep.mubr.f32.mxu0 0.0
      %2803 = vmatmul.mubr.f32.gmra.mrb[0].mxu0 %v2578
      %v2804 = vpop.f32.mrb[0].mxu0
      %v2805 = vadd.f32 0.0, %v2804
      %v2806 = vpop.f32.mrb[0].mxu0
      %2807 = vdwg.mxu0
      %v2808 = vadd.f32 %v2417, %v2650
      %v2809 = vadd.f32 %v2418, %v2655
      %v2810 = vadd.f32 %v2419, %v2660
      %v2811 = vadd.f32 %v2420, %v2665
      %v2812 = vadd.f32 %v2421, %v2670
      %v2813 = vadd.f32 %v2422, %v2675
      %v2814 = vadd.f32 %v2423, %v2680
      %v2815 = vadd.f32 %v2424, %v2685
      %v2816 = vadd.f32 %v2425, %v2690
      %v2817 = vadd.f32 %v2426, %v2695
      %v2818 = vadd.f32 %v2427, %v2700
      %v2819 = vadd.f32 %v2428, %v2705
      %v2820 = vadd.f32 %v2429, %v2710
      %v2821 = vadd.f32 %v2430, %v2715
      %v2822 = vadd.f32 %v2431, %v2720
      %v2823 = vadd.f32 %v2432, %v2725
      %v2824 = vadd.f32 %v2433, %v2730
      %v2825 = vadd.f32 %v2434, %v2735
      %v2826 = vadd.f32 %v2435, %v2740
      %v2827 = vadd.f32 %v2436, %v2745
      %v2828 = vadd.f32 %v2437, %v2750
      %v2829 = vadd.f32 %v2438, %v2755
      %v2830 = vadd.f32 %v2439, %v2760
      %v2831 = vadd.f32 %v2440, %v2765
      %v2832 = vadd.f32 %v2441, %v2770
      %v2833 = vadd.f32 %v2442, %v2775
      %v2834 = vadd.f32 %v2443, %v2780
      %v2835 = vadd.f32 %v2444, %v2785
      %v2836 = vadd.f32 %v2445, %v2790
      %v2837 = vadd.f32 %v2446, %v2795
      %v2838 = vadd.f32 %v2447, %v2800
      %v2839 = vadd.f32 %v2448, %v2805
      %v2840 = vld [vmem:[%s2449 + $0x1] sm:$0xff]
      %v2841 = vld [vmem:[%s2449 + $0x9] sm:$0xff]
      %v2842 = vld [vmem:[%s2449 + $0x19] sm:$0xff]
      %v2843 = vld [vmem:[%s2449 + $0x21] sm:$0xff]
      %v2844 = vld [vmem:[%s2449 + $0x31] sm:$0xff]
      %v2845 = vld [vmem:[%s2449 + $0x39] sm:$0xff]
      %v2846 = vld [vmem:[%s2449 + $0x49] sm:$0xff]
      %v2847 = vld [vmem:[%s2449 + $0x51] sm:$0xff]
      %v2848 = vld [vmem:[%s2449 + $0x61] sm:$0xff]
      %v2849 = vld [vmem:[%s2449 + $0x69] sm:$0xff]
      %v2850 = vld [vmem:[%s2449 + $0x79] sm:$0xff]
      %v2851 = vld [vmem:[%s2449 + $0x81] sm:$0xff]
      %v2852 = vld [vmem:[%s2449 + $0x91] sm:$0xff]
      %v2853 = vld [vmem:[%s2449 + $0x99] sm:$0xff]
      %v2854 = vld [vmem:[%s2449 + $0xa9] sm:$0xff]
      %v2855 = vld [vmem:[%s2449 + $0xb1] sm:$0xff]
      %v2856 = vld [vmem:[%s2449 + $0xc1] sm:$0xff]
      %v2857 = vld [vmem:[%s2449 + $0xc9] sm:$0xff]
      %v2858 = vld [vmem:[%s2449 + $0xd9] sm:$0xff]
      %v2859 = vld [vmem:[%s2449 + $0xe1] sm:$0xff]
      %v2860 = vld [vmem:[%s2449 + $0xf1] sm:$0xff]
      %v2861 = vld [vmem:[%s2449 + $0xf9] sm:$0xff]
      %v2862 = vld [vmem:[%s2449 + $0x109] sm:$0xff]
      %v2863 = vld [vmem:[%s2449 + $0x111] sm:$0xff]
      %v2864 = vld [vmem:[%s2449 + $0x121] sm:$0xff]
      %v2865 = vld [vmem:[%s2449 + $0x129] sm:$0xff]
      %v2866 = vld [vmem:[%s2449 + $0x139] sm:$0xff]
      %v2867 = vld [vmem:[%s2449 + $0x141] sm:$0xff]
      %v2868 = vld [vmem:[%s2449 + $0x151] sm:$0xff]
      %v2869 = vld [vmem:[%s2449 + $0x159] sm:$0xff]
      %v2870 = vld [vmem:[%s2449 + $0x169] sm:$0xff]
      %v2871 = vld [vmem:[%s2449 + $0x171] sm:$0xff]
      %s2872 = scalar_lea.vmem %s1, 28
      %v2873 = vld [vmem:[%s2872] sm:$0xf]
      %v2875 = vsel %vm238, %v2840, 0
      %v2878 = vsel %vm238, %v2841, 0
      %v2881 = vsel %vm238, %v2842, 0
      %v2884 = vsel %vm238, %v2843, 0
      %v2887 = vsel %vm238, %v2844, 0
      %v2890 = vsel %vm238, %v2845, 0
      %v2893 = vsel %vm238, %v2846, 0
      %v2896 = vsel %vm238, %v2847, 0
      %v2899 = vsel %vm238, %v2848, 0
      %v2902 = vsel %vm238, %v2849, 0
      %v2905 = vsel %vm238, %v2850, 0
      %v2908 = vsel %vm238, %v2851, 0
      %v2911 = vsel %vm238, %v2852, 0
      %v2914 = vsel %vm238, %v2853, 0
      %v2917 = vsel %vm238, %v2854, 0
      %v2920 = vsel %vm238, %v2855, 0
      %v2923 = vsel %vm238, %v2856, 0
      %v2926 = vsel %vm238, %v2857, 0
      %v2929 = vsel %vm238, %v2858, 0
      %v2932 = vsel %vm238, %v2859, 0
      %v2935 = vsel %vm238, %v2860, 0
      %v2938 = vsel %vm238, %v2861, 0
      %v2941 = vsel %vm238, %v2862, 0
      %v2944 = vsel %vm238, %v2863, 0
      %v2947 = vsel %vm238, %v2864, 0
      %v2950 = vsel %vm238, %v2865, 0
      %v2953 = vsel %vm238, %v2866, 0
      %v2956 = vsel %vm238, %v2867, 0
      %v2959 = vsel %vm238, %v2868, 0
      %v2962 = vsel %vm238, %v2869, 0
      %v2965 = vsel %vm238, %v2870, 0
      %v2968 = vsel %vm238, %v2871, 0
      %v2971 = vsel %vm335, %v2873, 0
      %2973 = vmatprep.subr.mxu0 0.0
      %2974 = vmatpush1.msra.mxu0 %v2971
      %2975 = vmatprep.subr.mxu0 0.0
      %2976 = vmatpush1.msra.mxu0 0.0
      %2977 = vmatprep.subr.mxu0 0.0
      %2978 = vmatpush1.msra.mxu0 0.0
      %2979 = vmatprep.subr.mxu0 0.0
      %2980 = vmatpush1.msra.mxu0 0.0
      %2981 = vmatprep.subr.mxu0 0.0
      %2982 = vmatpush1.msra.mxu0 0.0
      %2983 = vmatprep.subr.mxu0 0.0
      %2984 = vmatpush1.msra.mxu0 0.0
      %2985 = vmatprep.subr.mxu0 0.0
      %2986 = vmatpush1.msra.mxu0 0.0
      %2987 = vmatprep.subr.mxu0 0.0
      %2988 = vmatpush1.msra.mxu0 0.0
      %2989 = vmatprep.subr.mxu0 0.0
      %2990 = vmatpush1.msra.mxu0 0.0
      %2991 = vmatprep.subr.mxu0 0.0
      %2992 = vmatpush1.msra.mxu0 0.0
      %2993 = vmatprep.subr.mxu0 0.0
      %2994 = vmatpush1.msra.mxu0 0.0
      %2995 = vmatprep.subr.mxu0 0.0
      %2996 = vmatpush1.msra.mxu0 0.0
      %2997 = vmatprep.subr.mxu0 0.0
      %2998 = vmatpush1.msra.mxu0 0.0
      %2999 = vmatprep.subr.mxu0 0.0
      %3000 = vmatpush1.msra.mxu0 0.0
      %3001 = vmatprep.subr.mxu0 0.0
      %3002 = vmatpush1.msra.mxu0 0.0
      %3003 = vmatprep.subr.mxu0 0.0
      %3004 = vmatpush1.msra.mxu0 0.0
      %3005 = vmatprep.subr.mxu0 0.0
      %3006 = vmatpush1.msra.mxu0 0.0
      %3007 = vmatprep.subr.mxu0 0.0
      %3008 = vmatpush1.msra.mxu0 0.0
      %3009 = vmatprep.subr.mxu0 0.0
      %3010 = vmatpush1.msra.mxu0 0.0
      %3011 = vmatprep.subr.mxu0 0.0
      %3012 = vmatpush1.msra.mxu0 0.0
      %3013 = vmatprep.subr.mxu0 0.0
      %3014 = vmatpush1.msra.mxu0 0.0
      %3015 = vmatprep.subr.mxu0 0.0
      %3016 = vmatpush1.msra.mxu0 0.0
      %3017 = vmatprep.subr.mxu0 0.0
      %3018 = vmatpush1.msra.mxu0 0.0
      %3019 = vmatprep.subr.mxu0 0.0
      %3020 = vmatpush1.msra.mxu0 0.0
      %3021 = vmatprep.subr.mxu0 0.0
      %3022 = vmatpush1.msra.mxu0 0.0
      %3023 = vmatprep.subr.mxu0 0.0
      %3024 = vmatpush1.msra.mxu0 0.0
      %3025 = vmatprep.subr.mxu0 0.0
      %3026 = vmatpush1.msra.mxu0 0.0
      %3027 = vmatprep.subr.mxu0 0.0
      %3028 = vmatpush1.msra.mxu0 0.0
      %3029 = vmatprep.subr.mxu0 0.0
      %3030 = vmatpush1.msra.mxu0 0.0
      %3031 = vmatprep.subr.mxu0 0.0
      %3032 = vmatpush1.msra.mxu0 0.0
      %3033 = vmatprep.subr.mxu0 0.0
      %3034 = vmatpush1.msra.mxu0 0.0
      %3035 = vmatprep.subr.mxu0 0.0
      %3036 = vmatpush1.msra.mxu0 0.0
      %3037 = vmatprep.mubr.f32.mxu0 0.0
      %3038 = vmatmul.mubr.f32.gmra.mrb[0].mxu0 %v2875
      %v3039 = vpop.f32.mrb[0].mxu0
      %v3040 = vadd.f32 0.0, %v3039
      %v3041 = vpop.f32.mrb[0].mxu0
      %3042 = vmatprep.mubr.f32.mxu0 0.0
      %3043 = vmatmul.mubr.f32.gmra.mrb[0].mxu0 %v2878
      %v3044 = vpop.f32.mrb[0].mxu0
      %v3045 = vadd.f32 0.0, %v3044
      %v3046 = vpop.f32.mrb[0].mxu0
      %3047 = vmatprep.mubr.f32.mxu0 0.0
      %3048 = vmatmul.mubr.f32.gmra.mrb[0].mxu0 %v2881
      %v3049 = vpop.f32.mrb[0].mxu0
      %v3050 = vadd.f32 0.0, %v3049
      %v3051 = vpop.f32.mrb[0].mxu0
      %3052 = vmatprep.mubr.f32.mxu0 0.0
      %3053 = vmatmul.mubr.f32.gmra.mrb[0].mxu0 %v2884
      %v3054 = vpop.f32.mrb[0].mxu0
      %v3055 = vadd.f32 0.0, %v3054
      %v3056 = vpop.f32.mrb[0].mxu0
      %3057 = vmatprep.mubr.f32.mxu0 0.0
      %3058 = vmatmul.mubr.f32.gmra.mrb[0].mxu0 %v2887
      %v3059 = vpop.f32.mrb[0].mxu0
      %v3060 = vadd.f32 0.0, %v3059
      %v3061 = vpop.f32.mrb[0].mxu0
      %3062 = vmatprep.mubr.f32.mxu0 0.0
      %3063 = vmatmul.mubr.f32.gmra.mrb[0].mxu0 %v2890
      %v3064 = vpop.f32.mrb[0].mxu0
      %v3065 = vadd.f32 0.0, %v3064
      %v3066 = vpop.f32.mrb[0].mxu0
      %3067 = vmatprep.mubr.f32.mxu0 0.0
      %3068 = vmatmul.mubr.f32.gmra.mrb[0].mxu0 %v2893
      %v3069 = vpop.f32.mrb[0].mxu0
      %v3070 = vadd.f32 0.0, %v3069
      %v3071 = vpop.f32.mrb[0].mxu0
      %3072 = vmatprep.mubr.f32.mxu0 0.0
      %3073 = vmatmul.mubr.f32.gmra.mrb[0].mxu0 %v2896
      %v3074 = vpop.f32.mrb[0].mxu0
      %v3075 = vadd.f32 0.0, %v3074
      %v3076 = vpop.f32.mrb[0].mxu0
      %3077 = vmatprep.mubr.f32.mxu0 0.0
      %3078 = vmatmul.mubr.f32.gmra.mrb[0].mxu0 %v2899
      %v3079 = vpop.f32.mrb[0].mxu0
      %v3080 = vadd.f32 0.0, %v3079
      %v3081 = vpop.f32.mrb[0].mxu0
      %3082 = vmatprep.mubr.f32.mxu0 0.0
      %3083 = vmatmul.mubr.f32.gmra.mrb[0].mxu0 %v2902
      %v3084 = vpop.f32.mrb[0].mxu0
      %v3085 = vadd.f32 0.0, %v3084
      %v3086 = vpop.f32.mrb[0].mxu0
      %3087 = vmatprep.mubr.f32.mxu0 0.0
      %3088 = vmatmul.mubr.f32.gmra.mrb[0].mxu0 %v2905
      %v3089 = vpop.f32.mrb[0].mxu0
      %v3090 = vadd.f32 0.0, %v3089
      %v3091 = vpop.f32.mrb[0].mxu0
      %3092 = vmatprep.mubr.f32.mxu0 0.0
      %3093 = vmatmul.mubr.f32.gmra.mrb[0].mxu0 %v2908
      %v3094 = vpop.f32.mrb[0].mxu0
      %v3095 = vadd.f32 0.0, %v3094
      %v3096 = vpop.f32.mrb[0].mxu0
      %3097 = vmatprep.mubr.f32.mxu0 0.0
      %3098 = vmatmul.mubr.f32.gmra.mrb[0].mxu0 %v2911
      %v3099 = vpop.f32.mrb[0].mxu0
      %v3100 = vadd.f32 0.0, %v3099
      %v3101 = vpop.f32.mrb[0].mxu0
      %3102 = vmatprep.mubr.f32.mxu0 0.0
      %3103 = vmatmul.mubr.f32.gmra.mrb[0].mxu0 %v2914
      %v3104 = vpop.f32.mrb[0].mxu0
      %v3105 = vadd.f32 0.0, %v3104
      %v3106 = vpop.f32.mrb[0].mxu0
      %3107 = vmatprep.mubr.f32.mxu0 0.0
      %3108 = vmatmul.mubr.f32.gmra.mrb[0].mxu0 %v2917
      %v3109 = vpop.f32.mrb[0].mxu0
      %v3110 = vadd.f32 0.0, %v3109
      %v3111 = vpop.f32.mrb[0].mxu0
      %3112 = vmatprep.mubr.f32.mxu0 0.0
      %3113 = vmatmul.mubr.f32.gmra.mrb[0].mxu0 %v2920
      %v3114 = vpop.f32.mrb[0].mxu0
      %v3115 = vadd.f32 0.0, %v3114
      %v3116 = vpop.f32.mrb[0].mxu0
      %3117 = vmatprep.mubr.f32.mxu0 0.0
      %3118 = vmatmul.mubr.f32.gmra.mrb[0].mxu0 %v2923
      %v3119 = vpop.f32.mrb[0].mxu0
      %v3120 = vadd.f32 0.0, %v3119
      %v3121 = vpop.f32.mrb[0].mxu0
      %3122 = vmatprep.mubr.f32.mxu0 0.0
      %3123 = vmatmul.mubr.f32.gmra.mrb[0].mxu0 %v2926
      %v3124 = vpop.f32.mrb[0].mxu0
      %v3125 = vadd.f32 0.0, %v3124
      %v3126 = vpop.f32.mrb[0].mxu0
      %3127 = vmatprep.mubr.f32.mxu0 0.0
      %3128 = vmatmul.mubr.f32.gmra.mrb[0].mxu0 %v2929
      %v3129 = vpop.f32.mrb[0].mxu0
      %v3130 = vadd.f32 0.0, %v3129
      %v3131 = vpop.f32.mrb[0].mxu0
      %3132 = vmatprep.mubr.f32.mxu0 0.0
      %3133 = vmatmul.mubr.f32.gmra.mrb[0].mxu0 %v2932
      %v3134 = vpop.f32.mrb[0].mxu0
      %v3135 = vadd.f32 0.0, %v3134
      %v3136 = vpop.f32.mrb[0].mxu0
      %3137 = vmatprep.mubr.f32.mxu0 0.0
      %3138 = vmatmul.mubr.f32.gmra.mrb[0].mxu0 %v2935
      %v3139 = vpop.f32.mrb[0].mxu0
      %v3140 = vadd.f32 0.0, %v3139
      %v3141 = vpop.f32.mrb[0].mxu0
      %3142 = vmatprep.mubr.f32.mxu0 0.0
      %3143 = vmatmul.mubr.f32.gmra.mrb[0].mxu0 %v2938
      %v3144 = vpop.f32.mrb[0].mxu0
      %v3145 = vadd.f32 0.0, %v3144
      %v3146 = vpop.f32.mrb[0].mxu0
      %3147 = vmatprep.mubr.f32.mxu0 0.0
      %3148 = vmatmul.mubr.f32.gmra.mrb[0].mxu0 %v2941
      %v3149 = vpop.f32.mrb[0].mxu0
      %v3150 = vadd.f32 0.0, %v3149
      %v3151 = vpop.f32.mrb[0].mxu0
      %3152 = vmatprep.mubr.f32.mxu0 0.0
      %3153 = vmatmul.mubr.f32.gmra.mrb[0].mxu0 %v2944
      %v3154 = vpop.f32.mrb[0].mxu0
      %v3155 = vadd.f32 0.0, %v3154
      %v3156 = vpop.f32.mrb[0].mxu0
      %3157 = vmatprep.mubr.f32.mxu0 0.0
      %3158 = vmatmul.mubr.f32.gmra.mrb[0].mxu0 %v2947
      %v3159 = vpop.f32.mrb[0].mxu0
      %v3160 = vadd.f32 0.0, %v3159
      %v3161 = vpop.f32.mrb[0].mxu0
      %3162 = vmatprep.mubr.f32.mxu0 0.0
      %3163 = vmatmul.mubr.f32.gmra.mrb[0].mxu0 %v2950
      %v3164 = vpop.f32.mrb[0].mxu0
      %v3165 = vadd.f32 0.0, %v3164
      %v3166 = vpop.f32.mrb[0].mxu0
      %3167 = vmatprep.mubr.f32.mxu0 0.0
      %3168 = vmatmul.mubr.f32.gmra.mrb[0].mxu0 %v2953
      %v3169 = vpop.f32.mrb[0].mxu0
      %v3170 = vadd.f32 0.0, %v3169
      %v3171 = vpop.f32.mrb[0].mxu0
      %3172 = vmatprep.mubr.f32.mxu0 0.0
      %3173 = vmatmul.mubr.f32.gmra.mrb[0].mxu0 %v2956
      %v3174 = vpop.f32.mrb[0].mxu0
      %v3175 = vadd.f32 0.0, %v3174
      %v3176 = vpop.f32.mrb[0].mxu0
      %3177 = vmatprep.mubr.f32.mxu0 0.0
      %3178 = vmatmul.mubr.f32.gmra.mrb[0].mxu0 %v2959
      %v3179 = vpop.f32.mrb[0].mxu0
      %v3180 = vadd.f32 0.0, %v3179
      %v3181 = vpop.f32.mrb[0].mxu0
      %3182 = vmatprep.mubr.f32.mxu0 0.0
      %3183 = vmatmul.mubr.f32.gmra.mrb[0].mxu0 %v2962
      %v3184 = vpop.f32.mrb[0].mxu0
      %v3185 = vadd.f32 0.0, %v3184
      %v3186 = vpop.f32.mrb[0].mxu0
      %3187 = vmatprep.mubr.f32.mxu0 0.0
      %3188 = vmatmul.mubr.f32.gmra.mrb[0].mxu0 %v2965
      %v3189 = vpop.f32.mrb[0].mxu0
      %v3190 = vadd.f32 0.0, %v3189
      %v3191 = vpop.f32.mrb[0].mxu0
      %3192 = vmatprep.mubr.f32.mxu0 0.0
      %3193 = vmatmul.mubr.f32.gmra.mrb[0].mxu0 %v2968
      %v3194 = vpop.f32.mrb[0].mxu0
      %v3195 = vadd.f32 0.0, %v3194
      %v3196 = vpop.f32.mrb[0].mxu0
      %3197 = vdwg.mxu0
      %v3198 = vadd.f32 %v2808, %v3040
      %v3199 = vadd.f32 %v2809, %v3045
      %v3200 = vadd.f32 %v2810, %v3050
      %v3201 = vadd.f32 %v2811, %v3055
      %v3202 = vadd.f32 %v2812, %v3060
      %v3203 = vadd.f32 %v2813, %v3065
      %v3204 = vadd.f32 %v2814, %v3070
      %v3205 = vadd.f32 %v2815, %v3075
      %v3206 = vadd.f32 %v2816, %v3080
      %v3207 = vadd.f32 %v2817, %v3085
      %v3208 = vadd.f32 %v2818, %v3090
      %v3209 = vadd.f32 %v2819, %v3095
      %v3210 = vadd.f32 %v2820, %v3100
      %v3211 = vadd.f32 %v2821, %v3105
      %v3212 = vadd.f32 %v2822, %v3110
      %v3213 = vadd.f32 %v2823, %v3115
      %v3214 = vadd.f32 %v2824, %v3120
      %v3215 = vadd.f32 %v2825, %v3125
      %v3216 = vadd.f32 %v2826, %v3130
      %v3217 = vadd.f32 %v2827, %v3135
      %v3218 = vadd.f32 %v2828, %v3140
      %v3219 = vadd.f32 %v2829, %v3145
      %v3220 = vadd.f32 %v2830, %v3150
      %v3221 = vadd.f32 %v2831, %v3155
      %v3222 = vadd.f32 %v2832, %v3160
      %v3223 = vadd.f32 %v2833, %v3165
      %v3224 = vadd.f32 %v2834, %v3170
      %v3225 = vadd.f32 %v2835, %v3175
      %v3226 = vadd.f32 %v2836, %v3180
      %v3227 = vadd.f32 %v2837, %v3185
      %v3228 = vadd.f32 %v2838, %v3190
      %v3229 = vadd.f32 %v2839, %v3195
      %v3230 = vld [vmem:[%s2449 + $0x2] sm:$0xff]
      %v3231 = vld [vmem:[%s2449 + $0xa] sm:$0xff]
      %v3232 = vld [vmem:[%s2449 + $0x1a] sm:$0xff]
      %v3233 = vld [vmem:[%s2449 + $0x22] sm:$0xff]
      %v3234 = vld [vmem:[%s2449 + $0x32] sm:$0xff]
      %v3235 = vld [vmem:[%s2449 + $0x3a] sm:$0xff]
      %v3236 = vld [vmem:[%s2449 + $0x4a] sm:$0xff]
      %v3237 = vld [vmem:[%s2449 + $0x52] sm:$0xff]
      %v3238 = vld [vmem:[%s2449 + $0x62] sm:$0xff]
      %v3239 = vld [vmem:[%s2449 + $0x6a] sm:$0xff]
      %v3240 = vld [vmem:[%s2449 + $0x7a] sm:$0xff]
      %v3241 = vld [vmem:[%s2449 + $0x82] sm:$0xff]
      %v3242 = vld [vmem:[%s2449 + $0x92] sm:$0xff]
      %v3243 = vld [vmem:[%s2449 + $0x9a] sm:$0xff]
      %v3244 = vld [vmem:[%s2449 + $0xaa] sm:$0xff]
      %v3245 = vld [vmem:[%s2449 + $0xb2] sm:$0xff]
      %v3246 = vld [vmem:[%s2449 + $0xc2] sm:$0xff]
      %v3247 = vld [vmem:[%s2449 + $0xca] sm:$0xff]
      %v3248 = vld [vmem:[%s2449 + $0xda] sm:$0xff]
      %v3249 = vld [vmem:[%s2449 + $0xe2] sm:$0xff]
      %v3250 = vld [vmem:[%s2449 + $0xf2] sm:$0xff]
      %v3251 = vld [vmem:[%s2449 + $0xfa] sm:$0xff]
      %v3252 = vld [vmem:[%s2449 + $0x10a] sm:$0xff]
      %v3253 = vld [vmem:[%s2449 + $0x112] sm:$0xff]
      %v3254 = vld [vmem:[%s2449 + $0x122] sm:$0xff]
      %v3255 = vld [vmem:[%s2449 + $0x12a] sm:$0xff]
      %v3256 = vld [vmem:[%s2449 + $0x13a] sm:$0xff]
      %v3257 = vld [vmem:[%s2449 + $0x142] sm:$0xff]
      %v3258 = vld [vmem:[%s2449 + $0x152] sm:$0xff]
      %v3259 = vld [vmem:[%s2449 + $0x15a] sm:$0xff]
      %v3260 = vld [vmem:[%s2449 + $0x16a] sm:$0xff]
      %v3261 = vld [vmem:[%s2449 + $0x172] sm:$0xff]
      %s3262 = scalar_lea.vmem %s1, 32
      %v3263 = vld [vmem:[%s3262] sm:$0xf]
      %v3265 = vsel %vm238, %v3230, 0
      %v3268 = vsel %vm238, %v3231, 0
      %v3271 = vsel %vm238, %v3232, 0
      %v3274 = vsel %vm238, %v3233, 0
      %v3277 = vsel %vm238, %v3234, 0
      %v3280 = vsel %vm238, %v3235, 0
      %v3283 = vsel %vm238, %v3236, 0
      %v3286 = vsel %vm238, %v3237, 0
      %v3289 = vsel %vm238, %v3238, 0
      %v3292 = vsel %vm238, %v3239, 0
      %v3295 = vsel %vm238, %v3240, 0
      %v3298 = vsel %vm238, %v3241, 0
      %v3301 = vsel %vm238, %v3242, 0
      %v3304 = vsel %vm238, %v3243, 0
      %v3307 = vsel %vm238, %v3244, 0
      %v3310 = vsel %vm238, %v3245, 0
      %v3313 = vsel %vm238, %v3246, 0
      %v3316 = vsel %vm238, %v3247, 0
      %v3319 = vsel %vm238, %v3248, 0
      %v3322 = vsel %vm238, %v3249, 0
      %v3325 = vsel %vm238, %v3250, 0
      %v3328 = vsel %vm238, %v3251, 0
      %v3331 = vsel %vm238, %v3252, 0
      %v3334 = vsel %vm238, %v3253, 0
      %v3337 = vsel %vm238, %v3254, 0
      %v3340 = vsel %vm238, %v3255, 0
      %v3343 = vsel %vm238, %v3256, 0
      %v3346 = vsel %vm238, %v3257, 0
      %v3349 = vsel %vm238, %v3258, 0
      %v3352 = vsel %vm238, %v3259, 0
      %v3355 = vsel %vm238, %v3260, 0
      %v3358 = vsel %vm238, %v3261, 0
      %v3361 = vsel %vm335, %v3263, 0
      %3363 = vmatprep.subr.mxu0 0.0
      %3364 = vmatpush1.msra.mxu0 %v3361
      %3365 = vmatprep.subr.mxu0 0.0
      %3366 = vmatpush1.msra.mxu0 0.0
      %3367 = vmatprep.subr.mxu0 0.0
      %3368 = vmatpush1.msra.mxu0 0.0
      %3369 = vmatprep.subr.mxu0 0.0
      %3370 = vmatpush1.msra.mxu0 0.0
      %3371 = vmatprep.subr.mxu0 0.0
      %3372 = vmatpush1.msra.mxu0 0.0
      %3373 = vmatprep.subr.mxu0 0.0
      %3374 = vmatpush1.msra.mxu0 0.0
      %3375 = vmatprep.subr.mxu0 0.0
      %3376 = vmatpush1.msra.mxu0 0.0
      %3377 = vmatprep.subr.mxu0 0.0
      %3378 = vmatpush1.msra.mxu0 0.0
      %3379 = vmatprep.subr.mxu0 0.0
      %3380 = vmatpush1.msra.mxu0 0.0
      %3381 = vmatprep.subr.mxu0 0.0
      %3382 = vmatpush1.msra.mxu0 0.0
      %3383 = vmatprep.subr.mxu0 0.0
      %3384 = vmatpush1.msra.mxu0 0.0
      %3385 = vmatprep.subr.mxu0 0.0
      %3386 = vmatpush1.msra.mxu0 0.0
      %3387 = vmatprep.subr.mxu0 0.0
      %3388 = vmatpush1.msra.mxu0 0.0
      %3389 = vmatprep.subr.mxu0 0.0
      %3390 = vmatpush1.msra.mxu0 0.0
      %3391 = vmatprep.subr.mxu0 0.0
      %3392 = vmatpush1.msra.mxu0 0.0
      %3393 = vmatprep.subr.mxu0 0.0
      %3394 = vmatpush1.msra.mxu0 0.0
      %3395 = vmatprep.subr.mxu0 0.0
      %3396 = vmatpush1.msra.mxu0 0.0
      %3397 = vmatprep.subr.mxu0 0.0
      %3398 = vmatpush1.msra.mxu0 0.0
      %3399 = vmatprep.subr.mxu0 0.0
      %3400 = vmatpush1.msra.mxu0 0.0
      %3401 = vmatprep.subr.mxu0 0.0
      %3402 = vmatpush1.msra.mxu0 0.0
      %3403 = vmatprep.subr.mxu0 0.0
      %3404 = vmatpush1.msra.mxu0 0.0
      %3405 = vmatprep.subr.mxu0 0.0
      %3406 = vmatpush1.msra.mxu0 0.0
      %3407 = vmatprep.subr.mxu0 0.0
      %3408 = vmatpush1.msra.mxu0 0.0
      %3409 = vmatprep.subr.mxu0 0.0
      %3410 = vmatpush1.msra.mxu0 0.0
      %3411 = vmatprep.subr.mxu0 0.0
      %3412 = vmatpush1.msra.mxu0 0.0
      %3413 = vmatprep.subr.mxu0 0.0
      %3414 = vmatpush1.msra.mxu0 0.0
      %3415 = vmatprep.subr.mxu0 0.0
      %3416 = vmatpush1.msra.mxu0 0.0
      %3417 = vmatprep.subr.mxu0 0.0
      %3418 = vmatpush1.msra.mxu0 0.0
      %3419 = vmatprep.subr.mxu0 0.0
      %3420 = vmatpush1.msra.mxu0 0.0
      %3421 = vmatprep.subr.mxu0 0.0
      %3422 = vmatpush1.msra.mxu0 0.0
      %3423 = vmatprep.subr.mxu0 0.0
      %3424 = vmatpush1.msra.mxu0 0.0
      %3425 = vmatprep.subr.mxu0 0.0
      %3426 = vmatpush1.msra.mxu0 0.0
      %3427 = vmatprep.mubr.f32.mxu0 0.0
      %3428 = vmatmul.mubr.f32.gmra.mrb[0].mxu0 %v3265
      %v3429 = vpop.f32.mrb[0].mxu0
      %v3430 = vadd.f32 0.0, %v3429
      %v3431 = vpop.f32.mrb[0].mxu0
      %3432 = vmatprep.mubr.f32.mxu0 0.0
      %3433 = vmatmul.mubr.f32.gmra.mrb[0].mxu0 %v3268
      %v3434 = vpop.f32.mrb[0].mxu0
      %v3435 = vadd.f32 0.0, %v3434
      %v3436 = vpop.f32.mrb[0].mxu0
      %3437 = vmatprep.mubr.f32.mxu0 0.0
      %3438 = vmatmul.mubr.f32.gmra.mrb[0].mxu0 %v3271
      %v3439 = vpop.f32.mrb[0].mxu0
      %v3440 = vadd.f32 0.0, %v3439
      %v3441 = vpop.f32.mrb[0].mxu0
      %3442 = vmatprep.mubr.f32.mxu0 0.0
      %3443 = vmatmul.mubr.f32.gmra.mrb[0].mxu0 %v3274
      %v3444 = vpop.f32.mrb[0].mxu0
      %v3445 = vadd.f32 0.0, %v3444
      %v3446 = vpop.f32.mrb[0].mxu0
      %3447 = vmatprep.mubr.f32.mxu0 0.0
      %3448 = vmatmul.mubr.f32.gmra.mrb[0].mxu0 %v3277
      %v3449 = vpop.f32.mrb[0].mxu0
      %v3450 = vadd.f32 0.0, %v3449
      %v3451 = vpop.f32.mrb[0].mxu0
      %3452 = vmatprep.mubr.f32.mxu0 0.0
      %3453 = vmatmul.mubr.f32.gmra.mrb[0].mxu0 %v3280
      %v3454 = vpop.f32.mrb[0].mxu0
      %v3455 = vadd.f32 0.0, %v3454
      %v3456 = vpop.f32.mrb[0].mxu0
      %3457 = vmatprep.mubr.f32.mxu0 0.0
      %3458 = vmatmul.mubr.f32.gmra.mrb[0].mxu0 %v3283
      %v3459 = vpop.f32.mrb[0].mxu0
      %v3460 = vadd.f32 0.0, %v3459
      %v3461 = vpop.f32.mrb[0].mxu0
      %3462 = vmatprep.mubr.f32.mxu0 0.0
      %3463 = vmatmul.mubr.f32.gmra.mrb[0].mxu0 %v3286
      %v3464 = vpop.f32.mrb[0].mxu0
      %v3465 = vadd.f32 0.0, %v3464
      %v3466 = vpop.f32.mrb[0].mxu0
      %3467 = vmatprep.mubr.f32.mxu0 0.0
      %3468 = vmatmul.mubr.f32.gmra.mrb[0].mxu0 %v3289
      %v3469 = vpop.f32.mrb[0].mxu0
      %v3470 = vadd.f32 0.0, %v3469
      %v3471 = vpop.f32.mrb[0].mxu0
      %3472 = vmatprep.mubr.f32.mxu0 0.0
      %3473 = vmatmul.mubr.f32.gmra.mrb[0].mxu0 %v3292
      %v3474 = vpop.f32.mrb[0].mxu0
      %v3475 = vadd.f32 0.0, %v3474
      %v3476 = vpop.f32.mrb[0].mxu0
      %3477 = vmatprep.mubr.f32.mxu0 0.0
      %3478 = vmatmul.mubr.f32.gmra.mrb[0].mxu0 %v3295
      %v3479 = vpop.f32.mrb[0].mxu0
      %v3480 = vadd.f32 0.0, %v3479
      %v3481 = vpop.f32.mrb[0].mxu0
      %3482 = vmatprep.mubr.f32.mxu0 0.0
      %3483 = vmatmul.mubr.f32.gmra.mrb[0].mxu0 %v3298
      %v3484 = vpop.f32.mrb[0].mxu0
      %v3485 = vadd.f32 0.0, %v3484
      %v3486 = vpop.f32.mrb[0].mxu0
      %3487 = vmatprep.mubr.f32.mxu0 0.0
      %3488 = vmatmul.mubr.f32.gmra.mrb[0].mxu0 %v3301
      %v3489 = vpop.f32.mrb[0].mxu0
      %v3490 = vadd.f32 0.0, %v3489
      %v3491 = vpop.f32.mrb[0].mxu0
      %3492 = vmatprep.mubr.f32.mxu0 0.0
      %3493 = vmatmul.mubr.f32.gmra.mrb[0].mxu0 %v3304
      %v3494 = vpop.f32.mrb[0].mxu0
      %v3495 = vadd.f32 0.0, %v3494
      %v3496 = vpop.f32.mrb[0].mxu0
      %3497 = vmatprep.mubr.f32.mxu0 0.0
      %3498 = vmatmul.mubr.f32.gmra.mrb[0].mxu0 %v3307
      %v3499 = vpop.f32.mrb[0].mxu0
      %v3500 = vadd.f32 0.0, %v3499
      %v3501 = vpop.f32.mrb[0].mxu0
      %3502 = vmatprep.mubr.f32.mxu0 0.0
      %3503 = vmatmul.mubr.f32.gmra.mrb[0].mxu0 %v3310
      %v3504 = vpop.f32.mrb[0].mxu0
      %v3505 = vadd.f32 0.0, %v3504
      %v3506 = vpop.f32.mrb[0].mxu0
      %3507 = vmatprep.mubr.f32.mxu0 0.0
      %3508 = vmatmul.mubr.f32.gmra.mrb[0].mxu0 %v3313
      %v3509 = vpop.f32.mrb[0].mxu0
      %v3510 = vadd.f32 0.0, %v3509
      %v3511 = vpop.f32.mrb[0].mxu0
      %3512 = vmatprep.mubr.f32.mxu0 0.0
      %3513 = vmatmul.mubr.f32.gmra.mrb[0].mxu0 %v3316
      %v3514 = vpop.f32.mrb[0].mxu0
      %v3515 = vadd.f32 0.0, %v3514
      %v3516 = vpop.f32.mrb[0].mxu0
      %3517 = vmatprep.mubr.f32.mxu0 0.0
      %3518 = vmatmul.mubr.f32.gmra.mrb[0].mxu0 %v3319
      %v3519 = vpop.f32.mrb[0].mxu0
      %v3520 = vadd.f32 0.0, %v3519
      %v3521 = vpop.f32.mrb[0].mxu0
      %3522 = vmatprep.mubr.f32.mxu0 0.0
      %3523 = vmatmul.mubr.f32.gmra.mrb[0].mxu0 %v3322
      %v3524 = vpop.f32.mrb[0].mxu0
      %v3525 = vadd.f32 0.0, %v3524
      %v3526 = vpop.f32.mrb[0].mxu0
      %3527 = vmatprep.mubr.f32.mxu0 0.0
      %3528 = vmatmul.mubr.f32.gmra.mrb[0].mxu0 %v3325
      %v3529 = vpop.f32.mrb[0].mxu0
      %v3530 = vadd.f32 0.0, %v3529
      %v3531 = vpop.f32.mrb[0].mxu0
      %3532 = vmatprep.mubr.f32.mxu0 0.0
      %3533 = vmatmul.mubr.f32.gmra.mrb[0].mxu0 %v3328
      %v3534 = vpop.f32.mrb[0].mxu0
      %v3535 = vadd.f32 0.0, %v3534
      %v3536 = vpop.f32.mrb[0].mxu0
      %3537 = vmatprep.mubr.f32.mxu0 0.0
      %3538 = vmatmul.mubr.f32.gmra.mrb[0].mxu0 %v3331
      %v3539 = vpop.f32.mrb[0].mxu0
      %v3540 = vadd.f32 0.0, %v3539
      %v3541 = vpop.f32.mrb[0].mxu0
      %3542 = vmatprep.mubr.f32.mxu0 0.0
      %3543 = vmatmul.mubr.f32.gmra.mrb[0].mxu0 %v3334
      %v3544 = vpop.f32.mrb[0].mxu0
      %v3545 = vadd.f32 0.0, %v3544
      %v3546 = vpop.f32.mrb[0].mxu0
      %3547 = vmatprep.mubr.f32.mxu0 0.0
      %3548 = vmatmul.mubr.f32.gmra.mrb[0].mxu0 %v3337
      %v3549 = vpop.f32.mrb[0].mxu0
      %v3550 = vadd.f32 0.0, %v3549
      %v3551 = vpop.f32.mrb[0].mxu0
      %3552 = vmatprep.mubr.f32.mxu0 0.0
      %3553 = vmatmul.mubr.f32.gmra.mrb[0].mxu0 %v3340
      %v3554 = vpop.f32.mrb[0].mxu0
      %v3555 = vadd.f32 0.0, %v3554
      %v3556 = vpop.f32.mrb[0].mxu0
      %3557 = vmatprep.mubr.f32.mxu0 0.0
      %3558 = vmatmul.mubr.f32.gmra.mrb[0].mxu0 %v3343
      %v3559 = vpop.f32.mrb[0].mxu0
      %v3560 = vadd.f32 0.0, %v3559
      %v3561 = vpop.f32.mrb[0].mxu0
      %3562 = vmatprep.mubr.f32.mxu0 0.0
      %3563 = vmatmul.mubr.f32.gmra.mrb[0].mxu0 %v3346
      %v3564 = vpop.f32.mrb[0].mxu0
      %v3565 = vadd.f32 0.0, %v3564
      %v3566 = vpop.f32.mrb[0].mxu0
      %3567 = vmatprep.mubr.f32.mxu0 0.0
      %3568 = vmatmul.mubr.f32.gmra.mrb[0].mxu0 %v3349
      %v3569 = vpop.f32.mrb[0].mxu0
      %v3570 = vadd.f32 0.0, %v3569
      %v3571 = vpop.f32.mrb[0].mxu0
      %3572 = vmatprep.mubr.f32.mxu0 0.0
      %3573 = vmatmul.mubr.f32.gmra.mrb[0].mxu0 %v3352
      %v3574 = vpop.f32.mrb[0].mxu0
      %v3575 = vadd.f32 0.0, %v3574
      %v3576 = vpop.f32.mrb[0].mxu0
      %3577 = vmatprep.mubr.f32.mxu0 0.0
      %3578 = vmatmul.mubr.f32.gmra.mrb[0].mxu0 %v3355
      %v3579 = vpop.f32.mrb[0].mxu0
      %v3580 = vadd.f32 0.0, %v3579
      %v3581 = vpop.f32.mrb[0].mxu0
      %3582 = vmatprep.mubr.f32.mxu0 0.0
      %3583 = vmatmul.mubr.f32.gmra.mrb[0].mxu0 %v3358
      %v3584 = vpop.f32.mrb[0].mxu0
      %v3585 = vadd.f32 0.0, %v3584
      %v3586 = vpop.f32.mrb[0].mxu0
      %3587 = vdwg.mxu0
      %v3588 = vadd.f32 %v3198, %v3430
      %v3589 = vadd.f32 %v3199, %v3435
      %v3590 = vadd.f32 %v3200, %v3440
      %v3591 = vadd.f32 %v3201, %v3445
      %v3592 = vadd.f32 %v3202, %v3450
      %v3593 = vadd.f32 %v3203, %v3455
      %v3594 = vadd.f32 %v3204, %v3460
      %v3595 = vadd.f32 %v3205, %v3465
      %v3596 = vadd.f32 %v3206, %v3470
      %v3597 = vadd.f32 %v3207, %v3475
      %v3598 = vadd.f32 %v3208, %v3480
      %v3599 = vadd.f32 %v3209, %v3485
      %v3600 = vadd.f32 %v3210, %v3490
      %v3601 = vadd.f32 %v3211, %v3495
      %v3602 = vadd.f32 %v3212, %v3500
      %v3603 = vadd.f32 %v3213, %v3505
      %v3604 = vadd.f32 %v3214, %v3510
      %v3605 = vadd.f32 %v3215, %v3515
      %v3606 = vadd.f32 %v3216, %v3520
      %v3607 = vadd.f32 %v3217, %v3525
      %v3608 = vadd.f32 %v3218, %v3530
      %v3609 = vadd.f32 %v3219, %v3535
      %v3610 = vadd.f32 %v3220, %v3540
      %v3611 = vadd.f32 %v3221, %v3545
      %v3612 = vadd.f32 %v3222, %v3550
      %v3613 = vadd.f32 %v3223, %v3555
      %v3614 = vadd.f32 %v3224, %v3560
      %v3615 = vadd.f32 %v3225, %v3565
      %v3616 = vadd.f32 %v3226, %v3570
      %v3617 = vadd.f32 %v3227, %v3575
      %v3618 = vadd.f32 %v3228, %v3580
      %v3619 = vadd.f32 %v3229, %v3585
      %v3620 = vld [vmem:[%s2] sm:$0x1]
      %v3622 = vlaneseq
      %v3623 = vshrl.u32 %v3622, 7
      %v3624 = vsub.s32 0, %v3623
      %v3625 = vrot.slane %v3620, %v3624
      %v3627 = vadd.f32 %v3588, %v3625
      %v3628 = vadd.f32 %v3589, %v3625
      %v3629 = vadd.f32 %v3590, %v3625
      %v3630 = vadd.f32 %v3591, %v3625
      %v3631 = vadd.f32 %v3592, %v3625
      %v3632 = vadd.f32 %v3593, %v3625
      %v3633 = vadd.f32 %v3594, %v3625
      %v3634 = vadd.f32 %v3595, %v3625
      %v3635 = vadd.f32 %v3596, %v3625
      %v3636 = vadd.f32 %v3597, %v3625
      %v3637 = vadd.f32 %v3598, %v3625
      %v3638 = vadd.f32 %v3599, %v3625
      %v3639 = vadd.f32 %v3600, %v3625
      %v3640 = vadd.f32 %v3601, %v3625
      %v3641 = vadd.f32 %v3602, %v3625
      %v3642 = vadd.f32 %v3603, %v3625
      %v3643 = vadd.f32 %v3604, %v3625
      %v3644 = vadd.f32 %v3605, %v3625
      %v3645 = vadd.f32 %v3606, %v3625
      %v3646 = vadd.f32 %v3607, %v3625
      %v3647 = vadd.f32 %v3608, %v3625
      %v3648 = vadd.f32 %v3609, %v3625
      %v3649 = vadd.f32 %v3610, %v3625
      %v3650 = vadd.f32 %v3611, %v3625
      %v3651 = vadd.f32 %v3612, %v3625
      %v3652 = vadd.f32 %v3613, %v3625
      %v3653 = vadd.f32 %v3614, %v3625
      %v3654 = vadd.f32 %v3615, %v3625
      %v3655 = vadd.f32 %v3616, %v3625
      %v3656 = vadd.f32 %v3617, %v3625
      %v3657 = vadd.f32 %v3618, %v3625
      %v3658 = vadd.f32 %v3619, %v3625
      %v3659 = vmax.f32 %v3627, 0.0
      %v3660 = vmax.f32 %v3628, 0.0
      %v3661 = vmax.f32 %v3629, 0.0
      %v3662 = vmax.f32 %v3630, 0.0
      %v3663 = vmax.f32 %v3631, 0.0
      %v3664 = vmax.f32 %v3632, 0.0
      %v3665 = vmax.f32 %v3633, 0.0
      %v3666 = vmax.f32 %v3634, 0.0
      %v3667 = vmax.f32 %v3635, 0.0
      %v3668 = vmax.f32 %v3636, 0.0
      %v3669 = vmax.f32 %v3637, 0.0
      %v3670 = vmax.f32 %v3638, 0.0
      %v3671 = vmax.f32 %v3639, 0.0
      %v3672 = vmax.f32 %v3640, 0.0
      %v3673 = vmax.f32 %v3641, 0.0
      %v3674 = vmax.f32 %v3642, 0.0
      %v3675 = vmax.f32 %v3643, 0.0
      %v3676 = vmax.f32 %v3644, 0.0
      %v3677 = vmax.f32 %v3645, 0.0
      %v3678 = vmax.f32 %v3646, 0.0
      %v3679 = vmax.f32 %v3647, 0.0
      %v3680 = vmax.f32 %v3648, 0.0
      %v3681 = vmax.f32 %v3649, 0.0
      %v3682 = vmax.f32 %v3650, 0.0
      %v3683 = vmax.f32 %v3651, 0.0
      %v3684 = vmax.f32 %v3652, 0.0
      %v3685 = vmax.f32 %v3653, 0.0
      %v3686 = vmax.f32 %v3654, 0.0
      %v3687 = vmax.f32 %v3655, 0.0
      %v3688 = vmax.f32 %v3656, 0.0
      %v3689 = vmax.f32 %v3657, 0.0
      %v3690 = vmax.f32 %v3658, 0.0
      %3691 = vst [vmem:[%s170] sm:$0xff] %v3659
      %3692 = vst [vmem:[%s170 + $0x8] sm:$0xff] %v3660
      %3693 = vst [vmem:[%s170 + $0x10] sm:$0xff] %v3661
      %3694 = vst [vmem:[%s170 + $0x18] sm:$0xff] %v3662
      %3695 = vst [vmem:[%s170 + $0x20] sm:$0xff] %v3663
      %3696 = vst [vmem:[%s170 + $0x28] sm:$0xff] %v3664
      %3697 = vst [vmem:[%s170 + $0x30] sm:$0xff] %v3665
      %3698 = vst [vmem:[%s170 + $0x38] sm:$0xff] %v3666
      %3699 = vst [vmem:[%s170 + $0x40] sm:$0xff] %v3667
      %3700 = vst [vmem:[%s170 + $0x48] sm:$0xff] %v3668
      %3701 = vst [vmem:[%s170 + $0x50] sm:$0xff] %v3669
      %3702 = vst [vmem:[%s170 + $0x58] sm:$0xff] %v3670
      %3703 = vst [vmem:[%s170 + $0x60] sm:$0xff] %v3671
      %3704 = vst [vmem:[%s170 + $0x68] sm:$0xff] %v3672
      %3705 = vst [vmem:[%s170 + $0x70] sm:$0xff] %v3673
      %3706 = vst [vmem:[%s170 + $0x78] sm:$0xff] %v3674
      %3707 = vst [vmem:[%s170 + $0x80] sm:$0xff] %v3675
      %3708 = vst [vmem:[%s170 + $0x88] sm:$0xff] %v3676
      %3709 = vst [vmem:[%s170 + $0x90] sm:$0xff] %v3677
      %3710 = vst [vmem:[%s170 + $0x98] sm:$0xff] %v3678
      %3711 = vst [vmem:[%s170 + $0xa0] sm:$0xff] %v3679
      %3712 = vst [vmem:[%s170 + $0xa8] sm:$0xff] %v3680
      %3713 = vst [vmem:[%s170 + $0xb0] sm:$0xff] %v3681
      %3714 = vst [vmem:[%s170 + $0xb8] sm:$0xff] %v3682
      %3715 = vst [vmem:[%s170 + $0xc0] sm:$0xff] %v3683
      %3716 = vst [vmem:[%s170 + $0xc8] sm:$0xff] %v3684
      %3717 = vst [vmem:[%s170 + $0xd0] sm:$0xff] %v3685
      %3718 = vst [vmem:[%s170 + $0xd8] sm:$0xff] %v3686
      %3719 = vst [vmem:[%s170 + $0xe0] sm:$0xff] %v3687
      %3720 = vst [vmem:[%s170 + $0xe8] sm:$0xff] %v3688
      %3721 = vst [vmem:[%s170 + $0xf0] sm:$0xff] %v3689
      %3722 = vst [vmem:[%s170 + $0xf8] sm:$0xff] %v3690
      %p3723 = scmp.lt.s32.totalorder %s14, 1
      %s3724 = scalar_select %p3723, %s14, 1
      %s3725 = smul.addr %s3724, 32
      %s3726 = smul.addr %s3725, 8
      %s3727 = scalar_lea.vmem %s3, %s3726
      // Predicated region
      $region33: #{inception_forward.7} parent=31 // pred_check
        %p3728 = pneg %p100
      $region34: #{inception_forward.7} parent=31 // pred_check_branch
        %3730 = sbr.rel (%p3728) target = $region36
      $region35: #{inception_forward.7} parent=31 // pred_region
        _
      $region36: #{inception_forward.7} parent=31 // pred_fallthru
        _
    $region32: #{inception_forward.7} parent=5 // pred_fallthru
      _
    %p3731 = scmp.le.s32.totalorder 2, %s9
    // Predicated region
    $region37: #{inception_forward.7} parent=5 // pred_check
      %p3732 = pneg %p3731
    $region38: #{inception_forward.7} parent=5 // pred_check_branch
      %3734 = sbr.rel (%p3732) target = $region40
    $region39: #{inception_forward.7} parent=5 // pred_region
      %s3735 = ssub.s32 %s9, 2
      // Predicated region
      $region41: #{inception_forward.7} parent=39 // pred_check
        %p3736 = pneg %p106
      $region42: #{inception_forward.7} parent=39 // pred_check_branch
        %3738 = sbr.rel (%p3736) target = $region44
      $region43: #{inception_forward.7} parent=39 // pred_region
        %p3739 = scmp.lt.s32.totalorder %s15, 1
        %s3740 = scalar_select %p3739, %s15, 1
        %s3741 = smul.addr %s3740, 32
        %s3742 = smul.addr %s3741, 8
        %s3743 = scalar_lea.vmem %s3, %s3742
      $region44: #{inception_forward.7} parent=39 // pred_fallthru
        _
    $region40: #{inception_forward.7} parent=5 // pred_fallthru
      _
  $region6: #{inception_forward.7} parent=0 // loop_footer
    %s13 = sadd.s32 1, %s9
  $region7: #{inception_forward.7} parent=0 // loop_footer_branch
    %8 = sbr.rel target = $region3
  $region8: #{inception_forward.7} parent=0 // loop_exit
    _

// kernel: inception_forward.8
$region0: #{inception_forward.8}
  #allocation0 [shape = 'u32[]', space=smem, size = 0x4, offset = 0x4, fixed_abs, tag = 'smem constant byte address 0x4 - core index']
  #allocation1 [shape = 'u32[144,128]{1,0:T(1,128)}', space=vmem, size = 0x12000, scoped, tag = 'internal scratch']
  %s0 = inlined_call_operand.vmem [shape: f32[2,18,18,8], index: 0, kind: input, shape index: {}]
  %s1 = inlined_call_operand.vmem [shape: f32[9,8,128], index: 1, kind: input, shape index: {}]
  %s2 = inlined_call_operand.vmem [shape: f32[1,128], index: 2, kind: input, shape index: {}]
  %s3 = inlined_call_operand.vmem [shape: f32[2,16,16,128], index: 3, kind: output, shape index: {}]
  %s4 = sld [smem:[#allocation0]]
  $region45: #{inception_forward.8} parent=0
    _
  %s6 = ssub.s32 1, %s4
  %s7 = scalar_select 0, %s6, %s4
  loop: start=0, step=1, limit=4
  $region2: #{inception_forward.8} parent=0 // loop_pre_header
    _
  $region3: #{inception_forward.8} parent=0 // loop_header
    %s9 = sphi 0, %s13
    %p10 = scmp.ge.s32.totalorder %s9, 4
    %s19 = sphi 0, %s21
    %s22 = sphi 0, %s19
    %s23 = sphi 0, %s22
    %s39 = sphi 0, %s23
    %s43 = sphi 0, %s43
    %s45 = sphi 0, %s43
    %s46 = sphi 0, %s45
    %s60 = sphi 0, %s46
    %s64 = sphi 0, %s64
    %s66 = sphi 0, %s64
    %s67 = sphi 0, %s66
    %s81 = sphi 0, %s67
    %s87 = sphi 0, %s89
    %s90 = sphi 0, %s87
    %s91 = sphi 0, %s90
    %s107 = sphi 0, %s91
  $region4: #{inception_forward.8} parent=0 // loop_header_branch
    %12 = sbr.rel (%p10) target = $region8
  $region5: #{inception_forward.8} parent=0 // loop_body
    %s14 = ssub.s32 %s9, 1
    %s15 = ssub.s32 %s9, 2
    %s16 = sadd.s32 %s9, 1
    %s17 = ssub.s32 %s9, %s16
    %p18 = scmp.eq.s32.totalorder %s17, 0
    %s20 = sadd.s32 %s19, 1
    %s21 = scalar_select %p18, %s19, %s20
    %p24 = pneg %p18
    %p25 = scmp.eq.s32.totalorder %s9, 1
    %p26 = por %p24, %p25
    %p27 = scmp.ne.s32.totalorder %s19, %s22
    %p28 = scmp.eq.s32.totalorder %s9, 0
    %p29 = por %p27, %p28
    %p30 = scmp.ne.s32.totalorder %s19, %s22
    %p31 = scmp.eq.s32.totalorder %s14, 1
    %p32 = por %p30, %p31
    %p33 = scmp.ne.s32.totalorder %s22, %s23
    %p34 = scmp.eq.s32.totalorder %s14, 0
    %p35 = por %p33, %p34
    %p36 = scmp.ne.s32.totalorder %s22, %s23
    %p37 = scmp.eq.s32.totalorder %s15, 1
    %p38 = por %p36, %p37
    %p40 = scmp.ne.s32.totalorder %s23, %s39
    %p41 = scmp.eq.s32.totalorder %s15, 0
    %p42 = por %p40, %p41
    %s44 = sadd.s32 %s43, 1
    %p47 = scmp.eq.s32.totalorder %s9, 1
    %p48 = scmp.ne.s32.totalorder %s43, %s45
    %p49 = scmp.eq.s32.totalorder %s9, 0
    %p50 = por %p48, %p49
    %p51 = scmp.ne.s32.totalorder %s43, %s45
    %p52 = scmp.eq.s32.totalorder %s14, 1
    %p53 = por %p51, %p52
    %p54 = scmp.ne.s32.totalorder %s45, %s46
    %p55 = scmp.eq.s32.totalorder %s14, 0
    %p56 = por %p54, %p55
    %p57 = scmp.ne.s32.totalorder %s45, %s46
    %p58 = scmp.eq.s32.totalorder %s15, 1
    %p59 = por %p57, %p58
    %p61 = scmp.ne.s32.totalorder %s46, %s60
    %p62 = scmp.eq.s32.totalorder %s15, 0
    %p63 = por %p61, %p62
    %s65 = sadd.s32 %s64, 1
    %p68 = scmp.eq.s32.totalorder %s9, 1
    %p69 = scmp.ne.s32.totalorder %s64, %s66
    %p70 = scmp.eq.s32.totalorder %s9, 0
    %p71 = por %p69, %p70
    %p72 = scmp.ne.s32.totalorder %s64, %s66
    %p73 = scmp.eq.s32.totalorder %s14, 1
    %p74 = por %p72, %p73
    %p75 = scmp.ne.s32.totalorder %s66, %s67
    %p76 = scmp.eq.s32.totalorder %s14, 0
    %p77 = por %p75, %p76
    %p78 = scmp.ne.s32.totalorder %s66, %s67
    %p79 = scmp.eq.s32.totalorder %s15, 1
    %p80 = por %p78, %p79
    %p82 = scmp.ne.s32.totalorder %s67, %s81
    %p83 = scmp.eq.s32.totalorder %s15, 0
    %p84 = por %p82, %p83
    %s85 = ssub.s32 %s9, %s16
    %p86 = scmp.eq.s32.totalorder %s85, 0
    %s88 = sadd.s32 %s87, 1
    %s89 = scalar_select %p86, %s87, %s88
    %p92 = pneg %p86
    %p93 = scmp.eq.s32.totalorder %s9, 1
    %p94 = por %p92, %p93
    %p95 = scmp.ne.s32.totalorder %s87, %s90
    %p96 = scmp.eq.s32.totalorder %s9, 0
    %p97 = por %p95, %p96
    %p98 = scmp.ne.s32.totalorder %s87, %s90
    %p99 = scmp.eq.s32.totalorder %s14, 1
    %p100 = por %p98, %p99
    %p101 = scmp.ne.s32.totalorder %s90, %s91
    %p102 = scmp.eq.s32.totalorder %s14, 0
    %p103 = por %p101, %p102
    %p104 = scmp.ne.s32.totalorder %s90, %s91
    %p105 = scmp.eq.s32.totalorder %s15, 1
    %p106 = por %p104, %p105
    %p108 = scmp.ne.s32.totalorder %s91, %s107
    %p109 = scmp.eq.s32.totalorder %s15, 0
    %p110 = por %p108, %p109
    %p111 = scmp.le.s32.totalorder 1, %s9
    %p112 = scmp.lt.s32.totalorder %s9, 3
    %p113 = pnand %p111, %p112
    %p114 = pneg %p113
    // Predicated region
    $region9: #{inception_forward.8} parent=5 // pred_check
      _
    $region10: #{inception_forward.8} parent=5 // pred_check_branch
      %116 = sbr.rel (%p113) target = $region12
    $region11: #{inception_forward.8} parent=5 // pred_region
      %s117 = ssub.s32 %s9, 1
      // Predicated region
      $region13: #{inception_forward.8} parent=11 // pred_check
        %p118 = pneg %p56
      $region14: #{inception_forward.8} parent=11 // pred_check_branch
        %120 = sbr.rel (%p118) target = $region16
      $region15: #{inception_forward.8} parent=11 // pred_region
        _
      $region16: #{inception_forward.8} parent=11 // pred_fallthru
        _
      // Predicated region
      $region17: #{inception_forward.8} parent=11 // pred_check
        %p121 = pneg %p77
      $region18: #{inception_forward.8} parent=11 // pred_check_branch
        %123 = sbr.rel (%p121) target = $region20
      $region19: #{inception_forward.8} parent=11 // pred_region
        _
      $region20: #{inception_forward.8} parent=11 // pred_fallthru
        _
    $region12: #{inception_forward.8} parent=5 // pred_fallthru
      _
    %p124 = scmp.lt.s32.totalorder %s9, 2
    // Predicated region
    $region21: #{inception_forward.8} parent=5 // pred_check
      %p125 = pneg %p124
    $region22: #{inception_forward.8} parent=5 // pred_check_branch
      %127 = sbr.rel (%p125) target = $region24
    $region23: #{inception_forward.8} parent=5 // pred_region
      // Predicated region
      $region25: #{inception_forward.8} parent=23 // pred_check
        %p128 = pneg %p29
      $region26: #{inception_forward.8} parent=23 // pred_check_branch
        %130 = sbr.rel (%p128) target = $region28
      $region27: #{inception_forward.8} parent=23 // pred_region
        %p131 = scmp.lt.s32.totalorder %s9, 1
        %s132 = scalar_select %p131, %s9, 1
        %s133 = smul.addr %s132, 54
        %s134 = smul.addr %s133, 8
        %s135 = scalar_lea.vmem %s0, %s134
      $region28: #{inception_forward.8} parent=23 // pred_fallthru
        _
    $region24: #{inception_forward.8} parent=5 // pred_fallthru
      _
    %p136 = scmp.le.s32.totalorder 1, %s9
    %p137 = scmp.lt.s32.totalorder %s9, 3
    %p138 = pnand %p136, %p137
    %p139 = pneg %p138
    // Predicated region
    $region29: #{inception_forward.8} parent=5 // pred_check
      _
    $region30: #{inception_forward.8} parent=5 // pred_check_branch
      %141 = sbr.rel (%p138) target = $region32
    $region31: #{inception_forward.8} parent=5 // pred_region
      %s142 = ssub.s32 %s9, 1
      %p143 = scmp.lt.s32.totalorder %s14, 1
      %s144 = scalar_select %p143, %s14, 1
      %s145 = smul.addr %s144, 54
      %s146 = smul.addr %s145, 8
      %s147 = scalar_lea.vmem %s0, %s146
      %p148 = pneg %p35
      %p149 = pneg %p32
      %p150 = pneg %p56
      %p151 = pneg %p53
      %p152 = pneg %p77
      %p153 = pneg %p74
      %p154 = pneg %p103
      %p155 = pneg %p100
      %p156 = scmp.lt.s32.totalorder %s14, 1
      %s157 = scalar_select %p156, %s14, 1
      %s158 = smul.addr %s157, 32
      %s159 = smul.addr %s158, 8
      %s160 = scalar_lea.vmem %s3, %s159
      %p161 = scmp.lt.s32.totalorder %s14, 1
      %s162 = scalar_select %p161, %s14, 1
      %s163 = smul.addr %s162, 54
      %s164 = smul.addr %s163, 8
      %s165 = scalar_lea.vmem %s0, %s164
      %p166 = scmp.lt.s32.totalorder %s14, 1
      %s167 = scalar_select %p166, %s14, 1
      %s168 = smul.addr %s167, 32
      %s169 = smul.addr %s168, 8
      %s170 = scalar_lea.vmem %s3, %s169
      %v171 = vld [vmem:[%s165] sm:$0xff]
      %v172 = vld [vmem:[%s165 + $0x8] sm:$0xff]
      %v173 = vld [vmem:[%s165 + $0x18] sm:$0xff]
      %v174 = vld [vmem:[%s165 + $0x20] sm:$0xff]
      %v175 = vld [vmem:[%s165 + $0x30] sm:$0xff]
      %v176 = vld [vmem:[%s165 + $0x38] sm:$0xff]
      %v177 = vld [vmem:[%s165 + $0x48] sm:$0xff]
      %v178 = vld [vmem:[%s165 + $0x50] sm:$0xff]
      %v179 = vld [vmem:[%s165 + $0x60] sm:$0xff]
      %v180 = vld [vmem:[%s165 + $0x68] sm:$0xff]
      %v181 = vld [vmem:[%s165 + $0x78] sm:$0xff]
      %v182 = vld [vmem:[%s165 + $0x80] sm:$0xff]
      %v183 = vld [vmem:[%s165 + $0x90] sm:$0xff]
      %v184 = vld [vmem:[%s165 + $0x98] sm:$0xff]
      %v185 = vld [vmem:[%s165 + $0xa8] sm:$0xff]
      %v186 = vld [vmem:[%s165 + $0xb0] sm:$0xff]
      %v187 = vld [vmem:[%s165 + $0xc0] sm:$0xff]
      %v188 = vld [vmem:[%s165 + $0xc8] sm:$0xff]
      %v189 = vld [vmem:[%s165 + $0xd8] sm:$0xff]
      %v190 = vld [vmem:[%s165 + $0xe0] sm:$0xff]
      %v191 = vld [vmem:[%s165 + $0xf0] sm:$0xff]
      %v192 = vld [vmem:[%s165 + $0xf8] sm:$0xff]
      %v193 = vld [vmem:[%s165 + $0x108] sm:$0xff]
      %v194 = vld [vmem:[%s165 + $0x110] sm:$0xff]
      %v195 = vld [vmem:[%s165 + $0x120] sm:$0xff]
      %v196 = vld [vmem:[%s165 + $0x128] sm:$0xff]
      %v197 = vld [vmem:[%s165 + $0x138] sm:$0xff]
      %v198 = vld [vmem:[%s165 + $0x140] sm:$0xff]
      %v199 = vld [vmem:[%s165 + $0x150] sm:$0xff]
      %v200 = vld [vmem:[%s165 + $0x158] sm:$0xff]
      %v201 = vld [vmem:[%s165 + $0x168] sm:$0xff]
      %v202 = vld [vmem:[%s165 + $0x170] sm:$0xff]
      %v203 = vld [vmem:[%s1] sm:$0xff]
      %v204 = vld [vmem:[%s165 + $0x1] sm:$0xff]
      %v205 = vld [vmem:[%s165 + $0x9] sm:$0xff]
      %v206 = vld [vmem:[%s165 + $0x19] sm:$0xff]
      %v207 = vld [vmem:[%s165 + $0x21] sm:$0xff]
      %v208 = vld [vmem:[%s165 + $0x31] sm:$0xff]
      %v209 = vld [vmem:[%s165 + $0x39] sm:$0xff]
      %v210 = vld [vmem:[%s165 + $0x49] sm:$0xff]
      %v211 = vld [vmem:[%s165 + $0x51] sm:$0xff]
      %v212 = vld [vmem:[%s165 + $0x61] sm:$0xff]
      %v213 = vld [vmem:[%s165 + $0x69] sm:$0xff]
      %v214 = vld [vmem:[%s165 + $0x79] sm:$0xff]
      %v215 = vld [vmem:[%s165 + $0x81] sm:$0xff]
      %v216 = vld [vmem:[%s165 + $0x91] sm:$0xff]
      %v217 = vld [vmem:[%s165 + $0x99] sm:$0xff]
      %v218 = vld [vmem:[%s165 + $0xa9] sm:$0xff]
      %v219 = vld [vmem:[%s165 + $0xb1] sm:$0xff]
      %v220 = vld [vmem:[%s165 + $0xc1] sm:$0xff]
      %v221 = vld [vmem:[%s165 + $0xc9] sm:$0xff]
      %v222 = vld [vmem:[%s165 + $0xd9] sm:$0xff]
      %v223 = vld [vmem:[%s165 + $0xe1] sm:$0xff]
      %v224 = vld [vmem:[%s165 + $0xf1] sm:$0xff]
      %v225 = vld [vmem:[%s165 + $0xf9] sm:$0xff]
      %v226 = vld [vmem:[%s165 + $0x109] sm:$0xff]
      %v227 = vld [vmem:[%s165 + $0x111] sm:$0xff]
      %v228 = vld [vmem:[%s165 + $0x121] sm:$0xff]
      %v229 = vld [vmem:[%s165 + $0x129] sm:$0xff]
      %v230 = vld [vmem:[%s165 + $0x139] sm:$0xff]
      %v231 = vld [vmem:[%s165 + $0x141] sm:$0xff]
      %v232 = vld [vmem:[%s165 + $0x151] sm:$0xff]
      %v233 = vld [vmem:[%s165 + $0x159] sm:$0xff]
      %v234 = vld [vmem:[%s165 + $0x169] sm:$0xff]
      %v235 = vld [vmem:[%s165 + $0x171] sm:$0xff]
      %s236 = scalar_lea.vmem %s1, 8
      %v237 = vld [vmem:[%s236] sm:$0xff]
      %vm238 = vcmask 64512
      %v240 = vsel %vm238, %v204, 0
      %v243 = vsel %vm238, %v205, 0
      %v246 = vsel %vm238, %v206, 0
      %v249 = vsel %vm238, %v207, 0
      %v252 = vsel %vm238, %v208, 0
      %v255 = vsel %vm238, %v209, 0
      %v258 = vsel %vm238, %v210, 0
      %v261 = vsel %vm238, %v211, 0
      %v264 = vsel %vm238, %v212, 0
      %v267 = vsel %vm238, %v213, 0
      %v270 = vsel %vm238, %v214, 0
      %v273 = vsel %vm238, %v215, 0
      %v276 = vsel %vm238, %v216, 0
      %v279 = vsel %vm238, %v217, 0
      %v282 = vsel %vm238, %v218, 0
      %v285 = vsel %vm238, %v219, 0
      %v288 = vsel %vm238, %v220, 0
      %v291 = vsel %vm238, %v221, 0
      %v294 = vsel %vm238, %v222, 0
      %v297 = vsel %vm238, %v223, 0
      %v300 = vsel %vm238, %v224, 0
      %v303 = vsel %vm238, %v225, 0
      %v306 = vsel %vm238, %v226, 0
      %v309 = vsel %vm238, %v227, 0
      %v312 = vsel %vm238, %v228, 0
      %v315 = vsel %vm238, %v229, 0
      %v318 = vsel %vm238, %v230, 0
      %v321 = vsel %vm238, %v231, 0
      %v324 = vsel %vm238, %v232, 0
      %v327 = vsel %vm238, %v233, 0
      %v330 = vsel %vm238, %v234, 0
      %v333 = vsel %vm238, %v235, 0
      %335 = vmatprep.subr.mxu0 0.0
      %336 = vmatpush1.msra.mxu0 %v237
      %337 = vmatprep.subr.mxu0 0.0
      %338 = vmatpush1.msra.mxu0 0.0
      %339 = vmatprep.subr.mxu0 0.0
      %340 = vmatpush1.msra.mxu0 0.0
      %341 = vmatprep.subr.mxu0 0.0
      %342 = vmatpush1.msra.mxu0 0.0
      %343 = vmatprep.subr.mxu0 0.0
      %344 = vmatpush1.msra.mxu0 0.0
      %345 = vmatprep.subr.mxu0 0.0
      %346 = vmatpush1.msra.mxu0 0.0
      %347 = vmatprep.subr.mxu0 0.0
      %348 = vmatpush1.msra.mxu0 0.0
      %349 = vmatprep.subr.mxu0 0.0
      %350 = vmatpush1.msra.mxu0 0.0
      %351 = vmatprep.subr.mxu0 0.0
      %352 = vmatpush1.msra.mxu0 0.0
      %353 = vmatprep.subr.mxu0 0.0
      %354 = vmatpush1.msra.mxu0 0.0
      %355 = vmatprep.subr.mxu0 0.0
      %356 = vmatpush1.msra.mxu0 0.0
      %357 = vmatprep.subr.mxu0 0.0
      %358 = vmatpush1.msra.mxu0 0.0
      %359 = vmatprep.subr.mxu0 0.0
      %360 = vmatpush1.msra.mxu0 0.0
      %361 = vmatprep.subr.mxu0 0.0
      %362 = vmatpush1.msra.mxu0 0.0
      %363 = vmatprep.subr.mxu0 0.0
      %364 = vmatpush1.msra.mxu0 0.0
      %365 = vmatprep.subr.mxu0 0.0
      %366 = vmatpush1.msra.mxu0 0.0
      %367 = vmatprep.subr.mxu0 0.0
      %368 = vmatpush1.msra.mxu0 0.0
      %369 = vmatprep.subr.mxu0 0.0
      %370 = vmatpush1.msra.mxu0 0.0
      %371 = vmatprep.subr.mxu0 0.0
      %372 = vmatpush1.msra.mxu0 0.0
      %373 = vmatprep.subr.mxu0 0.0
      %374 = vmatpush1.msra.mxu0 0.0
      %375 = vmatprep.subr.mxu0 0.0
      %376 = vmatpush1.msra.mxu0 0.0
      %377 = vmatprep.subr.mxu0 0.0
      %378 = vmatpush1.msra.mxu0 0.0
      %379 = vmatprep.subr.mxu0 0.0
      %380 = vmatpush1.msra.mxu0 0.0
      %381 = vmatprep.subr.mxu0 0.0
      %382 = vmatpush1.msra.mxu0 0.0
      %383 = vmatprep.subr.mxu0 0.0
      %384 = vmatpush1.msra.mxu0 0.0
      %385 = vmatprep.subr.mxu0 0.0
      %386 = vmatpush1.msra.mxu0 0.0
      %387 = vmatprep.subr.mxu0 0.0
      %388 = vmatpush1.msra.mxu0 0.0
      %389 = vmatprep.subr.mxu0 0.0
      %390 = vmatpush1.msra.mxu0 0.0
      %391 = vmatprep.subr.mxu0 0.0
      %392 = vmatpush1.msra.mxu0 0.0
      %393 = vmatprep.subr.mxu0 0.0
      %394 = vmatpush1.msra.mxu0 0.0
      %395 = vmatprep.subr.mxu0 0.0
      %396 = vmatpush1.msra.mxu0 0.0
      %397 = vmatprep.subr.mxu0 0.0
      %398 = vmatpush1.msra.mxu0 0.0
      %399 = vmatprep.mubr.f32.mxu0 0.0
      %400 = vmatmul.mubr.f32.gmra.mrb[0].mxu0 %v240
      %v401 = vpop.f32.mrb[0].mxu0
      %v402 = vadd.f32 0.0, %v401
      %v403 = vpop.f32.mrb[0].mxu0
      %404 = vmatprep.mubr.f32.mxu0 0.0
      %405 = vmatmul.mubr.f32.gmra.mrb[0].mxu0 %v243
      %v406 = vpop.f32.mrb[0].mxu0
      %v407 = vadd.f32 0.0, %v406
      %v408 = vpop.f32.mrb[0].mxu0
      %409 = vmatprep.mubr.f32.mxu0 0.0
      %410 = vmatmul.mubr.f32.gmra.mrb[0].mxu0 %v246
      %v411 = vpop.f32.mrb[0].mxu0
      %v412 = vadd.f32 0.0, %v411
      %v413 = vpop.f32.mrb[0].mxu0
      %414 = vmatprep.mubr.f32.mxu0 0.0
      %415 = vmatmul.mubr.f32.gmra.mrb[0].mxu0 %v249
      %v416 = vpop.f32.mrb[0].mxu0
      %v417 = vadd.f32 0.0, %v416
      %v418 = vpop.f32.mrb[0].mxu0
      %419 = vmatprep.mubr.f32.mxu0 0.0
      %420 = vmatmul.mubr.f32.gmra.mrb[0].mxu0 %v252
      %v421 = vpop.f32.mrb[0].mxu0
      %v422 = vadd.f32 0.0, %v421
      %v423 = vpop.f32.mrb[0].mxu0
      %424 = vmatprep.mubr.f32.mxu0 0.0
      %425 = vmatmul.mubr.f32.gmra.mrb[0].mxu0 %v255
      %v426 = vpop.f32.mrb[0].mxu0
      %v427 = vadd.f32 0.0, %v426
      %v428 = vpop.f32.mrb[0].mxu0
      %429 = vmatprep.mubr.f32.mxu0 0.0
      %430 = vmatmul.mubr.f32.gmra.mrb[0].mxu0 %v258
      %v431 = vpop.f32.mrb[0].mxu0
      %v432 = vadd.f32 0.0, %v431
      %v433 = vpop.f32.mrb[0].mxu0
      %434 = vmatprep.mubr.f32.mxu0 0.0
      %435 = vmatmul.mubr.f32.gmra.mrb[0].mxu0 %v261
      %v436 = vpop.f32.mrb[0].mxu0
      %v437 = vadd.f32 0.0, %v436
      %v438 = vpop.f32.mrb[0].mxu0
      %439 = vmatprep.mubr.f32.mxu0 0.0
      %440 = vmatmul.mubr.f32.gmra.mrb[0].mxu0 %v264
      %v441 = vpop.f32.mrb[0].mxu0
      %v442 = vadd.f32 0.0, %v441
      %v443 = vpop.f32.mrb[0].mxu0
      %444 = vmatprep.mubr.f32.mxu0 0.0
      %445 = vmatmul.mubr.f32.gmra.mrb[0].mxu0 %v267
      %v446 = vpop.f32.mrb[0].mxu0
      %v447 = vadd.f32 0.0, %v446
      %v448 = vpop.f32.mrb[0].mxu0
      %449 = vmatprep.mubr.f32.mxu0 0.0
      %450 = vmatmul.mubr.f32.gmra.mrb[0].mxu0 %v270
      %v451 = vpop.f32.mrb[0].mxu0
      %v452 = vadd.f32 0.0, %v451
      %v453 = vpop.f32.mrb[0].mxu0
      %454 = vmatprep.mubr.f32.mxu0 0.0
      %455 = vmatmul.mubr.f32.gmra.mrb[0].mxu0 %v273
      %v456 = vpop.f32.mrb[0].mxu0
      %v457 = vadd.f32 0.0, %v456
      %v458 = vpop.f32.mrb[0].mxu0
      %459 = vmatprep.mubr.f32.mxu0 0.0
      %460 = vmatmul.mubr.f32.gmra.mrb[0].mxu0 %v276
      %v461 = vpop.f32.mrb[0].mxu0
      %v462 = vadd.f32 0.0, %v461
      %v463 = vpop.f32.mrb[0].mxu0
      %464 = vmatprep.mubr.f32.mxu0 0.0
      %465 = vmatmul.mubr.f32.gmra.mrb[0].mxu0 %v279
      %v466 = vpop.f32.mrb[0].mxu0
      %v467 = vadd.f32 0.0, %v466
      %v468 = vpop.f32.mrb[0].mxu0
      %469 = vmatprep.mubr.f32.mxu0 0.0
      %470 = vmatmul.mubr.f32.gmra.mrb[0].mxu0 %v282
      %v471 = vpop.f32.mrb[0].mxu0
      %v472 = vadd.f32 0.0, %v471
      %v473 = vpop.f32.mrb[0].mxu0
      %474 = vmatprep.mubr.f32.mxu0 0.0
      %475 = vmatmul.mubr.f32.gmra.mrb[0].mxu0 %v285
      %v476 = vpop.f32.mrb[0].mxu0
      %v477 = vadd.f32 0.0, %v476
      %v478 = vpop.f32.mrb[0].mxu0
      %479 = vmatprep.mubr.f32.mxu0 0.0
      %480 = vmatmul.mubr.f32.gmra.mrb[0].mxu0 %v288
      %v481 = vpop.f32.mrb[0].mxu0
      %v482 = vadd.f32 0.0, %v481
      %v483 = vpop.f32.mrb[0].mxu0
      %484 = vmatprep.mubr.f32.mxu0 0.0
      %485 = vmatmul.mubr.f32.gmra.mrb[0].mxu0 %v291
      %v486 = vpop.f32.mrb[0].mxu0
      %v487 = vadd.f32 0.0, %v486
      %v488 = vpop.f32.mrb[0].mxu0
      %489 = vmatprep.mubr.f32.mxu0 0.0
      %490 = vmatmul.mubr.f32.gmra.mrb[0].mxu0 %v294
      %v491 = vpop.f32.mrb[0].mxu0
      %v492 = vadd.f32 0.0, %v491
      %v493 = vpop.f32.mrb[0].mxu0
      %494 = vmatprep.mubr.f32.mxu0 0.0
      %495 = vmatmul.mubr.f32.gmra.mrb[0].mxu0 %v297
      %v496 = vpop.f32.mrb[0].mxu0
      %v497 = vadd.f32 0.0, %v496
      %v498 = vpop.f32.mrb[0].mxu0
      %499 = vmatprep.mubr.f32.mxu0 0.0
      %500 = vmatmul.mubr.f32.gmra.mrb[0].mxu0 %v300
      %v501 = vpop.f32.mrb[0].mxu0
      %v502 = vadd.f32 0.0, %v501
      %v503 = vpop.f32.mrb[0].mxu0
      %504 = vmatprep.mubr.f32.mxu0 0.0
      %505 = vmatmul.mubr.f32.gmra.mrb[0].mxu0 %v303
      %v506 = vpop.f32.mrb[0].mxu0
      %v507 = vadd.f32 0.0, %v506
      %v508 = vpop.f32.mrb[0].mxu0
      %509 = vmatprep.mubr.f32.mxu0 0.0
      %510 = vmatmul.mubr.f32.gmra.mrb[0].mxu0 %v306
      %v511 = vpop.f32.mrb[0].mxu0
      %v512 = vadd.f32 0.0, %v511
      %v513 = vpop.f32.mrb[0].mxu0
      %514 = vmatprep.mubr.f32.mxu0 0.0
      %515 = vmatmul.mubr.f32.gmra.mrb[0].mxu0 %v309
      %v516 = vpop.f32.mrb[0].mxu0
      %v517 = vadd.f32 0.0, %v516
      %v518 = vpop.f32.mrb[0].mxu0
      %519 = vmatprep.mubr.f32.mxu0 0.0
      %520 = vmatmul.mubr.f32.gmra.mrb[0].mxu0 %v312
      %v521 = vpop.f32.mrb[0].mxu0
      %v522 = vadd.f32 0.0, %v521
      %v523 = vpop.f32.mrb[0].mxu0
      %524 = vmatprep.mubr.f32.mxu0 0.0
      %525 = vmatmul.mubr.f32.gmra.mrb[0].mxu0 %v315
      %v526 = vpop.f32.mrb[0].mxu0
      %v527 = vadd.f32 0.0, %v526
      %v528 = vpop.f32.mrb[0].mxu0
      %529 = vmatprep.mubr.f32.mxu0 0.0
      %530 = vmatmul.mubr.f32.gmra.mrb[0].mxu0 %v318
      %v531 = vpop.f32.mrb[0].mxu0
      %v532 = vadd.f32 0.0, %v531
      %v533 = vpop.f32.mrb[0].mxu0
      %534 = vmatprep.mubr.f32.mxu0 0.0
      %535 = vmatmul.mubr.f32.gmra.mrb[0].mxu0 %v321
      %v536 = vpop.f32.mrb[0].mxu0
      %v537 = vadd.f32 0.0, %v536
      %v538 = vpop.f32.mrb[0].mxu0
      %539 = vmatprep.mubr.f32.mxu0 0.0
      %540 = vmatmul.mubr.f32.gmra.mrb[0].mxu0 %v324
      %v541 = vpop.f32.mrb[0].mxu0
      %v542 = vadd.f32 0.0, %v541
      %v543 = vpop.f32.mrb[0].mxu0
      %544 = vmatprep.mubr.f32.mxu0 0.0
      %545 = vmatmul.mubr.f32.gmra.mrb[0].mxu0 %v327
      %v546 = vpop.f32.mrb[0].mxu0
      %v547 = vadd.f32 0.0, %v546
      %v548 = vpop.f32.mrb[0].mxu0
      %549 = vmatprep.mubr.f32.mxu0 0.0
      %550 = vmatmul.mubr.f32.gmra.mrb[0].mxu0 %v330
      %v551 = vpop.f32.mrb[0].mxu0
      %v552 = vadd.f32 0.0, %v551
      %v553 = vpop.f32.mrb[0].mxu0
      %554 = vmatprep.mubr.f32.mxu0 0.0
      %555 = vmatmul.mubr.f32.gmra.mrb[0].mxu0 %v333
      %v556 = vpop.f32.mrb[0].mxu0
      %v557 = vadd.f32 0.0, %v556
      %v558 = vpop.f32.mrb[0].mxu0
      %559 = vdwg.mxu0
      %v561 = vsel %vm238, %v171, 0
      %v564 = vsel %vm238, %v172, 0
      %v567 = vsel %vm238, %v173, 0
      %v570 = vsel %vm238, %v174, 0
      %v573 = vsel %vm238, %v175, 0
      %v576 = vsel %vm238, %v176, 0
      %v579 = vsel %vm238, %v177, 0
      %v582 = vsel %vm238, %v178, 0
      %v585 = vsel %vm238, %v179, 0
      %v588 = vsel %vm238, %v180, 0
      %v591 = vsel %vm238, %v181, 0
      %v594 = vsel %vm238, %v182, 0
      %v597 = vsel %vm238, %v183, 0
      %v600 = vsel %vm238, %v184, 0
      %v603 = vsel %vm238, %v185, 0
      %v606 = vsel %vm238, %v186, 0
      %v609 = vsel %vm238, %v187, 0
      %v612 = vsel %vm238, %v188, 0
      %v615 = vsel %vm238, %v189, 0
      %v618 = vsel %vm238, %v190, 0
      %v621 = vsel %vm238, %v191, 0
      %v624 = vsel %vm238, %v192, 0
      %v627 = vsel %vm238, %v193, 0
      %v630 = vsel %vm238, %v194, 0
      %v633 = vsel %vm238, %v195, 0
      %v636 = vsel %vm238, %v196, 0
      %v639 = vsel %vm238, %v197, 0
      %v642 = vsel %vm238, %v198, 0
      %v645 = vsel %vm238, %v199, 0
      %v648 = vsel %vm238, %v200, 0
      %v651 = vsel %vm238, %v201, 0
      %v654 = vsel %vm238, %v202, 0
      %656 = vmatprep.subr.mxu0 0.0
      %657 = vmatpush1.msra.mxu0 %v203
      %658 = vmatprep.subr.mxu0 0.0
      %659 = vmatpush1.msra.mxu0 0.0
      %660 = vmatprep.subr.mxu0 0.0
      %661 = vmatpush1.msra.mxu0 0.0
      %662 = vmatprep.subr.mxu0 0.0
      %663 = vmatpush1.msra.mxu0 0.0
      %664 = vmatprep.subr.mxu0 0.0
      %665 = vmatpush1.msra.mxu0 0.0
      %666 = vmatprep.subr.mxu0 0.0
      %667 = vmatpush1.msra.mxu0 0.0
      %668 = vmatprep.subr.mxu0 0.0
      %669 = vmatpush1.msra.mxu0 0.0
      %670 = vmatprep.subr.mxu0 0.0
      %671 = vmatpush1.msra.mxu0 0.0
      %672 = vmatprep.subr.mxu0 0.0
      %673 = vmatpush1.msra.mxu0 0.0
      %674 = vmatprep.subr.mxu0 0.0
      %675 = vmatpush1.msra.mxu0 0.0
      %676 = vmatprep.subr.mxu0 0.0
      %677 = vmatpush1.msra.mxu0 0.0
      %678 = vmatprep.subr.mxu0 0.0
      %679 = vmatpush1.msra.mxu0 0.0
      %680 = vmatprep.subr.mxu0 0.0
      %681 = vmatpush1.msra.mxu0 0.0
      %682 = vmatprep.subr.mxu0 0.0
      %683 = vmatpush1.msra.mxu0 0.0
      %684 = vmatprep.subr.mxu0 0.0
      %685 = vmatpush1.msra.mxu0 0.0
      %686 = vmatprep.subr.mxu0 0.0
      %687 = vmatpush1.msra.mxu0 0.0
      %688 = vmatprep.subr.mxu0 0.0
      %689 = vmatpush1.msra.mxu0 0.0
      %690 = vmatprep.subr.mxu0 0.0
      %691 = vmatpush1.msra.mxu0 0.0
      %692 = vmatprep.subr.mxu0 0.0
      %693 = vmatpush1.msra.mxu0 0.0
      %694 = vmatprep.subr.mxu0 0.0
      %695 = vmatpush1.msra.mxu0 0.0
      %696 = vmatprep.subr.mxu0 0.0
      %697 = vmatpush1.msra.mxu0 0.0
      %698 = vmatprep.subr.mxu0 0.0
      %699 = vmatpush1.msra.mxu0 0.0
      %700 = vmatprep.subr.mxu0 0.0
      %701 = vmatpush1.msra.mxu0 0.0
      %702 = vmatprep.subr.mxu0 0.0
      %703 = vmatpush1.msra.mxu0 0.0
      %704 = vmatprep.subr.mxu0 0.0
      %705 = vmatpush1.msra.mxu0 0.0
      %706 = vmatprep.subr.mxu0 0.0
      %707 = vmatpush1.msra.mxu0 0.0
      %708 = vmatprep.subr.mxu0 0.0
      %709 = vmatpush1.msra.mxu0 0.0
      %710 = vmatprep.subr.mxu0 0.0
      %711 = vmatpush1.msra.mxu0 0.0
      %712 = vmatprep.subr.mxu0 0.0
      %713 = vmatpush1.msra.mxu0 0.0
      %714 = vmatprep.subr.mxu0 0.0
      %715 = vmatpush1.msra.mxu0 0.0
      %716 = vmatprep.subr.mxu0 0.0
      %717 = vmatpush1.msra.mxu0 0.0
      %718 = vmatprep.subr.mxu0 0.0
      %719 = vmatpush1.msra.mxu0 0.0
      %720 = vmatprep.mubr.f32.mxu0 0.0
      %721 = vmatmul.mubr.f32.gmra.mrb[0].mxu0 %v561
      %v722 = vpop.f32.mrb[0].mxu0
      %v723 = vadd.f32 %v402, %v722
      %v724 = vpop.f32.mrb[0].mxu0
      %725 = vmatprep.mubr.f32.mxu0 0.0
      %726 = vmatmul.mubr.f32.gmra.mrb[0].mxu0 %v564
      %v727 = vpop.f32.mrb[0].mxu0
      %v728 = vadd.f32 %v407, %v727
      %v729 = vpop.f32.mrb[0].mxu0
      %730 = vmatprep.mubr.f32.mxu0 0.0
      %731 = vmatmul.mubr.f32.gmra.mrb[0].mxu0 %v567
      %v732 = vpop.f32.mrb[0].mxu0
      %v733 = vadd.f32 %v412, %v732
      %v734 = vpop.f32.mrb[0].mxu0
      %735 = vmatprep.mubr.f32.mxu0 0.0
      %736 = vmatmul.mubr.f32.gmra.mrb[0].mxu0 %v570
      %v737 = vpop.f32.mrb[0].mxu0
      %v738 = vadd.f32 %v417, %v737
      %v739 = vpop.f32.mrb[0].mxu0
      %740 = vmatprep.mubr.f32.mxu0 0.0
      %741 = vmatmul.mubr.f32.gmra.mrb[0].mxu0 %v573
      %v742 = vpop.f32.mrb[0].mxu0
      %v743 = vadd.f32 %v422, %v742
      %v744 = vpop.f32.mrb[0].mxu0
      %745 = vmatprep.mubr.f32.mxu0 0.0
      %746 = vmatmul.mubr.f32.gmra.mrb[0].mxu0 %v576
      %v747 = vpop.f32.mrb[0].mxu0
      %v748 = vadd.f32 %v427, %v747
      %v749 = vpop.f32.mrb[0].mxu0
      %750 = vmatprep.mubr.f32.mxu0 0.0
      %751 = vmatmul.mubr.f32.gmra.mrb[0].mxu0 %v579
      %v752 = vpop.f32.mrb[0].mxu0
      %v753 = vadd.f32 %v432, %v752
      %v754 = vpop.f32.mrb[0].mxu0
      %755 = vmatprep.mubr.f32.mxu0 0.0
      %756 = vmatmul.mubr.f32.gmra.mrb[0].mxu0 %v582
      %v757 = vpop.f32.mrb[0].mxu0
      %v758 = vadd.f32 %v437, %v757
      %v759 = vpop.f32.mrb[0].mxu0
      %760 = vmatprep.mubr.f32.mxu0 0.0
      %761 = vmatmul.mubr.f32.gmra.mrb[0].mxu0 %v585
      %v762 = vpop.f32.mrb[0].mxu0
      %v763 = vadd.f32 %v442, %v762
      %v764 = vpop.f32.mrb[0].mxu0
      %765 = vmatprep.mubr.f32.mxu0 0.0
      %766 = vmatmul.mubr.f32.gmra.mrb[0].mxu0 %v588
      %v767 = vpop.f32.mrb[0].mxu0
      %v768 = vadd.f32 %v447, %v767
      %v769 = vpop.f32.mrb[0].mxu0
      %770 = vmatprep.mubr.f32.mxu0 0.0
      %771 = vmatmul.mubr.f32.gmra.mrb[0].mxu0 %v591
      %v772 = vpop.f32.mrb[0].mxu0
      %v773 = vadd.f32 %v452, %v772
      %v774 = vpop.f32.mrb[0].mxu0
      %775 = vmatprep.mubr.f32.mxu0 0.0
      %776 = vmatmul.mubr.f32.gmra.mrb[0].mxu0 %v594
      %v777 = vpop.f32.mrb[0].mxu0
      %v778 = vadd.f32 %v457, %v777
      %v779 = vpop.f32.mrb[0].mxu0
      %780 = vmatprep.mubr.f32.mxu0 0.0
      %781 = vmatmul.mubr.f32.gmra.mrb[0].mxu0 %v597
      %v782 = vpop.f32.mrb[0].mxu0
      %v783 = vadd.f32 %v462, %v782
      %v784 = vpop.f32.mrb[0].mxu0
      %785 = vmatprep.mubr.f32.mxu0 0.0
      %786 = vmatmul.mubr.f32.gmra.mrb[0].mxu0 %v600
      %v787 = vpop.f32.mrb[0].mxu0
      %v788 = vadd.f32 %v467, %v787
      %v789 = vpop.f32.mrb[0].mxu0
      %790 = vmatprep.mubr.f32.mxu0 0.0
      %791 = vmatmul.mubr.f32.gmra.mrb[0].mxu0 %v603
      %v792 = vpop.f32.mrb[0].mxu0
      %v793 = vadd.f32 %v472, %v792
      %v794 = vpop.f32.mrb[0].mxu0
      %795 = vmatprep.mubr.f32.mxu0 0.0
      %796 = vmatmul.mubr.f32.gmra.mrb[0].mxu0 %v606
      %v797 = vpop.f32.mrb[0].mxu0
      %v798 = vadd.f32 %v477, %v797
      %v799 = vpop.f32.mrb[0].mxu0
      %800 = vmatprep.mubr.f32.mxu0 0.0
      %801 = vmatmul.mubr.f32.gmra.mrb[0].mxu0 %v609
      %v802 = vpop.f32.mrb[0].mxu0
      %v803 = vadd.f32 %v482, %v802
      %v804 = vpop.f32.mrb[0].mxu0
      %805 = vmatprep.mubr.f32.mxu0 0.0
      %806 = vmatmul.mubr.f32.gmra.mrb[0].mxu0 %v612
      %v807 = vpop.f32.mrb[0].mxu0
      %v808 = vadd.f32 %v487, %v807
      %v809 = vpop.f32.mrb[0].mxu0
      %810 = vmatprep.mubr.f32.mxu0 0.0
      %811 = vmatmul.mubr.f32.gmra.mrb[0].mxu0 %v615
      %v812 = vpop.f32.mrb[0].mxu0
      %v813 = vadd.f32 %v492, %v812
      %v814 = vpop.f32.mrb[0].mxu0
      %815 = vmatprep.mubr.f32.mxu0 0.0
      %816 = vmatmul.mubr.f32.gmra.mrb[0].mxu0 %v618
      %v817 = vpop.f32.mrb[0].mxu0
      %v818 = vadd.f32 %v497, %v817
      %v819 = vpop.f32.mrb[0].mxu0
      %820 = vmatprep.mubr.f32.mxu0 0.0
      %821 = vmatmul.mubr.f32.gmra.mrb[0].mxu0 %v621
      %v822 = vpop.f32.mrb[0].mxu0
      %v823 = vadd.f32 %v502, %v822
      %v824 = vpop.f32.mrb[0].mxu0
      %825 = vmatprep.mubr.f32.mxu0 0.0
      %826 = vmatmul.mubr.f32.gmra.mrb[0].mxu0 %v624
      %v827 = vpop.f32.mrb[0].mxu0
      %v828 = vadd.f32 %v507, %v827
      %v829 = vpop.f32.mrb[0].mxu0
      %830 = vmatprep.mubr.f32.mxu0 0.0
      %831 = vmatmul.mubr.f32.gmra.mrb[0].mxu0 %v627
      %v832 = vpop.f32.mrb[0].mxu0
      %v833 = vadd.f32 %v512, %v832
      %v834 = vpop.f32.mrb[0].mxu0
      %835 = vmatprep.mubr.f32.mxu0 0.0
      %836 = vmatmul.mubr.f32.gmra.mrb[0].mxu0 %v630
      %v837 = vpop.f32.mrb[0].mxu0
      %v838 = vadd.f32 %v517, %v837
      %v839 = vpop.f32.mrb[0].mxu0
      %840 = vmatprep.mubr.f32.mxu0 0.0
      %841 = vmatmul.mubr.f32.gmra.mrb[0].mxu0 %v633
      %v842 = vpop.f32.mrb[0].mxu0
      %v843 = vadd.f32 %v522, %v842
      %v844 = vpop.f32.mrb[0].mxu0
      %845 = vmatprep.mubr.f32.mxu0 0.0
      %846 = vmatmul.mubr.f32.gmra.mrb[0].mxu0 %v636
      %v847 = vpop.f32.mrb[0].mxu0
      %v848 = vadd.f32 %v527, %v847
      %v849 = vpop.f32.mrb[0].mxu0
      %850 = vmatprep.mubr.f32.mxu0 0.0
      %851 = vmatmul.mubr.f32.gmra.mrb[0].mxu0 %v639
      %v852 = vpop.f32.mrb[0].mxu0
      %v853 = vadd.f32 %v532, %v852
      %v854 = vpop.f32.mrb[0].mxu0
      %855 = vmatprep.mubr.f32.mxu0 0.0
      %856 = vmatmul.mubr.f32.gmra.mrb[0].mxu0 %v642
      %v857 = vpop.f32.mrb[0].mxu0
      %v858 = vadd.f32 %v537, %v857
      %v859 = vpop.f32.mrb[0].mxu0
      %860 = vmatprep.mubr.f32.mxu0 0.0
      %861 = vmatmul.mubr.f32.gmra.mrb[0].mxu0 %v645
      %v862 = vpop.f32.mrb[0].mxu0
      %v863 = vadd.f32 %v542, %v862
      %v864 = vpop.f32.mrb[0].mxu0
      %865 = vmatprep.mubr.f32.mxu0 0.0
      %866 = vmatmul.mubr.f32.gmra.mrb[0].mxu0 %v648
      %v867 = vpop.f32.mrb[0].mxu0
      %v868 = vadd.f32 %v547, %v867
      %v869 = vpop.f32.mrb[0].mxu0
      %870 = vmatprep.mubr.f32.mxu0 0.0
      %871 = vmatmul.mubr.f32.gmra.mrb[0].mxu0 %v651
      %v872 = vpop.f32.mrb[0].mxu0
      %v873 = vadd.f32 %v552, %v872
      %v874 = vpop.f32.mrb[0].mxu0
      %875 = vmatprep.mubr.f32.mxu0 0.0
      %876 = vmatmul.mubr.f32.gmra.mrb[0].mxu0 %v654
      %v877 = vpop.f32.mrb[0].mxu0
      %v878 = vadd.f32 %v557, %v877
      %v879 = vpop.f32.mrb[0].mxu0
      %880 = vdwg.mxu0
      %v881 = vld [vmem:[%s165 + $0x2] sm:$0xff]
      %v882 = vld [vmem:[%s165 + $0xa] sm:$0xff]
      %v883 = vld [vmem:[%s165 + $0x1a] sm:$0xff]
      %v884 = vld [vmem:[%s165 + $0x22] sm:$0xff]
      %v885 = vld [vmem:[%s165 + $0x32] sm:$0xff]
      %v886 = vld [vmem:[%s165 + $0x3a] sm:$0xff]
      %v887 = vld [vmem:[%s165 + $0x4a] sm:$0xff]
      %v888 = vld [vmem:[%s165 + $0x52] sm:$0xff]
      %v889 = vld [vmem:[%s165 + $0x62] sm:$0xff]
      %v890 = vld [vmem:[%s165 + $0x6a] sm:$0xff]
      %v891 = vld [vmem:[%s165 + $0x7a] sm:$0xff]
      %v892 = vld [vmem:[%s165 + $0x82] sm:$0xff]
      %v893 = vld [vmem:[%s165 + $0x92] sm:$0xff]
      %v894 = vld [vmem:[%s165 + $0x9a] sm:$0xff]
      %v895 = vld [vmem:[%s165 + $0xaa] sm:$0xff]
      %v896 = vld [vmem:[%s165 + $0xb2] sm:$0xff]
      %v897 = vld [vmem:[%s165 + $0xc2] sm:$0xff]
      %v898 = vld [vmem:[%s165 + $0xca] sm:$0xff]
      %v899 = vld [vmem:[%s165 + $0xda] sm:$0xff]
      %v900 = vld [vmem:[%s165 + $0xe2] sm:$0xff]
      %v901 = vld [vmem:[%s165 + $0xf2] sm:$0xff]
      %v902 = vld [vmem:[%s165 + $0xfa] sm:$0xff]
      %v903 = vld [vmem:[%s165 + $0x10a] sm:$0xff]
      %v904 = vld [vmem:[%s165 + $0x112] sm:$0xff]
      %v905 = vld [vmem:[%s165 + $0x122] sm:$0xff]
      %v906 = vld [vmem:[%s165 + $0x12a] sm:$0xff]
      %v907 = vld [vmem:[%s165 + $0x13a] sm:$0xff]
      %v908 = vld [vmem:[%s165 + $0x142] sm:$0xff]
      %v909 = vld [vmem:[%s165 + $0x152] sm:$0xff]
      %v910 = vld [vmem:[%s165 + $0x15a] sm:$0xff]
      %v911 = vld [vmem:[%s165 + $0x16a] sm:$0xff]
      %v912 = vld [vmem:[%s165 + $0x172] sm:$0xff]
      %s913 = scalar_lea.vmem %s1, 16
      %v914 = vld [vmem:[%s913] sm:$0xff]
      %v916 = vsel %vm238, %v881, 0
      %v919 = vsel %vm238, %v882, 0
      %v922 = vsel %vm238, %v883, 0
      %v925 = vsel %vm238, %v884, 0
      %v928 = vsel %vm238, %v885, 0
      %v931 = vsel %vm238, %v886, 0
      %v934 = vsel %vm238, %v887, 0
      %v937 = vsel %vm238, %v888, 0
      %v940 = vsel %vm238, %v889, 0
      %v943 = vsel %vm238, %v890, 0
      %v946 = vsel %vm238, %v891, 0
      %v949 = vsel %vm238, %v892, 0
      %v952 = vsel %vm238, %v893, 0
      %v955 = vsel %vm238, %v894, 0
      %v958 = vsel %vm238, %v895, 0
      %v961 = vsel %vm238, %v896, 0
      %v964 = vsel %vm238, %v897, 0
      %v967 = vsel %vm238, %v898, 0
      %v970 = vsel %vm238, %v899, 0
      %v973 = vsel %vm238, %v900, 0
      %v976 = vsel %vm238, %v901, 0
      %v979 = vsel %vm238, %v902, 0
      %v982 = vsel %vm238, %v903, 0
      %v985 = vsel %vm238, %v904, 0
      %v988 = vsel %vm238, %v905, 0
      %v991 = vsel %vm238, %v906, 0
      %v994 = vsel %vm238, %v907, 0
      %v997 = vsel %vm238, %v908, 0
      %v1000 = vsel %vm238, %v909, 0
      %v1003 = vsel %vm238, %v910, 0
      %v1006 = vsel %vm238, %v911, 0
      %v1009 = vsel %vm238, %v912, 0
      %1011 = vmatprep.subr.mxu0 0.0
      %1012 = vmatpush1.msra.mxu0 %v914
      %1013 = vmatprep.subr.mxu0 0.0
      %1014 = vmatpush1.msra.mxu0 0.0
      %1015 = vmatprep.subr.mxu0 0.0
      %1016 = vmatpush1.msra.mxu0 0.0
      %1017 = vmatprep.subr.mxu0 0.0
      %1018 = vmatpush1.msra.mxu0 0.0
      %1019 = vmatprep.subr.mxu0 0.0
      %1020 = vmatpush1.msra.mxu0 0.0
      %1021 = vmatprep.subr.mxu0 0.0
      %1022 = vmatpush1.msra.mxu0 0.0
      %1023 = vmatprep.subr.mxu0 0.0
      %1024 = vmatpush1.msra.mxu0 0.0
      %1025 = vmatprep.subr.mxu0 0.0
      %1026 = vmatpush1.msra.mxu0 0.0
      %1027 = vmatprep.subr.mxu0 0.0
      %1028 = vmatpush1.msra.mxu0 0.0
      %1029 = vmatprep.subr.mxu0 0.0
      %1030 = vmatpush1.msra.mxu0 0.0
      %1031 = vmatprep.subr.mxu0 0.0
      %1032 = vmatpush1.msra.mxu0 0.0
      %1033 = vmatprep.subr.mxu0 0.0
      %1034 = vmatpush1.msra.mxu0 0.0
      %1035 = vmatprep.subr.mxu0 0.0
      %1036 = vmatpush1.msra.mxu0 0.0
      %1037 = vmatprep.subr.mxu0 0.0
      %1038 = vmatpush1.msra.mxu0 0.0
      %1039 = vmatprep.subr.mxu0 0.0
      %1040 = vmatpush1.msra.mxu0 0.0
      %1041 = vmatprep.subr.mxu0 0.0
      %1042 = vmatpush1.msra.mxu0 0.0
      %1043 = vmatprep.subr.mxu0 0.0
      %1044 = vmatpush1.msra.mxu0 0.0
      %1045 = vmatprep.subr.mxu0 0.0
      %1046 = vmatpush1.msra.mxu0 0.0
      %1047 = vmatprep.subr.mxu0 0.0
      %1048 = vmatpush1.msra.mxu0 0.0
      %1049 = vmatprep.subr.mxu0 0.0
      %1050 = vmatpush1.msra.mxu0 0.0
      %1051 = vmatprep.subr.mxu0 0.0
      %1052 = vmatpush1.msra.mxu0 0.0
      %1053 = vmatprep.subr.mxu0 0.0
      %1054 = vmatpush1.msra.mxu0 0.0
      %1055 = vmatprep.subr.mxu0 0.0
      %1056 = vmatpush1.msra.mxu0 0.0
      %1057 = vmatprep.subr.mxu0 0.0
      %1058 = vmatpush1.msra.mxu0 0.0
      %1059 = vmatprep.subr.mxu0 0.0
      %1060 = vmatpush1.msra.mxu0 0.0
      %1061 = vmatprep.subr.mxu0 0.0
      %1062 = vmatpush1.msra.mxu0 0.0
      %1063 = vmatprep.subr.mxu0 0.0
      %1064 = vmatpush1.msra.mxu0 0.0
      %1065 = vmatprep.subr.mxu0 0.0
      %1066 = vmatpush1.msra.mxu0 0.0
      %1067 = vmatprep.subr.mxu0 0.0
      %1068 = vmatpush1.msra.mxu0 0.0
      %1069 = vmatprep.subr.mxu0 0.0
      %1070 = vmatpush1.msra.mxu0 0.0
      %1071 = vmatprep.subr.mxu0 0.0
      %1072 = vmatpush1.msra.mxu0 0.0
      %1073 = vmatprep.subr.mxu0 0.0
      %1074 = vmatpush1.msra.mxu0 0.0
      %1075 = vmatprep.mubr.f32.mxu0 0.0
      %1076 = vmatmul.mubr.f32.gmra.mrb[0].mxu0 %v916
      %v1077 = vpop.f32.mrb[0].mxu0
      %v1078 = vadd.f32 0.0, %v1077
      %v1079 = vpop.f32.mrb[0].mxu0
      %1080 = vmatprep.mubr.f32.mxu0 0.0
      %1081 = vmatmul.mubr.f32.gmra.mrb[0].mxu0 %v919
      %v1082 = vpop.f32.mrb[0].mxu0
      %v1083 = vadd.f32 0.0, %v1082
      %v1084 = vpop.f32.mrb[0].mxu0
      %1085 = vmatprep.mubr.f32.mxu0 0.0
      %1086 = vmatmul.mubr.f32.gmra.mrb[0].mxu0 %v922
      %v1087 = vpop.f32.mrb[0].mxu0
      %v1088 = vadd.f32 0.0, %v1087
      %v1089 = vpop.f32.mrb[0].mxu0
      %1090 = vmatprep.mubr.f32.mxu0 0.0
      %1091 = vmatmul.mubr.f32.gmra.mrb[0].mxu0 %v925
      %v1092 = vpop.f32.mrb[0].mxu0
      %v1093 = vadd.f32 0.0, %v1092
      %v1094 = vpop.f32.mrb[0].mxu0
      %1095 = vmatprep.mubr.f32.mxu0 0.0
      %1096 = vmatmul.mubr.f32.gmra.mrb[0].mxu0 %v928
      %v1097 = vpop.f32.mrb[0].mxu0
      %v1098 = vadd.f32 0.0, %v1097
      %v1099 = vpop.f32.mrb[0].mxu0
      %1100 = vmatprep.mubr.f32.mxu0 0.0
      %1101 = vmatmul.mubr.f32.gmra.mrb[0].mxu0 %v931
      %v1102 = vpop.f32.mrb[0].mxu0
      %v1103 = vadd.f32 0.0, %v1102
      %v1104 = vpop.f32.mrb[0].mxu0
      %1105 = vmatprep.mubr.f32.mxu0 0.0
      %1106 = vmatmul.mubr.f32.gmra.mrb[0].mxu0 %v934
      %v1107 = vpop.f32.mrb[0].mxu0
      %v1108 = vadd.f32 0.0, %v1107
      %v1109 = vpop.f32.mrb[0].mxu0
      %1110 = vmatprep.mubr.f32.mxu0 0.0
      %1111 = vmatmul.mubr.f32.gmra.mrb[0].mxu0 %v937
      %v1112 = vpop.f32.mrb[0].mxu0
      %v1113 = vadd.f32 0.0, %v1112
      %v1114 = vpop.f32.mrb[0].mxu0
      %1115 = vmatprep.mubr.f32.mxu0 0.0
      %1116 = vmatmul.mubr.f32.gmra.mrb[0].mxu0 %v940
      %v1117 = vpop.f32.mrb[0].mxu0
      %v1118 = vadd.f32 0.0, %v1117
      %v1119 = vpop.f32.mrb[0].mxu0
      %1120 = vmatprep.mubr.f32.mxu0 0.0
      %1121 = vmatmul.mubr.f32.gmra.mrb[0].mxu0 %v943
      %v1122 = vpop.f32.mrb[0].mxu0
      %v1123 = vadd.f32 0.0, %v1122
      %v1124 = vpop.f32.mrb[0].mxu0
      %1125 = vmatprep.mubr.f32.mxu0 0.0
      %1126 = vmatmul.mubr.f32.gmra.mrb[0].mxu0 %v946
      %v1127 = vpop.f32.mrb[0].mxu0
      %v1128 = vadd.f32 0.0, %v1127
      %v1129 = vpop.f32.mrb[0].mxu0
      %1130 = vmatprep.mubr.f32.mxu0 0.0
      %1131 = vmatmul.mubr.f32.gmra.mrb[0].mxu0 %v949
      %v1132 = vpop.f32.mrb[0].mxu0
      %v1133 = vadd.f32 0.0, %v1132
      %v1134 = vpop.f32.mrb[0].mxu0
      %1135 = vmatprep.mubr.f32.mxu0 0.0
      %1136 = vmatmul.mubr.f32.gmra.mrb[0].mxu0 %v952
      %v1137 = vpop.f32.mrb[0].mxu0
      %v1138 = vadd.f32 0.0, %v1137
      %v1139 = vpop.f32.mrb[0].mxu0
      %1140 = vmatprep.mubr.f32.mxu0 0.0
      %1141 = vmatmul.mubr.f32.gmra.mrb[0].mxu0 %v955
      %v1142 = vpop.f32.mrb[0].mxu0
      %v1143 = vadd.f32 0.0, %v1142
      %v1144 = vpop.f32.mrb[0].mxu0
      %1145 = vmatprep.mubr.f32.mxu0 0.0
      %1146 = vmatmul.mubr.f32.gmra.mrb[0].mxu0 %v958
      %v1147 = vpop.f32.mrb[0].mxu0
      %v1148 = vadd.f32 0.0, %v1147
      %v1149 = vpop.f32.mrb[0].mxu0
      %1150 = vmatprep.mubr.f32.mxu0 0.0
      %1151 = vmatmul.mubr.f32.gmra.mrb[0].mxu0 %v961
      %v1152 = vpop.f32.mrb[0].mxu0
      %v1153 = vadd.f32 0.0, %v1152
      %v1154 = vpop.f32.mrb[0].mxu0
      %1155 = vmatprep.mubr.f32.mxu0 0.0
      %1156 = vmatmul.mubr.f32.gmra.mrb[0].mxu0 %v964
      %v1157 = vpop.f32.mrb[0].mxu0
      %v1158 = vadd.f32 0.0, %v1157
      %v1159 = vpop.f32.mrb[0].mxu0
      %1160 = vmatprep.mubr.f32.mxu0 0.0
      %1161 = vmatmul.mubr.f32.gmra.mrb[0].mxu0 %v967
      %v1162 = vpop.f32.mrb[0].mxu0
      %v1163 = vadd.f32 0.0, %v1162
      %v1164 = vpop.f32.mrb[0].mxu0
      %1165 = vmatprep.mubr.f32.mxu0 0.0
      %1166 = vmatmul.mubr.f32.gmra.mrb[0].mxu0 %v970
      %v1167 = vpop.f32.mrb[0].mxu0
      %v1168 = vadd.f32 0.0, %v1167
      %v1169 = vpop.f32.mrb[0].mxu0
      %1170 = vmatprep.mubr.f32.mxu0 0.0
      %1171 = vmatmul.mubr.f32.gmra.mrb[0].mxu0 %v973
      %v1172 = vpop.f32.mrb[0].mxu0
      %v1173 = vadd.f32 0.0, %v1172
      %v1174 = vpop.f32.mrb[0].mxu0
      %1175 = vmatprep.mubr.f32.mxu0 0.0
      %1176 = vmatmul.mubr.f32.gmra.mrb[0].mxu0 %v976
      %v1177 = vpop.f32.mrb[0].mxu0
      %v1178 = vadd.f32 0.0, %v1177
      %v1179 = vpop.f32.mrb[0].mxu0
      %1180 = vmatprep.mubr.f32.mxu0 0.0
      %1181 = vmatmul.mubr.f32.gmra.mrb[0].mxu0 %v979
      %v1182 = vpop.f32.mrb[0].mxu0
      %v1183 = vadd.f32 0.0, %v1182
      %v1184 = vpop.f32.mrb[0].mxu0
      %1185 = vmatprep.mubr.f32.mxu0 0.0
      %1186 = vmatmul.mubr.f32.gmra.mrb[0].mxu0 %v982
      %v1187 = vpop.f32.mrb[0].mxu0
      %v1188 = vadd.f32 0.0, %v1187
      %v1189 = vpop.f32.mrb[0].mxu0
      %1190 = vmatprep.mubr.f32.mxu0 0.0
      %1191 = vmatmul.mubr.f32.gmra.mrb[0].mxu0 %v985
      %v1192 = vpop.f32.mrb[0].mxu0
      %v1193 = vadd.f32 0.0, %v1192
      %v1194 = vpop.f32.mrb[0].mxu0
      %1195 = vmatprep.mubr.f32.mxu0 0.0
      %1196 = vmatmul.mubr.f32.gmra.mrb[0].mxu0 %v988
      %v1197 = vpop.f32.mrb[0].mxu0
      %v1198 = vadd.f32 0.0, %v1197
      %v1199 = vpop.f32.mrb[0].mxu0
      %1200 = vmatprep.mubr.f32.mxu0 0.0
      %1201 = vmatmul.mubr.f32.gmra.mrb[0].mxu0 %v991
      %v1202 = vpop.f32.mrb[0].mxu0
      %v1203 = vadd.f32 0.0, %v1202
      %v1204 = vpop.f32.mrb[0].mxu0
      %1205 = vmatprep.mubr.f32.mxu0 0.0
      %1206 = vmatmul.mubr.f32.gmra.mrb[0].mxu0 %v994
      %v1207 = vpop.f32.mrb[0].mxu0
      %v1208 = vadd.f32 0.0, %v1207
      %v1209 = vpop.f32.mrb[0].mxu0
      %1210 = vmatprep.mubr.f32.mxu0 0.0
      %1211 = vmatmul.mubr.f32.gmra.mrb[0].mxu0 %v997
      %v1212 = vpop.f32.mrb[0].mxu0
      %v1213 = vadd.f32 0.0, %v1212
      %v1214 = vpop.f32.mrb[0].mxu0
      %1215 = vmatprep.mubr.f32.mxu0 0.0
      %1216 = vmatmul.mubr.f32.gmra.mrb[0].mxu0 %v1000
      %v1217 = vpop.f32.mrb[0].mxu0
      %v1218 = vadd.f32 0.0, %v1217
      %v1219 = vpop.f32.mrb[0].mxu0
      %1220 = vmatprep.mubr.f32.mxu0 0.0
      %1221 = vmatmul.mubr.f32.gmra.mrb[0].mxu0 %v1003
      %v1222 = vpop.f32.mrb[0].mxu0
      %v1223 = vadd.f32 0.0, %v1222
      %v1224 = vpop.f32.mrb[0].mxu0
      %1225 = vmatprep.mubr.f32.mxu0 0.0
      %1226 = vmatmul.mubr.f32.gmra.mrb[0].mxu0 %v1006
      %v1227 = vpop.f32.mrb[0].mxu0
      %v1228 = vadd.f32 0.0, %v1227
      %v1229 = vpop.f32.mrb[0].mxu0
      %1230 = vmatprep.mubr.f32.mxu0 0.0
      %1231 = vmatmul.mubr.f32.gmra.mrb[0].mxu0 %v1009
      %v1232 = vpop.f32.mrb[0].mxu0
      %v1233 = vadd.f32 0.0, %v1232
      %v1234 = vpop.f32.mrb[0].mxu0
      %1235 = vdwg.mxu0
      %v1236 = vadd.f32 %v723, %v1078
      %v1237 = vadd.f32 %v728, %v1083
      %v1238 = vadd.f32 %v733, %v1088
      %v1239 = vadd.f32 %v738, %v1093
      %v1240 = vadd.f32 %v743, %v1098
      %v1241 = vadd.f32 %v748, %v1103
      %v1242 = vadd.f32 %v753, %v1108
      %v1243 = vadd.f32 %v758, %v1113
      %v1244 = vadd.f32 %v763, %v1118
      %v1245 = vadd.f32 %v768, %v1123
      %v1246 = vadd.f32 %v773, %v1128
      %v1247 = vadd.f32 %v778, %v1133
      %v1248 = vadd.f32 %v783, %v1138
      %v1249 = vadd.f32 %v788, %v1143
      %v1250 = vadd.f32 %v793, %v1148
      %v1251 = vadd.f32 %v798, %v1153
      %v1252 = vadd.f32 %v803, %v1158
      %v1253 = vadd.f32 %v808, %v1163
      %v1254 = vadd.f32 %v813, %v1168
      %v1255 = vadd.f32 %v818, %v1173
      %v1256 = vadd.f32 %v823, %v1178
      %v1257 = vadd.f32 %v828, %v1183
      %v1258 = vadd.f32 %v833, %v1188
      %v1259 = vadd.f32 %v838, %v1193
      %v1260 = vadd.f32 %v843, %v1198
      %v1261 = vadd.f32 %v848, %v1203
      %v1262 = vadd.f32 %v853, %v1208
      %v1263 = vadd.f32 %v858, %v1213
      %v1264 = vadd.f32 %v863, %v1218
      %v1265 = vadd.f32 %v868, %v1223
      %v1266 = vadd.f32 %v873, %v1228
      %v1267 = vadd.f32 %v878, %v1233
      %s1268 = scalar_lea.vmem %s165, 24
      %v1269 = vld [vmem:[%s1268] sm:$0xff]
      %v1270 = vld [vmem:[%s1268 + $0x8] sm:$0xff]
      %v1271 = vld [vmem:[%s1268 + $0x18] sm:$0xff]
      %v1272 = vld [vmem:[%s1268 + $0x20] sm:$0xff]
      %v1273 = vld [vmem:[%s1268 + $0x30] sm:$0xff]
      %v1274 = vld [vmem:[%s1268 + $0x38] sm:$0xff]
      %v1275 = vld [vmem:[%s1268 + $0x48] sm:$0xff]
      %v1276 = vld [vmem:[%s1268 + $0x50] sm:$0xff]
      %v1277 = vld [vmem:[%s1268 + $0x60] sm:$0xff]
      %v1278 = vld [vmem:[%s1268 + $0x68] sm:$0xff]
      %v1279 = vld [vmem:[%s1268 + $0x78] sm:$0xff]
      %v1280 = vld [vmem:[%s1268 + $0x80] sm:$0xff]
      %v1281 = vld [vmem:[%s1268 + $0x90] sm:$0xff]
      %v1282 = vld [vmem:[%s1268 + $0x98] sm:$0xff]
      %v1283 = vld [vmem:[%s1268 + $0xa8] sm:$0xff]
      %v1284 = vld [vmem:[%s1268 + $0xb0] sm:$0xff]
      %v1285 = vld [vmem:[%s1268 + $0xc0] sm:$0xff]
      %v1286 = vld [vmem:[%s1268 + $0xc8] sm:$0xff]
      %v1287 = vld [vmem:[%s1268 + $0xd8] sm:$0xff]
      %v1288 = vld [vmem:[%s1268 + $0xe0] sm:$0xff]
      %v1289 = vld [vmem:[%s1268 + $0xf0] sm:$0xff]
      %v1290 = vld [vmem:[%s1268 + $0xf8] sm:$0xff]
      %v1291 = vld [vmem:[%s1268 + $0x108] sm:$0xff]
      %v1292 = vld [vmem:[%s1268 + $0x110] sm:$0xff]
      %v1293 = vld [vmem:[%s1268 + $0x120] sm:$0xff]
      %v1294 = vld [vmem:[%s1268 + $0x128] sm:$0xff]
      %v1295 = vld [vmem:[%s1268 + $0x138] sm:$0xff]
      %v1296 = vld [vmem:[%s1268 + $0x140] sm:$0xff]
      %v1297 = vld [vmem:[%s1268 + $0x150] sm:$0xff]
      %v1298 = vld [vmem:[%s1268 + $0x158] sm:$0xff]
      %v1299 = vld [vmem:[%s1268 + $0x168] sm:$0xff]
      %v1300 = vld [vmem:[%s1268 + $0x170] sm:$0xff]
      %s1301 = scalar_lea.vmem %s1, 24
      %v1302 = vld [vmem:[%s1301] sm:$0xff]
      %v1304 = vsel %vm238, %v1269, 0
      %v1307 = vsel %vm238, %v1270, 0
      %v1310 = vsel %vm238, %v1271, 0
      %v1313 = vsel %vm238, %v1272, 0
      %v1316 = vsel %vm238, %v1273, 0
      %v1319 = vsel %vm238, %v1274, 0
      %v1322 = vsel %vm238, %v1275, 0
      %v1325 = vsel %vm238, %v1276, 0
      %v1328 = vsel %vm238, %v1277, 0
      %v1331 = vsel %vm238, %v1278, 0
      %v1334 = vsel %vm238, %v1279, 0
      %v1337 = vsel %vm238, %v1280, 0
      %v1340 = vsel %vm238, %v1281, 0
      %v1343 = vsel %vm238, %v1282, 0
      %v1346 = vsel %vm238, %v1283, 0
      %v1349 = vsel %vm238, %v1284, 0
      %v1352 = vsel %vm238, %v1285, 0
      %v1355 = vsel %vm238, %v1286, 0
      %v1358 = vsel %vm238, %v1287, 0
      %v1361 = vsel %vm238, %v1288, 0
      %v1364 = vsel %vm238, %v1289, 0
      %v1367 = vsel %vm238, %v1290, 0
      %v1370 = vsel %vm238, %v1291, 0
      %v1373 = vsel %vm238, %v1292, 0
      %v1376 = vsel %vm238, %v1293, 0
      %v1379 = vsel %vm238, %v1294, 0
      %v1382 = vsel %vm238, %v1295, 0
      %v1385 = vsel %vm238, %v1296, 0
      %v1388 = vsel %vm238, %v1297, 0
      %v1391 = vsel %vm238, %v1298, 0
      %v1394 = vsel %vm238, %v1299, 0
      %v1397 = vsel %vm238, %v1300, 0
      %1399 = vmatprep.subr.mxu0 0.0
      %1400 = vmatpush1.msra.mxu0 %v1302
      %1401 = vmatprep.subr.mxu0 0.0
      %1402 = vmatpush1.msra.mxu0 0.0
      %1403 = vmatprep.subr.mxu0 0.0
      %1404 = vmatpush1.msra.mxu0 0.0
      %1405 = vmatprep.subr.mxu0 0.0
      %1406 = vmatpush1.msra.mxu0 0.0
      %1407 = vmatprep.subr.mxu0 0.0
      %1408 = vmatpush1.msra.mxu0 0.0
      %1409 = vmatprep.subr.mxu0 0.0
      %1410 = vmatpush1.msra.mxu0 0.0
      %1411 = vmatprep.subr.mxu0 0.0
      %1412 = vmatpush1.msra.mxu0 0.0
      %1413 = vmatprep.subr.mxu0 0.0
      %1414 = vmatpush1.msra.mxu0 0.0
      %1415 = vmatprep.subr.mxu0 0.0
      %1416 = vmatpush1.msra.mxu0 0.0
      %1417 = vmatprep.subr.mxu0 0.0
      %1418 = vmatpush1.msra.mxu0 0.0
      %1419 = vmatprep.subr.mxu0 0.0
      %1420 = vmatpush1.msra.mxu0 0.0
      %1421 = vmatprep.subr.mxu0 0.0
      %1422 = vmatpush1.msra.mxu0 0.0
      %1423 = vmatprep.subr.mxu0 0.0
      %1424 = vmatpush1.msra.mxu0 0.0
      %1425 = vmatprep.subr.mxu0 0.0
      %1426 = vmatpush1.msra.mxu0 0.0
      %1427 = vmatprep.subr.mxu0 0.0
      %1428 = vmatpush1.msra.mxu0 0.0
      %1429 = vmatprep.subr.mxu0 0.0
      %1430 = vmatpush1.msra.mxu0 0.0
      %1431 = vmatprep.subr.mxu0 0.0
      %1432 = vmatpush1.msra.mxu0 0.0
      %1433 = vmatprep.subr.mxu0 0.0
      %1434 = vmatpush1.msra.mxu0 0.0
      %1435 = vmatprep.subr.mxu0 0.0
      %1436 = vmatpush1.msra.mxu0 0.0
      %1437 = vmatprep.subr.mxu0 0.0
      %1438 = vmatpush1.msra.mxu0 0.0
      %1439 = vmatprep.subr.mxu0 0.0
      %1440 = vmatpush1.msra.mxu0 0.0
      %1441 = vmatprep.subr.mxu0 0.0
      %1442 = vmatpush1.msra.mxu0 0.0
      %1443 = vmatprep.subr.mxu0 0.0
      %1444 = vmatpush1.msra.mxu0 0.0
      %1445 = vmatprep.subr.mxu0 0.0
      %1446 = vmatpush1.msra.mxu0 0.0
      %1447 = vmatprep.subr.mxu0 0.0
      %1448 = vmatpush1.msra.mxu0 0.0
      %1449 = vmatprep.subr.mxu0 0.0
      %1450 = vmatpush1.msra.mxu0 0.0
      %1451 = vmatprep.subr.mxu0 0.0
      %1452 = vmatpush1.msra.mxu0 0.0
      %1453 = vmatprep.subr.mxu0 0.0
      %1454 = vmatpush1.msra.mxu0 0.0
      %1455 = vmatprep.subr.mxu0 0.0
      %1456 = vmatpush1.msra.mxu0 0.0
      %1457 = vmatprep.subr.mxu0 0.0
      %1458 = vmatpush1.msra.mxu0 0.0
      %1459 = vmatprep.subr.mxu0 0.0
      %1460 = vmatpush1.msra.mxu0 0.0
      %1461 = vmatprep.subr.mxu0 0.0
      %1462 = vmatpush1.msra.mxu0 0.0
      %1463 = vmatprep.mubr.f32.mxu0 0.0
      %1464 = vmatmul.mubr.f32.gmra.mrb[0].mxu0 %v1304
      %v1465 = vpop.f32.mrb[0].mxu0
      %v1466 = vadd.f32 0.0, %v1465
      %v1467 = vpop.f32.mrb[0].mxu0
      %1468 = vmatprep.mubr.f32.mxu0 0.0
      %1469 = vmatmul.mubr.f32.gmra.mrb[0].mxu0 %v1307
      %v1470 = vpop.f32.mrb[0].mxu0
      %v1471 = vadd.f32 0.0, %v1470
      %v1472 = vpop.f32.mrb[0].mxu0
      %1473 = vmatprep.mubr.f32.mxu0 0.0
      %1474 = vmatmul.mubr.f32.gmra.mrb[0].mxu0 %v1310
      %v1475 = vpop.f32.mrb[0].mxu0
      %v1476 = vadd.f32 0.0, %v1475
      %v1477 = vpop.f32.mrb[0].mxu0
      %1478 = vmatprep.mubr.f32.mxu0 0.0
      %1479 = vmatmul.mubr.f32.gmra.mrb[0].mxu0 %v1313
      %v1480 = vpop.f32.mrb[0].mxu0
      %v1481 = vadd.f32 0.0, %v1480
      %v1482 = vpop.f32.mrb[0].mxu0
      %1483 = vmatprep.mubr.f32.mxu0 0.0
      %1484 = vmatmul.mubr.f32.gmra.mrb[0].mxu0 %v1316
      %v1485 = vpop.f32.mrb[0].mxu0
      %v1486 = vadd.f32 0.0, %v1485
      %v1487 = vpop.f32.mrb[0].mxu0
      %1488 = vmatprep.mubr.f32.mxu0 0.0
      %1489 = vmatmul.mubr.f32.gmra.mrb[0].mxu0 %v1319
      %v1490 = vpop.f32.mrb[0].mxu0
      %v1491 = vadd.f32 0.0, %v1490
      %v1492 = vpop.f32.mrb[0].mxu0
      %1493 = vmatprep.mubr.f32.mxu0 0.0
      %1494 = vmatmul.mubr.f32.gmra.mrb[0].mxu0 %v1322
      %v1495 = vpop.f32.mrb[0].mxu0
      %v1496 = vadd.f32 0.0, %v1495
      %v1497 = vpop.f32.mrb[0].mxu0
      %1498 = vmatprep.mubr.f32.mxu0 0.0
      %1499 = vmatmul.mubr.f32.gmra.mrb[0].mxu0 %v1325
      %v1500 = vpop.f32.mrb[0].mxu0
      %v1501 = vadd.f32 0.0, %v1500
      %v1502 = vpop.f32.mrb[0].mxu0
      %1503 = vmatprep.mubr.f32.mxu0 0.0
      %1504 = vmatmul.mubr.f32.gmra.mrb[0].mxu0 %v1328
      %v1505 = vpop.f32.mrb[0].mxu0
      %v1506 = vadd.f32 0.0, %v1505
      %v1507 = vpop.f32.mrb[0].mxu0
      %1508 = vmatprep.mubr.f32.mxu0 0.0
      %1509 = vmatmul.mubr.f32.gmra.mrb[0].mxu0 %v1331
      %v1510 = vpop.f32.mrb[0].mxu0
      %v1511 = vadd.f32 0.0, %v1510
      %v1512 = vpop.f32.mrb[0].mxu0
      %1513 = vmatprep.mubr.f32.mxu0 0.0
      %1514 = vmatmul.mubr.f32.gmra.mrb[0].mxu0 %v1334
      %v1515 = vpop.f32.mrb[0].mxu0
      %v1516 = vadd.f32 0.0, %v1515
      %v1517 = vpop.f32.mrb[0].mxu0
      %1518 = vmatprep.mubr.f32.mxu0 0.0
      %1519 = vmatmul.mubr.f32.gmra.mrb[0].mxu0 %v1337
      %v1520 = vpop.f32.mrb[0].mxu0
      %v1521 = vadd.f32 0.0, %v1520
      %v1522 = vpop.f32.mrb[0].mxu0
      %1523 = vmatprep.mubr.f32.mxu0 0.0
      %1524 = vmatmul.mubr.f32.gmra.mrb[0].mxu0 %v1340
      %v1525 = vpop.f32.mrb[0].mxu0
      %v1526 = vadd.f32 0.0, %v1525
      %v1527 = vpop.f32.mrb[0].mxu0
      %1528 = vmatprep.mubr.f32.mxu0 0.0
      %1529 = vmatmul.mubr.f32.gmra.mrb[0].mxu0 %v1343
      %v1530 = vpop.f32.mrb[0].mxu0
      %v1531 = vadd.f32 0.0, %v1530
      %v1532 = vpop.f32.mrb[0].mxu0
      %1533 = vmatprep.mubr.f32.mxu0 0.0
      %1534 = vmatmul.mubr.f32.gmra.mrb[0].mxu0 %v1346
      %v1535 = vpop.f32.mrb[0].mxu0
      %v1536 = vadd.f32 0.0, %v1535
      %v1537 = vpop.f32.mrb[0].mxu0
      %1538 = vmatprep.mubr.f32.mxu0 0.0
      %1539 = vmatmul.mubr.f32.gmra.mrb[0].mxu0 %v1349
      %v1540 = vpop.f32.mrb[0].mxu0
      %v1541 = vadd.f32 0.0, %v1540
      %v1542 = vpop.f32.mrb[0].mxu0
      %1543 = vmatprep.mubr.f32.mxu0 0.0
      %1544 = vmatmul.mubr.f32.gmra.mrb[0].mxu0 %v1352
      %v1545 = vpop.f32.mrb[0].mxu0
      %v1546 = vadd.f32 0.0, %v1545
      %v1547 = vpop.f32.mrb[0].mxu0
      %1548 = vmatprep.mubr.f32.mxu0 0.0
      %1549 = vmatmul.mubr.f32.gmra.mrb[0].mxu0 %v1355
      %v1550 = vpop.f32.mrb[0].mxu0
      %v1551 = vadd.f32 0.0, %v1550
      %v1552 = vpop.f32.mrb[0].mxu0
      %1553 = vmatprep.mubr.f32.mxu0 0.0
      %1554 = vmatmul.mubr.f32.gmra.mrb[0].mxu0 %v1358
      %v1555 = vpop.f32.mrb[0].mxu0
      %v1556 = vadd.f32 0.0, %v1555
      %v1557 = vpop.f32.mrb[0].mxu0
      %1558 = vmatprep.mubr.f32.mxu0 0.0
      %1559 = vmatmul.mubr.f32.gmra.mrb[0].mxu0 %v1361
      %v1560 = vpop.f32.mrb[0].mxu0
      %v1561 = vadd.f32 0.0, %v1560
      %v1562 = vpop.f32.mrb[0].mxu0
      %1563 = vmatprep.mubr.f32.mxu0 0.0
      %1564 = vmatmul.mubr.f32.gmra.mrb[0].mxu0 %v1364
      %v1565 = vpop.f32.mrb[0].mxu0
      %v1566 = vadd.f32 0.0, %v1565
      %v1567 = vpop.f32.mrb[0].mxu0
      %1568 = vmatprep.mubr.f32.mxu0 0.0
      %1569 = vmatmul.mubr.f32.gmra.mrb[0].mxu0 %v1367
      %v1570 = vpop.f32.mrb[0].mxu0
      %v1571 = vadd.f32 0.0, %v1570
      %v1572 = vpop.f32.mrb[0].mxu0
      %1573 = vmatprep.mubr.f32.mxu0 0.0
      %1574 = vmatmul.mubr.f32.gmra.mrb[0].mxu0 %v1370
      %v1575 = vpop.f32.mrb[0].mxu0
      %v1576 = vadd.f32 0.0, %v1575
      %v1577 = vpop.f32.mrb[0].mxu0
      %1578 = vmatprep.mubr.f32.mxu0 0.0
      %1579 = vmatmul.mubr.f32.gmra.mrb[0].mxu0 %v1373
      %v1580 = vpop.f32.mrb[0].mxu0
      %v1581 = vadd.f32 0.0, %v1580
      %v1582 = vpop.f32.mrb[0].mxu0
      %1583 = vmatprep.mubr.f32.mxu0 0.0
      %1584 = vmatmul.mubr.f32.gmra.mrb[0].mxu0 %v1376
      %v1585 = vpop.f32.mrb[0].mxu0
      %v1586 = vadd.f32 0.0, %v1585
      %v1587 = vpop.f32.mrb[0].mxu0
      %1588 = vmatprep.mubr.f32.mxu0 0.0
      %1589 = vmatmul.mubr.f32.gmra.mrb[0].mxu0 %v1379
      %v1590 = vpop.f32.mrb[0].mxu0
      %v1591 = vadd.f32 0.0, %v1590
      %v1592 = vpop.f32.mrb[0].mxu0
      %1593 = vmatprep.mubr.f32.mxu0 0.0
      %1594 = vmatmul.mubr.f32.gmra.mrb[0].mxu0 %v1382
      %v1595 = vpop.f32.mrb[0].mxu0
      %v1596 = vadd.f32 0.0, %v1595
      %v1597 = vpop.f32.mrb[0].mxu0
      %1598 = vmatprep.mubr.f32.mxu0 0.0
      %1599 = vmatmul.mubr.f32.gmra.mrb[0].mxu0 %v1385
      %v1600 = vpop.f32.mrb[0].mxu0
      %v1601 = vadd.f32 0.0, %v1600
      %v1602 = vpop.f32.mrb[0].mxu0
      %1603 = vmatprep.mubr.f32.mxu0 0.0
      %1604 = vmatmul.mubr.f32.gmra.mrb[0].mxu0 %v1388
      %v1605 = vpop.f32.mrb[0].mxu0
      %v1606 = vadd.f32 0.0, %v1605
      %v1607 = vpop.f32.mrb[0].mxu0
      %1608 = vmatprep.mubr.f32.mxu0 0.0
      %1609 = vmatmul.mubr.f32.gmra.mrb[0].mxu0 %v1391
      %v1610 = vpop.f32.mrb[0].mxu0
      %v1611 = vadd.f32 0.0, %v1610
      %v1612 = vpop.f32.mrb[0].mxu0
      %1613 = vmatprep.mubr.f32.mxu0 0.0
      %1614 = vmatmul.mubr.f32.gmra.mrb[0].mxu0 %v1394
      %v1615 = vpop.f32.mrb[0].mxu0
      %v1616 = vadd.f32 0.0, %v1615
      %v1617 = vpop.f32.mrb[0].mxu0
      %1618 = vmatprep.mubr.f32.mxu0 0.0
      %1619 = vmatmul.mubr.f32.gmra.mrb[0].mxu0 %v1397
      %v1620 = vpop.f32.mrb[0].mxu0
      %v1621 = vadd.f32 0.0, %v1620
      %v1622 = vpop.f32.mrb[0].mxu0
      %1623 = vdwg.mxu0
      %v1624 = vadd.f32 %v1236, %v1466
      %v1625 = vadd.f32 %v1237, %v1471
      %v1626 = vadd.f32 %v1238, %v1476
      %v1627 = vadd.f32 %v1239, %v1481
      %v1628 = vadd.f32 %v1240, %v1486
      %v1629 = vadd.f32 %v1241, %v1491
      %v1630 = vadd.f32 %v1242, %v1496
      %v1631 = vadd.f32 %v1243, %v1501
      %v1632 = vadd.f32 %v1244, %v1506
      %v1633 = vadd.f32 %v1245, %v1511
      %v1634 = vadd.f32 %v1246, %v1516
      %v1635 = vadd.f32 %v1247, %v1521
      %v1636 = vadd.f32 %v1248, %v1526
      %v1637 = vadd.f32 %v1249, %v1531
      %v1638 = vadd.f32 %v1250, %v1536
      %v1639 = vadd.f32 %v1251, %v1541
      %v1640 = vadd.f32 %v1252, %v1546
      %v1641 = vadd.f32 %v1253, %v1551
      %v1642 = vadd.f32 %v1254, %v1556
      %v1643 = vadd.f32 %v1255, %v1561
      %v1644 = vadd.f32 %v1256, %v1566
      %v1645 = vadd.f32 %v1257, %v1571
      %v1646 = vadd.f32 %v1258, %v1576
      %v1647 = vadd.f32 %v1259, %v1581
      %v1648 = vadd.f32 %v1260, %v1586
      %v1649 = vadd.f32 %v1261, %v1591
      %v1650 = vadd.f32 %v1262, %v1596
      %v1651 = vadd.f32 %v1263, %v1601
      %v1652 = vadd.f32 %v1264, %v1606
      %v1653 = vadd.f32 %v1265, %v1611
      %v1654 = vadd.f32 %v1266, %v1616
      %v1655 = vadd.f32 %v1267, %v1621
      %v1656 = vld [vmem:[%s1268 + $0x1] sm:$0xff]
      %v1657 = vld [vmem:[%s1268 + $0x9] sm:$0xff]
      %v1658 = vld [vmem:[%s1268 + $0x19] sm:$0xff]
      %v1659 = vld [vmem:[%s1268 + $0x21] sm:$0xff]
      %v1660 = vld [vmem:[%s1268 + $0x31] sm:$0xff]
      %v1661 = vld [vmem:[%s1268 + $0x39] sm:$0xff]
      %v1662 = vld [vmem:[%s1268 + $0x49] sm:$0xff]
      %v1663 = vld [vmem:[%s1268 + $0x51] sm:$0xff]
      %v1664 = vld [vmem:[%s1268 + $0x61] sm:$0xff]
      %v1665 = vld [vmem:[%s1268 + $0x69] sm:$0xff]
      %v1666 = vld [vmem:[%s1268 + $0x79] sm:$0xff]
      %v1667 = vld [vmem:[%s1268 + $0x81] sm:$0xff]
      %v1668 = vld [vmem:[%s1268 + $0x91] sm:$0xff]
      %v1669 = vld [vmem:[%s1268 + $0x99] sm:$0xff]
      %v1670 = vld [vmem:[%s1268 + $0xa9] sm:$0xff]
      %v1671 = vld [vmem:[%s1268 + $0xb1] sm:$0xff]
      %v1672 = vld [vmem:[%s1268 + $0xc1] sm:$0xff]
      %v1673 = vld [vmem:[%s1268 + $0xc9] sm:$0xff]
      %v1674 = vld [vmem:[%s1268 + $0xd9] sm:$0xff]
      %v1675 = vld [vmem:[%s1268 + $0xe1] sm:$0xff]
      %v1676 = vld [vmem:[%s1268 + $0xf1] sm:$0xff]
      %v1677 = vld [vmem:[%s1268 + $0xf9] sm:$0xff]
      %v1678 = vld [vmem:[%s1268 + $0x109] sm:$0xff]
      %v1679 = vld [vmem:[%s1268 + $0x111] sm:$0xff]
      %v1680 = vld [vmem:[%s1268 + $0x121] sm:$0xff]
      %v1681 = vld [vmem:[%s1268 + $0x129] sm:$0xff]
      %v1682 = vld [vmem:[%s1268 + $0x139] sm:$0xff]
      %v1683 = vld [vmem:[%s1268 + $0x141] sm:$0xff]
      %v1684 = vld [vmem:[%s1268 + $0x151] sm:$0xff]
      %v1685 = vld [vmem:[%s1268 + $0x159] sm:$0xff]
      %v1686 = vld [vmem:[%s1268 + $0x169] sm:$0xff]
      %v1687 = vld [vmem:[%s1268 + $0x171] sm:$0xff]
      %s1688 = scalar_lea.vmem %s1, 32
      %v1689 = vld [vmem:[%s1688] sm:$0xff]
      %v1691 = vsel %vm238, %v1656, 0
      %v1694 = vsel %vm238, %v1657, 0
      %v1697 = vsel %vm238, %v1658, 0
      %v1700 = vsel %vm238, %v1659, 0
      %v1703 = vsel %vm238, %v1660, 0
      %v1706 = vsel %vm238, %v1661, 0
      %v1709 = vsel %vm238, %v1662, 0
      %v1712 = vsel %vm238, %v1663, 0
      %v1715 = vsel %vm238, %v1664, 0
      %v1718 = vsel %vm238, %v1665, 0
      %v1721 = vsel %vm238, %v1666, 0
      %v1724 = vsel %vm238, %v1667, 0
      %v1727 = vsel %vm238, %v1668, 0
      %v1730 = vsel %vm238, %v1669, 0
      %v1733 = vsel %vm238, %v1670, 0
      %v1736 = vsel %vm238, %v1671, 0
      %v1739 = vsel %vm238, %v1672, 0
      %v1742 = vsel %vm238, %v1673, 0
      %v1745 = vsel %vm238, %v1674, 0
      %v1748 = vsel %vm238, %v1675, 0
      %v1751 = vsel %vm238, %v1676, 0
      %v1754 = vsel %vm238, %v1677, 0
      %v1757 = vsel %vm238, %v1678, 0
      %v1760 = vsel %vm238, %v1679, 0
      %v1763 = vsel %vm238, %v1680, 0
      %v1766 = vsel %vm238, %v1681, 0
      %v1769 = vsel %vm238, %v1682, 0
      %v1772 = vsel %vm238, %v1683, 0
      %v1775 = vsel %vm238, %v1684, 0
      %v1778 = vsel %vm238, %v1685, 0
      %v1781 = vsel %vm238, %v1686, 0
      %v1784 = vsel %vm238, %v1687, 0
      %1786 = vmatprep.subr.mxu0 0.0
      %1787 = vmatpush1.msra.mxu0 %v1689
      %1788 = vmatprep.subr.mxu0 0.0
      %1789 = vmatpush1.msra.mxu0 0.0
      %1790 = vmatprep.subr.mxu0 0.0
      %1791 = vmatpush1.msra.mxu0 0.0
      %1792 = vmatprep.subr.mxu0 0.0
      %1793 = vmatpush1.msra.mxu0 0.0
      %1794 = vmatprep.subr.mxu0 0.0
      %1795 = vmatpush1.msra.mxu0 0.0
      %1796 = vmatprep.subr.mxu0 0.0
      %1797 = vmatpush1.msra.mxu0 0.0
      %1798 = vmatprep.subr.mxu0 0.0
      %1799 = vmatpush1.msra.mxu0 0.0
      %1800 = vmatprep.subr.mxu0 0.0
      %1801 = vmatpush1.msra.mxu0 0.0
      %1802 = vmatprep.subr.mxu0 0.0
      %1803 = vmatpush1.msra.mxu0 0.0
      %1804 = vmatprep.subr.mxu0 0.0
      %1805 = vmatpush1.msra.mxu0 0.0
      %1806 = vmatprep.subr.mxu0 0.0
      %1807 = vmatpush1.msra.mxu0 0.0
      %1808 = vmatprep.subr.mxu0 0.0
      %1809 = vmatpush1.msra.mxu0 0.0
      %1810 = vmatprep.subr.mxu0 0.0
      %1811 = vmatpush1.msra.mxu0 0.0
      %1812 = vmatprep.subr.mxu0 0.0
      %1813 = vmatpush1.msra.mxu0 0.0
      %1814 = vmatprep.subr.mxu0 0.0
      %1815 = vmatpush1.msra.mxu0 0.0
      %1816 = vmatprep.subr.mxu0 0.0
      %1817 = vmatpush1.msra.mxu0 0.0
      %1818 = vmatprep.subr.mxu0 0.0
      %1819 = vmatpush1.msra.mxu0 0.0
      %1820 = vmatprep.subr.mxu0 0.0
      %1821 = vmatpush1.msra.mxu0 0.0
      %1822 = vmatprep.subr.mxu0 0.0
      %1823 = vmatpush1.msra.mxu0 0.0
      %1824 = vmatprep.subr.mxu0 0.0
      %1825 = vmatpush1.msra.mxu0 0.0
      %1826 = vmatprep.subr.mxu0 0.0
      %1827 = vmatpush1.msra.mxu0 0.0
      %1828 = vmatprep.subr.mxu0 0.0
      %1829 = vmatpush1.msra.mxu0 0.0
      %1830 = vmatprep.subr.mxu0 0.0
      %1831 = vmatpush1.msra.mxu0 0.0
      %1832 = vmatprep.subr.mxu0 0.0
      %1833 = vmatpush1.msra.mxu0 0.0
      %1834 = vmatprep.subr.mxu0 0.0
      %1835 = vmatpush1.msra.mxu0 0.0
      %1836 = vmatprep.subr.mxu0 0.0
      %1837 = vmatpush1.msra.mxu0 0.0
      %1838 = vmatprep.subr.mxu0 0.0
      %1839 = vmatpush1.msra.mxu0 0.0
      %1840 = vmatprep.subr.mxu0 0.0
      %1841 = vmatpush1.msra.mxu0 0.0
      %1842 = vmatprep.subr.mxu0 0.0
      %1843 = vmatpush1.msra.mxu0 0.0
      %1844 = vmatprep.subr.mxu0 0.0
      %1845 = vmatpush1.msra.mxu0 0.0
      %1846 = vmatprep.subr.mxu0 0.0
      %1847 = vmatpush1.msra.mxu0 0.0
      %1848 = vmatprep.subr.mxu0 0.0
      %1849 = vmatpush1.msra.mxu0 0.0
      %1850 = vmatprep.mubr.f32.mxu0 0.0
      %1851 = vmatmul.mubr.f32.gmra.mrb[0].mxu0 %v1691
      %v1852 = vpop.f32.mrb[0].mxu0
      %v1853 = vadd.f32 0.0, %v1852
      %v1854 = vpop.f32.mrb[0].mxu0
      %1855 = vmatprep.mubr.f32.mxu0 0.0
      %1856 = vmatmul.mubr.f32.gmra.mrb[0].mxu0 %v1694
      %v1857 = vpop.f32.mrb[0].mxu0
      %v1858 = vadd.f32 0.0, %v1857
      %v1859 = vpop.f32.mrb[0].mxu0
      %1860 = vmatprep.mubr.f32.mxu0 0.0
      %1861 = vmatmul.mubr.f32.gmra.mrb[0].mxu0 %v1697
      %v1862 = vpop.f32.mrb[0].mxu0
      %v1863 = vadd.f32 0.0, %v1862
      %v1864 = vpop.f32.mrb[0].mxu0
      %1865 = vmatprep.mubr.f32.mxu0 0.0
      %1866 = vmatmul.mubr.f32.gmra.mrb[0].mxu0 %v1700
      %v1867 = vpop.f32.mrb[0].mxu0
      %v1868 = vadd.f32 0.0, %v1867
      %v1869 = vpop.f32.mrb[0].mxu0
      %1870 = vmatprep.mubr.f32.mxu0 0.0
      %1871 = vmatmul.mubr.f32.gmra.mrb[0].mxu0 %v1703
      %v1872 = vpop.f32.mrb[0].mxu0
      %v1873 = vadd.f32 0.0, %v1872
      %v1874 = vpop.f32.mrb[0].mxu0
      %1875 = vmatprep.mubr.f32.mxu0 0.0
      %1876 = vmatmul.mubr.f32.gmra.mrb[0].mxu0 %v1706
      %v1877 = vpop.f32.mrb[0].mxu0
      %v1878 = vadd.f32 0.0, %v1877
      %v1879 = vpop.f32.mrb[0].mxu0
      %1880 = vmatprep.mubr.f32.mxu0 0.0
      %1881 = vmatmul.mubr.f32.gmra.mrb[0].mxu0 %v1709
      %v1882 = vpop.f32.mrb[0].mxu0
      %v1883 = vadd.f32 0.0, %v1882
      %v1884 = vpop.f32.mrb[0].mxu0
      %1885 = vmatprep.mubr.f32.mxu0 0.0
      %1886 = vmatmul.mubr.f32.gmra.mrb[0].mxu0 %v1712
      %v1887 = vpop.f32.mrb[0].mxu0
      %v1888 = vadd.f32 0.0, %v1887
      %v1889 = vpop.f32.mrb[0].mxu0
      %1890 = vmatprep.mubr.f32.mxu0 0.0
      %1891 = vmatmul.mubr.f32.gmra.mrb[0].mxu0 %v1715
      %v1892 = vpop.f32.mrb[0].mxu0
      %v1893 = vadd.f32 0.0, %v1892
      %v1894 = vpop.f32.mrb[0].mxu0
      %1895 = vmatprep.mubr.f32.mxu0 0.0
      %1896 = vmatmul.mubr.f32.gmra.mrb[0].mxu0 %v1718
      %v1897 = vpop.f32.mrb[0].mxu0
      %v1898 = vadd.f32 0.0, %v1897
      %v1899 = vpop.f32.mrb[0].mxu0
      %1900 = vmatprep.mubr.f32.mxu0 0.0
      %1901 = vmatmul.mubr.f32.gmra.mrb[0].mxu0 %v1721
      %v1902 = vpop.f32.mrb[0].mxu0
      %v1903 = vadd.f32 0.0, %v1902
      %v1904 = vpop.f32.mrb[0].mxu0
      %1905 = vmatprep.mubr.f32.mxu0 0.0
      %1906 = vmatmul.mubr.f32.gmra.mrb[0].mxu0 %v1724
      %v1907 = vpop.f32.mrb[0].mxu0
      %v1908 = vadd.f32 0.0, %v1907
      %v1909 = vpop.f32.mrb[0].mxu0
      %1910 = vmatprep.mubr.f32.mxu0 0.0
      %1911 = vmatmul.mubr.f32.gmra.mrb[0].mxu0 %v1727
      %v1912 = vpop.f32.mrb[0].mxu0
      %v1913 = vadd.f32 0.0, %v1912
      %v1914 = vpop.f32.mrb[0].mxu0
      %1915 = vmatprep.mubr.f32.mxu0 0.0
      %1916 = vmatmul.mubr.f32.gmra.mrb[0].mxu0 %v1730
      %v1917 = vpop.f32.mrb[0].mxu0
      %v1918 = vadd.f32 0.0, %v1917
      %v1919 = vpop.f32.mrb[0].mxu0
      %1920 = vmatprep.mubr.f32.mxu0 0.0
      %1921 = vmatmul.mubr.f32.gmra.mrb[0].mxu0 %v1733
      %v1922 = vpop.f32.mrb[0].mxu0
      %v1923 = vadd.f32 0.0, %v1922
      %v1924 = vpop.f32.mrb[0].mxu0
      %1925 = vmatprep.mubr.f32.mxu0 0.0
      %1926 = vmatmul.mubr.f32.gmra.mrb[0].mxu0 %v1736
      %v1927 = vpop.f32.mrb[0].mxu0
      %v1928 = vadd.f32 0.0, %v1927
      %v1929 = vpop.f32.mrb[0].mxu0
      %1930 = vmatprep.mubr.f32.mxu0 0.0
      %1931 = vmatmul.mubr.f32.gmra.mrb[0].mxu0 %v1739
      %v1932 = vpop.f32.mrb[0].mxu0
      %v1933 = vadd.f32 0.0, %v1932
      %v1934 = vpop.f32.mrb[0].mxu0
      %1935 = vmatprep.mubr.f32.mxu0 0.0
      %1936 = vmatmul.mubr.f32.gmra.mrb[0].mxu0 %v1742
      %v1937 = vpop.f32.mrb[0].mxu0
      %v1938 = vadd.f32 0.0, %v1937
      %v1939 = vpop.f32.mrb[0].mxu0
      %1940 = vmatprep.mubr.f32.mxu0 0.0
      %1941 = vmatmul.mubr.f32.gmra.mrb[0].mxu0 %v1745
      %v1942 = vpop.f32.mrb[0].mxu0
      %v1943 = vadd.f32 0.0, %v1942
      %v1944 = vpop.f32.mrb[0].mxu0
      %1945 = vmatprep.mubr.f32.mxu0 0.0
      %1946 = vmatmul.mubr.f32.gmra.mrb[0].mxu0 %v1748
      %v1947 = vpop.f32.mrb[0].mxu0
      %v1948 = vadd.f32 0.0, %v1947
      %v1949 = vpop.f32.mrb[0].mxu0
      %1950 = vmatprep.mubr.f32.mxu0 0.0
      %1951 = vmatmul.mubr.f32.gmra.mrb[0].mxu0 %v1751
      %v1952 = vpop.f32.mrb[0].mxu0
      %v1953 = vadd.f32 0.0, %v1952
      %v1954 = vpop.f32.mrb[0].mxu0
      %1955 = vmatprep.mubr.f32.mxu0 0.0
      %1956 = vmatmul.mubr.f32.gmra.mrb[0].mxu0 %v1754
      %v1957 = vpop.f32.mrb[0].mxu0
      %v1958 = vadd.f32 0.0, %v1957
      %v1959 = vpop.f32.mrb[0].mxu0
      %1960 = vmatprep.mubr.f32.mxu0 0.0
      %1961 = vmatmul.mubr.f32.gmra.mrb[0].mxu0 %v1757
      %v1962 = vpop.f32.mrb[0].mxu0
      %v1963 = vadd.f32 0.0, %v1962
      %v1964 = vpop.f32.mrb[0].mxu0
      %1965 = vmatprep.mubr.f32.mxu0 0.0
      %1966 = vmatmul.mubr.f32.gmra.mrb[0].mxu0 %v1760
      %v1967 = vpop.f32.mrb[0].mxu0
      %v1968 = vadd.f32 0.0, %v1967
      %v1969 = vpop.f32.mrb[0].mxu0
      %1970 = vmatprep.mubr.f32.mxu0 0.0
      %1971 = vmatmul.mubr.f32.gmra.mrb[0].mxu0 %v1763
      %v1972 = vpop.f32.mrb[0].mxu0
      %v1973 = vadd.f32 0.0, %v1972
      %v1974 = vpop.f32.mrb[0].mxu0
      %1975 = vmatprep.mubr.f32.mxu0 0.0
      %1976 = vmatmul.mubr.f32.gmra.mrb[0].mxu0 %v1766
      %v1977 = vpop.f32.mrb[0].mxu0
      %v1978 = vadd.f32 0.0, %v1977
      %v1979 = vpop.f32.mrb[0].mxu0
      %1980 = vmatprep.mubr.f32.mxu0 0.0
      %1981 = vmatmul.mubr.f32.gmra.mrb[0].mxu0 %v1769
      %v1982 = vpop.f32.mrb[0].mxu0
      %v1983 = vadd.f32 0.0, %v1982
      %v1984 = vpop.f32.mrb[0].mxu0
      %1985 = vmatprep.mubr.f32.mxu0 0.0
      %1986 = vmatmul.mubr.f32.gmra.mrb[0].mxu0 %v1772
      %v1987 = vpop.f32.mrb[0].mxu0
      %v1988 = vadd.f32 0.0, %v1987
      %v1989 = vpop.f32.mrb[0].mxu0
      %1990 = vmatprep.mubr.f32.mxu0 0.0
      %1991 = vmatmul.mubr.f32.gmra.mrb[0].mxu0 %v1775
      %v1992 = vpop.f32.mrb[0].mxu0
      %v1993 = vadd.f32 0.0, %v1992
      %v1994 = vpop.f32.mrb[0].mxu0
      %1995 = vmatprep.mubr.f32.mxu0 0.0
      %1996 = vmatmul.mubr.f32.gmra.mrb[0].mxu0 %v1778
      %v1997 = vpop.f32.mrb[0].mxu0
      %v1998 = vadd.f32 0.0, %v1997
      %v1999 = vpop.f32.mrb[0].mxu0
      %2000 = vmatprep.mubr.f32.mxu0 0.0
      %2001 = vmatmul.mubr.f32.gmra.mrb[0].mxu0 %v1781
      %v2002 = vpop.f32.mrb[0].mxu0
      %v2003 = vadd.f32 0.0, %v2002
      %v2004 = vpop.f32.mrb[0].mxu0
      %2005 = vmatprep.mubr.f32.mxu0 0.0
      %2006 = vmatmul.mubr.f32.gmra.mrb[0].mxu0 %v1784
      %v2007 = vpop.f32.mrb[0].mxu0
      %v2008 = vadd.f32 0.0, %v2007
      %v2009 = vpop.f32.mrb[0].mxu0
      %2010 = vdwg.mxu0
      %v2011 = vadd.f32 %v1624, %v1853
      %v2012 = vadd.f32 %v1625, %v1858
      %v2013 = vadd.f32 %v1626, %v1863
      %v2014 = vadd.f32 %v1627, %v1868
      %v2015 = vadd.f32 %v1628, %v1873
      %v2016 = vadd.f32 %v1629, %v1878
      %v2017 = vadd.f32 %v1630, %v1883
      %v2018 = vadd.f32 %v1631, %v1888
      %v2019 = vadd.f32 %v1632, %v1893
      %v2020 = vadd.f32 %v1633, %v1898
      %v2021 = vadd.f32 %v1634, %v1903
      %v2022 = vadd.f32 %v1635, %v1908
      %v2023 = vadd.f32 %v1636, %v1913
      %v2024 = vadd.f32 %v1637, %v1918
      %v2025 = vadd.f32 %v1638, %v1923
      %v2026 = vadd.f32 %v1639, %v1928
      %v2027 = vadd.f32 %v1640, %v1933
      %v2028 = vadd.f32 %v1641, %v1938
      %v2029 = vadd.f32 %v1642, %v1943
      %v2030 = vadd.f32 %v1643, %v1948
      %v2031 = vadd.f32 %v1644, %v1953
      %v2032 = vadd.f32 %v1645, %v1958
      %v2033 = vadd.f32 %v1646, %v1963
      %v2034 = vadd.f32 %v1647, %v1968
      %v2035 = vadd.f32 %v1648, %v1973
      %v2036 = vadd.f32 %v1649, %v1978
      %v2037 = vadd.f32 %v1650, %v1983
      %v2038 = vadd.f32 %v1651, %v1988
      %v2039 = vadd.f32 %v1652, %v1993
      %v2040 = vadd.f32 %v1653, %v1998
      %v2041 = vadd.f32 %v1654, %v2003
      %v2042 = vadd.f32 %v1655, %v2008
      %v2043 = vld [vmem:[%s1268 + $0x2] sm:$0xff]
      %v2044 = vld [vmem:[%s1268 + $0xa] sm:$0xff]
      %v2045 = vld [vmem:[%s1268 + $0x1a] sm:$0xff]
      %v2046 = vld [vmem:[%s1268 + $0x22] sm:$0xff]
      %v2047 = vld [vmem:[%s1268 + $0x32] sm:$0xff]
      %v2048 = vld [vmem:[%s1268 + $0x3a] sm:$0xff]
      %v2049 = vld [vmem:[%s1268 + $0x4a] sm:$0xff]
      %v2050 = vld [vmem:[%s1268 + $0x52] sm:$0xff]
      %v2051 = vld [vmem:[%s1268 + $0x62] sm:$0xff]
      %v2052 = vld [vmem:[%s1268 + $0x6a] sm:$0xff]
      %v2053 = vld [vmem:[%s1268 + $0x7a] sm:$0xff]
      %v2054 = vld [vmem:[%s1268 + $0x82] sm:$0xff]
      %v2055 = vld [vmem:[%s1268 + $0x92] sm:$0xff]
      %v2056 = vld [vmem:[%s1268 + $0x9a] sm:$0xff]
      %v2057 = vld [vmem:[%s1268 + $0xaa] sm:$0xff]
      %v2058 = vld [vmem:[%s1268 + $0xb2] sm:$0xff]
      %v2059 = vld [vmem:[%s1268 + $0xc2] sm:$0xff]
      %v2060 = vld [vmem:[%s1268 + $0xca] sm:$0xff]
      %v2061 = vld [vmem:[%s1268 + $0xda] sm:$0xff]
      %v2062 = vld [vmem:[%s1268 + $0xe2] sm:$0xff]
      %v2063 = vld [vmem:[%s1268 + $0xf2] sm:$0xff]
      %v2064 = vld [vmem:[%s1268 + $0xfa] sm:$0xff]
      %v2065 = vld [vmem:[%s1268 + $0x10a] sm:$0xff]
      %v2066 = vld [vmem:[%s1268 + $0x112] sm:$0xff]
      %v2067 = vld [vmem:[%s1268 + $0x122] sm:$0xff]
      %v2068 = vld [vmem:[%s1268 + $0x12a] sm:$0xff]
      %v2069 = vld [vmem:[%s1268 + $0x13a] sm:$0xff]
      %v2070 = vld [vmem:[%s1268 + $0x142] sm:$0xff]
      %v2071 = vld [vmem:[%s1268 + $0x152] sm:$0xff]
      %v2072 = vld [vmem:[%s1268 + $0x15a] sm:$0xff]
      %v2073 = vld [vmem:[%s1268 + $0x16a] sm:$0xff]
      %v2074 = vld [vmem:[%s1268 + $0x172] sm:$0xff]
      %s2075 = scalar_lea.vmem %s1, 40
      %v2076 = vld [vmem:[%s2075] sm:$0xff]
      %v2078 = vsel %vm238, %v2043, 0
      %v2081 = vsel %vm238, %v2044, 0
      %v2084 = vsel %vm238, %v2045, 0
      %v2087 = vsel %vm238, %v2046, 0
      %v2090 = vsel %vm238, %v2047, 0
      %v2093 = vsel %vm238, %v2048, 0
      %v2096 = vsel %vm238, %v2049, 0
      %v2099 = vsel %vm238, %v2050, 0
      %v2102 = vsel %vm238, %v2051, 0
      %v2105 = vsel %vm238, %v2052, 0
      %v2108 = vsel %vm238, %v2053, 0
      %v2111 = vsel %vm238, %v2054, 0
      %v2114 = vsel %vm238, %v2055, 0
      %v2117 = vsel %vm238, %v2056, 0
      %v2120 = vsel %vm238, %v2057, 0
      %v2123 = vsel %vm238, %v2058, 0
      %v2126 = vsel %vm238, %v2059, 0
      %v2129 = vsel %vm238, %v2060, 0
      %v2132 = vsel %vm238, %v2061, 0
      %v2135 = vsel %vm238, %v2062, 0
      %v2138 = vsel %vm238, %v2063, 0
      %v2141 = vsel %vm238, %v2064, 0
      %v2144 = vsel %vm238, %v2065, 0
      %v2147 = vsel %vm238, %v2066, 0
      %v2150 = vsel %vm238, %v2067, 0
      %v2153 = vsel %vm238, %v2068, 0
      %v2156 = vsel %vm238, %v2069, 0
      %v2159 = vsel %vm238, %v2070, 0
      %v2162 = vsel %vm238, %v2071, 0
      %v2165 = vsel %vm238, %v2072, 0
      %v2168 = vsel %vm238, %v2073, 0
      %v2171 = vsel %vm238, %v2074, 0
      %2173 = vmatprep.subr.mxu0 0.0
      %2174 = vmatpush1.msra.mxu0 %v2076
      %2175 = vmatprep.subr.mxu0 0.0
      %2176 = vmatpush1.msra.mxu0 0.0
      %2177 = vmatprep.subr.mxu0 0.0
      %2178 = vmatpush1.msra.mxu0 0.0
      %2179 = vmatprep.subr.mxu0 0.0
      %2180 = vmatpush1.msra.mxu0 0.0
      %2181 = vmatprep.subr.mxu0 0.0
      %2182 = vmatpush1.msra.mxu0 0.0
      %2183 = vmatprep.subr.mxu0 0.0
      %2184 = vmatpush1.msra.mxu0 0.0
      %2185 = vmatprep.subr.mxu0 0.0
      %2186 = vmatpush1.msra.mxu0 0.0
      %2187 = vmatprep.subr.mxu0 0.0
      %2188 = vmatpush1.msra.mxu0 0.0
      %2189 = vmatprep.subr.mxu0 0.0
      %2190 = vmatpush1.msra.mxu0 0.0
      %2191 = vmatprep.subr.mxu0 0.0
      %2192 = vmatpush1.msra.mxu0 0.0
      %2193 = vmatprep.subr.mxu0 0.0
      %2194 = vmatpush1.msra.mxu0 0.0
      %2195 = vmatprep.subr.mxu0 0.0
      %2196 = vmatpush1.msra.mxu0 0.0
      %2197 = vmatprep.subr.mxu0 0.0
      %2198 = vmatpush1.msra.mxu0 0.0
      %2199 = vmatprep.subr.mxu0 0.0
      %2200 = vmatpush1.msra.mxu0 0.0
      %2201 = vmatprep.subr.mxu0 0.0
      %2202 = vmatpush1.msra.mxu0 0.0
      %2203 = vmatprep.subr.mxu0 0.0
      %2204 = vmatpush1.msra.mxu0 0.0
      %2205 = vmatprep.subr.mxu0 0.0
      %2206 = vmatpush1.msra.mxu0 0.0
      %2207 = vmatprep.subr.mxu0 0.0
      %2208 = vmatpush1.msra.mxu0 0.0
      %2209 = vmatprep.subr.mxu0 0.0
      %2210 = vmatpush1.msra.mxu0 0.0
      %2211 = vmatprep.subr.mxu0 0.0
      %2212 = vmatpush1.msra.mxu0 0.0
      %2213 = vmatprep.subr.mxu0 0.0
      %2214 = vmatpush1.msra.mxu0 0.0
      %2215 = vmatprep.subr.mxu0 0.0
      %2216 = vmatpush1.msra.mxu0 0.0
      %2217 = vmatprep.subr.mxu0 0.0
      %2218 = vmatpush1.msra.mxu0 0.0
      %2219 = vmatprep.subr.mxu0 0.0
      %2220 = vmatpush1.msra.mxu0 0.0
      %2221 = vmatprep.subr.mxu0 0.0
      %2222 = vmatpush1.msra.mxu0 0.0
      %2223 = vmatprep.subr.mxu0 0.0
      %2224 = vmatpush1.msra.mxu0 0.0
      %2225 = vmatprep.subr.mxu0 0.0
      %2226 = vmatpush1.msra.mxu0 0.0
      %2227 = vmatprep.subr.mxu0 0.0
      %2228 = vmatpush1.msra.mxu0 0.0
      %2229 = vmatprep.subr.mxu0 0.0
      %2230 = vmatpush1.msra.mxu0 0.0
      %2231 = vmatprep.subr.mxu0 0.0
      %2232 = vmatpush1.msra.mxu0 0.0
      %2233 = vmatprep.subr.mxu0 0.0
      %2234 = vmatpush1.msra.mxu0 0.0
      %2235 = vmatprep.subr.mxu0 0.0
      %2236 = vmatpush1.msra.mxu0 0.0
      %2237 = vmatprep.mubr.f32.mxu0 0.0
      %2238 = vmatmul.mubr.f32.gmra.mrb[0].mxu0 %v2078
      %v2239 = vpop.f32.mrb[0].mxu0
      %v2240 = vadd.f32 0.0, %v2239
      %v2241 = vpop.f32.mrb[0].mxu0
      %2242 = vmatprep.mubr.f32.mxu0 0.0
      %2243 = vmatmul.mubr.f32.gmra.mrb[0].mxu0 %v2081
      %v2244 = vpop.f32.mrb[0].mxu0
      %v2245 = vadd.f32 0.0, %v2244
      %v2246 = vpop.f32.mrb[0].mxu0
      %2247 = vmatprep.mubr.f32.mxu0 0.0
      %2248 = vmatmul.mubr.f32.gmra.mrb[0].mxu0 %v2084
      %v2249 = vpop.f32.mrb[0].mxu0
      %v2250 = vadd.f32 0.0, %v2249
      %v2251 = vpop.f32.mrb[0].mxu0
      %2252 = vmatprep.mubr.f32.mxu0 0.0
      %2253 = vmatmul.mubr.f32.gmra.mrb[0].mxu0 %v2087
      %v2254 = vpop.f32.mrb[0].mxu0
      %v2255 = vadd.f32 0.0, %v2254
      %v2256 = vpop.f32.mrb[0].mxu0
      %2257 = vmatprep.mubr.f32.mxu0 0.0
      %2258 = vmatmul.mubr.f32.gmra.mrb[0].mxu0 %v2090
      %v2259 = vpop.f32.mrb[0].mxu0
      %v2260 = vadd.f32 0.0, %v2259
      %v2261 = vpop.f32.mrb[0].mxu0
      %2262 = vmatprep.mubr.f32.mxu0 0.0
      %2263 = vmatmul.mubr.f32.gmra.mrb[0].mxu0 %v2093
      %v2264 = vpop.f32.mrb[0].mxu0
      %v2265 = vadd.f32 0.0, %v2264
      %v2266 = vpop.f32.mrb[0].mxu0
      %2267 = vmatprep.mubr.f32.mxu0 0.0
      %2268 = vmatmul.mubr.f32.gmra.mrb[0].mxu0 %v2096
      %v2269 = vpop.f32.mrb[0].mxu0
      %v2270 = vadd.f32 0.0, %v2269
      %v2271 = vpop.f32.mrb[0].mxu0
      %2272 = vmatprep.mubr.f32.mxu0 0.0
      %2273 = vmatmul.mubr.f32.gmra.mrb[0].mxu0 %v2099
      %v2274 = vpop.f32.mrb[0].mxu0
      %v2275 = vadd.f32 0.0, %v2274
      %v2276 = vpop.f32.mrb[0].mxu0
      %2277 = vmatprep.mubr.f32.mxu0 0.0
      %2278 = vmatmul.mubr.f32.gmra.mrb[0].mxu0 %v2102
      %v2279 = vpop.f32.mrb[0].mxu0
      %v2280 = vadd.f32 0.0, %v2279
      %v2281 = vpop.f32.mrb[0].mxu0
      %2282 = vmatprep.mubr.f32.mxu0 0.0
      %2283 = vmatmul.mubr.f32.gmra.mrb[0].mxu0 %v2105
      %v2284 = vpop.f32.mrb[0].mxu0
      %v2285 = vadd.f32 0.0, %v2284
      %v2286 = vpop.f32.mrb[0].mxu0
      %2287 = vmatprep.mubr.f32.mxu0 0.0
      %2288 = vmatmul.mubr.f32.gmra.mrb[0].mxu0 %v2108
      %v2289 = vpop.f32.mrb[0].mxu0
      %v2290 = vadd.f32 0.0, %v2289
      %v2291 = vpop.f32.mrb[0].mxu0
      %2292 = vmatprep.mubr.f32.mxu0 0.0
      %2293 = vmatmul.mubr.f32.gmra.mrb[0].mxu0 %v2111
      %v2294 = vpop.f32.mrb[0].mxu0
      %v2295 = vadd.f32 0.0, %v2294
      %v2296 = vpop.f32.mrb[0].mxu0
      %2297 = vmatprep.mubr.f32.mxu0 0.0
      %2298 = vmatmul.mubr.f32.gmra.mrb[0].mxu0 %v2114
      %v2299 = vpop.f32.mrb[0].mxu0
      %v2300 = vadd.f32 0.0, %v2299
      %v2301 = vpop.f32.mrb[0].mxu0
      %2302 = vmatprep.mubr.f32.mxu0 0.0
      %2303 = vmatmul.mubr.f32.gmra.mrb[0].mxu0 %v2117
      %v2304 = vpop.f32.mrb[0].mxu0
      %v2305 = vadd.f32 0.0, %v2304
      %v2306 = vpop.f32.mrb[0].mxu0
      %2307 = vmatprep.mubr.f32.mxu0 0.0
      %2308 = vmatmul.mubr.f32.gmra.mrb[0].mxu0 %v2120
      %v2309 = vpop.f32.mrb[0].mxu0
      %v2310 = vadd.f32 0.0, %v2309
      %v2311 = vpop.f32.mrb[0].mxu0
      %2312 = vmatprep.mubr.f32.mxu0 0.0
      %2313 = vmatmul.mubr.f32.gmra.mrb[0].mxu0 %v2123
      %v2314 = vpop.f32.mrb[0].mxu0
      %v2315 = vadd.f32 0.0, %v2314
      %v2316 = vpop.f32.mrb[0].mxu0
      %2317 = vmatprep.mubr.f32.mxu0 0.0
      %2318 = vmatmul.mubr.f32.gmra.mrb[0].mxu0 %v2126
      %v2319 = vpop.f32.mrb[0].mxu0
      %v2320 = vadd.f32 0.0, %v2319
      %v2321 = vpop.f32.mrb[0].mxu0
      %2322 = vmatprep.mubr.f32.mxu0 0.0
      %2323 = vmatmul.mubr.f32.gmra.mrb[0].mxu0 %v2129
      %v2324 = vpop.f32.mrb[0].mxu0
      %v2325 = vadd.f32 0.0, %v2324
      %v2326 = vpop.f32.mrb[0].mxu0
      %2327 = vmatprep.mubr.f32.mxu0 0.0
      %2328 = vmatmul.mubr.f32.gmra.mrb[0].mxu0 %v2132
      %v2329 = vpop.f32.mrb[0].mxu0
      %v2330 = vadd.f32 0.0, %v2329
      %v2331 = vpop.f32.mrb[0].mxu0
      %2332 = vmatprep.mubr.f32.mxu0 0.0
      %2333 = vmatmul.mubr.f32.gmra.mrb[0].mxu0 %v2135
      %v2334 = vpop.f32.mrb[0].mxu0
      %v2335 = vadd.f32 0.0, %v2334
      %v2336 = vpop.f32.mrb[0].mxu0
      %2337 = vmatprep.mubr.f32.mxu0 0.0
      %2338 = vmatmul.mubr.f32.gmra.mrb[0].mxu0 %v2138
      %v2339 = vpop.f32.mrb[0].mxu0
      %v2340 = vadd.f32 0.0, %v2339
      %v2341 = vpop.f32.mrb[0].mxu0
      %2342 = vmatprep.mubr.f32.mxu0 0.0
      %2343 = vmatmul.mubr.f32.gmra.mrb[0].mxu0 %v2141
      %v2344 = vpop.f32.mrb[0].mxu0
      %v2345 = vadd.f32 0.0, %v2344
      %v2346 = vpop.f32.mrb[0].mxu0
      %2347 = vmatprep.mubr.f32.mxu0 0.0
      %2348 = vmatmul.mubr.f32.gmra.mrb[0].mxu0 %v2144
      %v2349 = vpop.f32.mrb[0].mxu0
      %v2350 = vadd.f32 0.0, %v2349
      %v2351 = vpop.f32.mrb[0].mxu0
      %2352 = vmatprep.mubr.f32.mxu0 0.0
      %2353 = vmatmul.mubr.f32.gmra.mrb[0].mxu0 %v2147
      %v2354 = vpop.f32.mrb[0].mxu0
      %v2355 = vadd.f32 0.0, %v2354
      %v2356 = vpop.f32.mrb[0].mxu0
      %2357 = vmatprep.mubr.f32.mxu0 0.0
      %2358 = vmatmul.mubr.f32.gmra.mrb[0].mxu0 %v2150
      %v2359 = vpop.f32.mrb[0].mxu0
      %v2360 = vadd.f32 0.0, %v2359
      %v2361 = vpop.f32.mrb[0].mxu0
      %2362 = vmatprep.mubr.f32.mxu0 0.0
      %2363 = vmatmul.mubr.f32.gmra.mrb[0].mxu0 %v2153
      %v2364 = vpop.f32.mrb[0].mxu0
      %v2365 = vadd.f32 0.0, %v2364
      %v2366 = vpop.f32.mrb[0].mxu0
      %2367 = vmatprep.mubr.f32.mxu0 0.0
      %2368 = vmatmul.mubr.f32.gmra.mrb[0].mxu0 %v2156
      %v2369 = vpop.f32.mrb[0].mxu0
      %v2370 = vadd.f32 0.0, %v2369
      %v2371 = vpop.f32.mrb[0].mxu0
      %2372 = vmatprep.mubr.f32.mxu0 0.0
      %2373 = vmatmul.mubr.f32.gmra.mrb[0].mxu0 %v2159
      %v2374 = vpop.f32.mrb[0].mxu0
      %v2375 = vadd.f32 0.0, %v2374
      %v2376 = vpop.f32.mrb[0].mxu0
      %2377 = vmatprep.mubr.f32.mxu0 0.0
      %2378 = vmatmul.mubr.f32.gmra.mrb[0].mxu0 %v2162
      %v2379 = vpop.f32.mrb[0].mxu0
      %v2380 = vadd.f32 0.0, %v2379
      %v2381 = vpop.f32.mrb[0].mxu0
      %2382 = vmatprep.mubr.f32.mxu0 0.0
      %2383 = vmatmul.mubr.f32.gmra.mrb[0].mxu0 %v2165
      %v2384 = vpop.f32.mrb[0].mxu0
      %v2385 = vadd.f32 0.0, %v2384
      %v2386 = vpop.f32.mrb[0].mxu0
      %2387 = vmatprep.mubr.f32.mxu0 0.0
      %2388 = vmatmul.mubr.f32.gmra.mrb[0].mxu0 %v2168
      %v2389 = vpop.f32.mrb[0].mxu0
      %v2390 = vadd.f32 0.0, %v2389
      %v2391 = vpop.f32.mrb[0].mxu0
      %2392 = vmatprep.mubr.f32.mxu0 0.0
      %2393 = vmatmul.mubr.f32.gmra.mrb[0].mxu0 %v2171
      %v2394 = vpop.f32.mrb[0].mxu0
      %v2395 = vadd.f32 0.0, %v2394
      %v2396 = vpop.f32.mrb[0].mxu0
      %2397 = vdwg.mxu0
      %v2398 = vadd.f32 %v2011, %v2240
      %v2399 = vadd.f32 %v2012, %v2245
      %v2400 = vadd.f32 %v2013, %v2250
      %v2401 = vadd.f32 %v2014, %v2255
      %v2402 = vadd.f32 %v2015, %v2260
      %v2403 = vadd.f32 %v2016, %v2265
      %v2404 = vadd.f32 %v2017, %v2270
      %v2405 = vadd.f32 %v2018, %v2275
      %v2406 = vadd.f32 %v2019, %v2280
      %v2407 = vadd.f32 %v2020, %v2285
      %v2408 = vadd.f32 %v2021, %v2290
      %v2409 = vadd.f32 %v2022, %v2295
      %v2410 = vadd.f32 %v2023, %v2300
      %v2411 = vadd.f32 %v2024, %v2305
      %v2412 = vadd.f32 %v2025, %v2310
      %v2413 = vadd.f32 %v2026, %v2315
      %v2414 = vadd.f32 %v2027, %v2320
      %v2415 = vadd.f32 %v2028, %v2325
      %v2416 = vadd.f32 %v2029, %v2330
      %v2417 = vadd.f32 %v2030, %v2335
      %v2418 = vadd.f32 %v2031, %v2340
      %v2419 = vadd.f32 %v2032, %v2345
      %v2420 = vadd.f32 %v2033, %v2350
      %v2421 = vadd.f32 %v2034, %v2355
      %v2422 = vadd.f32 %v2035, %v2360
      %v2423 = vadd.f32 %v2036, %v2365
      %v2424 = vadd.f32 %v2037, %v2370
      %v2425 = vadd.f32 %v2038, %v2375
      %v2426 = vadd.f32 %v2039, %v2380
      %v2427 = vadd.f32 %v2040, %v2385
      %v2428 = vadd.f32 %v2041, %v2390
      %v2429 = vadd.f32 %v2042, %v2395
      %s2430 = scalar_lea.vmem %s165, 48
      %v2431 = vld [vmem:[%s2430] sm:$0xff]
      %v2432 = vld [vmem:[%s2430 + $0x8] sm:$0xff]
      %v2433 = vld [vmem:[%s2430 + $0x18] sm:$0xff]
      %v2434 = vld [vmem:[%s2430 + $0x20] sm:$0xff]
      %v2435 = vld [vmem:[%s2430 + $0x30] sm:$0xff]
      %v2436 = vld [vmem:[%s2430 + $0x38] sm:$0xff]
      %v2437 = vld [vmem:[%s2430 + $0x48] sm:$0xff]
      %v2438 = vld [vmem:[%s2430 + $0x50] sm:$0xff]
      %v2439 = vld [vmem:[%s2430 + $0x60] sm:$0xff]
      %v2440 = vld [vmem:[%s2430 + $0x68] sm:$0xff]
      %v2441 = vld [vmem:[%s2430 + $0x78] sm:$0xff]
      %v2442 = vld [vmem:[%s2430 + $0x80] sm:$0xff]
      %v2443 = vld [vmem:[%s2430 + $0x90] sm:$0xff]
      %v2444 = vld [vmem:[%s2430 + $0x98] sm:$0xff]
      %v2445 = vld [vmem:[%s2430 + $0xa8] sm:$0xff]
      %v2446 = vld [vmem:[%s2430 + $0xb0] sm:$0xff]
      %v2447 = vld [vmem:[%s2430 + $0xc0] sm:$0xff]
      %v2448 = vld [vmem:[%s2430 + $0xc8] sm:$0xff]
      %v2449 = vld [vmem:[%s2430 + $0xd8] sm:$0xff]
      %v2450 = vld [vmem:[%s2430 + $0xe0] sm:$0xff]
      %v2451 = vld [vmem:[%s2430 + $0xf0] sm:$0xff]
      %v2452 = vld [vmem:[%s2430 + $0xf8] sm:$0xff]
      %v2453 = vld [vmem:[%s2430 + $0x108] sm:$0xff]
      %v2454 = vld [vmem:[%s2430 + $0x110] sm:$0xff]
      %v2455 = vld [vmem:[%s2430 + $0x120] sm:$0xff]
      %v2456 = vld [vmem:[%s2430 + $0x128] sm:$0xff]
      %v2457 = vld [vmem:[%s2430 + $0x138] sm:$0xff]
      %v2458 = vld [vmem:[%s2430 + $0x140] sm:$0xff]
      %v2459 = vld [vmem:[%s2430 + $0x150] sm:$0xff]
      %v2460 = vld [vmem:[%s2430 + $0x158] sm:$0xff]
      %v2461 = vld [vmem:[%s2430 + $0x168] sm:$0xff]
      %v2462 = vld [vmem:[%s2430 + $0x170] sm:$0xff]
      %s2463 = scalar_lea.vmem %s1, 48
      %v2464 = vld [vmem:[%s2463] sm:$0xff]
      %v2466 = vsel %vm238, %v2431, 0
      %v2469 = vsel %vm238, %v2432, 0
      %v2472 = vsel %vm238, %v2433, 0
      %v2475 = vsel %vm238, %v2434, 0
      %v2478 = vsel %vm238, %v2435, 0
      %v2481 = vsel %vm238, %v2436, 0
      %v2484 = vsel %vm238, %v2437, 0
      %v2487 = vsel %vm238, %v2438, 0
      %v2490 = vsel %vm238, %v2439, 0
      %v2493 = vsel %vm238, %v2440, 0
      %v2496 = vsel %vm238, %v2441, 0
      %v2499 = vsel %vm238, %v2442, 0
      %v2502 = vsel %vm238, %v2443, 0
      %v2505 = vsel %vm238, %v2444, 0
      %v2508 = vsel %vm238, %v2445, 0
      %v2511 = vsel %vm238, %v2446, 0
      %v2514 = vsel %vm238, %v2447, 0
      %v2517 = vsel %vm238, %v2448, 0
      %v2520 = vsel %vm238, %v2449, 0
      %v2523 = vsel %vm238, %v2450, 0
      %v2526 = vsel %vm238, %v2451, 0
      %v2529 = vsel %vm238, %v2452, 0
      %v2532 = vsel %vm238, %v2453, 0
      %v2535 = vsel %vm238, %v2454, 0
      %v2538 = vsel %vm238, %v2455, 0
      %v2541 = vsel %vm238, %v2456, 0
      %v2544 = vsel %vm238, %v2457, 0
      %v2547 = vsel %vm238, %v2458, 0
      %v2550 = vsel %vm238, %v2459, 0
      %v2553 = vsel %vm238, %v2460, 0
      %v2556 = vsel %vm238, %v2461, 0
      %v2559 = vsel %vm238, %v2462, 0
      %2561 = vmatprep.subr.mxu0 0.0
      %2562 = vmatpush1.msra.mxu0 %v2464
      %2563 = vmatprep.subr.mxu0 0.0
      %2564 = vmatpush1.msra.mxu0 0.0
      %2565 = vmatprep.subr.mxu0 0.0
      %2566 = vmatpush1.msra.mxu0 0.0
      %2567 = vmatprep.subr.mxu0 0.0
      %2568 = vmatpush1.msra.mxu0 0.0
      %2569 = vmatprep.subr.mxu0 0.0
      %2570 = vmatpush1.msra.mxu0 0.0
      %2571 = vmatprep.subr.mxu0 0.0
      %2572 = vmatpush1.msra.mxu0 0.0
      %2573 = vmatprep.subr.mxu0 0.0
      %2574 = vmatpush1.msra.mxu0 0.0
      %2575 = vmatprep.subr.mxu0 0.0
      %2576 = vmatpush1.msra.mxu0 0.0
      %2577 = vmatprep.subr.mxu0 0.0
      %2578 = vmatpush1.msra.mxu0 0.0
      %2579 = vmatprep.subr.mxu0 0.0
      %2580 = vmatpush1.msra.mxu0 0.0
      %2581 = vmatprep.subr.mxu0 0.0
      %2582 = vmatpush1.msra.mxu0 0.0
      %2583 = vmatprep.subr.mxu0 0.0
      %2584 = vmatpush1.msra.mxu0 0.0
      %2585 = vmatprep.subr.mxu0 0.0
      %2586 = vmatpush1.msra.mxu0 0.0
      %2587 = vmatprep.subr.mxu0 0.0
      %2588 = vmatpush1.msra.mxu0 0.0
      %2589 = vmatprep.subr.mxu0 0.0
      %2590 = vmatpush1.msra.mxu0 0.0
      %2591 = vmatprep.subr.mxu0 0.0
      %2592 = vmatpush1.msra.mxu0 0.0
      %2593 = vmatprep.subr.mxu0 0.0
      %2594 = vmatpush1.msra.mxu0 0.0
      %2595 = vmatprep.subr.mxu0 0.0
      %2596 = vmatpush1.msra.mxu0 0.0
      %2597 = vmatprep.subr.mxu0 0.0
      %2598 = vmatpush1.msra.mxu0 0.0
      %2599 = vmatprep.subr.mxu0 0.0
      %2600 = vmatpush1.msra.mxu0 0.0
      %2601 = vmatprep.subr.mxu0 0.0
      %2602 = vmatpush1.msra.mxu0 0.0
      %2603 = vmatprep.subr.mxu0 0.0
      %2604 = vmatpush1.msra.mxu0 0.0
      %2605 = vmatprep.subr.mxu0 0.0
      %2606 = vmatpush1.msra.mxu0 0.0
      %2607 = vmatprep.subr.mxu0 0.0
      %2608 = vmatpush1.msra.mxu0 0.0
      %2609 = vmatprep.subr.mxu0 0.0
      %2610 = vmatpush1.msra.mxu0 0.0
      %2611 = vmatprep.subr.mxu0 0.0
      %2612 = vmatpush1.msra.mxu0 0.0
      %2613 = vmatprep.subr.mxu0 0.0
      %2614 = vmatpush1.msra.mxu0 0.0
      %2615 = vmatprep.subr.mxu0 0.0
      %2616 = vmatpush1.msra.mxu0 0.0
      %2617 = vmatprep.subr.mxu0 0.0
      %2618 = vmatpush1.msra.mxu0 0.0
      %2619 = vmatprep.subr.mxu0 0.0
      %2620 = vmatpush1.msra.mxu0 0.0
      %2621 = vmatprep.subr.mxu0 0.0
      %2622 = vmatpush1.msra.mxu0 0.0
      %2623 = vmatprep.subr.mxu0 0.0
      %2624 = vmatpush1.msra.mxu0 0.0
      %2625 = vmatprep.mubr.f32.mxu0 0.0
      %2626 = vmatmul.mubr.f32.gmra.mrb[0].mxu0 %v2466
      %v2627 = vpop.f32.mrb[0].mxu0
      %v2628 = vadd.f32 0.0, %v2627
      %v2629 = vpop.f32.mrb[0].mxu0
      %2630 = vmatprep.mubr.f32.mxu0 0.0
      %2631 = vmatmul.mubr.f32.gmra.mrb[0].mxu0 %v2469
      %v2632 = vpop.f32.mrb[0].mxu0
      %v2633 = vadd.f32 0.0, %v2632
      %v2634 = vpop.f32.mrb[0].mxu0
      %2635 = vmatprep.mubr.f32.mxu0 0.0
      %2636 = vmatmul.mubr.f32.gmra.mrb[0].mxu0 %v2472
      %v2637 = vpop.f32.mrb[0].mxu0
      %v2638 = vadd.f32 0.0, %v2637
      %v2639 = vpop.f32.mrb[0].mxu0
      %2640 = vmatprep.mubr.f32.mxu0 0.0
      %2641 = vmatmul.mubr.f32.gmra.mrb[0].mxu0 %v2475
      %v2642 = vpop.f32.mrb[0].mxu0
      %v2643 = vadd.f32 0.0, %v2642
      %v2644 = vpop.f32.mrb[0].mxu0
      %2645 = vmatprep.mubr.f32.mxu0 0.0
      %2646 = vmatmul.mubr.f32.gmra.mrb[0].mxu0 %v2478
      %v2647 = vpop.f32.mrb[0].mxu0
      %v2648 = vadd.f32 0.0, %v2647
      %v2649 = vpop.f32.mrb[0].mxu0
      %2650 = vmatprep.mubr.f32.mxu0 0.0
      %2651 = vmatmul.mubr.f32.gmra.mrb[0].mxu0 %v2481
      %v2652 = vpop.f32.mrb[0].mxu0
      %v2653 = vadd.f32 0.0, %v2652
      %v2654 = vpop.f32.mrb[0].mxu0
      %2655 = vmatprep.mubr.f32.mxu0 0.0
      %2656 = vmatmul.mubr.f32.gmra.mrb[0].mxu0 %v2484
      %v2657 = vpop.f32.mrb[0].mxu0
      %v2658 = vadd.f32 0.0, %v2657
      %v2659 = vpop.f32.mrb[0].mxu0
      %2660 = vmatprep.mubr.f32.mxu0 0.0
      %2661 = vmatmul.mubr.f32.gmra.mrb[0].mxu0 %v2487
      %v2662 = vpop.f32.mrb[0].mxu0
      %v2663 = vadd.f32 0.0, %v2662
      %v2664 = vpop.f32.mrb[0].mxu0
      %2665 = vmatprep.mubr.f32.mxu0 0.0
      %2666 = vmatmul.mubr.f32.gmra.mrb[0].mxu0 %v2490
      %v2667 = vpop.f32.mrb[0].mxu0
      %v2668 = vadd.f32 0.0, %v2667
      %v2669 = vpop.f32.mrb[0].mxu0
      %2670 = vmatprep.mubr.f32.mxu0 0.0
      %2671 = vmatmul.mubr.f32.gmra.mrb[0].mxu0 %v2493
      %v2672 = vpop.f32.mrb[0].mxu0
      %v2673 = vadd.f32 0.0, %v2672
      %v2674 = vpop.f32.mrb[0].mxu0
      %2675 = vmatprep.mubr.f32.mxu0 0.0
      %2676 = vmatmul.mubr.f32.gmra.mrb[0].mxu0 %v2496
      %v2677 = vpop.f32.mrb[0].mxu0
      %v2678 = vadd.f32 0.0, %v2677
      %v2679 = vpop.f32.mrb[0].mxu0
      %2680 = vmatprep.mubr.f32.mxu0 0.0
      %2681 = vmatmul.mubr.f32.gmra.mrb[0].mxu0 %v2499
      %v2682 = vpop.f32.mrb[0].mxu0
      %v2683 = vadd.f32 0.0, %v2682
      %v2684 = vpop.f32.mrb[0].mxu0
      %2685 = vmatprep.mubr.f32.mxu0 0.0
      %2686 = vmatmul.mubr.f32.gmra.mrb[0].mxu0 %v2502
      %v2687 = vpop.f32.mrb[0].mxu0
      %v2688 = vadd.f32 0.0, %v2687
      %v2689 = vpop.f32.mrb[0].mxu0
      %2690 = vmatprep.mubr.f32.mxu0 0.0
      %2691 = vmatmul.mubr.f32.gmra.mrb[0].mxu0 %v2505
      %v2692 = vpop.f32.mrb[0].mxu0
      %v2693 = vadd.f32 0.0, %v2692
      %v2694 = vpop.f32.mrb[0].mxu0
      %2695 = vmatprep.mubr.f32.mxu0 0.0
      %2696 = vmatmul.mubr.f32.gmra.mrb[0].mxu0 %v2508
      %v2697 = vpop.f32.mrb[0].mxu0
      %v2698 = vadd.f32 0.0, %v2697
      %v2699 = vpop.f32.mrb[0].mxu0
      %2700 = vmatprep.mubr.f32.mxu0 0.0
      %2701 = vmatmul.mubr.f32.gmra.mrb[0].mxu0 %v2511
      %v2702 = vpop.f32.mrb[0].mxu0
      %v2703 = vadd.f32 0.0, %v2702
      %v2704 = vpop.f32.mrb[0].mxu0
      %2705 = vmatprep.mubr.f32.mxu0 0.0
      %2706 = vmatmul.mubr.f32.gmra.mrb[0].mxu0 %v2514
      %v2707 = vpop.f32.mrb[0].mxu0
      %v2708 = vadd.f32 0.0, %v2707
      %v2709 = vpop.f32.mrb[0].mxu0
      %2710 = vmatprep.mubr.f32.mxu0 0.0
      %2711 = vmatmul.mubr.f32.gmra.mrb[0].mxu0 %v2517
      %v2712 = vpop.f32.mrb[0].mxu0
      %v2713 = vadd.f32 0.0, %v2712
      %v2714 = vpop.f32.mrb[0].mxu0
      %2715 = vmatprep.mubr.f32.mxu0 0.0
      %2716 = vmatmul.mubr.f32.gmra.mrb[0].mxu0 %v2520
      %v2717 = vpop.f32.mrb[0].mxu0
      %v2718 = vadd.f32 0.0, %v2717
      %v2719 = vpop.f32.mrb[0].mxu0
      %2720 = vmatprep.mubr.f32.mxu0 0.0
      %2721 = vmatmul.mubr.f32.gmra.mrb[0].mxu0 %v2523
      %v2722 = vpop.f32.mrb[0].mxu0
      %v2723 = vadd.f32 0.0, %v2722
      %v2724 = vpop.f32.mrb[0].mxu0
      %2725 = vmatprep.mubr.f32.mxu0 0.0
      %2726 = vmatmul.mubr.f32.gmra.mrb[0].mxu0 %v2526
      %v2727 = vpop.f32.mrb[0].mxu0
      %v2728 = vadd.f32 0.0, %v2727
      %v2729 = vpop.f32.mrb[0].mxu0
      %2730 = vmatprep.mubr.f32.mxu0 0.0
      %2731 = vmatmul.mubr.f32.gmra.mrb[0].mxu0 %v2529
      %v2732 = vpop.f32.mrb[0].mxu0
      %v2733 = vadd.f32 0.0, %v2732
      %v2734 = vpop.f32.mrb[0].mxu0
      %2735 = vmatprep.mubr.f32.mxu0 0.0
      %2736 = vmatmul.mubr.f32.gmra.mrb[0].mxu0 %v2532
      %v2737 = vpop.f32.mrb[0].mxu0
      %v2738 = vadd.f32 0.0, %v2737
      %v2739 = vpop.f32.mrb[0].mxu0
      %2740 = vmatprep.mubr.f32.mxu0 0.0
      %2741 = vmatmul.mubr.f32.gmra.mrb[0].mxu0 %v2535
      %v2742 = vpop.f32.mrb[0].mxu0
      %v2743 = vadd.f32 0.0, %v2742
      %v2744 = vpop.f32.mrb[0].mxu0
      %2745 = vmatprep.mubr.f32.mxu0 0.0
      %2746 = vmatmul.mubr.f32.gmra.mrb[0].mxu0 %v2538
      %v2747 = vpop.f32.mrb[0].mxu0
      %v2748 = vadd.f32 0.0, %v2747
      %v2749 = vpop.f32.mrb[0].mxu0
      %2750 = vmatprep.mubr.f32.mxu0 0.0
      %2751 = vmatmul.mubr.f32.gmra.mrb[0].mxu0 %v2541
      %v2752 = vpop.f32.mrb[0].mxu0
      %v2753 = vadd.f32 0.0, %v2752
      %v2754 = vpop.f32.mrb[0].mxu0
      %2755 = vmatprep.mubr.f32.mxu0 0.0
      %2756 = vmatmul.mubr.f32.gmra.mrb[0].mxu0 %v2544
      %v2757 = vpop.f32.mrb[0].mxu0
      %v2758 = vadd.f32 0.0, %v2757
      %v2759 = vpop.f32.mrb[0].mxu0
      %2760 = vmatprep.mubr.f32.mxu0 0.0
      %2761 = vmatmul.mubr.f32.gmra.mrb[0].mxu0 %v2547
      %v2762 = vpop.f32.mrb[0].mxu0
      %v2763 = vadd.f32 0.0, %v2762
      %v2764 = vpop.f32.mrb[0].mxu0
      %2765 = vmatprep.mubr.f32.mxu0 0.0
      %2766 = vmatmul.mubr.f32.gmra.mrb[0].mxu0 %v2550
      %v2767 = vpop.f32.mrb[0].mxu0
      %v2768 = vadd.f32 0.0, %v2767
      %v2769 = vpop.f32.mrb[0].mxu0
      %2770 = vmatprep.mubr.f32.mxu0 0.0
      %2771 = vmatmul.mubr.f32.gmra.mrb[0].mxu0 %v2553
      %v2772 = vpop.f32.mrb[0].mxu0
      %v2773 = vadd.f32 0.0, %v2772
      %v2774 = vpop.f32.mrb[0].mxu0
      %2775 = vmatprep.mubr.f32.mxu0 0.0
      %2776 = vmatmul.mubr.f32.gmra.mrb[0].mxu0 %v2556
      %v2777 = vpop.f32.mrb[0].mxu0
      %v2778 = vadd.f32 0.0, %v2777
      %v2779 = vpop.f32.mrb[0].mxu0
      %2780 = vmatprep.mubr.f32.mxu0 0.0
      %2781 = vmatmul.mubr.f32.gmra.mrb[0].mxu0 %v2559
      %v2782 = vpop.f32.mrb[0].mxu0
      %v2783 = vadd.f32 0.0, %v2782
      %v2784 = vpop.f32.mrb[0].mxu0
      %2785 = vdwg.mxu0
      %v2786 = vadd.f32 %v2398, %v2628
      %v2787 = vadd.f32 %v2399, %v2633
      %v2788 = vadd.f32 %v2400, %v2638
      %v2789 = vadd.f32 %v2401, %v2643
      %v2790 = vadd.f32 %v2402, %v2648
      %v2791 = vadd.f32 %v2403, %v2653
      %v2792 = vadd.f32 %v2404, %v2658
      %v2793 = vadd.f32 %v2405, %v2663
      %v2794 = vadd.f32 %v2406, %v2668
      %v2795 = vadd.f32 %v2407, %v2673
      %v2796 = vadd.f32 %v2408, %v2678
      %v2797 = vadd.f32 %v2409, %v2683
      %v2798 = vadd.f32 %v2410, %v2688
      %v2799 = vadd.f32 %v2411, %v2693
      %v2800 = vadd.f32 %v2412, %v2698
      %v2801 = vadd.f32 %v2413, %v2703
      %v2802 = vadd.f32 %v2414, %v2708
      %v2803 = vadd.f32 %v2415, %v2713
      %v2804 = vadd.f32 %v2416, %v2718
      %v2805 = vadd.f32 %v2417, %v2723
      %v2806 = vadd.f32 %v2418, %v2728
      %v2807 = vadd.f32 %v2419, %v2733
      %v2808 = vadd.f32 %v2420, %v2738
      %v2809 = vadd.f32 %v2421, %v2743
      %v2810 = vadd.f32 %v2422, %v2748
      %v2811 = vadd.f32 %v2423, %v2753
      %v2812 = vadd.f32 %v2424, %v2758
      %v2813 = vadd.f32 %v2425, %v2763
      %v2814 = vadd.f32 %v2426, %v2768
      %v2815 = vadd.f32 %v2427, %v2773
      %v2816 = vadd.f32 %v2428, %v2778
      %v2817 = vadd.f32 %v2429, %v2783
      %v2818 = vld [vmem:[%s2430 + $0x1] sm:$0xff]
      %v2819 = vld [vmem:[%s2430 + $0x9] sm:$0xff]
      %v2820 = vld [vmem:[%s2430 + $0x19] sm:$0xff]
      %v2821 = vld [vmem:[%s2430 + $0x21] sm:$0xff]
      %v2822 = vld [vmem:[%s2430 + $0x31] sm:$0xff]
      %v2823 = vld [vmem:[%s2430 + $0x39] sm:$0xff]
      %v2824 = vld [vmem:[%s2430 + $0x49] sm:$0xff]
      %v2825 = vld [vmem:[%s2430 + $0x51] sm:$0xff]
      %v2826 = vld [vmem:[%s2430 + $0x61] sm:$0xff]
      %v2827 = vld [vmem:[%s2430 + $0x69] sm:$0xff]
      %v2828 = vld [vmem:[%s2430 + $0x79] sm:$0xff]
      %v2829 = vld [vmem:[%s2430 + $0x81] sm:$0xff]
      %v2830 = vld [vmem:[%s2430 + $0x91] sm:$0xff]
      %v2831 = vld [vmem:[%s2430 + $0x99] sm:$0xff]
      %v2832 = vld [vmem:[%s2430 + $0xa9] sm:$0xff]
      %v2833 = vld [vmem:[%s2430 + $0xb1] sm:$0xff]
      %v2834 = vld [vmem:[%s2430 + $0xc1] sm:$0xff]
      %v2835 = vld [vmem:[%s2430 + $0xc9] sm:$0xff]
      %v2836 = vld [vmem:[%s2430 + $0xd9] sm:$0xff]
      %v2837 = vld [vmem:[%s2430 + $0xe1] sm:$0xff]
      %v2838 = vld [vmem:[%s2430 + $0xf1] sm:$0xff]
      %v2839 = vld [vmem:[%s2430 + $0xf9] sm:$0xff]
      %v2840 = vld [vmem:[%s2430 + $0x109] sm:$0xff]
      %v2841 = vld [vmem:[%s2430 + $0x111] sm:$0xff]
      %v2842 = vld [vmem:[%s2430 + $0x121] sm:$0xff]
      %v2843 = vld [vmem:[%s2430 + $0x129] sm:$0xff]
      %v2844 = vld [vmem:[%s2430 + $0x139] sm:$0xff]
      %v2845 = vld [vmem:[%s2430 + $0x141] sm:$0xff]
      %v2846 = vld [vmem:[%s2430 + $0x151] sm:$0xff]
      %v2847 = vld [vmem:[%s2430 + $0x159] sm:$0xff]
      %v2848 = vld [vmem:[%s2430 + $0x169] sm:$0xff]
      %v2849 = vld [vmem:[%s2430 + $0x171] sm:$0xff]
      %s2850 = scalar_lea.vmem %s1, 56
      %v2851 = vld [vmem:[%s2850] sm:$0xff]
      %v2853 = vsel %vm238, %v2818, 0
      %v2856 = vsel %vm238, %v2819, 0
      %v2859 = vsel %vm238, %v2820, 0
      %v2862 = vsel %vm238, %v2821, 0
      %v2865 = vsel %vm238, %v2822, 0
      %v2868 = vsel %vm238, %v2823, 0
      %v2871 = vsel %vm238, %v2824, 0
      %v2874 = vsel %vm238, %v2825, 0
      %v2877 = vsel %vm238, %v2826, 0
      %v2880 = vsel %vm238, %v2827, 0
      %v2883 = vsel %vm238, %v2828, 0
      %v2886 = vsel %vm238, %v2829, 0
      %v2889 = vsel %vm238, %v2830, 0
      %v2892 = vsel %vm238, %v2831, 0
      %v2895 = vsel %vm238, %v2832, 0
      %v2898 = vsel %vm238, %v2833, 0
      %v2901 = vsel %vm238, %v2834, 0
      %v2904 = vsel %vm238, %v2835, 0
      %v2907 = vsel %vm238, %v2836, 0
      %v2910 = vsel %vm238, %v2837, 0
      %v2913 = vsel %vm238, %v2838, 0
      %v2916 = vsel %vm238, %v2839, 0
      %v2919 = vsel %vm238, %v2840, 0
      %v2922 = vsel %vm238, %v2841, 0
      %v2925 = vsel %vm238, %v2842, 0
      %v2928 = vsel %vm238, %v2843, 0
      %v2931 = vsel %vm238, %v2844, 0
      %v2934 = vsel %vm238, %v2845, 0
      %v2937 = vsel %vm238, %v2846, 0
      %v2940 = vsel %vm238, %v2847, 0
      %v2943 = vsel %vm238, %v2848, 0
      %v2946 = vsel %vm238, %v2849, 0
      %2948 = vmatprep.subr.mxu0 0.0
      %2949 = vmatpush1.msra.mxu0 %v2851
      %2950 = vmatprep.subr.mxu0 0.0
      %2951 = vmatpush1.msra.mxu0 0.0
      %2952 = vmatprep.subr.mxu0 0.0
      %2953 = vmatpush1.msra.mxu0 0.0
      %2954 = vmatprep.subr.mxu0 0.0
      %2955 = vmatpush1.msra.mxu0 0.0
      %2956 = vmatprep.subr.mxu0 0.0
      %2957 = vmatpush1.msra.mxu0 0.0
      %2958 = vmatprep.subr.mxu0 0.0
      %2959 = vmatpush1.msra.mxu0 0.0
      %2960 = vmatprep.subr.mxu0 0.0
      %2961 = vmatpush1.msra.mxu0 0.0
      %2962 = vmatprep.subr.mxu0 0.0
      %2963 = vmatpush1.msra.mxu0 0.0
      %2964 = vmatprep.subr.mxu0 0.0
      %2965 = vmatpush1.msra.mxu0 0.0
      %2966 = vmatprep.subr.mxu0 0.0
      %2967 = vmatpush1.msra.mxu0 0.0
      %2968 = vmatprep.subr.mxu0 0.0
      %2969 = vmatpush1.msra.mxu0 0.0
      %2970 = vmatprep.subr.mxu0 0.0
      %2971 = vmatpush1.msra.mxu0 0.0
      %2972 = vmatprep.subr.mxu0 0.0
      %2973 = vmatpush1.msra.mxu0 0.0
      %2974 = vmatprep.subr.mxu0 0.0
      %2975 = vmatpush1.msra.mxu0 0.0
      %2976 = vmatprep.subr.mxu0 0.0
      %2977 = vmatpush1.msra.mxu0 0.0
      %2978 = vmatprep.subr.mxu0 0.0
      %2979 = vmatpush1.msra.mxu0 0.0
      %2980 = vmatprep.subr.mxu0 0.0
      %2981 = vmatpush1.msra.mxu0 0.0
      %2982 = vmatprep.subr.mxu0 0.0
      %2983 = vmatpush1.msra.mxu0 0.0
      %2984 = vmatprep.subr.mxu0 0.0
      %2985 = vmatpush1.msra.mxu0 0.0
      %2986 = vmatprep.subr.mxu0 0.0
      %2987 = vmatpush1.msra.mxu0 0.0
      %2988 = vmatprep.subr.mxu0 0.0
      %2989 = vmatpush1.msra.mxu0 0.0
      %2990 = vmatprep.subr.mxu0 0.0
      %2991 = vmatpush1.msra.mxu0 0.0
      %2992 = vmatprep.subr.mxu0 0.0
      %2993 = vmatpush1.msra.mxu0 0.0
      %2994 = vmatprep.subr.mxu0 0.0
      %2995 = vmatpush1.msra.mxu0 0.0
      %2996 = vmatprep.subr.mxu0 0.0
      %2997 = vmatpush1.msra.mxu0 0.0
      %2998 = vmatprep.subr.mxu0 0.0
      %2999 = vmatpush1.msra.mxu0 0.0
      %3000 = vmatprep.subr.mxu0 0.0
      %3001 = vmatpush1.msra.mxu0 0.0
      %3002 = vmatprep.subr.mxu0 0.0
      %3003 = vmatpush1.msra.mxu0 0.0
      %3004 = vmatprep.subr.mxu0 0.0
      %3005 = vmatpush1.msra.mxu0 0.0
      %3006 = vmatprep.subr.mxu0 0.0
      %3007 = vmatpush1.msra.mxu0 0.0
      %3008 = vmatprep.subr.mxu0 0.0
      %3009 = vmatpush1.msra.mxu0 0.0
      %3010 = vmatprep.subr.mxu0 0.0
      %3011 = vmatpush1.msra.mxu0 0.0
      %3012 = vmatprep.mubr.f32.mxu0 0.0
      %3013 = vmatmul.mubr.f32.gmra.mrb[0].mxu0 %v2853
      %v3014 = vpop.f32.mrb[0].mxu0
      %v3015 = vadd.f32 0.0, %v3014
      %v3016 = vpop.f32.mrb[0].mxu0
      %3017 = vmatprep.mubr.f32.mxu0 0.0
      %3018 = vmatmul.mubr.f32.gmra.mrb[0].mxu0 %v2856
      %v3019 = vpop.f32.mrb[0].mxu0
      %v3020 = vadd.f32 0.0, %v3019
      %v3021 = vpop.f32.mrb[0].mxu0
      %3022 = vmatprep.mubr.f32.mxu0 0.0
      %3023 = vmatmul.mubr.f32.gmra.mrb[0].mxu0 %v2859
      %v3024 = vpop.f32.mrb[0].mxu0
      %v3025 = vadd.f32 0.0, %v3024
      %v3026 = vpop.f32.mrb[0].mxu0
      %3027 = vmatprep.mubr.f32.mxu0 0.0
      %3028 = vmatmul.mubr.f32.gmra.mrb[0].mxu0 %v2862
      %v3029 = vpop.f32.mrb[0].mxu0
      %v3030 = vadd.f32 0.0, %v3029
      %v3031 = vpop.f32.mrb[0].mxu0
      %3032 = vmatprep.mubr.f32.mxu0 0.0
      %3033 = vmatmul.mubr.f32.gmra.mrb[0].mxu0 %v2865
      %v3034 = vpop.f32.mrb[0].mxu0
      %v3035 = vadd.f32 0.0, %v3034
      %v3036 = vpop.f32.mrb[0].mxu0
      %3037 = vmatprep.mubr.f32.mxu0 0.0
      %3038 = vmatmul.mubr.f32.gmra.mrb[0].mxu0 %v2868
      %v3039 = vpop.f32.mrb[0].mxu0
      %v3040 = vadd.f32 0.0, %v3039
      %v3041 = vpop.f32.mrb[0].mxu0
      %3042 = vmatprep.mubr.f32.mxu0 0.0
      %3043 = vmatmul.mubr.f32.gmra.mrb[0].mxu0 %v2871
      %v3044 = vpop.f32.mrb[0].mxu0
      %v3045 = vadd.f32 0.0, %v3044
      %v3046 = vpop.f32.mrb[0].mxu0
      %3047 = vmatprep.mubr.f32.mxu0 0.0
      %3048 = vmatmul.mubr.f32.gmra.mrb[0].mxu0 %v2874
      %v3049 = vpop.f32.mrb[0].mxu0
      %v3050 = vadd.f32 0.0, %v3049
      %v3051 = vpop.f32.mrb[0].mxu0
      %3052 = vmatprep.mubr.f32.mxu0 0.0
      %3053 = vmatmul.mubr.f32.gmra.mrb[0].mxu0 %v2877
      %v3054 = vpop.f32.mrb[0].mxu0
      %v3055 = vadd.f32 0.0, %v3054
      %v3056 = vpop.f32.mrb[0].mxu0
      %3057 = vmatprep.mubr.f32.mxu0 0.0
      %3058 = vmatmul.mubr.f32.gmra.mrb[0].mxu0 %v2880
      %v3059 = vpop.f32.mrb[0].mxu0
      %v3060 = vadd.f32 0.0, %v3059
      %v3061 = vpop.f32.mrb[0].mxu0
      %3062 = vmatprep.mubr.f32.mxu0 0.0
      %3063 = vmatmul.mubr.f32.gmra.mrb[0].mxu0 %v2883
      %v3064 = vpop.f32.mrb[0].mxu0
      %v3065 = vadd.f32 0.0, %v3064
      %v3066 = vpop.f32.mrb[0].mxu0
      %3067 = vmatprep.mubr.f32.mxu0 0.0
      %3068 = vmatmul.mubr.f32.gmra.mrb[0].mxu0 %v2886
      %v3069 = vpop.f32.mrb[0].mxu0
      %v3070 = vadd.f32 0.0, %v3069
      %v3071 = vpop.f32.mrb[0].mxu0
      %3072 = vmatprep.mubr.f32.mxu0 0.0
      %3073 = vmatmul.mubr.f32.gmra.mrb[0].mxu0 %v2889
      %v3074 = vpop.f32.mrb[0].mxu0
      %v3075 = vadd.f32 0.0, %v3074
      %v3076 = vpop.f32.mrb[0].mxu0
      %3077 = vmatprep.mubr.f32.mxu0 0.0
      %3078 = vmatmul.mubr.f32.gmra.mrb[0].mxu0 %v2892
      %v3079 = vpop.f32.mrb[0].mxu0
      %v3080 = vadd.f32 0.0, %v3079
      %v3081 = vpop.f32.mrb[0].mxu0
      %3082 = vmatprep.mubr.f32.mxu0 0.0
      %3083 = vmatmul.mubr.f32.gmra.mrb[0].mxu0 %v2895
      %v3084 = vpop.f32.mrb[0].mxu0
      %v3085 = vadd.f32 0.0, %v3084
      %v3086 = vpop.f32.mrb[0].mxu0
      %3087 = vmatprep.mubr.f32.mxu0 0.0
      %3088 = vmatmul.mubr.f32.gmra.mrb[0].mxu0 %v2898
      %v3089 = vpop.f32.mrb[0].mxu0
      %v3090 = vadd.f32 0.0, %v3089
      %v3091 = vpop.f32.mrb[0].mxu0
      %3092 = vmatprep.mubr.f32.mxu0 0.0
      %3093 = vmatmul.mubr.f32.gmra.mrb[0].mxu0 %v2901
      %v3094 = vpop.f32.mrb[0].mxu0
      %v3095 = vadd.f32 0.0, %v3094
      %v3096 = vpop.f32.mrb[0].mxu0
      %3097 = vmatprep.mubr.f32.mxu0 0.0
      %3098 = vmatmul.mubr.f32.gmra.mrb[0].mxu0 %v2904
      %v3099 = vpop.f32.mrb[0].mxu0
      %v3100 = vadd.f32 0.0, %v3099
      %v3101 = vpop.f32.mrb[0].mxu0
      %3102 = vmatprep.mubr.f32.mxu0 0.0
      %3103 = vmatmul.mubr.f32.gmra.mrb[0].mxu0 %v2907
      %v3104 = vpop.f32.mrb[0].mxu0
      %v3105 = vadd.f32 0.0, %v3104
      %v3106 = vpop.f32.mrb[0].mxu0
      %3107 = vmatprep.mubr.f32.mxu0 0.0
      %3108 = vmatmul.mubr.f32.gmra.mrb[0].mxu0 %v2910
      %v3109 = vpop.f32.mrb[0].mxu0
      %v3110 = vadd.f32 0.0, %v3109
      %v3111 = vpop.f32.mrb[0].mxu0
      %3112 = vmatprep.mubr.f32.mxu0 0.0
      %3113 = vmatmul.mubr.f32.gmra.mrb[0].mxu0 %v2913
      %v3114 = vpop.f32.mrb[0].mxu0
      %v3115 = vadd.f32 0.0, %v3114
      %v3116 = vpop.f32.mrb[0].mxu0
      %3117 = vmatprep.mubr.f32.mxu0 0.0
      %3118 = vmatmul.mubr.f32.gmra.mrb[0].mxu0 %v2916
      %v3119 = vpop.f32.mrb[0].mxu0
      %v3120 = vadd.f32 0.0, %v3119
      %v3121 = vpop.f32.mrb[0].mxu0
      %3122 = vmatprep.mubr.f32.mxu0 0.0
      %3123 = vmatmul.mubr.f32.gmra.mrb[0].mxu0 %v2919
      %v3124 = vpop.f32.mrb[0].mxu0
      %v3125 = vadd.f32 0.0, %v3124
      %v3126 = vpop.f32.mrb[0].mxu0
      %3127 = vmatprep.mubr.f32.mxu0 0.0
      %3128 = vmatmul.mubr.f32.gmra.mrb[0].mxu0 %v2922
      %v3129 = vpop.f32.mrb[0].mxu0
      %v3130 = vadd.f32 0.0, %v3129
      %v3131 = vpop.f32.mrb[0].mxu0
      %3132 = vmatprep.mubr.f32.mxu0 0.0
      %3133 = vmatmul.mubr.f32.gmra.mrb[0].mxu0 %v2925
      %v3134 = vpop.f32.mrb[0].mxu0
      %v3135 = vadd.f32 0.0, %v3134
      %v3136 = vpop.f32.mrb[0].mxu0
      %3137 = vmatprep.mubr.f32.mxu0 0.0
      %3138 = vmatmul.mubr.f32.gmra.mrb[0].mxu0 %v2928
      %v3139 = vpop.f32.mrb[0].mxu0
      %v3140 = vadd.f32 0.0, %v3139
      %v3141 = vpop.f32.mrb[0].mxu0
      %3142 = vmatprep.mubr.f32.mxu0 0.0
      %3143 = vmatmul.mubr.f32.gmra.mrb[0].mxu0 %v2931
      %v3144 = vpop.f32.mrb[0].mxu0
      %v3145 = vadd.f32 0.0, %v3144
      %v3146 = vpop.f32.mrb[0].mxu0
      %3147 = vmatprep.mubr.f32.mxu0 0.0
      %3148 = vmatmul.mubr.f32.gmra.mrb[0].mxu0 %v2934
      %v3149 = vpop.f32.mrb[0].mxu0
      %v3150 = vadd.f32 0.0, %v3149
      %v3151 = vpop.f32.mrb[0].mxu0
      %3152 = vmatprep.mubr.f32.mxu0 0.0
      %3153 = vmatmul.mubr.f32.gmra.mrb[0].mxu0 %v2937
      %v3154 = vpop.f32.mrb[0].mxu0
      %v3155 = vadd.f32 0.0, %v3154
      %v3156 = vpop.f32.mrb[0].mxu0
      %3157 = vmatprep.mubr.f32.mxu0 0.0
      %3158 = vmatmul.mubr.f32.gmra.mrb[0].mxu0 %v2940
      %v3159 = vpop.f32.mrb[0].mxu0
      %v3160 = vadd.f32 0.0, %v3159
      %v3161 = vpop.f32.mrb[0].mxu0
      %3162 = vmatprep.mubr.f32.mxu0 0.0
      %3163 = vmatmul.mubr.f32.gmra.mrb[0].mxu0 %v2943
      %v3164 = vpop.f32.mrb[0].mxu0
      %v3165 = vadd.f32 0.0, %v3164
      %v3166 = vpop.f32.mrb[0].mxu0
      %3167 = vmatprep.mubr.f32.mxu0 0.0
      %3168 = vmatmul.mubr.f32.gmra.mrb[0].mxu0 %v2946
      %v3169 = vpop.f32.mrb[0].mxu0
      %v3170 = vadd.f32 0.0, %v3169
      %v3171 = vpop.f32.mrb[0].mxu0
      %3172 = vdwg.mxu0
      %v3173 = vadd.f32 %v2786, %v3015
      %v3174 = vadd.f32 %v2787, %v3020
      %v3175 = vadd.f32 %v2788, %v3025
      %v3176 = vadd.f32 %v2789, %v3030
      %v3177 = vadd.f32 %v2790, %v3035
      %v3178 = vadd.f32 %v2791, %v3040
      %v3179 = vadd.f32 %v2792, %v3045
      %v3180 = vadd.f32 %v2793, %v3050
      %v3181 = vadd.f32 %v2794, %v3055
      %v3182 = vadd.f32 %v2795, %v3060
      %v3183 = vadd.f32 %v2796, %v3065
      %v3184 = vadd.f32 %v2797, %v3070
      %v3185 = vadd.f32 %v2798, %v3075
      %v3186 = vadd.f32 %v2799, %v3080
      %v3187 = vadd.f32 %v2800, %v3085
      %v3188 = vadd.f32 %v2801, %v3090
      %v3189 = vadd.f32 %v2802, %v3095
      %v3190 = vadd.f32 %v2803, %v3100
      %v3191 = vadd.f32 %v2804, %v3105
      %v3192 = vadd.f32 %v2805, %v3110
      %v3193 = vadd.f32 %v2806, %v3115
      %v3194 = vadd.f32 %v2807, %v3120
      %v3195 = vadd.f32 %v2808, %v3125
      %v3196 = vadd.f32 %v2809, %v3130
      %v3197 = vadd.f32 %v2810, %v3135
      %v3198 = vadd.f32 %v2811, %v3140
      %v3199 = vadd.f32 %v2812, %v3145
      %v3200 = vadd.f32 %v2813, %v3150
      %v3201 = vadd.f32 %v2814, %v3155
      %v3202 = vadd.f32 %v2815, %v3160
      %v3203 = vadd.f32 %v2816, %v3165
      %v3204 = vadd.f32 %v2817, %v3170
      %v3205 = vld [vmem:[%s2430 + $0x2] sm:$0xff]
      %v3206 = vld [vmem:[%s2430 + $0xa] sm:$0xff]
      %v3207 = vld [vmem:[%s2430 + $0x1a] sm:$0xff]
      %v3208 = vld [vmem:[%s2430 + $0x22] sm:$0xff]
      %v3209 = vld [vmem:[%s2430 + $0x32] sm:$0xff]
      %v3210 = vld [vmem:[%s2430 + $0x3a] sm:$0xff]
      %v3211 = vld [vmem:[%s2430 + $0x4a] sm:$0xff]
      %v3212 = vld [vmem:[%s2430 + $0x52] sm:$0xff]
      %v3213 = vld [vmem:[%s2430 + $0x62] sm:$0xff]
      %v3214 = vld [vmem:[%s2430 + $0x6a] sm:$0xff]
      %v3215 = vld [vmem:[%s2430 + $0x7a] sm:$0xff]
      %v3216 = vld [vmem:[%s2430 + $0x82] sm:$0xff]
      %v3217 = vld [vmem:[%s2430 + $0x92] sm:$0xff]
      %v3218 = vld [vmem:[%s2430 + $0x9a] sm:$0xff]
      %v3219 = vld [vmem:[%s2430 + $0xaa] sm:$0xff]
      %v3220 = vld [vmem:[%s2430 + $0xb2] sm:$0xff]
      %v3221 = vld [vmem:[%s2430 + $0xc2] sm:$0xff]
      %v3222 = vld [vmem:[%s2430 + $0xca] sm:$0xff]
      %v3223 = vld [vmem:[%s2430 + $0xda] sm:$0xff]
      %v3224 = vld [vmem:[%s2430 + $0xe2] sm:$0xff]
      %v3225 = vld [vmem:[%s2430 + $0xf2] sm:$0xff]
      %v3226 = vld [vmem:[%s2430 + $0xfa] sm:$0xff]
      %v3227 = vld [vmem:[%s2430 + $0x10a] sm:$0xff]
      %v3228 = vld [vmem:[%s2430 + $0x112] sm:$0xff]
      %v3229 = vld [vmem:[%s2430 + $0x122] sm:$0xff]
      %v3230 = vld [vmem:[%s2430 + $0x12a] sm:$0xff]
      %v3231 = vld [vmem:[%s2430 + $0x13a] sm:$0xff]
      %v3232 = vld [vmem:[%s2430 + $0x142] sm:$0xff]
      %v3233 = vld [vmem:[%s2430 + $0x152] sm:$0xff]
      %v3234 = vld [vmem:[%s2430 + $0x15a] sm:$0xff]
      %v3235 = vld [vmem:[%s2430 + $0x16a] sm:$0xff]
      %v3236 = vld [vmem:[%s2430 + $0x172] sm:$0xff]
      %s3237 = scalar_lea.vmem %s1, 64
      %v3238 = vld [vmem:[%s3237] sm:$0xff]
      %v3240 = vsel %vm238, %v3205, 0
      %v3243 = vsel %vm238, %v3206, 0
      %v3246 = vsel %vm238, %v3207, 0
      %v3249 = vsel %vm238, %v3208, 0
      %v3252 = vsel %vm238, %v3209, 0
      %v3255 = vsel %vm238, %v3210, 0
      %v3258 = vsel %vm238, %v3211, 0
      %v3261 = vsel %vm238, %v3212, 0
      %v3264 = vsel %vm238, %v3213, 0
      %v3267 = vsel %vm238, %v3214, 0
      %v3270 = vsel %vm238, %v3215, 0
      %v3273 = vsel %vm238, %v3216, 0
      %v3276 = vsel %vm238, %v3217, 0
      %v3279 = vsel %vm238, %v3218, 0
      %v3282 = vsel %vm238, %v3219, 0
      %v3285 = vsel %vm238, %v3220, 0
      %v3288 = vsel %vm238, %v3221, 0
      %v3291 = vsel %vm238, %v3222, 0
      %v3294 = vsel %vm238, %v3223, 0
      %v3297 = vsel %vm238, %v3224, 0
      %v3300 = vsel %vm238, %v3225, 0
      %v3303 = vsel %vm238, %v3226, 0
      %v3306 = vsel %vm238, %v3227, 0
      %v3309 = vsel %vm238, %v3228, 0
      %v3312 = vsel %vm238, %v3229, 0
      %v3315 = vsel %vm238, %v3230, 0
      %v3318 = vsel %vm238, %v3231, 0
      %v3321 = vsel %vm238, %v3232, 0
      %v3324 = vsel %vm238, %v3233, 0
      %v3327 = vsel %vm238, %v3234, 0
      %v3330 = vsel %vm238, %v3235, 0
      %v3333 = vsel %vm238, %v3236, 0
      %3335 = vmatprep.subr.mxu0 0.0
      %3336 = vmatpush1.msra.mxu0 %v3238
      %3337 = vmatprep.subr.mxu0 0.0
      %3338 = vmatpush1.msra.mxu0 0.0
      %3339 = vmatprep.subr.mxu0 0.0
      %3340 = vmatpush1.msra.mxu0 0.0
      %3341 = vmatprep.subr.mxu0 0.0
      %3342 = vmatpush1.msra.mxu0 0.0
      %3343 = vmatprep.subr.mxu0 0.0
      %3344 = vmatpush1.msra.mxu0 0.0
      %3345 = vmatprep.subr.mxu0 0.0
      %3346 = vmatpush1.msra.mxu0 0.0
      %3347 = vmatprep.subr.mxu0 0.0
      %3348 = vmatpush1.msra.mxu0 0.0
      %3349 = vmatprep.subr.mxu0 0.0
      %3350 = vmatpush1.msra.mxu0 0.0
      %3351 = vmatprep.subr.mxu0 0.0
      %3352 = vmatpush1.msra.mxu0 0.0
      %3353 = vmatprep.subr.mxu0 0.0
      %3354 = vmatpush1.msra.mxu0 0.0
      %3355 = vmatprep.subr.mxu0 0.0
      %3356 = vmatpush1.msra.mxu0 0.0
      %3357 = vmatprep.subr.mxu0 0.0
      %3358 = vmatpush1.msra.mxu0 0.0
      %3359 = vmatprep.subr.mxu0 0.0
      %3360 = vmatpush1.msra.mxu0 0.0
      %3361 = vmatprep.subr.mxu0 0.0
      %3362 = vmatpush1.msra.mxu0 0.0
      %3363 = vmatprep.subr.mxu0 0.0
      %3364 = vmatpush1.msra.mxu0 0.0
      %3365 = vmatprep.subr.mxu0 0.0
      %3366 = vmatpush1.msra.mxu0 0.0
      %3367 = vmatprep.subr.mxu0 0.0
      %3368 = vmatpush1.msra.mxu0 0.0
      %3369 = vmatprep.subr.mxu0 0.0
      %3370 = vmatpush1.msra.mxu0 0.0
      %3371 = vmatprep.subr.mxu0 0.0
      %3372 = vmatpush1.msra.mxu0 0.0
      %3373 = vmatprep.subr.mxu0 0.0
      %3374 = vmatpush1.msra.mxu0 0.0
      %3375 = vmatprep.subr.mxu0 0.0
      %3376 = vmatpush1.msra.mxu0 0.0
      %3377 = vmatprep.subr.mxu0 0.0
      %3378 = vmatpush1.msra.mxu0 0.0
      %3379 = vmatprep.subr.mxu0 0.0
      %3380 = vmatpush1.msra.mxu0 0.0
      %3381 = vmatprep.subr.mxu0 0.0
      %3382 = vmatpush1.msra.mxu0 0.0
      %3383 = vmatprep.subr.mxu0 0.0
      %3384 = vmatpush1.msra.mxu0 0.0
      %3385 = vmatprep.subr.mxu0 0.0
      %3386 = vmatpush1.msra.mxu0 0.0
      %3387 = vmatprep.subr.mxu0 0.0
      %3388 = vmatpush1.msra.mxu0 0.0
      %3389 = vmatprep.subr.mxu0 0.0
      %3390 = vmatpush1.msra.mxu0 0.0
      %3391 = vmatprep.subr.mxu0 0.0
      %3392 = vmatpush1.msra.mxu0 0.0
      %3393 = vmatprep.subr.mxu0 0.0
      %3394 = vmatpush1.msra.mxu0 0.0
      %3395 = vmatprep.subr.mxu0 0.0
      %3396 = vmatpush1.msra.mxu0 0.0
      %3397 = vmatprep.subr.mxu0 0.0
      %3398 = vmatpush1.msra.mxu0 0.0
      %3399 = vmatprep.mubr.f32.mxu0 0.0
      %3400 = vmatmul.mubr.f32.gmra.mrb[0].mxu0 %v3240
      %v3401 = vpop.f32.mrb[0].mxu0
      %v3402 = vadd.f32 0.0, %v3401
      %v3403 = vpop.f32.mrb[0].mxu0
      %3404 = vmatprep.mubr.f32.mxu0 0.0
      %3405 = vmatmul.mubr.f32.gmra.mrb[0].mxu0 %v3243
      %v3406 = vpop.f32.mrb[0].mxu0
      %v3407 = vadd.f32 0.0, %v3406
      %v3408 = vpop.f32.mrb[0].mxu0
      %3409 = vmatprep.mubr.f32.mxu0 0.0
      %3410 = vmatmul.mubr.f32.gmra.mrb[0].mxu0 %v3246
      %v3411 = vpop.f32.mrb[0].mxu0
      %v3412 = vadd.f32 0.0, %v3411
      %v3413 = vpop.f32.mrb[0].mxu0
      %3414 = vmatprep.mubr.f32.mxu0 0.0
      %3415 = vmatmul.mubr.f32.gmra.mrb[0].mxu0 %v3249
      %v3416 = vpop.f32.mrb[0].mxu0
      %v3417 = vadd.f32 0.0, %v3416
      %v3418 = vpop.f32.mrb[0].mxu0
      %3419 = vmatprep.mubr.f32.mxu0 0.0
      %3420 = vmatmul.mubr.f32.gmra.mrb[0].mxu0 %v3252
      %v3421 = vpop.f32.mrb[0].mxu0
      %v3422 = vadd.f32 0.0, %v3421
      %v3423 = vpop.f32.mrb[0].mxu0
      %3424 = vmatprep.mubr.f32.mxu0 0.0
      %3425 = vmatmul.mubr.f32.gmra.mrb[0].mxu0 %v3255
      %v3426 = vpop.f32.mrb[0].mxu0
      %v3427 = vadd.f32 0.0, %v3426
      %v3428 = vpop.f32.mrb[0].mxu0
      %3429 = vmatprep.mubr.f32.mxu0 0.0
      %3430 = vmatmul.mubr.f32.gmra.mrb[0].mxu0 %v3258
      %v3431 = vpop.f32.mrb[0].mxu0
      %v3432 = vadd.f32 0.0, %v3431
      %v3433 = vpop.f32.mrb[0].mxu0
      %3434 = vmatprep.mubr.f32.mxu0 0.0
      %3435 = vmatmul.mubr.f32.gmra.mrb[0].mxu0 %v3261
      %v3436 = vpop.f32.mrb[0].mxu0
      %v3437 = vadd.f32 0.0, %v3436
      %v3438 = vpop.f32.mrb[0].mxu0
      %3439 = vmatprep.mubr.f32.mxu0 0.0
      %3440 = vmatmul.mubr.f32.gmra.mrb[0].mxu0 %v3264
      %v3441 = vpop.f32.mrb[0].mxu0
      %v3442 = vadd.f32 0.0, %v3441
      %v3443 = vpop.f32.mrb[0].mxu0
      %3444 = vmatprep.mubr.f32.mxu0 0.0
      %3445 = vmatmul.mubr.f32.gmra.mrb[0].mxu0 %v3267
      %v3446 = vpop.f32.mrb[0].mxu0
      %v3447 = vadd.f32 0.0, %v3446
      %v3448 = vpop.f32.mrb[0].mxu0
      %3449 = vmatprep.mubr.f32.mxu0 0.0
      %3450 = vmatmul.mubr.f32.gmra.mrb[0].mxu0 %v3270
      %v3451 = vpop.f32.mrb[0].mxu0
      %v3452 = vadd.f32 0.0, %v3451
      %v3453 = vpop.f32.mrb[0].mxu0
      %3454 = vmatprep.mubr.f32.mxu0 0.0
      %3455 = vmatmul.mubr.f32.gmra.mrb[0].mxu0 %v3273
      %v3456 = vpop.f32.mrb[0].mxu0
      %v3457 = vadd.f32 0.0, %v3456
      %v3458 = vpop.f32.mrb[0].mxu0
      %3459 = vmatprep.mubr.f32.mxu0 0.0
      %3460 = vmatmul.mubr.f32.gmra.mrb[0].mxu0 %v3276
      %v3461 = vpop.f32.mrb[0].mxu0
      %v3462 = vadd.f32 0.0, %v3461
      %v3463 = vpop.f32.mrb[0].mxu0
      %3464 = vmatprep.mubr.f32.mxu0 0.0
      %3465 = vmatmul.mubr.f32.gmra.mrb[0].mxu0 %v3279
      %v3466 = vpop.f32.mrb[0].mxu0
      %v3467 = vadd.f32 0.0, %v3466
      %v3468 = vpop.f32.mrb[0].mxu0
      %3469 = vmatprep.mubr.f32.mxu0 0.0
      %3470 = vmatmul.mubr.f32.gmra.mrb[0].mxu0 %v3282
      %v3471 = vpop.f32.mrb[0].mxu0
      %v3472 = vadd.f32 0.0, %v3471
      %v3473 = vpop.f32.mrb[0].mxu0
      %3474 = vmatprep.mubr.f32.mxu0 0.0
      %3475 = vmatmul.mubr.f32.gmra.mrb[0].mxu0 %v3285
      %v3476 = vpop.f32.mrb[0].mxu0
      %v3477 = vadd.f32 0.0, %v3476
      %v3478 = vpop.f32.mrb[0].mxu0
      %3479 = vmatprep.mubr.f32.mxu0 0.0
      %3480 = vmatmul.mubr.f32.gmra.mrb[0].mxu0 %v3288
      %v3481 = vpop.f32.mrb[0].mxu0
      %v3482 = vadd.f32 0.0, %v3481
      %v3483 = vpop.f32.mrb[0].mxu0
      %3484 = vmatprep.mubr.f32.mxu0 0.0
      %3485 = vmatmul.mubr.f32.gmra.mrb[0].mxu0 %v3291
      %v3486 = vpop.f32.mrb[0].mxu0
      %v3487 = vadd.f32 0.0, %v3486
      %v3488 = vpop.f32.mrb[0].mxu0
      %3489 = vmatprep.mubr.f32.mxu0 0.0
      %3490 = vmatmul.mubr.f32.gmra.mrb[0].mxu0 %v3294
      %v3491 = vpop.f32.mrb[0].mxu0
      %v3492 = vadd.f32 0.0, %v3491
      %v3493 = vpop.f32.mrb[0].mxu0
      %3494 = vmatprep.mubr.f32.mxu0 0.0
      %3495 = vmatmul.mubr.f32.gmra.mrb[0].mxu0 %v3297
      %v3496 = vpop.f32.mrb[0].mxu0
      %v3497 = vadd.f32 0.0, %v3496
      %v3498 = vpop.f32.mrb[0].mxu0
      %3499 = vmatprep.mubr.f32.mxu0 0.0
      %3500 = vmatmul.mubr.f32.gmra.mrb[0].mxu0 %v3300
      %v3501 = vpop.f32.mrb[0].mxu0
      %v3502 = vadd.f32 0.0, %v3501
      %v3503 = vpop.f32.mrb[0].mxu0
      %3504 = vmatprep.mubr.f32.mxu0 0.0
      %3505 = vmatmul.mubr.f32.gmra.mrb[0].mxu0 %v3303
      %v3506 = vpop.f32.mrb[0].mxu0
      %v3507 = vadd.f32 0.0, %v3506
      %v3508 = vpop.f32.mrb[0].mxu0
      %3509 = vmatprep.mubr.f32.mxu0 0.0
      %3510 = vmatmul.mubr.f32.gmra.mrb[0].mxu0 %v3306
      %v3511 = vpop.f32.mrb[0].mxu0
      %v3512 = vadd.f32 0.0, %v3511
      %v3513 = vpop.f32.mrb[0].mxu0
      %3514 = vmatprep.mubr.f32.mxu0 0.0
      %3515 = vmatmul.mubr.f32.gmra.mrb[0].mxu0 %v3309
      %v3516 = vpop.f32.mrb[0].mxu0
      %v3517 = vadd.f32 0.0, %v3516
      %v3518 = vpop.f32.mrb[0].mxu0
      %3519 = vmatprep.mubr.f32.mxu0 0.0
      %3520 = vmatmul.mubr.f32.gmra.mrb[0].mxu0 %v3312
      %v3521 = vpop.f32.mrb[0].mxu0
      %v3522 = vadd.f32 0.0, %v3521
      %v3523 = vpop.f32.mrb[0].mxu0
      %3524 = vmatprep.mubr.f32.mxu0 0.0
      %3525 = vmatmul.mubr.f32.gmra.mrb[0].mxu0 %v3315
      %v3526 = vpop.f32.mrb[0].mxu0
      %v3527 = vadd.f32 0.0, %v3526
      %v3528 = vpop.f32.mrb[0].mxu0
      %3529 = vmatprep.mubr.f32.mxu0 0.0
      %3530 = vmatmul.mubr.f32.gmra.mrb[0].mxu0 %v3318
      %v3531 = vpop.f32.mrb[0].mxu0
      %v3532 = vadd.f32 0.0, %v3531
      %v3533 = vpop.f32.mrb[0].mxu0
      %3534 = vmatprep.mubr.f32.mxu0 0.0
      %3535 = vmatmul.mubr.f32.gmra.mrb[0].mxu0 %v3321
      %v3536 = vpop.f32.mrb[0].mxu0
      %v3537 = vadd.f32 0.0, %v3536
      %v3538 = vpop.f32.mrb[0].mxu0
      %3539 = vmatprep.mubr.f32.mxu0 0.0
      %3540 = vmatmul.mubr.f32.gmra.mrb[0].mxu0 %v3324
      %v3541 = vpop.f32.mrb[0].mxu0
      %v3542 = vadd.f32 0.0, %v3541
      %v3543 = vpop.f32.mrb[0].mxu0
      %3544 = vmatprep.mubr.f32.mxu0 0.0
      %3545 = vmatmul.mubr.f32.gmra.mrb[0].mxu0 %v3327
      %v3546 = vpop.f32.mrb[0].mxu0
      %v3547 = vadd.f32 0.0, %v3546
      %v3548 = vpop.f32.mrb[0].mxu0
      %3549 = vmatprep.mubr.f32.mxu0 0.0
      %3550 = vmatmul.mubr.f32.gmra.mrb[0].mxu0 %v3330
      %v3551 = vpop.f32.mrb[0].mxu0
      %v3552 = vadd.f32 0.0, %v3551
      %v3553 = vpop.f32.mrb[0].mxu0
      %3554 = vmatprep.mubr.f32.mxu0 0.0
      %3555 = vmatmul.mubr.f32.gmra.mrb[0].mxu0 %v3333
      %v3556 = vpop.f32.mrb[0].mxu0
      %v3557 = vadd.f32 0.0, %v3556
      %v3558 = vpop.f32.mrb[0].mxu0
      %3559 = vdwg.mxu0
      %v3560 = vadd.f32 %v3173, %v3402
      %v3561 = vadd.f32 %v3174, %v3407
      %v3562 = vadd.f32 %v3175, %v3412
      %v3563 = vadd.f32 %v3176, %v3417
      %v3564 = vadd.f32 %v3177, %v3422
      %v3565 = vadd.f32 %v3178, %v3427
      %v3566 = vadd.f32 %v3179, %v3432
      %v3567 = vadd.f32 %v3180, %v3437
      %v3568 = vadd.f32 %v3181, %v3442
      %v3569 = vadd.f32 %v3182, %v3447
      %v3570 = vadd.f32 %v3183, %v3452
      %v3571 = vadd.f32 %v3184, %v3457
      %v3572 = vadd.f32 %v3185, %v3462
      %v3573 = vadd.f32 %v3186, %v3467
      %v3574 = vadd.f32 %v3187, %v3472
      %v3575 = vadd.f32 %v3188, %v3477
      %v3576 = vadd.f32 %v3189, %v3482
      %v3577 = vadd.f32 %v3190, %v3487
      %v3578 = vadd.f32 %v3191, %v3492
      %v3579 = vadd.f32 %v3192, %v3497
      %v3580 = vadd.f32 %v3193, %v3502
      %v3581 = vadd.f32 %v3194, %v3507
      %v3582 = vadd.f32 %v3195, %v3512
      %v3583 = vadd.f32 %v3196, %v3517
      %v3584 = vadd.f32 %v3197, %v3522
      %v3585 = vadd.f32 %v3198, %v3527
      %v3586 = vadd.f32 %v3199, %v3532
      %v3587 = vadd.f32 %v3200, %v3537
      %v3588 = vadd.f32 %v3201, %v3542
      %v3589 = vadd.f32 %v3202, %v3547
      %v3590 = vadd.f32 %v3203, %v3552
      %v3591 = vadd.f32 %v3204, %v3557
      %v3592 = vld [vmem:[%s2] sm:$0x1]
      %v3594 = vlaneseq
      %v3595 = vshrl.u32 %v3594, 7
      %v3596 = vsub.s32 0, %v3595
      %v3597 = vrot.slane %v3592, %v3596
      %v3599 = vadd.f32 %v3560, %v3597
      %v3600 = vadd.f32 %v3561, %v3597
      %v3601 = vadd.f32 %v3562, %v3597
      %v3602 = vadd.f32 %v3563, %v3597
      %v3603 = vadd.f32 %v3564, %v3597
      %v3604 = vadd.f32 %v3565, %v3597
      %v3605 = vadd.f32 %v3566, %v3597
      %v3606 = vadd.f32 %v3567, %v3597
      %v3607 = vadd.f32 %v3568, %v3597
      %v3608 = vadd.f32 %v3569, %v3597
      %v3609 = vadd.f32 %v3570, %v3597
      %v3610 = vadd.f32 %v3571, %v3597
      %v3611 = vadd.f32 %v3572, %v3597
      %v3612 = vadd.f32 %v3573, %v3597
      %v3613 = vadd.f32 %v3574, %v3597
      %v3614 = vadd.f32 %v3575, %v3597
      %v3615 = vadd.f32 %v3576, %v3597
      %v3616 = vadd.f32 %v3577, %v3597
      %v3617 = vadd.f32 %v3578, %v3597
      %v3618 = vadd.f32 %v3579, %v3597
      %v3619 = vadd.f32 %v3580, %v3597
      %v3620 = vadd.f32 %v3581, %v3597
      %v3621 = vadd.f32 %v3582, %v3597
      %v3622 = vadd.f32 %v3583, %v3597
      %v3623 = vadd.f32 %v3584, %v3597
      %v3624 = vadd.f32 %v3585, %v3597
      %v3625 = vadd.f32 %v3586, %v3597
      %v3626 = vadd.f32 %v3587, %v3597
      %v3627 = vadd.f32 %v3588, %v3597
      %v3628 = vadd.f32 %v3589, %v3597
      %v3629 = vadd.f32 %v3590, %v3597
      %v3630 = vadd.f32 %v3591, %v3597
      %v3631 = vmax.f32 %v3599, 0.0
      %v3632 = vmax.f32 %v3600, 0.0
      %v3633 = vmax.f32 %v3601, 0.0
      %v3634 = vmax.f32 %v3602, 0.0
      %v3635 = vmax.f32 %v3603, 0.0
      %v3636 = vmax.f32 %v3604, 0.0
      %v3637 = vmax.f32 %v3605, 0.0
      %v3638 = vmax.f32 %v3606, 0.0
      %v3639 = vmax.f32 %v3607, 0.0
      %v3640 = vmax.f32 %v3608, 0.0
      %v3641 = vmax.f32 %v3609, 0.0
      %v3642 = vmax.f32 %v3610, 0.0
      %v3643 = vmax.f32 %v3611, 0.0
      %v3644 = vmax.f32 %v3612, 0.0
      %v3645 = vmax.f32 %v3613, 0.0
      %v3646 = vmax.f32 %v3614, 0.0
      %v3647 = vmax.f32 %v3615, 0.0
      %v3648 = vmax.f32 %v3616, 0.0
      %v3649 = vmax.f32 %v3617, 0.0
      %v3650 = vmax.f32 %v3618, 0.0
      %v3651 = vmax.f32 %v3619, 0.0
      %v3652 = vmax.f32 %v3620, 0.0
      %v3653 = vmax.f32 %v3621, 0.0
      %v3654 = vmax.f32 %v3622, 0.0
      %v3655 = vmax.f32 %v3623, 0.0
      %v3656 = vmax.f32 %v3624, 0.0
      %v3657 = vmax.f32 %v3625, 0.0
      %v3658 = vmax.f32 %v3626, 0.0
      %v3659 = vmax.f32 %v3627, 0.0
      %v3660 = vmax.f32 %v3628, 0.0
      %v3661 = vmax.f32 %v3629, 0.0
      %v3662 = vmax.f32 %v3630, 0.0
      %3663 = vst [vmem:[%s170] sm:$0xff] %v3631
      %3664 = vst [vmem:[%s170 + $0x8] sm:$0xff] %v3632
      %3665 = vst [vmem:[%s170 + $0x10] sm:$0xff] %v3633
      %3666 = vst [vmem:[%s170 + $0x18] sm:$0xff] %v3634
      %3667 = vst [vmem:[%s170 + $0x20] sm:$0xff] %v3635
      %3668 = vst [vmem:[%s170 + $0x28] sm:$0xff] %v3636
      %3669 = vst [vmem:[%s170 + $0x30] sm:$0xff] %v3637
      %3670 = vst [vmem:[%s170 + $0x38] sm:$0xff] %v3638
      %3671 = vst [vmem:[%s170 + $0x40] sm:$0xff] %v3639
      %3672 = vst [vmem:[%s170 + $0x48] sm:$0xff] %v3640
      %3673 = vst [vmem:[%s170 + $0x50] sm:$0xff] %v3641
      %3674 = vst [vmem:[%s170 + $0x58] sm:$0xff] %v3642
      %3675 = vst [vmem:[%s170 + $0x60] sm:$0xff] %v3643
      %3676 = vst [vmem:[%s170 + $0x68] sm:$0xff] %v3644
      %3677 = vst [vmem:[%s170 + $0x70] sm:$0xff] %v3645
      %3678 = vst [vmem:[%s170 + $0x78] sm:$0xff] %v3646
      %3679 = vst [vmem:[%s170 + $0x80] sm:$0xff] %v3647
      %3680 = vst [vmem:[%s170 + $0x88] sm:$0xff] %v3648
      %3681 = vst [vmem:[%s170 + $0x90] sm:$0xff] %v3649
      %3682 = vst [vmem:[%s170 + $0x98] sm:$0xff] %v3650
      %3683 = vst [vmem:[%s170 + $0xa0] sm:$0xff] %v3651
      %3684 = vst [vmem:[%s170 + $0xa8] sm:$0xff] %v3652
      %3685 = vst [vmem:[%s170 + $0xb0] sm:$0xff] %v3653
      %3686 = vst [vmem:[%s170 + $0xb8] sm:$0xff] %v3654
      %3687 = vst [vmem:[%s170 + $0xc0] sm:$0xff] %v3655
      %3688 = vst [vmem:[%s170 + $0xc8] sm:$0xff] %v3656
      %3689 = vst [vmem:[%s170 + $0xd0] sm:$0xff] %v3657
      %3690 = vst [vmem:[%s170 + $0xd8] sm:$0xff] %v3658
      %3691 = vst [vmem:[%s170 + $0xe0] sm:$0xff] %v3659
      %3692 = vst [vmem:[%s170 + $0xe8] sm:$0xff] %v3660
      %3693 = vst [vmem:[%s170 + $0xf0] sm:$0xff] %v3661
      %3694 = vst [vmem:[%s170 + $0xf8] sm:$0xff] %v3662
      %p3695 = scmp.lt.s32.totalorder %s14, 1
      %s3696 = scalar_select %p3695, %s14, 1
      %s3697 = smul.addr %s3696, 32
      %s3698 = smul.addr %s3697, 8
      %s3699 = scalar_lea.vmem %s3, %s3698
      // Predicated region
      $region33: #{inception_forward.8} parent=31 // pred_check
        %p3700 = pneg %p100
      $region34: #{inception_forward.8} parent=31 // pred_check_branch
        %3702 = sbr.rel (%p3700) target = $region36
      $region35: #{inception_forward.8} parent=31 // pred_region
        _
      $region36: #{inception_forward.8} parent=31 // pred_fallthru
        _
    $region32: #{inception_forward.8} parent=5 // pred_fallthru
      _
    %p3703 = scmp.le.s32.totalorder 2, %s9
    // Predicated region
    $region37: #{inception_forward.8} parent=5 // pred_check
      %p3704 = pneg %p3703
    $region38: #{inception_forward.8} parent=5 // pred_check_branch
      %3706 = sbr.rel (%p3704) target = $region40
    $region39: #{inception_forward.8} parent=5 // pred_region
      %s3707 = ssub.s32 %s9, 2
      // Predicated region
      $region41: #{inception_forward.8} parent=39 // pred_check
        %p3708 = pneg %p106
      $region42: #{inception_forward.8} parent=39 // pred_check_branch
        %3710 = sbr.rel (%p3708) target = $region44
      $region43: #{inception_forward.8} parent=39 // pred_region
        %p3711 = scmp.lt.s32.totalorder %s15, 1
        %s3712 = scalar_select %p3711, %s15, 1
        %s3713 = smul.addr %s3712, 32
        %s3714 = smul.addr %s3713, 8
        %s3715 = scalar_lea.vmem %s3, %s3714
      $region44: #{inception_forward.8} parent=39 // pred_fallthru
        _
    $region40: #{inception_forward.8} parent=5 // pred_fallthru
      _
  $region6: #{inception_forward.8} parent=0 // loop_footer
    %s13 = sadd.s32 1, %s9
  $region7: #{inception_forward.8} parent=0 // loop_footer_branch
    %8 = sbr.rel target = $region3
  $region8: #{inception_forward.8} parent=0 // loop_exit
    _

</llo_original>
